<compile_context>
chip_gen: v5e
topology: v5e:2x2
jax: 0.10.0
libtpu: 0.0.40
codegen_flags: <defaults>
</compile_context>

<pallas_src>
import jax
import jax.numpy as jnp
import numpy as np
from jax import lax
from jax.experimental import pallas as pl
from jax.experimental.pallas import tpu as pltpu


def lenet5_kernel(x_ref, m1e_ref, m1o_ref, b1h_ref,
                  m2e_ref, m2o_ref, b2h_ref,
                  fw1_ref, fb1_ref, fw2_ref, fb2_ref, fw3_ref, fb3_ref,
                  out_ref, p1_ref, p2_ref):
    f32 = jnp.float32
    m1e = m1e_ref[...]          # (72, 160)  conv1 band weights, even output cols
    m1o = m1o_ref[...]          # (72, 160)  conv1 band weights, odd  output cols
    b1h = b1h_ref[...]          # (72, 1)
    m2e = m2e_ref[...]          # (64, 360)
    m2o = m2o_ref[...]          # (64, 360)
    b2h = b2h_ref[...]          # (64, 1)

    # ---- conv1 (1->6, k=5) + ReLU + 2x2 max-pool (banded MXU matmuls) ----
    def conv1_pooled_row(h):
        rhs = x_ref[pl.ds(h * 32, 160), :]                      # (160, TB): rows kh*32+j
        ze = jnp.dot(m1e, rhs, preferred_element_type=f32) + b1h
        zo = jnp.dot(m1o, rhs, preferred_element_type=f32) + b1h
        # ReLU + pool over width (the even/odd columns are the two matmuls)
        return jnp.maximum(jnp.maximum(ze, zo), 0.0)            # (72, TB): rows c*12+t

    for s in range(12):                                         # pooled output rows
        row = jnp.maximum(conv1_pooled_row(2 * s), conv1_pooled_row(2 * s + 1))
        p1_ref[pl.ds(s * 72, 72), :] = row                      # p1 row: s*72 + c*12 + t

    # ---- conv2 (6->16, k=5) + ReLU + 2x2 max-pool ----
    def conv2_pooled_row(h):
        rhs = p1_ref[pl.ds(h * 72, 360), :]                     # (360, TB): rows kh*72+c*12+j
        ze = jnp.dot(m2e, rhs, preferred_element_type=f32) + b2h
        zo = jnp.dot(m2o, rhs, preferred_element_type=f32) + b2h
        return jnp.maximum(jnp.maximum(ze, zo), 0.0)            # (64, TB): rows c*4+t

    for s in range(4):
        row = jnp.maximum(conv2_pooled_row(2 * s), conv2_pooled_row(2 * s + 1))
        p2_ref[pl.ds(s * 64, 64), :] = row                      # p2 row: s*64 + c*4 + t

    # ---- FC stack (batch in lanes: W @ h), M/K padded for aligned MXU tiles ----
    # TODO(synk): nn.Dropout(p=0.09) is eval-mode identity; no train-mode dropout here.
    flat = p2_ref[...]                                          # (256, TB)
    h1 = jnp.maximum(
        jnp.dot(fw1_ref[...], flat, preferred_element_type=f32) + fb1_ref[...], 0.0)
    h2 = jnp.maximum(
        jnp.dot(fw2_ref[...], h1, preferred_element_type=f32) + fb2_ref[...], 0.0)
    out_ref[...] = jnp.dot(fw3_ref[...], h2,
                           preferred_element_type=f32) + fb3_ref[...]   # (16, TB)


def _prep_params(params):
    """Wrapper-side layout plumbing: banded conv matrices, padded FC weights."""
    (w1, b1, w2, b2, fw1, fb1, fw2, fb2, fw3, fb3) = params
    f32 = jnp.float32

    # conv1 band: M1[c*24 + w, kh*32 + j] = w1[c, 0, kh, j - w]  (0 <= j-w < 5)
    w_idx = jnp.arange(24)[:, None]
    j_idx = jnp.arange(32)[None, :]
    d = j_idx - w_idx
    band1 = w1[:, 0][:, :, jnp.clip(d, 0, 4)]                   # (6, 5, 24, 32)
    band1 = jnp.where(((d >= 0) & (d < 5))[None, None], band1, 0.0)
    M1 = band1.transpose(0, 2, 1, 3).reshape(144, 160).astype(f32)
    M1e, M1o = M1[0::2], M1[1::2]                               # (72, 160) each
    b1h = jnp.repeat(b1, 12).reshape(72, 1).astype(f32)

    # conv2 band: M2[co*8 + w, kh*72 + c*12 + j] = w2[co, c, kh, j - w]
    w_idx2 = jnp.arange(8)[:, None]
    j_idx2 = jnp.arange(12)[None, :]
    d2 = j_idx2 - w_idx2
    band2 = w2[:, :, :, jnp.clip(d2, 0, 4)]                     # (16, 6, 5, 8, 12)
    band2 = jnp.where(((d2 >= 0) & (d2 < 5))[None, None, None], band2, 0.0)
    M2 = band2.transpose(0, 3, 2, 1, 4).reshape(128, 360).astype(f32)
    M2e, M2o = M2[0::2], M2[1::2]                               # (64, 360) each
    b2h = jnp.repeat(b2, 4).reshape(64, 1).astype(f32)

    # fc1 columns permuted to the kernel flatten order:
    # kernel flat f' = hh*64 + c*4 + ww   <->   torch flat f = c*16 + hh*4 + ww
    perm = np.array([c * 16 + hh * 4 + ww
                     for hh in range(4) for c in range(16) for ww in range(4)],
                    dtype=np.int32)
    fw1p = jnp.zeros((128, 256), f32).at[:120].set(fw1[:, perm])
    fb1p = jnp.zeros((128, 1), f32).at[:120, 0].set(fb1)
    fw2p = jnp.zeros((128, 128), f32).at[:84, :120].set(fw2)
    fb2p = jnp.zeros((128, 1), f32).at[:84, 0].set(fb2)
    fw3p = jnp.zeros((16, 128), f32).at[:10, :84].set(fw3)
    fb3p = jnp.zeros((16, 1), f32).at[:10, 0].set(fb3)
    return (M1e, M1o, b1h, M2e, M2o, b2h, fw1p, fb1p, fw2p, fb2p, fw3p, fb3p)


def lenet5_forward(x, params, block_b=128):
    """x: (B, 1, 28, 28) float32 -> (B, 10) float32."""
    B = x.shape[0]
    Bp = ((B + block_b - 1) // block_b) * block_b

    # Batch-in-lanes input layout: (H * Wpad, B) with W padded 28 -> 32 so that
    # per-output-row conv slices are contiguous and sublane aligned.
    xi = x.reshape(B, 28, 28)
    xi = jnp.pad(xi, ((0, Bp - B), (0, 0), (0, 4)))             # (Bp, 28, 32)
    x2 = xi.reshape(Bp, 896).T.astype(jnp.float32)              # (896, Bp)

    weights = _prep_params(params)

    def fullspec(a):
        return pl.BlockSpec(a.shape, lambda b, _n=a.ndim: (0,) * _n)

    out = pl.pallas_call(
        lenet5_kernel,
        out_shape=jax.ShapeDtypeStruct((16, Bp), jnp.float32),
        grid_spec=pltpu.PrefetchScalarGridSpec(
            num_scalar_prefetch=0,
            grid=(Bp // block_b,),
            in_specs=[pl.BlockSpec((896, block_b), lambda b: (0, b))]
                     + [fullspec(w) for w in weights],
            out_specs=pl.BlockSpec((16, block_b), lambda b: (0, b)),
            scratch_shapes=[pltpu.VMEM((864, block_b), jnp.float32),   # p1 (12*72)
                            pltpu.VMEM((256, block_b), jnp.float32)],  # p2 (4*64)
        ),
        compiler_params=pltpu.CompilerParams(dimension_semantics=("parallel",)),
    )(x2, *weights)
    return out[:10, :B].T                                       # (B, 10)


def lenet5_ref(x, params):
    """Pure-JAX reference mirroring the PyTorch forward (eval mode)."""
    (w1, b1, w2, b2, fw1, fb1, fw2, fb2, fw3, fb3) = params

    def conv(y, w, b):
        y = lax.conv_general_dilated(
            y, w, window_strides=(1, 1), padding='VALID',
            dimension_numbers=('NCHW', 'OIHW', 'NCHW'))
        return y + b[None, :, None, None]

    def pool(y):
        return lax.reduce_window(y, -jnp.inf, lax.max,
                                 (1, 1, 2, 2), (1, 1, 2, 2), 'VALID')

    y = pool(jax.nn.relu(conv(x, w1, b1)))
    y = pool(jax.nn.relu(conv(y, w2, b2)))
    y = y.reshape(y.shape[0], -1)
    y = jax.nn.relu(y @ fw1.T + fb1)
    y = jax.nn.relu(y @ fw2.T + fb2)
    y = y @ fw3.T + fb3
    return y


def init_params(key):
    ks = jax.random.split(key, 10)
    s = 0.1
    w1 = s * jax.random.normal(ks[0], (6, 1, 5, 5), jnp.float32)
    b1 = s * jax.random.normal(ks[1], (6,), jnp.float32)
    w2 = s * jax.random.normal(ks[2], (16, 6, 5, 5), jnp.float32)
    b2 = s * jax.random.normal(ks[3], (16,), jnp.float32)
    fw1 = s * jax.random.normal(ks[4], (120, 256), jnp.float32)
    fb1 = s * jax.random.normal(ks[5], (120,), jnp.float32)
    fw2 = s * jax.random.normal(ks[6], (84, 120), jnp.float32)
    fb2 = s * jax.random.normal(ks[7], (84,), jnp.float32)
    fw3 = s * jax.random.normal(ks[8], (10, 84), jnp.float32)
    fb3 = s * jax.random.normal(ks[9], (10,), jnp.float32)
    return (w1, b1, w2, b2, fw1, fb1, fw2, fb2, fw3, fb3)


if __name__ == "__main__":
    key = jax.random.PRNGKey(0)
    k_x, k_p = jax.random.split(key)

    B = 2
    x = jax.random.normal(k_x, (B, 1, 28, 28), jnp.float32)
    params = init_params(k_p)

    out = jax.jit(lenet5_forward)(x, params)
    out = jax.block_until_ready(out)
    assert out.shape == (B, 10) and out.dtype == jnp.float32

    ref = lenet5_ref(x, params)
    np.testing.assert_allclose(np.asarray(out), np.asarray(ref),
                               rtol=1e-2, atol=1e-2)
    print("KERNEL_OK")
</pallas_src>

<mosaic_0001>
module attributes {stable_mosaic.version = 11 : i64} {
  func.func @lenet5_kernel(%arg0: i32, %arg1: memref<896x128xf32, #tpu.memory_space<vmem>>, %arg2: memref<72x160xf32, #tpu.memory_space<vmem>>, %arg3: memref<72x160xf32, #tpu.memory_space<vmem>>, %arg4: memref<72x1xf32, #tpu.memory_space<vmem>>, %arg5: memref<64x360xf32, #tpu.memory_space<vmem>>, %arg6: memref<64x360xf32, #tpu.memory_space<vmem>>, %arg7: memref<64x1xf32, #tpu.memory_space<vmem>>, %arg8: memref<128x256xf32, #tpu.memory_space<vmem>>, %arg9: memref<128x1xf32, #tpu.memory_space<vmem>>, %arg10: memref<128x128xf32, #tpu.memory_space<vmem>>, %arg11: memref<128x1xf32, #tpu.memory_space<vmem>>, %arg12: memref<16x128xf32, #tpu.memory_space<vmem>>, %arg13: memref<16x1xf32, #tpu.memory_space<vmem>>, %arg14: memref<16x128xf32, #tpu.memory_space<vmem>>, %arg15: memref<864x128xf32, #tpu.memory_space<vmem>>, %arg16: memref<256x128xf32, #tpu.memory_space<vmem>>) attributes {dimension_semantics = [#tpu.dimension_semantics<parallel>], iteration_bounds = array<i64: 1>, scalar_prefetch = 0 : i64, scratch_operands = 2 : i64, tpu.core_type = #tpu.core_type<tc>, window_params = [{transform_indices = @transform_0, window_bounds = array<i64: 896, 128>}, {pipeline_mode = #tpu.pipeline_mode<synchronous>, transform_indices = @transform_1, window_bounds = array<i64: 72, 160>}, {pipeline_mode = #tpu.pipeline_mode<synchronous>, transform_indices = @transform_2, window_bounds = array<i64: 72, 160>}, {pipeline_mode = #tpu.pipeline_mode<synchronous>, transform_indices = @transform_3, window_bounds = array<i64: 72, 1>}, {pipeline_mode = #tpu.pipeline_mode<synchronous>, transform_indices = @transform_4, window_bounds = array<i64: 64, 360>}, {pipeline_mode = #tpu.pipeline_mode<synchronous>, transform_indices = @transform_5, window_bounds = array<i64: 64, 360>}, {pipeline_mode = #tpu.pipeline_mode<synchronous>, transform_indices = @transform_6, window_bounds = array<i64: 64, 1>}, {pipeline_mode = #tpu.pipeline_mode<synchronous>, transform_indices = @transform_7, window_bounds = array<i64: 128, 256>}, {pipeline_mode = #tpu.pipeline_mode<synchronous>, transform_indices = @transform_8, window_bounds = array<i64: 128, 1>}, {pipeline_mode = #tpu.pipeline_mode<synchronous>, transform_indices = @transform_9, window_bounds = array<i64: 128, 128>}, {pipeline_mode = #tpu.pipeline_mode<synchronous>, transform_indices = @transform_10, window_bounds = array<i64: 128, 1>}, {pipeline_mode = #tpu.pipeline_mode<synchronous>, transform_indices = @transform_11, window_bounds = array<i64: 16, 128>}, {pipeline_mode = #tpu.pipeline_mode<synchronous>, transform_indices = @transform_12, window_bounds = array<i64: 16, 1>}, {transform_indices = @transform_13, window_bounds = array<i64: 16, 128>}]} {
    %c0 = arith.constant 0 : index
    %c0_0 = arith.constant 0 : index
    %0 = vector.load %arg2[%c0, %c0_0] : memref<72x160xf32, #tpu.memory_space<vmem>>, vector<72x160xf32>
    %c0_1 = arith.constant 0 : index
    %c0_2 = arith.constant 0 : index
    %1 = vector.load %arg3[%c0_1, %c0_2] : memref<72x160xf32, #tpu.memory_space<vmem>>, vector<72x160xf32>
    %c0_3 = arith.constant 0 : index
    %c0_4 = arith.constant 0 : index
    %2 = vector.load %arg4[%c0_3, %c0_4] : memref<72x1xf32, #tpu.memory_space<vmem>>, vector<72x1xf32>
    %c0_5 = arith.constant 0 : index
    %c0_6 = arith.constant 0 : index
    %3 = vector.load %arg5[%c0_5, %c0_6] : memref<64x360xf32, #tpu.memory_space<vmem>>, vector<64x360xf32>
    %c0_7 = arith.constant 0 : index
    %c0_8 = arith.constant 0 : index
    %4 = vector.load %arg6[%c0_7, %c0_8] : memref<64x360xf32, #tpu.memory_space<vmem>>, vector<64x360xf32>
    %c0_9 = arith.constant 0 : index
    %c0_10 = arith.constant 0 : index
    %5 = vector.load %arg7[%c0_9, %c0_10] : memref<64x1xf32, #tpu.memory_space<vmem>>, vector<64x1xf32>
    %c0_11 = arith.constant 0 : index
    %c0_12 = arith.constant 0 : index
    %6 = vector.load %arg1[%c0_11, %c0_12] : memref<896x128xf32, #tpu.memory_space<vmem>>, vector<160x128xf32>
    %cst = arith.constant dense<0.000000e+00> : vector<72x128xf32>
    %7 = tpu.matmul %0, %6, %cst {dimension_numbers = #tpu.dot_dimension_numbers<[1], [0], [0], [1], [0, 0, 1, 1], [], []>} : vector<72x160xf32>, vector<160x128xf32>, vector<72x128xf32> -> vector<72x128xf32>
    %8 = vector.broadcast %2 : vector<72x1xf32> to vector<72x128xf32>
    %9 = arith.addf %7, %8 : vector<72x128xf32>
    %cst_13 = arith.constant dense<0.000000e+00> : vector<72x128xf32>
    %10 = tpu.matmul %1, %6, %cst_13 {dimension_numbers = #tpu.dot_dimension_numbers<[1], [0], [0], [1], [0, 0, 1, 1], [], []>} : vector<72x160xf32>, vector<160x128xf32>, vector<72x128xf32> -> vector<72x128xf32>
    %11 = vector.broadcast %2 : vector<72x1xf32> to vector<72x128xf32>
    %12 = arith.addf %10, %11 : vector<72x128xf32>
    %13 = arith.maximumf %9, %12 : vector<72x128xf32>
    %cst_14 = arith.constant 0.000000e+00 : f32
    %14 = vector.broadcast %cst_14 : f32 to vector<72x128xf32>
    %15 = arith.maximumf %13, %14 : vector<72x128xf32>
    %c32 = arith.constant 32 : index
    %c0_15 = arith.constant 0 : index
    %16 = vector.load %arg1[%c32, %c0_15] : memref<896x128xf32, #tpu.memory_space<vmem>>, vector<160x128xf32>
    %cst_16 = arith.constant dense<0.000000e+00> : vector<72x128xf32>
    %17 = tpu.matmul %0, %16, %cst_16 {dimension_numbers = #tpu.dot_dimension_numbers<[1], [0], [0], [1], [0, 0, 1, 1], [], []>} : vector<72x160xf32>, vector<160x128xf32>, vector<72x128xf32> -> vector<72x128xf32>
    %18 = vector.broadcast %2 : vector<72x1xf32> to vector<72x128xf32>
    %19 = arith.addf %17, %18 : vector<72x128xf32>
    %cst_17 = arith.constant dense<0.000000e+00> : vector<72x128xf32>
    %20 = tpu.matmul %1, %16, %cst_17 {dimension_numbers = #tpu.dot_dimension_numbers<[1], [0], [0], [1], [0, 0, 1, 1], [], []>} : vector<72x160xf32>, vector<160x128xf32>, vector<72x128xf32> -> vector<72x128xf32>
    %21 = vector.broadcast %2 : vector<72x1xf32> to vector<72x128xf32>
    %22 = arith.addf %20, %21 : vector<72x128xf32>
    %23 = arith.maximumf %19, %22 : vector<72x128xf32>
    %cst_18 = arith.constant 0.000000e+00 : f32
    %24 = vector.broadcast %cst_18 : f32 to vector<72x128xf32>
    %25 = arith.maximumf %23, %24 : vector<72x128xf32>
    %26 = arith.maximumf %15, %25 : vector<72x128xf32>
    %c0_19 = arith.constant 0 : index
    %c0_20 = arith.constant 0 : index
    %27 = vector.load %arg15[%c0_19, %c0_20] : memref<864x128xf32, #tpu.memory_space<vmem>>, vector<72x128xf32>
    tpu.vector_store %arg15[%c0_19, %c0_20], %26 {strides = array<i32>} : memref<864x128xf32, #tpu.memory_space<vmem>>, vector<72x128xf32>,
    %c64 = arith.constant 64 : index
    %c0_21 = arith.constant 0 : index
    %28 = vector.load %arg1[%c64, %c0_21] : memref<896x128xf32, #tpu.memory_space<vmem>>, vector<160x128xf32>
    %cst_22 = arith.constant dense<0.000000e+00> : vector<72x128xf32>
    %29 = tpu.matmul %0, %28, %cst_22 {dimension_numbers = #tpu.dot_dimension_numbers<[1], [0], [0], [1], [0, 0, 1, 1], [], []>} : vector<72x160xf32>, vector<160x128xf32>, vector<72x128xf32> -> vector<72x128xf32>
    %30 = vector.broadcast %2 : vector<72x1xf32> to vector<72x128xf32>
    %31 = arith.addf %29, %30 : vector<72x128xf32>
    %cst_23 = arith.constant dense<0.000000e+00> : vector<72x128xf32>
    %32 = tpu.matmul %1, %28, %cst_23 {dimension_numbers = #tpu.dot_dimension_numbers<[1], [0], [0], [1], [0, 0, 1, 1], [], []>} : vector<72x160xf32>, vector<160x128xf32>, vector<72x128xf32> -> vector<72x128xf32>
    %33 = vector.broadcast %2 : vector<72x1xf32> to vector<72x128xf32>
    %34 = arith.addf %32, %33 : vector<72x128xf32>
    %35 = arith.maximumf %31, %34 : vector<72x128xf32>
    %cst_24 = arith.constant 0.000000e+00 : f32
    %36 = vector.broadcast %cst_24 : f32 to vector<72x128xf32>
    %37 = arith.maximumf %35, %36 : vector<72x128xf32>
    %c96 = arith.constant 96 : index
    %c0_25 = arith.constant 0 : index
    %38 = vector.load %arg1[%c96, %c0_25] : memref<896x128xf32, #tpu.memory_space<vmem>>, vector<160x128xf32>
    %cst_26 = arith.constant dense<0.000000e+00> : vector<72x128xf32>
    %39 = tpu.matmul %0, %38, %cst_26 {dimension_numbers = #tpu.dot_dimension_numbers<[1], [0], [0], [1], [0, 0, 1, 1], [], []>} : vector<72x160xf32>, vector<160x128xf32>, vector<72x128xf32> -> vector<72x128xf32>
    %40 = vector.broadcast %2 : vector<72x1xf32> to vector<72x128xf32>
    %41 = arith.addf %39, %40 : vector<72x128xf32>
    %cst_27 = arith.constant dense<0.000000e+00> : vector<72x128xf32>
    %42 = tpu.matmul %1, %38, %cst_27 {dimension_numbers = #tpu.dot_dimension_numbers<[1], [0], [0], [1], [0, 0, 1, 1], [], []>} : vector<72x160xf32>, vector<160x128xf32>, vector<72x128xf32> -> vector<72x128xf32>
    %43 = vector.broadcast %2 : vector<72x1xf32> to vector<72x128xf32>
    %44 = arith.addf %42, %43 : vector<72x128xf32>
    %45 = arith.maximumf %41, %44 : vector<72x128xf32>
    %cst_28 = arith.constant 0.000000e+00 : f32
    %46 = vector.broadcast %cst_28 : f32 to vector<72x128xf32>
    %47 = arith.maximumf %45, %46 : vector<72x128xf32>
    %48 = arith.maximumf %37, %47 : vector<72x128xf32>
    %c72 = arith.constant 72 : index
    %c0_29 = arith.constant 0 : index
    %49 = vector.load %arg15[%c72, %c0_29] : memref<864x128xf32, #tpu.memory_space<vmem>>, vector<72x128xf32>
    tpu.vector_store %arg15[%c72, %c0_29], %48 {strides = array<i32>} : memref<864x128xf32, #tpu.memory_space<vmem>>, vector<72x128xf32>,
    %c128 = arith.constant 128 : index
    %c0_30 = arith.constant 0 : index
    %50 = vector.load %arg1[%c128, %c0_30] : memref<896x128xf32, #tpu.memory_space<vmem>>, vector<160x128xf32>
    %cst_31 = arith.constant dense<0.000000e+00> : vector<72x128xf32>
    %51 = tpu.matmul %0, %50, %cst_31 {dimension_numbers = #tpu.dot_dimension_numbers<[1], [0], [0], [1], [0, 0, 1, 1], [], []>} : vector<72x160xf32>, vector<160x128xf32>, vector<72x128xf32> -> vector<72x128xf32>
    %52 = vector.broadcast %2 : vector<72x1xf32> to vector<72x128xf32>
    %53 = arith.addf %51, %52 : vector<72x128xf32>
    %cst_32 = arith.constant dense<0.000000e+00> : vector<72x128xf32>
    %54 = tpu.matmul %1, %50, %cst_32 {dimension_numbers = #tpu.dot_dimension_numbers<[1], [0], [0], [1], [0, 0, 1, 1], [], []>} : vector<72x160xf32>, vector<160x128xf32>, vector<72x128xf32> -> vector<72x128xf32>
    %55 = vector.broadcast %2 : vector<72x1xf32> to vector<72x128xf32>
    %56 = arith.addf %54, %55 : vector<72x128xf32>
    %57 = arith.maximumf %53, %56 : vector<72x128xf32>
    %cst_33 = arith.constant 0.000000e+00 : f32
    %58 = vector.broadcast %cst_33 : f32 to vector<72x128xf32>
    %59 = arith.maximumf %57, %58 : vector<72x128xf32>
    %c160 = arith.constant 160 : index
    %c0_34 = arith.constant 0 : index
    %60 = vector.load %arg1[%c160, %c0_34] : memref<896x128xf32, #tpu.memory_space<vmem>>, vector<160x128xf32>
    %cst_35 = arith.constant dense<0.000000e+00> : vector<72x128xf32>
    %61 = tpu.matmul %0, %60, %cst_35 {dimension_numbers = #tpu.dot_dimension_numbers<[1], [0], [0], [1], [0, 0, 1, 1], [], []>} : vector<72x160xf32>, vector<160x128xf32>, vector<72x128xf32> -> vector<72x128xf32>
    %62 = vector.broadcast %2 : vector<72x1xf32> to vector<72x128xf32>
    %63 = arith.addf %61, %62 : vector<72x128xf32>
    %cst_36 = arith.constant dense<0.000000e+00> : vector<72x128xf32>
    %64 = tpu.matmul %1, %60, %cst_36 {dimension_numbers = #tpu.dot_dimension_numbers<[1], [0], [0], [1], [0, 0, 1, 1], [], []>} : vector<72x160xf32>, vector<160x128xf32>, vector<72x128xf32> -> vector<72x128xf32>
    %65 = vector.broadcast %2 : vector<72x1xf32> to vector<72x128xf32>
    %66 = arith.addf %64, %65 : vector<72x128xf32>
    %67 = arith.maximumf %63, %66 : vector<72x128xf32>
    %cst_37 = arith.constant 0.000000e+00 : f32
    %68 = vector.broadcast %cst_37 : f32 to vector<72x128xf32>
    %69 = arith.maximumf %67, %68 : vector<72x128xf32>
    %70 = arith.maximumf %59, %69 : vector<72x128xf32>
    %c144 = arith.constant 144 : index
    %c0_38 = arith.constant 0 : index
    %71 = vector.load %arg15[%c144, %c0_38] : memref<864x128xf32, #tpu.memory_space<vmem>>, vector<72x128xf32>
    tpu.vector_store %arg15[%c144, %c0_38], %70 {strides = array<i32>} : memref<864x128xf32, #tpu.memory_space<vmem>>, vector<72x128xf32>,
    %c192 = arith.constant 192 : index
    %c0_39 = arith.constant 0 : index
    %72 = vector.load %arg1[%c192, %c0_39] : memref<896x128xf32, #tpu.memory_space<vmem>>, vector<160x128xf32>
    %cst_40 = arith.constant dense<0.000000e+00> : vector<72x128xf32>
    %73 = tpu.matmul %0, %72, %cst_40 {dimension_numbers = #tpu.dot_dimension_numbers<[1], [0], [0], [1], [0, 0, 1, 1], [], []>} : vector<72x160xf32>, vector<160x128xf32>, vector<72x128xf32> -> vector<72x128xf32>
    %74 = vector.broadcast %2 : vector<72x1xf32> to vector<72x128xf32>
    %75 = arith.addf %73, %74 : vector<72x128xf32>
    %cst_41 = arith.constant dense<0.000000e+00> : vector<72x128xf32>
    %76 = tpu.matmul %1, %72, %cst_41 {dimension_numbers = #tpu.dot_dimension_numbers<[1], [0], [0], [1], [0, 0, 1, 1], [], []>} : vector<72x160xf32>, vector<160x128xf32>, vector<72x128xf32> -> vector<72x128xf32>
    %77 = vector.broadcast %2 : vector<72x1xf32> to vector<72x128xf32>
    %78 = arith.addf %76, %77 : vector<72x128xf32>
    %79 = arith.maximumf %75, %78 : vector<72x128xf32>
    %cst_42 = arith.constant 0.000000e+00 : f32
    %80 = vector.broadcast %cst_42 : f32 to vector<72x128xf32>
    %81 = arith.maximumf %79, %80 : vector<72x128xf32>
    %c224 = arith.constant 224 : index
    %c0_43 = arith.constant 0 : index
    %82 = vector.load %arg1[%c224, %c0_43] : memref<896x128xf32, #tpu.memory_space<vmem>>, vector<160x128xf32>
    %cst_44 = arith.constant dense<0.000000e+00> : vector<72x128xf32>
    %83 = tpu.matmul %0, %82, %cst_44 {dimension_numbers = #tpu.dot_dimension_numbers<[1], [0], [0], [1], [0, 0, 1, 1], [], []>} : vector<72x160xf32>, vector<160x128xf32>, vector<72x128xf32> -> vector<72x128xf32>
    %84 = vector.broadcast %2 : vector<72x1xf32> to vector<72x128xf32>
    %85 = arith.addf %83, %84 : vector<72x128xf32>
    %cst_45 = arith.constant dense<0.000000e+00> : vector<72x128xf32>
    %86 = tpu.matmul %1, %82, %cst_45 {dimension_numbers = #tpu.dot_dimension_numbers<[1], [0], [0], [1], [0, 0, 1, 1], [], []>} : vector<72x160xf32>, vector<160x128xf32>, vector<72x128xf32> -> vector<72x128xf32>
    %87 = vector.broadcast %2 : vector<72x1xf32> to vector<72x128xf32>
    %88 = arith.addf %86, %87 : vector<72x128xf32>
    %89 = arith.maximumf %85, %88 : vector<72x128xf32>
    %cst_46 = arith.constant 0.000000e+00 : f32
    %90 = vector.broadcast %cst_46 : f32 to vector<72x128xf32>
    %91 = arith.maximumf %89, %90 : vector<72x128xf32>
    %92 = arith.maximumf %81, %91 : vector<72x128xf32>
    %c216 = arith.constant 216 : index
    %c0_47 = arith.constant 0 : index
    %93 = vector.load %arg15[%c216, %c0_47] : memref<864x128xf32, #tpu.memory_space<vmem>>, vector<72x128xf32>
    tpu.vector_store %arg15[%c216, %c0_47], %92 {strides = array<i32>} : memref<864x128xf32, #tpu.memory_space<vmem>>, vector<72x128xf32>,
    %c256 = arith.constant 256 : index
    %c0_48 = arith.constant 0 : index
    %94 = vector.load %arg1[%c256, %c0_48] : memref<896x128xf32, #tpu.memory_space<vmem>>, vector<160x128xf32>
    %cst_49 = arith.constant dense<0.000000e+00> : vector<72x128xf32>
    %95 = tpu.matmul %0, %94, %cst_49 {dimension_numbers = #tpu.dot_dimension_numbers<[1], [0], [0], [1], [0, 0, 1, 1], [], []>} : vector<72x160xf32>, vector<160x128xf32>, vector<72x128xf32> -> vector<72x128xf32>
    %96 = vector.broadcast %2 : vector<72x1xf32> to vector<72x128xf32>
    %97 = arith.addf %95, %96 : vector<72x128xf32>
    %cst_50 = arith.constant dense<0.000000e+00> : vector<72x128xf32>
    %98 = tpu.matmul %1, %94, %cst_50 {dimension_numbers = #tpu.dot_dimension_numbers<[1], [0], [0], [1], [0, 0, 1, 1], [], []>} : vector<72x160xf32>, vector<160x128xf32>, vector<72x128xf32> -> vector<72x128xf32>
    %99 = vector.broadcast %2 : vector<72x1xf32> to vector<72x128xf32>
    %100 = arith.addf %98, %99 : vector<72x128xf32>
    %101 = arith.maximumf %97, %100 : vector<72x128xf32>
    %cst_51 = arith.constant 0.000000e+00 : f32
    %102 = vector.broadcast %cst_51 : f32 to vector<72x128xf32>
    %103 = arith.maximumf %101, %102 : vector<72x128xf32>
    %c288 = arith.constant 288 : index
    %c0_52 = arith.constant 0 : index
    %104 = vector.load %arg1[%c288, %c0_52] : memref<896x128xf32, #tpu.memory_space<vmem>>, vector<160x128xf32>
    %cst_53 = arith.constant dense<0.000000e+00> : vector<72x128xf32>
    %105 = tpu.matmul %0, %104, %cst_53 {dimension_numbers = #tpu.dot_dimension_numbers<[1], [0], [0], [1], [0, 0, 1, 1], [], []>} : vector<72x160xf32>, vector<160x128xf32>, vector<72x128xf32> -> vector<72x128xf32>
    %106 = vector.broadcast %2 : vector<72x1xf32> to vector<72x128xf32>
    %107 = arith.addf %105, %106 : vector<72x128xf32>
    %cst_54 = arith.constant dense<0.000000e+00> : vector<72x128xf32>
    %108 = tpu.matmul %1, %104, %cst_54 {dimension_numbers = #tpu.dot_dimension_numbers<[1], [0], [0], [1], [0, 0, 1, 1], [], []>} : vector<72x160xf32>, vector<160x128xf32>, vector<72x128xf32> -> vector<72x128xf32>
    %109 = vector.broadcast %2 : vector<72x1xf32> to vector<72x128xf32>
    %110 = arith.addf %108, %109 : vector<72x128xf32>
    %111 = arith.maximumf %107, %110 : vector<72x128xf32>
    %cst_55 = arith.constant 0.000000e+00 : f32
    %112 = vector.broadcast %cst_55 : f32 to vector<72x128xf32>
    %113 = arith.maximumf %111, %112 : vector<72x128xf32>
    %114 = arith.maximumf %103, %113 : vector<72x128xf32>
    %c288_56 = arith.constant 288 : index
    %c0_57 = arith.constant 0 : index
    %115 = vector.load %arg15[%c288_56, %c0_57] : memref<864x128xf32, #tpu.memory_space<vmem>>, vector<72x128xf32>
    tpu.vector_store %arg15[%c288_56, %c0_57], %114 {strides = array<i32>} : memref<864x128xf32, #tpu.memory_space<vmem>>, vector<72x128xf32>,
    %c320 = arith.constant 320 : index
    %c0_58 = arith.constant 0 : index
    %116 = vector.load %arg1[%c320, %c0_58] : memref<896x128xf32, #tpu.memory_space<vmem>>, vector<160x128xf32>
    %cst_59 = arith.constant dense<0.000000e+00> : vector<72x128xf32>
    %117 = tpu.matmul %0, %116, %cst_59 {dimension_numbers = #tpu.dot_dimension_numbers<[1], [0], [0], [1], [0, 0, 1, 1], [], []>} : vector<72x160xf32>, vector<160x128xf32>, vector<72x128xf32> -> vector<72x128xf32>
    %118 = vector.broadcast %2 : vector<72x1xf32> to vector<72x128xf32>
    %119 = arith.addf %117, %118 : vector<72x128xf32>
    %cst_60 = arith.constant dense<0.000000e+00> : vector<72x128xf32>
    %120 = tpu.matmul %1, %116, %cst_60 {dimension_numbers = #tpu.dot_dimension_numbers<[1], [0], [0], [1], [0, 0, 1, 1], [], []>} : vector<72x160xf32>, vector<160x128xf32>, vector<72x128xf32> -> vector<72x128xf32>
    %121 = vector.broadcast %2 : vector<72x1xf32> to vector<72x128xf32>
    %122 = arith.addf %120, %121 : vector<72x128xf32>
    %123 = arith.maximumf %119, %122 : vector<72x128xf32>
    %cst_61 = arith.constant 0.000000e+00 : f32
    %124 = vector.broadcast %cst_61 : f32 to vector<72x128xf32>
    %125 = arith.maximumf %123, %124 : vector<72x128xf32>
    %c352 = arith.constant 352 : index
    %c0_62 = arith.constant 0 : index
    %126 = vector.load %arg1[%c352, %c0_62] : memref<896x128xf32, #tpu.memory_space<vmem>>, vector<160x128xf32>
    %cst_63 = arith.constant dense<0.000000e+00> : vector<72x128xf32>
    %127 = tpu.matmul %0, %126, %cst_63 {dimension_numbers = #tpu.dot_dimension_numbers<[1], [0], [0], [1], [0, 0, 1, 1], [], []>} : vector<72x160xf32>, vector<160x128xf32>, vector<72x128xf32> -> vector<72x128xf32>
    %128 = vector.broadcast %2 : vector<72x1xf32> to vector<72x128xf32>
    %129 = arith.addf %127, %128 : vector<72x128xf32>
    %cst_64 = arith.constant dense<0.000000e+00> : vector<72x128xf32>
    %130 = tpu.matmul %1, %126, %cst_64 {dimension_numbers = #tpu.dot_dimension_numbers<[1], [0], [0], [1], [0, 0, 1, 1], [], []>} : vector<72x160xf32>, vector<160x128xf32>, vector<72x128xf32> -> vector<72x128xf32>
    %131 = vector.broadcast %2 : vector<72x1xf32> to vector<72x128xf32>
    %132 = arith.addf %130, %131 : vector<72x128xf32>
    %133 = arith.maximumf %129, %132 : vector<72x128xf32>
    %cst_65 = arith.constant 0.000000e+00 : f32
    %134 = vector.broadcast %cst_65 : f32 to vector<72x128xf32>
    %135 = arith.maximumf %133, %134 : vector<72x128xf32>
    %136 = arith.maximumf %125, %135 : vector<72x128xf32>
    %c360 = arith.constant 360 : index
    %c0_66 = arith.constant 0 : index
    %137 = vector.load %arg15[%c360, %c0_66] : memref<864x128xf32, #tpu.memory_space<vmem>>, vector<72x128xf32>
    tpu.vector_store %arg15[%c360, %c0_66], %136 {strides = array<i32>} : memref<864x128xf32, #tpu.memory_space<vmem>>, vector<72x128xf32>,
    %c384 = arith.constant 384 : index
    %c0_67 = arith.constant 0 : index
    %138 = vector.load %arg1[%c384, %c0_67] : memref<896x128xf32, #tpu.memory_space<vmem>>, vector<160x128xf32>
    %cst_68 = arith.constant dense<0.000000e+00> : vector<72x128xf32>
    %139 = tpu.matmul %0, %138, %cst_68 {dimension_numbers = #tpu.dot_dimension_numbers<[1], [0], [0], [1], [0, 0, 1, 1], [], []>} : vector<72x160xf32>, vector<160x128xf32>, vector<72x128xf32> -> vector<72x128xf32>
    %140 = vector.broadcast %2 : vector<72x1xf32> to vector<72x128xf32>
    %141 = arith.addf %139, %140 : vector<72x128xf32>
    %cst_69 = arith.constant dense<0.000000e+00> : vector<72x128xf32>
    %142 = tpu.matmul %1, %138, %cst_69 {dimension_numbers = #tpu.dot_dimension_numbers<[1], [0], [0], [1], [0, 0, 1, 1], [], []>} : vector<72x160xf32>, vector<160x128xf32>, vector<72x128xf32> -> vector<72x128xf32>
    %143 = vector.broadcast %2 : vector<72x1xf32> to vector<72x128xf32>
    %144 = arith.addf %142, %143 : vector<72x128xf32>
    %145 = arith.maximumf %141, %144 : vector<72x128xf32>
    %cst_70 = arith.constant 0.000000e+00 : f32
    %146 = vector.broadcast %cst_70 : f32 to vector<72x128xf32>
    %147 = arith.maximumf %145, %146 : vector<72x128xf32>
    %c416 = arith.constant 416 : index
    %c0_71 = arith.constant 0 : index
    %148 = vector.load %arg1[%c416, %c0_71] : memref<896x128xf32, #tpu.memory_space<vmem>>, vector<160x128xf32>
    %cst_72 = arith.constant dense<0.000000e+00> : vector<72x128xf32>
    %149 = tpu.matmul %0, %148, %cst_72 {dimension_numbers = #tpu.dot_dimension_numbers<[1], [0], [0], [1], [0, 0, 1, 1], [], []>} : vector<72x160xf32>, vector<160x128xf32>, vector<72x128xf32> -> vector<72x128xf32>
    %150 = vector.broadcast %2 : vector<72x1xf32> to vector<72x128xf32>
    %151 = arith.addf %149, %150 : vector<72x128xf32>
    %cst_73 = arith.constant dense<0.000000e+00> : vector<72x128xf32>
    %152 = tpu.matmul %1, %148, %cst_73 {dimension_numbers = #tpu.dot_dimension_numbers<[1], [0], [0], [1], [0, 0, 1, 1], [], []>} : vector<72x160xf32>, vector<160x128xf32>, vector<72x128xf32> -> vector<72x128xf32>
    %153 = vector.broadcast %2 : vector<72x1xf32> to vector<72x128xf32>
    %154 = arith.addf %152, %153 : vector<72x128xf32>
    %155 = arith.maximumf %151, %154 : vector<72x128xf32>
    %cst_74 = arith.constant 0.000000e+00 : f32
    %156 = vector.broadcast %cst_74 : f32 to vector<72x128xf32>
    %157 = arith.maximumf %155, %156 : vector<72x128xf32>
    %158 = arith.maximumf %147, %157 : vector<72x128xf32>
    %c432 = arith.constant 432 : index
    %c0_75 = arith.constant 0 : index
    %159 = vector.load %arg15[%c432, %c0_75] : memref<864x128xf32, #tpu.memory_space<vmem>>, vector<72x128xf32>
    tpu.vector_store %arg15[%c432, %c0_75], %158 {strides = array<i32>} : memref<864x128xf32, #tpu.memory_space<vmem>>, vector<72x128xf32>,
    %c448 = arith.constant 448 : index
    %c0_76 = arith.constant 0 : index
    %160 = vector.load %arg1[%c448, %c0_76] : memref<896x128xf32, #tpu.memory_space<vmem>>, vector<160x128xf32>
    %cst_77 = arith.constant dense<0.000000e+00> : vector<72x128xf32>
    %161 = tpu.matmul %0, %160, %cst_77 {dimension_numbers = #tpu.dot_dimension_numbers<[1], [0], [0], [1], [0, 0, 1, 1], [], []>} : vector<72x160xf32>, vector<160x128xf32>, vector<72x128xf32> -> vector<72x128xf32>
    %162 = vector.broadcast %2 : vector<72x1xf32> to vector<72x128xf32>
    %163 = arith.addf %161, %162 : vector<72x128xf32>
    %cst_78 = arith.constant dense<0.000000e+00> : vector<72x128xf32>
    %164 = tpu.matmul %1, %160, %cst_78 {dimension_numbers = #tpu.dot_dimension_numbers<[1], [0], [0], [1], [0, 0, 1, 1], [], []>} : vector<72x160xf32>, vector<160x128xf32>, vector<72x128xf32> -> vector<72x128xf32>
    %165 = vector.broadcast %2 : vector<72x1xf32> to vector<72x128xf32>
    %166 = arith.addf %164, %165 : vector<72x128xf32>
    %167 = arith.maximumf %163, %166 : vector<72x128xf32>
    %cst_79 = arith.constant 0.000000e+00 : f32
    %168 = vector.broadcast %cst_79 : f32 to vector<72x128xf32>
    %169 = arith.maximumf %167, %168 : vector<72x128xf32>
    %c480 = arith.constant 480 : index
    %c0_80 = arith.constant 0 : index
    %170 = vector.load %arg1[%c480, %c0_80] : memref<896x128xf32, #tpu.memory_space<vmem>>, vector<160x128xf32>
    %cst_81 = arith.constant dense<0.000000e+00> : vector<72x128xf32>
    %171 = tpu.matmul %0, %170, %cst_81 {dimension_numbers = #tpu.dot_dimension_numbers<[1], [0], [0], [1], [0, 0, 1, 1], [], []>} : vector<72x160xf32>, vector<160x128xf32>, vector<72x128xf32> -> vector<72x128xf32>
    %172 = vector.broadcast %2 : vector<72x1xf32> to vector<72x128xf32>
    %173 = arith.addf %171, %172 : vector<72x128xf32>
    %cst_82 = arith.constant dense<0.000000e+00> : vector<72x128xf32>
    %174 = tpu.matmul %1, %170, %cst_82 {dimension_numbers = #tpu.dot_dimension_numbers<[1], [0], [0], [1], [0, 0, 1, 1], [], []>} : vector<72x160xf32>, vector<160x128xf32>, vector<72x128xf32> -> vector<72x128xf32>
    %175 = vector.broadcast %2 : vector<72x1xf32> to vector<72x128xf32>
    %176 = arith.addf %174, %175 : vector<72x128xf32>
    %177 = arith.maximumf %173, %176 : vector<72x128xf32>
    %cst_83 = arith.constant 0.000000e+00 : f32
    %178 = vector.broadcast %cst_83 : f32 to vector<72x128xf32>
    %179 = arith.maximumf %177, %178 : vector<72x128xf32>
    %180 = arith.maximumf %169, %179 : vector<72x128xf32>
    %c504 = arith.constant 504 : index
    %c0_84 = arith.constant 0 : index
    %181 = vector.load %arg15[%c504, %c0_84] : memref<864x128xf32, #tpu.memory_space<vmem>>, vector<72x128xf32>
    tpu.vector_store %arg15[%c504, %c0_84], %180 {strides = array<i32>} : memref<864x128xf32, #tpu.memory_space<vmem>>, vector<72x128xf32>,
    %c512 = arith.constant 512 : index
    %c0_85 = arith.constant 0 : index
    %182 = vector.load %arg1[%c512, %c0_85] : memref<896x128xf32, #tpu.memory_space<vmem>>, vector<160x128xf32>
    %cst_86 = arith.constant dense<0.000000e+00> : vector<72x128xf32>
    %183 = tpu.matmul %0, %182, %cst_86 {dimension_numbers = #tpu.dot_dimension_numbers<[1], [0], [0], [1], [0, 0, 1, 1], [], []>} : vector<72x160xf32>, vector<160x128xf32>, vector<72x128xf32> -> vector<72x128xf32>
    %184 = vector.broadcast %2 : vector<72x1xf32> to vector<72x128xf32>
    %185 = arith.addf %183, %184 : vector<72x128xf32>
    %cst_87 = arith.constant dense<0.000000e+00> : vector<72x128xf32>
    %186 = tpu.matmul %1, %182, %cst_87 {dimension_numbers = #tpu.dot_dimension_numbers<[1], [0], [0], [1], [0, 0, 1, 1], [], []>} : vector<72x160xf32>, vector<160x128xf32>, vector<72x128xf32> -> vector<72x128xf32>
    %187 = vector.broadcast %2 : vector<72x1xf32> to vector<72x128xf32>
    %188 = arith.addf %186, %187 : vector<72x128xf32>
    %189 = arith.maximumf %185, %188 : vector<72x128xf32>
    %cst_88 = arith.constant 0.000000e+00 : f32
    %190 = vector.broadcast %cst_88 : f32 to vector<72x128xf32>
    %191 = arith.maximumf %189, %190 : vector<72x128xf32>
    %c544 = arith.constant 544 : index
    %c0_89 = arith.constant 0 : index
    %192 = vector.load %arg1[%c544, %c0_89] : memref<896x128xf32, #tpu.memory_space<vmem>>, vector<160x128xf32>
    %cst_90 = arith.constant dense<0.000000e+00> : vector<72x128xf32>
    %193 = tpu.matmul %0, %192, %cst_90 {dimension_numbers = #tpu.dot_dimension_numbers<[1], [0], [0], [1], [0, 0, 1, 1], [], []>} : vector<72x160xf32>, vector<160x128xf32>, vector<72x128xf32> -> vector<72x128xf32>
    %194 = vector.broadcast %2 : vector<72x1xf32> to vector<72x128xf32>
    %195 = arith.addf %193, %194 : vector<72x128xf32>
    %cst_91 = arith.constant dense<0.000000e+00> : vector<72x128xf32>
    %196 = tpu.matmul %1, %192, %cst_91 {dimension_numbers = #tpu.dot_dimension_numbers<[1], [0], [0], [1], [0, 0, 1, 1], [], []>} : vector<72x160xf32>, vector<160x128xf32>, vector<72x128xf32> -> vector<72x128xf32>
    %197 = vector.broadcast %2 : vector<72x1xf32> to vector<72x128xf32>
    %198 = arith.addf %196, %197 : vector<72x128xf32>
    %199 = arith.maximumf %195, %198 : vector<72x128xf32>
    %cst_92 = arith.constant 0.000000e+00 : f32
    %200 = vector.broadcast %cst_92 : f32 to vector<72x128xf32>
    %201 = arith.maximumf %199, %200 : vector<72x128xf32>
    %202 = arith.maximumf %191, %201 : vector<72x128xf32>
    %c576 = arith.constant 576 : index
    %c0_93 = arith.constant 0 : index
    %203 = vector.load %arg15[%c576, %c0_93] : memref<864x128xf32, #tpu.memory_space<vmem>>, vector<72x128xf32>
    tpu.vector_store %arg15[%c576, %c0_93], %202 {strides = array<i32>} : memref<864x128xf32, #tpu.memory_space<vmem>>, vector<72x128xf32>,
    %c576_94 = arith.constant 576 : index
    %c0_95 = arith.constant 0 : index
    %204 = vector.load %arg1[%c576_94, %c0_95] : memref<896x128xf32, #tpu.memory_space<vmem>>, vector<160x128xf32>
    %cst_96 = arith.constant dense<0.000000e+00> : vector<72x128xf32>
    %205 = tpu.matmul %0, %204, %cst_96 {dimension_numbers = #tpu.dot_dimension_numbers<[1], [0], [0], [1], [0, 0, 1, 1], [], []>} : vector<72x160xf32>, vector<160x128xf32>, vector<72x128xf32> -> vector<72x128xf32>
    %206 = vector.broadcast %2 : vector<72x1xf32> to vector<72x128xf32>
    %207 = arith.addf %205, %206 : vector<72x128xf32>
    %cst_97 = arith.constant dense<0.000000e+00> : vector<72x128xf32>
    %208 = tpu.matmul %1, %204, %cst_97 {dimension_numbers = #tpu.dot_dimension_numbers<[1], [0], [0], [1], [0, 0, 1, 1], [], []>} : vector<72x160xf32>, vector<160x128xf32>, vector<72x128xf32> -> vector<72x128xf32>
    %209 = vector.broadcast %2 : vector<72x1xf32> to vector<72x128xf32>
    %210 = arith.addf %208, %209 : vector<72x128xf32>
    %211 = arith.maximumf %207, %210 : vector<72x128xf32>
    %cst_98 = arith.constant 0.000000e+00 : f32
    %212 = vector.broadcast %cst_98 : f32 to vector<72x128xf32>
    %213 = arith.maximumf %211, %212 : vector<72x128xf32>
    %c608 = arith.constant 608 : index
    %c0_99 = arith.constant 0 : index
    %214 = vector.load %arg1[%c608, %c0_99] : memref<896x128xf32, #tpu.memory_space<vmem>>, vector<160x128xf32>
    %cst_100 = arith.constant dense<0.000000e+00> : vector<72x128xf32>
    %215 = tpu.matmul %0, %214, %cst_100 {dimension_numbers = #tpu.dot_dimension_numbers<[1], [0], [0], [1], [0, 0, 1, 1], [], []>} : vector<72x160xf32>, vector<160x128xf32>, vector<72x128xf32> -> vector<72x128xf32>
    %216 = vector.broadcast %2 : vector<72x1xf32> to vector<72x128xf32>
    %217 = arith.addf %215, %216 : vector<72x128xf32>
    %cst_101 = arith.constant dense<0.000000e+00> : vector<72x128xf32>
    %218 = tpu.matmul %1, %214, %cst_101 {dimension_numbers = #tpu.dot_dimension_numbers<[1], [0], [0], [1], [0, 0, 1, 1], [], []>} : vector<72x160xf32>, vector<160x128xf32>, vector<72x128xf32> -> vector<72x128xf32>
    %219 = vector.broadcast %2 : vector<72x1xf32> to vector<72x128xf32>
    %220 = arith.addf %218, %219 : vector<72x128xf32>
    %221 = arith.maximumf %217, %220 : vector<72x128xf32>
    %cst_102 = arith.constant 0.000000e+00 : f32
    %222 = vector.broadcast %cst_102 : f32 to vector<72x128xf32>
    %223 = arith.maximumf %221, %222 : vector<72x128xf32>
    %224 = arith.maximumf %213, %223 : vector<72x128xf32>
    %c648 = arith.constant 648 : index
    %c0_103 = arith.constant 0 : index
    %225 = vector.load %arg15[%c648, %c0_103] : memref<864x128xf32, #tpu.memory_space<vmem>>, vector<72x128xf32>
    tpu.vector_store %arg15[%c648, %c0_103], %224 {strides = array<i32>} : memref<864x128xf32, #tpu.memory_space<vmem>>, vector<72x128xf32>,
    %c640 = arith.constant 640 : index
    %c0_104 = arith.constant 0 : index
    %226 = vector.load %arg1[%c640, %c0_104] : memref<896x128xf32, #tpu.memory_space<vmem>>, vector<160x128xf32>
    %cst_105 = arith.constant dense<0.000000e+00> : vector<72x128xf32>
    %227 = tpu.matmul %0, %226, %cst_105 {dimension_numbers = #tpu.dot_dimension_numbers<[1], [0], [0], [1], [0, 0, 1, 1], [], []>} : vector<72x160xf32>, vector<160x128xf32>, vector<72x128xf32> -> vector<72x128xf32>
    %228 = vector.broadcast %2 : vector<72x1xf32> to vector<72x128xf32>
    %229 = arith.addf %227, %228 : vector<72x128xf32>
    %cst_106 = arith.constant dense<0.000000e+00> : vector<72x128xf32>
    %230 = tpu.matmul %1, %226, %cst_106 {dimension_numbers = #tpu.dot_dimension_numbers<[1], [0], [0], [1], [0, 0, 1, 1], [], []>} : vector<72x160xf32>, vector<160x128xf32>, vector<72x128xf32> -> vector<72x128xf32>
    %231 = vector.broadcast %2 : vector<72x1xf32> to vector<72x128xf32>
    %232 = arith.addf %230, %231 : vector<72x128xf32>
    %233 = arith.maximumf %229, %232 : vector<72x128xf32>
    %cst_107 = arith.constant 0.000000e+00 : f32
    %234 = vector.broadcast %cst_107 : f32 to vector<72x128xf32>
    %235 = arith.maximumf %233, %234 : vector<72x128xf32>
    %c672 = arith.constant 672 : index
    %c0_108 = arith.constant 0 : index
    %236 = vector.load %arg1[%c672, %c0_108] : memref<896x128xf32, #tpu.memory_space<vmem>>, vector<160x128xf32>
    %cst_109 = arith.constant dense<0.000000e+00> : vector<72x128xf32>
    %237 = tpu.matmul %0, %236, %cst_109 {dimension_numbers = #tpu.dot_dimension_numbers<[1], [0], [0], [1], [0, 0, 1, 1], [], []>} : vector<72x160xf32>, vector<160x128xf32>, vector<72x128xf32> -> vector<72x128xf32>
    %238 = vector.broadcast %2 : vector<72x1xf32> to vector<72x128xf32>
    %239 = arith.addf %237, %238 : vector<72x128xf32>
    %cst_110 = arith.constant dense<0.000000e+00> : vector<72x128xf32>
    %240 = tpu.matmul %1, %236, %cst_110 {dimension_numbers = #tpu.dot_dimension_numbers<[1], [0], [0], [1], [0, 0, 1, 1], [], []>} : vector<72x160xf32>, vector<160x128xf32>, vector<72x128xf32> -> vector<72x128xf32>
    %241 = vector.broadcast %2 : vector<72x1xf32> to vector<72x128xf32>
    %242 = arith.addf %240, %241 : vector<72x128xf32>
    %243 = arith.maximumf %239, %242 : vector<72x128xf32>
    %cst_111 = arith.constant 0.000000e+00 : f32
    %244 = vector.broadcast %cst_111 : f32 to vector<72x128xf32>
    %245 = arith.maximumf %243, %244 : vector<72x128xf32>
    %246 = arith.maximumf %235, %245 : vector<72x128xf32>
    %c720 = arith.constant 720 : index
    %c0_112 = arith.constant 0 : index
    %247 = vector.load %arg15[%c720, %c0_112] : memref<864x128xf32, #tpu.memory_space<vmem>>, vector<72x128xf32>
    tpu.vector_store %arg15[%c720, %c0_112], %246 {strides = array<i32>} : memref<864x128xf32, #tpu.memory_space<vmem>>, vector<72x128xf32>,
    %c704 = arith.constant 704 : index
    %c0_113 = arith.constant 0 : index
    %248 = vector.load %arg1[%c704, %c0_113] : memref<896x128xf32, #tpu.memory_space<vmem>>, vector<160x128xf32>
    %cst_114 = arith.constant dense<0.000000e+00> : vector<72x128xf32>
    %249 = tpu.matmul %0, %248, %cst_114 {dimension_numbers = #tpu.dot_dimension_numbers<[1], [0], [0], [1], [0, 0, 1, 1], [], []>} : vector<72x160xf32>, vector<160x128xf32>, vector<72x128xf32> -> vector<72x128xf32>
    %250 = vector.broadcast %2 : vector<72x1xf32> to vector<72x128xf32>
    %251 = arith.addf %249, %250 : vector<72x128xf32>
    %cst_115 = arith.constant dense<0.000000e+00> : vector<72x128xf32>
    %252 = tpu.matmul %1, %248, %cst_115 {dimension_numbers = #tpu.dot_dimension_numbers<[1], [0], [0], [1], [0, 0, 1, 1], [], []>} : vector<72x160xf32>, vector<160x128xf32>, vector<72x128xf32> -> vector<72x128xf32>
    %253 = vector.broadcast %2 : vector<72x1xf32> to vector<72x128xf32>
    %254 = arith.addf %252, %253 : vector<72x128xf32>
    %255 = arith.maximumf %251, %254 : vector<72x128xf32>
    %cst_116 = arith.constant 0.000000e+00 : f32
    %256 = vector.broadcast %cst_116 : f32 to vector<72x128xf32>
    %257 = arith.maximumf %255, %256 : vector<72x128xf32>
    %c736 = arith.constant 736 : index
    %c0_117 = arith.constant 0 : index
    %258 = vector.load %arg1[%c736, %c0_117] : memref<896x128xf32, #tpu.memory_space<vmem>>, vector<160x128xf32>
    %cst_118 = arith.constant dense<0.000000e+00> : vector<72x128xf32>
    %259 = tpu.matmul %0, %258, %cst_118 {dimension_numbers = #tpu.dot_dimension_numbers<[1], [0], [0], [1], [0, 0, 1, 1], [], []>} : vector<72x160xf32>, vector<160x128xf32>, vector<72x128xf32> -> vector<72x128xf32>
    %260 = vector.broadcast %2 : vector<72x1xf32> to vector<72x128xf32>
    %261 = arith.addf %259, %260 : vector<72x128xf32>
    %cst_119 = arith.constant dense<0.000000e+00> : vector<72x128xf32>
    %262 = tpu.matmul %1, %258, %cst_119 {dimension_numbers = #tpu.dot_dimension_numbers<[1], [0], [0], [1], [0, 0, 1, 1], [], []>} : vector<72x160xf32>, vector<160x128xf32>, vector<72x128xf32> -> vector<72x128xf32>
    %263 = vector.broadcast %2 : vector<72x1xf32> to vector<72x128xf32>
    %264 = arith.addf %262, %263 : vector<72x128xf32>
    %265 = arith.maximumf %261, %264 : vector<72x128xf32>
    %cst_120 = arith.constant 0.000000e+00 : f32
    %266 = vector.broadcast %cst_120 : f32 to vector<72x128xf32>
    %267 = arith.maximumf %265, %266 : vector<72x128xf32>
    %268 = arith.maximumf %257, %267 : vector<72x128xf32>
    %c792 = arith.constant 792 : index
    %c0_121 = arith.constant 0 : index
    %269 = vector.load %arg15[%c792, %c0_121] : memref<864x128xf32, #tpu.memory_space<vmem>>, vector<72x128xf32>
    tpu.vector_store %arg15[%c792, %c0_121], %268 {strides = array<i32>} : memref<864x128xf32, #tpu.memory_space<vmem>>, vector<72x128xf32>,
    %c0_122 = arith.constant 0 : index
    %c0_123 = arith.constant 0 : index
    %270 = vector.load %arg15[%c0_122, %c0_123] : memref<864x128xf32, #tpu.memory_space<vmem>>, vector<360x128xf32>
    %cst_124 = arith.constant dense<0.000000e+00> : vector<64x128xf32>
    %271 = tpu.matmul %3, %270, %cst_124 {dimension_numbers = #tpu.dot_dimension_numbers<[1], [0], [0], [1], [0, 0, 1, 1], [], []>} : vector<64x360xf32>, vector<360x128xf32>, vector<64x128xf32> -> vector<64x128xf32>
    %272 = vector.broadcast %5 : vector<64x1xf32> to vector<64x128xf32>
    %273 = arith.addf %271, %272 : vector<64x128xf32>
    %cst_125 = arith.constant dense<0.000000e+00> : vector<64x128xf32>
    %274 = tpu.matmul %4, %270, %cst_125 {dimension_numbers = #tpu.dot_dimension_numbers<[1], [0], [0], [1], [0, 0, 1, 1], [], []>} : vector<64x360xf32>, vector<360x128xf32>, vector<64x128xf32> -> vector<64x128xf32>
    %275 = vector.broadcast %5 : vector<64x1xf32> to vector<64x128xf32>
    %276 = arith.addf %274, %275 : vector<64x128xf32>
    %277 = arith.maximumf %273, %276 : vector<64x128xf32>
    %cst_126 = arith.constant 0.000000e+00 : f32
    %278 = vector.broadcast %cst_126 : f32 to vector<64x128xf32>
    %279 = arith.maximumf %277, %278 : vector<64x128xf32>
    %c72_127 = arith.constant 72 : index
    %c0_128 = arith.constant 0 : index
    %280 = vector.load %arg15[%c72_127, %c0_128] : memref<864x128xf32, #tpu.memory_space<vmem>>, vector<360x128xf32>
    %cst_129 = arith.constant dense<0.000000e+00> : vector<64x128xf32>
    %281 = tpu.matmul %3, %280, %cst_129 {dimension_numbers = #tpu.dot_dimension_numbers<[1], [0], [0], [1], [0, 0, 1, 1], [], []>} : vector<64x360xf32>, vector<360x128xf32>, vector<64x128xf32> -> vector<64x128xf32>
    %282 = vector.broadcast %5 : vector<64x1xf32> to vector<64x128xf32>
    %283 = arith.addf %281, %282 : vector<64x128xf32>
    %cst_130 = arith.constant dense<0.000000e+00> : vector<64x128xf32>
    %284 = tpu.matmul %4, %280, %cst_130 {dimension_numbers = #tpu.dot_dimension_numbers<[1], [0], [0], [1], [0, 0, 1, 1], [], []>} : vector<64x360xf32>, vector<360x128xf32>, vector<64x128xf32> -> vector<64x128xf32>
    %285 = vector.broadcast %5 : vector<64x1xf32> to vector<64x128xf32>
    %286 = arith.addf %284, %285 : vector<64x128xf32>
    %287 = arith.maximumf %283, %286 : vector<64x128xf32>
    %cst_131 = arith.constant 0.000000e+00 : f32
    %288 = vector.broadcast %cst_131 : f32 to vector<64x128xf32>
    %289 = arith.maximumf %287, %288 : vector<64x128xf32>
    %290 = arith.maximumf %279, %289 : vector<64x128xf32>
    %c0_132 = arith.constant 0 : index
    %c0_133 = arith.constant 0 : index
    %291 = vector.load %arg16[%c0_132, %c0_133] : memref<256x128xf32, #tpu.memory_space<vmem>>, vector<64x128xf32>
    tpu.vector_store %arg16[%c0_132, %c0_133], %290 {strides = array<i32>} : memref<256x128xf32, #tpu.memory_space<vmem>>, vector<64x128xf32>,
    %c144_134 = arith.constant 144 : index
    %c0_135 = arith.constant 0 : index
    %292 = vector.load %arg15[%c144_134, %c0_135] : memref<864x128xf32, #tpu.memory_space<vmem>>, vector<360x128xf32>
    %cst_136 = arith.constant dense<0.000000e+00> : vector<64x128xf32>
    %293 = tpu.matmul %3, %292, %cst_136 {dimension_numbers = #tpu.dot_dimension_numbers<[1], [0], [0], [1], [0, 0, 1, 1], [], []>} : vector<64x360xf32>, vector<360x128xf32>, vector<64x128xf32> -> vector<64x128xf32>
    %294 = vector.broadcast %5 : vector<64x1xf32> to vector<64x128xf32>
    %295 = arith.addf %293, %294 : vector<64x128xf32>
    %cst_137 = arith.constant dense<0.000000e+00> : vector<64x128xf32>
    %296 = tpu.matmul %4, %292, %cst_137 {dimension_numbers = #tpu.dot_dimension_numbers<[1], [0], [0], [1], [0, 0, 1, 1], [], []>} : vector<64x360xf32>, vector<360x128xf32>, vector<64x128xf32> -> vector<64x128xf32>
    %297 = vector.broadcast %5 : vector<64x1xf32> to vector<64x128xf32>
    %298 = arith.addf %296, %297 : vector<64x128xf32>
    %299 = arith.maximumf %295, %298 : vector<64x128xf32>
    %cst_138 = arith.constant 0.000000e+00 : f32
    %300 = vector.broadcast %cst_138 : f32 to vector<64x128xf32>
    %301 = arith.maximumf %299, %300 : vector<64x128xf32>
    %c216_139 = arith.constant 216 : index
    %c0_140 = arith.constant 0 : index
    %302 = vector.load %arg15[%c216_139, %c0_140] : memref<864x128xf32, #tpu.memory_space<vmem>>, vector<360x128xf32>
    %cst_141 = arith.constant dense<0.000000e+00> : vector<64x128xf32>
    %303 = tpu.matmul %3, %302, %cst_141 {dimension_numbers = #tpu.dot_dimension_numbers<[1], [0], [0], [1], [0, 0, 1, 1], [], []>} : vector<64x360xf32>, vector<360x128xf32>, vector<64x128xf32> -> vector<64x128xf32>
    %304 = vector.broadcast %5 : vector<64x1xf32> to vector<64x128xf32>
    %305 = arith.addf %303, %304 : vector<64x128xf32>
    %cst_142 = arith.constant dense<0.000000e+00> : vector<64x128xf32>
    %306 = tpu.matmul %4, %302, %cst_142 {dimension_numbers = #tpu.dot_dimension_numbers<[1], [0], [0], [1], [0, 0, 1, 1], [], []>} : vector<64x360xf32>, vector<360x128xf32>, vector<64x128xf32> -> vector<64x128xf32>
    %307 = vector.broadcast %5 : vector<64x1xf32> to vector<64x128xf32>
    %308 = arith.addf %306, %307 : vector<64x128xf32>
    %309 = arith.maximumf %305, %308 : vector<64x128xf32>
    %cst_143 = arith.constant 0.000000e+00 : f32
    %310 = vector.broadcast %cst_143 : f32 to vector<64x128xf32>
    %311 = arith.maximumf %309, %310 : vector<64x128xf32>
    %312 = arith.maximumf %301, %311 : vector<64x128xf32>
    %c64_144 = arith.constant 64 : index
    %c0_145 = arith.constant 0 : index
    %313 = vector.load %arg16[%c64_144, %c0_145] : memref<256x128xf32, #tpu.memory_space<vmem>>, vector<64x128xf32>
    tpu.vector_store %arg16[%c64_144, %c0_145], %312 {strides = array<i32>} : memref<256x128xf32, #tpu.memory_space<vmem>>, vector<64x128xf32>,
    %c288_146 = arith.constant 288 : index
    %c0_147 = arith.constant 0 : index
    %314 = vector.load %arg15[%c288_146, %c0_147] : memref<864x128xf32, #tpu.memory_space<vmem>>, vector<360x128xf32>
    %cst_148 = arith.constant dense<0.000000e+00> : vector<64x128xf32>
    %315 = tpu.matmul %3, %314, %cst_148 {dimension_numbers = #tpu.dot_dimension_numbers<[1], [0], [0], [1], [0, 0, 1, 1], [], []>} : vector<64x360xf32>, vector<360x128xf32>, vector<64x128xf32> -> vector<64x128xf32>
    %316 = vector.broadcast %5 : vector<64x1xf32> to vector<64x128xf32>
    %317 = arith.addf %315, %316 : vector<64x128xf32>
    %cst_149 = arith.constant dense<0.000000e+00> : vector<64x128xf32>
    %318 = tpu.matmul %4, %314, %cst_149 {dimension_numbers = #tpu.dot_dimension_numbers<[1], [0], [0], [1], [0, 0, 1, 1], [], []>} : vector<64x360xf32>, vector<360x128xf32>, vector<64x128xf32> -> vector<64x128xf32>
    %319 = vector.broadcast %5 : vector<64x1xf32> to vector<64x128xf32>
    %320 = arith.addf %318, %319 : vector<64x128xf32>
    %321 = arith.maximumf %317, %320 : vector<64x128xf32>
    %cst_150 = arith.constant 0.000000e+00 : f32
    %322 = vector.broadcast %cst_150 : f32 to vector<64x128xf32>
    %323 = arith.maximumf %321, %322 : vector<64x128xf32>
    %c360_151 = arith.constant 360 : index
    %c0_152 = arith.constant 0 : index
    %324 = vector.load %arg15[%c360_151, %c0_152] : memref<864x128xf32, #tpu.memory_space<vmem>>, vector<360x128xf32>
    %cst_153 = arith.constant dense<0.000000e+00> : vector<64x128xf32>
    %325 = tpu.matmul %3, %324, %cst_153 {dimension_numbers = #tpu.dot_dimension_numbers<[1], [0], [0], [1], [0, 0, 1, 1], [], []>} : vector<64x360xf32>, vector<360x128xf32>, vector<64x128xf32> -> vector<64x128xf32>
    %326 = vector.broadcast %5 : vector<64x1xf32> to vector<64x128xf32>
    %327 = arith.addf %325, %326 : vector<64x128xf32>
    %cst_154 = arith.constant dense<0.000000e+00> : vector<64x128xf32>
    %328 = tpu.matmul %4, %324, %cst_154 {dimension_numbers = #tpu.dot_dimension_numbers<[1], [0], [0], [1], [0, 0, 1, 1], [], []>} : vector<64x360xf32>, vector<360x128xf32>, vector<64x128xf32> -> vector<64x128xf32>
    %329 = vector.broadcast %5 : vector<64x1xf32> to vector<64x128xf32>
    %330 = arith.addf %328, %329 : vector<64x128xf32>
    %331 = arith.maximumf %327, %330 : vector<64x128xf32>
    %cst_155 = arith.constant 0.000000e+00 : f32
    %332 = vector.broadcast %cst_155 : f32 to vector<64x128xf32>
    %333 = arith.maximumf %331, %332 : vector<64x128xf32>
    %334 = arith.maximumf %323, %333 : vector<64x128xf32>
    %c128_156 = arith.constant 128 : index
    %c0_157 = arith.constant 0 : index
    %335 = vector.load %arg16[%c128_156, %c0_157] : memref<256x128xf32, #tpu.memory_space<vmem>>, vector<64x128xf32>
    tpu.vector_store %arg16[%c128_156, %c0_157], %334 {strides = array<i32>} : memref<256x128xf32, #tpu.memory_space<vmem>>, vector<64x128xf32>,
    %c432_158 = arith.constant 432 : index
    %c0_159 = arith.constant 0 : index
    %336 = vector.load %arg15[%c432_158, %c0_159] : memref<864x128xf32, #tpu.memory_space<vmem>>, vector<360x128xf32>
    %cst_160 = arith.constant dense<0.000000e+00> : vector<64x128xf32>
    %337 = tpu.matmul %3, %336, %cst_160 {dimension_numbers = #tpu.dot_dimension_numbers<[1], [0], [0], [1], [0, 0, 1, 1], [], []>} : vector<64x360xf32>, vector<360x128xf32>, vector<64x128xf32> -> vector<64x128xf32>
    %338 = vector.broadcast %5 : vector<64x1xf32> to vector<64x128xf32>
    %339 = arith.addf %337, %338 : vector<64x128xf32>
    %cst_161 = arith.constant dense<0.000000e+00> : vector<64x128xf32>
    %340 = tpu.matmul %4, %336, %cst_161 {dimension_numbers = #tpu.dot_dimension_numbers<[1], [0], [0], [1], [0, 0, 1, 1], [], []>} : vector<64x360xf32>, vector<360x128xf32>, vector<64x128xf32> -> vector<64x128xf32>
    %341 = vector.broadcast %5 : vector<64x1xf32> to vector<64x128xf32>
    %342 = arith.addf %340, %341 : vector<64x128xf32>
    %343 = arith.maximumf %339, %342 : vector<64x128xf32>
    %cst_162 = arith.constant 0.000000e+00 : f32
    %344 = vector.broadcast %cst_162 : f32 to vector<64x128xf32>
    %345 = arith.maximumf %343, %344 : vector<64x128xf32>
    %c504_163 = arith.constant 504 : index
    %c0_164 = arith.constant 0 : index
    %346 = vector.load %arg15[%c504_163, %c0_164] : memref<864x128xf32, #tpu.memory_space<vmem>>, vector<360x128xf32>
    %cst_165 = arith.constant dense<0.000000e+00> : vector<64x128xf32>
    %347 = tpu.matmul %3, %346, %cst_165 {dimension_numbers = #tpu.dot_dimension_numbers<[1], [0], [0], [1], [0, 0, 1, 1], [], []>} : vector<64x360xf32>, vector<360x128xf32>, vector<64x128xf32> -> vector<64x128xf32>
    %348 = vector.broadcast %5 : vector<64x1xf32> to vector<64x128xf32>
    %349 = arith.addf %347, %348 : vector<64x128xf32>
    %cst_166 = arith.constant dense<0.000000e+00> : vector<64x128xf32>
    %350 = tpu.matmul %4, %346, %cst_166 {dimension_numbers = #tpu.dot_dimension_numbers<[1], [0], [0], [1], [0, 0, 1, 1], [], []>} : vector<64x360xf32>, vector<360x128xf32>, vector<64x128xf32> -> vector<64x128xf32>
    %351 = vector.broadcast %5 : vector<64x1xf32> to vector<64x128xf32>
    %352 = arith.addf %350, %351 : vector<64x128xf32>
    %353 = arith.maximumf %349, %352 : vector<64x128xf32>
    %cst_167 = arith.constant 0.000000e+00 : f32
    %354 = vector.broadcast %cst_167 : f32 to vector<64x128xf32>
    %355 = arith.maximumf %353, %354 : vector<64x128xf32>
    %356 = arith.maximumf %345, %355 : vector<64x128xf32>
    %c192_168 = arith.constant 192 : index
    %c0_169 = arith.constant 0 : index
    %357 = vector.load %arg16[%c192_168, %c0_169] : memref<256x128xf32, #tpu.memory_space<vmem>>, vector<64x128xf32>
    tpu.vector_store %arg16[%c192_168, %c0_169], %356 {strides = array<i32>} : memref<256x128xf32, #tpu.memory_space<vmem>>, vector<64x128xf32>,
    %c0_170 = arith.constant 0 : index
    %c0_171 = arith.constant 0 : index
    %358 = vector.load %arg16[%c0_170, %c0_171] : memref<256x128xf32, #tpu.memory_space<vmem>>, vector<256x128xf32>
    %c0_172 = arith.constant 0 : index
    %c0_173 = arith.constant 0 : index
    %359 = vector.load %arg8[%c0_172, %c0_173] : memref<128x256xf32, #tpu.memory_space<vmem>>, vector<128x256xf32>
    %cst_174 = arith.constant dense<0.000000e+00> : vector<128x128xf32>
    %360 = tpu.matmul %359, %358, %cst_174 {dimension_numbers = #tpu.dot_dimension_numbers<[1], [0], [0], [1], [0, 0, 1, 1], [], []>} : vector<128x256xf32>, vector<256x128xf32>, vector<128x128xf32> -> vector<128x128xf32>
    %c0_175 = arith.constant 0 : index
    %c0_176 = arith.constant 0 : index
    %361 = vector.load %arg9[%c0_175, %c0_176] : memref<128x1xf32, #tpu.memory_space<vmem>>, vector<128x1xf32>
    %362 = vector.broadcast %361 : vector<128x1xf32> to vector<128x128xf32>
    %363 = arith.addf %360, %362 : vector<128x128xf32>
    %cst_177 = arith.constant 0.000000e+00 : f32
    %364 = vector.broadcast %cst_177 : f32 to vector<128x128xf32>
    %365 = arith.maximumf %363, %364 : vector<128x128xf32>
    %c0_178 = arith.constant 0 : index
    %c0_179 = arith.constant 0 : index
    %366 = vector.load %arg10[%c0_178, %c0_179] : memref<128x128xf32, #tpu.memory_space<vmem>>, vector<128x128xf32>
    %cst_180 = arith.constant dense<0.000000e+00> : vector<128x128xf32>
    %367 = tpu.matmul %366, %365, %cst_180 {dimension_numbers = #tpu.dot_dimension_numbers<[1], [0], [0], [1], [0, 0, 1, 1], [], []>} : vector<128x128xf32>, vector<128x128xf32>, vector<128x128xf32> -> vector<128x128xf32>
    %c0_181 = arith.constant 0 : index
    %c0_182 = arith.constant 0 : index
    %368 = vector.load %arg11[%c0_181, %c0_182] : memref<128x1xf32, #tpu.memory_space<vmem>>, vector<128x1xf32>
    %369 = vector.broadcast %368 : vector<128x1xf32> to vector<128x128xf32>
    %370 = arith.addf %367, %369 : vector<128x128xf32>
    %cst_183 = arith.constant 0.000000e+00 : f32
    %371 = vector.broadcast %cst_183 : f32 to vector<128x128xf32>
    %372 = arith.maximumf %370, %371 : vector<128x128xf32>
    %c0_184 = arith.constant 0 : index
    %c0_185 = arith.constant 0 : index
    %373 = vector.load %arg12[%c0_184, %c0_185] : memref<16x128xf32, #tpu.memory_space<vmem>>, vector<16x128xf32>
    %cst_186 = arith.constant dense<0.000000e+00> : vector<16x128xf32>
    %374 = tpu.matmul %373, %372, %cst_186 {dimension_numbers = #tpu.dot_dimension_numbers<[1], [0], [0], [1], [0, 0, 1, 1], [], []>} : vector<16x128xf32>, vector<128x128xf32>, vector<16x128xf32> -> vector<16x128xf32>
    %c0_187 = arith.constant 0 : index
    %c0_188 = arith.constant 0 : index
    %375 = vector.load %arg13[%c0_187, %c0_188] : memref<16x1xf32, #tpu.memory_space<vmem>>, vector<16x1xf32>
    %376 = vector.broadcast %375 : vector<16x1xf32> to vector<16x128xf32>
    %377 = arith.addf %374, %376 : vector<16x128xf32>
    %c0_189 = arith.constant 0 : index
    %c0_190 = arith.constant 0 : index
    %378 = vector.load %arg14[%c0_189, %c0_190] : memref<16x128xf32, #tpu.memory_space<vmem>>, vector<16x128xf32>
    tpu.vector_store %arg14[%c0_189, %c0_190], %377 {strides = array<i32>} : memref<16x128xf32, #tpu.memory_space<vmem>>, vector<16x128xf32>,
    return
  }
  func.func @transform_0(%arg0: i32) -> (i32, i32) {
    %c0_i32 = arith.constant 0 : i32
    %c0_i32_0 = arith.constant 0 : i32
    return %c0_i32, %arg0 : i32, i32
  }
  func.func @transform_1(%arg0: i32) -> (i32, i32) {
    %c0_i32 = arith.constant 0 : i32
    %c0_i32_0 = arith.constant 0 : i32
    %c0_i32_1 = arith.constant 0 : i32
    return %c0_i32, %c0_i32_0 : i32, i32
  }
  func.func @transform_2(%arg0: i32) -> (i32, i32) {
    %c0_i32 = arith.constant 0 : i32
    %c0_i32_0 = arith.constant 0 : i32
    %c0_i32_1 = arith.constant 0 : i32
    return %c0_i32, %c0_i32_0 : i32, i32
  }
  func.func @transform_3(%arg0: i32) -> (i32, i32) {
    %c0_i32 = arith.constant 0 : i32
    %c0_i32_0 = arith.constant 0 : i32
    %c0_i32_1 = arith.constant 0 : i32
    return %c0_i32, %c0_i32_0 : i32, i32
  }
  func.func @transform_4(%arg0: i32) -> (i32, i32) {
    %c0_i32 = arith.constant 0 : i32
    %c0_i32_0 = arith.constant 0 : i32
    %c0_i32_1 = arith.constant 0 : i32
    return %c0_i32, %c0_i32_0 : i32, i32
  }
  func.func @transform_5(%arg0: i32) -> (i32, i32) {
    %c0_i32 = arith.constant 0 : i32
    %c0_i32_0 = arith.constant 0 : i32
    %c0_i32_1 = arith.constant 0 : i32
    return %c0_i32, %c0_i32_0 : i32, i32
  }
  func.func @transform_6(%arg0: i32) -> (i32, i32) {
    %c0_i32 = arith.constant 0 : i32
    %c0_i32_0 = arith.constant 0 : i32
    %c0_i32_1 = arith.constant 0 : i32
    return %c0_i32, %c0_i32_0 : i32, i32
  }
  func.func @transform_7(%arg0: i32) -> (i32, i32) {
    %c0_i32 = arith.constant 0 : i32
    %c0_i32_0 = arith.constant 0 : i32
    %c0_i32_1 = arith.constant 0 : i32
    return %c0_i32, %c0_i32_0 : i32, i32
  }
  func.func @transform_8(%arg0: i32) -> (i32, i32) {
    %c0_i32 = arith.constant 0 : i32
    %c0_i32_0 = arith.constant 0 : i32
    %c0_i32_1 = arith.constant 0 : i32
    return %c0_i32, %c0_i32_0 : i32, i32
  }
  func.func @transform_9(%arg0: i32) -> (i32, i32) {
    %c0_i32 = arith.constant 0 : i32
    %c0_i32_0 = arith.constant 0 : i32
    %c0_i32_1 = arith.constant 0 : i32
    return %c0_i32, %c0_i32_0 : i32, i32
  }
  func.func @transform_10(%arg0: i32) -> (i32, i32) {
    %c0_i32 = arith.constant 0 : i32
    %c0_i32_0 = arith.constant 0 : i32
    %c0_i32_1 = arith.constant 0 : i32
    return %c0_i32, %c0_i32_0 : i32, i32
  }
  func.func @transform_11(%arg0: i32) -> (i32, i32) {
    %c0_i32 = arith.constant 0 : i32
    %c0_i32_0 = arith.constant 0 : i32
    %c0_i32_1 = arith.constant 0 : i32
    return %c0_i32, %c0_i32_0 : i32, i32
  }
  func.func @transform_12(%arg0: i32) -> (i32, i32) {
    %c0_i32 = arith.constant 0 : i32
    %c0_i32_0 = arith.constant 0 : i32
    %c0_i32_1 = arith.constant 0 : i32
    return %c0_i32, %c0_i32_0 : i32, i32
  }
  func.func @transform_13(%arg0: i32) -> (i32, i32) {
    %c0_i32 = arith.constant 0 : i32
    %c0_i32_0 = arith.constant 0 : i32
    return %c0_i32, %arg0 : i32, i32
  }
}

</mosaic_0001>

<llo_original>
// kernel: lenet5_forward.1
$region0: #{lenet5_forward.1}
  #allocation0 [shape = 'u32[]', space=smem, size = 0x4, offset = 0x4, fixed_abs, tag = 'smem constant byte address 0x4 - core index']
  #allocation1 [shape = 'u32[72,128]{1,0:T(1,128)}', space=vmem, size = 0x9000, scoped, tag = 'internal scratch']
  #allocation2 [shape = 'f32[864,128]{1,0:T(8,128)}', space=vmem, size = 0x6c000, scoped, tag = 'scratch operand']
  #allocation3 [shape = 'f32[256,128]{1,0:T(8,128)}', space=vmem, size = 0x20000, scoped, tag = 'scratch operand']
  %s0 = inlined_call_operand.vmem [shape: f32[896,128], index: 0, kind: input, shape index: {}]
  %s1 = inlined_call_operand.vmem [shape: f32[72,160], index: 1, kind: input, shape index: {}]
  %s2 = inlined_call_operand.vmem [shape: f32[72,160], index: 2, kind: input, shape index: {}]
  %s3 = inlined_call_operand.vmem [shape: f32[72,1], index: 3, kind: input, shape index: {}]
  %s4 = inlined_call_operand.vmem [shape: f32[64,360], index: 4, kind: input, shape index: {}]
  %s5 = inlined_call_operand.vmem [shape: f32[64,360], index: 5, kind: input, shape index: {}]
  %s6 = inlined_call_operand.vmem [shape: f32[64,1], index: 6, kind: input, shape index: {}]
  %s7 = inlined_call_operand.vmem [shape: f32[128,256], index: 7, kind: input, shape index: {}]
  %s8 = inlined_call_operand.vmem [shape: f32[128,1], index: 8, kind: input, shape index: {}]
  %s9 = inlined_call_operand.vmem [shape: f32[128,128], index: 9, kind: input, shape index: {}]
  %s10 = inlined_call_operand.vmem [shape: f32[128,1], index: 10, kind: input, shape index: {}]
  %s11 = inlined_call_operand.vmem [shape: f32[16,128], index: 11, kind: input, shape index: {}]
  %s12 = inlined_call_operand.vmem [shape: f32[16,1], index: 12, kind: input, shape index: {}]
  %s13 = inlined_call_operand.vmem [shape: f32[16,128], index: 13, kind: output, shape index: {}]
  %s14 = sld [smem:[#allocation0]]
  $region62: #{lenet5_forward.1} parent=0
    _
  %s16 = ssub.s32 1, %s14
  %s17 = scalar_select 0, %s16, %s14
  // Predicated region
  $region2: #{lenet5_forward.1} parent=0 // pred_check
    _
  $region3: #{lenet5_forward.1} parent=0 // pred_check_branch
    %19 = sbr.rel (0) target = $region5
  $region4: #{lenet5_forward.1} parent=0 // pred_region
    _
  $region5: #{lenet5_forward.1} parent=0 // pred_fallthru
    _
  // Predicated region
  $region6: #{lenet5_forward.1} parent=0 // pred_check
    _
  $region7: #{lenet5_forward.1} parent=0 // pred_check_branch
    %21 = sbr.rel (0) target = $region9
  $region8: #{lenet5_forward.1} parent=0 // pred_region
    _
  $region9: #{lenet5_forward.1} parent=0 // pred_fallthru
    _
  // Predicated region
  $region10: #{lenet5_forward.1} parent=0 // pred_check
    _
  $region11: #{lenet5_forward.1} parent=0 // pred_check_branch
    %23 = sbr.rel (0) target = $region13
  $region12: #{lenet5_forward.1} parent=0 // pred_region
    _
  $region13: #{lenet5_forward.1} parent=0 // pred_fallthru
    _
  // Predicated region
  $region14: #{lenet5_forward.1} parent=0 // pred_check
    _
  $region15: #{lenet5_forward.1} parent=0 // pred_check_branch
    %25 = sbr.rel (0) target = $region17
  $region16: #{lenet5_forward.1} parent=0 // pred_region
    _
  $region17: #{lenet5_forward.1} parent=0 // pred_fallthru
    _
  // Predicated region
  $region18: #{lenet5_forward.1} parent=0 // pred_check
    _
  $region19: #{lenet5_forward.1} parent=0 // pred_check_branch
    %27 = sbr.rel (0) target = $region21
  $region20: #{lenet5_forward.1} parent=0 // pred_region
    _
  $region21: #{lenet5_forward.1} parent=0 // pred_fallthru
    _
  // Predicated region
  $region22: #{lenet5_forward.1} parent=0 // pred_check
    _
  $region23: #{lenet5_forward.1} parent=0 // pred_check_branch
    %29 = sbr.rel (0) target = $region25
  $region24: #{lenet5_forward.1} parent=0 // pred_region
    _
  $region25: #{lenet5_forward.1} parent=0 // pred_fallthru
    _
  // Predicated region
  $region26: #{lenet5_forward.1} parent=0 // pred_check
    _
  $region27: #{lenet5_forward.1} parent=0 // pred_check_branch
    %31 = sbr.rel (0) target = $region29
  $region28: #{lenet5_forward.1} parent=0 // pred_region
    _
  $region29: #{lenet5_forward.1} parent=0 // pred_fallthru
    _
  // Predicated region
  $region30: #{lenet5_forward.1} parent=0 // pred_check
    _
  $region31: #{lenet5_forward.1} parent=0 // pred_check_branch
    %33 = sbr.rel (0) target = $region33
  $region32: #{lenet5_forward.1} parent=0 // pred_region
    _
  $region33: #{lenet5_forward.1} parent=0 // pred_fallthru
    _
  // Predicated region
  $region34: #{lenet5_forward.1} parent=0 // pred_check
    _
  $region35: #{lenet5_forward.1} parent=0 // pred_check_branch
    %35 = sbr.rel (0) target = $region37
  $region36: #{lenet5_forward.1} parent=0 // pred_region
    _
  $region37: #{lenet5_forward.1} parent=0 // pred_fallthru
    _
  // Predicated region
  $region38: #{lenet5_forward.1} parent=0 // pred_check
    _
  $region39: #{lenet5_forward.1} parent=0 // pred_check_branch
    %37 = sbr.rel (0) target = $region41
  $region40: #{lenet5_forward.1} parent=0 // pred_region
    _
  $region41: #{lenet5_forward.1} parent=0 // pred_fallthru
    _
  // Predicated region
  $region42: #{lenet5_forward.1} parent=0 // pred_check
    _
  $region43: #{lenet5_forward.1} parent=0 // pred_check_branch
    %39 = sbr.rel (0) target = $region45
  $region44: #{lenet5_forward.1} parent=0 // pred_region
    _
  $region45: #{lenet5_forward.1} parent=0 // pred_fallthru
    _
  // Predicated region
  $region46: #{lenet5_forward.1} parent=0 // pred_check
    _
  $region47: #{lenet5_forward.1} parent=0 // pred_check_branch
    %41 = sbr.rel (0) target = $region49
  $region48: #{lenet5_forward.1} parent=0 // pred_region
    _
  $region49: #{lenet5_forward.1} parent=0 // pred_fallthru
    _
  // Predicated region
  $region50: #{lenet5_forward.1} parent=0 // pred_check
    _
  $region51: #{lenet5_forward.1} parent=0 // pred_check_branch
    %43 = sbr.rel (0) target = $region53
  $region52: #{lenet5_forward.1} parent=0 // pred_region
    _
  $region53: #{lenet5_forward.1} parent=0 // pred_fallthru
    _
  %v44 = vld [vmem:[%s1] sm:$0xff]
  %v45 = vld [vmem:[%s1 + $0x8] sm:$0xff]
  %v46 = vld [vmem:[%s1 + $0x10] sm:$0xff]
  %v47 = vld [vmem:[%s1 + $0x18] sm:$0xff]
  %v48 = vld [vmem:[%s1 + $0x20] sm:$0xff]
  %v49 = vld [vmem:[%s1 + $0x28] sm:$0xff]
  %v50 = vld [vmem:[%s1 + $0x30] sm:$0xff]
  %v51 = vld [vmem:[%s1 + $0x38] sm:$0xff]
  %v52 = vld [vmem:[%s1 + $0x40] sm:$0xff]
  %v53 = vld [vmem:[%s1 + $0x48] sm:$0xff]
  %v54 = vld [vmem:[%s1 + $0x50] sm:$0xff]
  %v55 = vld [vmem:[%s1 + $0x58] sm:$0xff]
  %v56 = vld [vmem:[%s1 + $0x60] sm:$0xff]
  %v57 = vld [vmem:[%s1 + $0x68] sm:$0xff]
  %v58 = vld [vmem:[%s1 + $0x70] sm:$0xff]
  %v59 = vld [vmem:[%s1 + $0x78] sm:$0xff]
  %v60 = vld [vmem:[%s1 + $0x80] sm:$0xff]
  %v61 = vld [vmem:[%s1 + $0x88] sm:$0xff]
  %v62 = vld [vmem:[%s2] sm:$0xff]
  %v63 = vld [vmem:[%s2 + $0x8] sm:$0xff]
  %v64 = vld [vmem:[%s2 + $0x10] sm:$0xff]
  %v65 = vld [vmem:[%s2 + $0x18] sm:$0xff]
  %v66 = vld [vmem:[%s2 + $0x20] sm:$0xff]
  %v67 = vld [vmem:[%s2 + $0x28] sm:$0xff]
  %v68 = vld [vmem:[%s2 + $0x30] sm:$0xff]
  %v69 = vld [vmem:[%s2 + $0x38] sm:$0xff]
  %v70 = vld [vmem:[%s2 + $0x40] sm:$0xff]
  %v71 = vld [vmem:[%s2 + $0x48] sm:$0xff]
  %v72 = vld [vmem:[%s2 + $0x50] sm:$0xff]
  %v73 = vld [vmem:[%s2 + $0x58] sm:$0xff]
  %v74 = vld [vmem:[%s2 + $0x60] sm:$0xff]
  %v75 = vld [vmem:[%s2 + $0x68] sm:$0xff]
  %v76 = vld [vmem:[%s2 + $0x70] sm:$0xff]
  %v77 = vld [vmem:[%s2 + $0x78] sm:$0xff]
  %v78 = vld [vmem:[%s2 + $0x80] sm:$0xff]
  %v79 = vld [vmem:[%s2 + $0x88] sm:$0xff]
  %v80 = vld [vmem:[%s3] sm:$0xff]
  %v81 = vld [vmem:[%s3 + $0x8] sm:$0xff]
  %v82 = vld [vmem:[%s3 + $0x10] sm:$0xff]
  %v83 = vld [vmem:[%s3 + $0x18] sm:$0xff]
  %v84 = vld [vmem:[%s3 + $0x20] sm:$0xff]
  %v85 = vld [vmem:[%s3 + $0x28] sm:$0xff]
  %v86 = vld [vmem:[%s3 + $0x30] sm:$0xff]
  %v87 = vld [vmem:[%s3 + $0x38] sm:$0xff]
  %v88 = vld [vmem:[%s3 + $0x40] sm:$0xff]
  %v89 = vld [vmem:[%s4] sm:$0xff]
  %v90 = vld [vmem:[%s4 + $0x8] sm:$0xff]
  %v91 = vld [vmem:[%s4 + $0x10] sm:$0xff]
  %v92 = vld [vmem:[%s4 + $0x18] sm:$0xff]
  %v93 = vld [vmem:[%s4 + $0x20] sm:$0xff]
  %v94 = vld [vmem:[%s4 + $0x28] sm:$0xff]
  %v95 = vld [vmem:[%s4 + $0x30] sm:$0xff]
  %v96 = vld [vmem:[%s4 + $0x38] sm:$0xff]
  %v97 = vld [vmem:[%s4 + $0x40] sm:$0xff]
  %v98 = vld [vmem:[%s4 + $0x48] sm:$0xff]
  %v99 = vld [vmem:[%s4 + $0x50] sm:$0xff]
  %v100 = vld [vmem:[%s4 + $0x58] sm:$0xff]
  %v101 = vld [vmem:[%s4 + $0x60] sm:$0xff]
  %v102 = vld [vmem:[%s4 + $0x68] sm:$0xff]
  %v103 = vld [vmem:[%s4 + $0x70] sm:$0xff]
  %v104 = vld [vmem:[%s4 + $0x78] sm:$0xff]
  %v105 = vld [vmem:[%s4 + $0x80] sm:$0xff]
  %v106 = vld [vmem:[%s4 + $0x88] sm:$0xff]
  %v107 = vld [vmem:[%s4 + $0x90] sm:$0xff]
  %v108 = vld [vmem:[%s4 + $0x98] sm:$0xff]
  %v109 = vld [vmem:[%s4 + $0xa0] sm:$0xff]
  %v110 = vld [vmem:[%s4 + $0xa8] sm:$0xff]
  %v111 = vld [vmem:[%s4 + $0xb0] sm:$0xff]
  %v112 = vld [vmem:[%s4 + $0xb8] sm:$0xff]
  %v113 = vld [vmem:[%s5] sm:$0xff]
  %v114 = vld [vmem:[%s5 + $0x8] sm:$0xff]
  %v115 = vld [vmem:[%s5 + $0x10] sm:$0xff]
  %v116 = vld [vmem:[%s5 + $0x18] sm:$0xff]
  %v117 = vld [vmem:[%s5 + $0x20] sm:$0xff]
  %v118 = vld [vmem:[%s5 + $0x28] sm:$0xff]
  %v119 = vld [vmem:[%s5 + $0x30] sm:$0xff]
  %v120 = vld [vmem:[%s5 + $0x38] sm:$0xff]
  %v121 = vld [vmem:[%s5 + $0x40] sm:$0xff]
  %v122 = vld [vmem:[%s5 + $0x48] sm:$0xff]
  %v123 = vld [vmem:[%s5 + $0x50] sm:$0xff]
  %v124 = vld [vmem:[%s5 + $0x58] sm:$0xff]
  %v125 = vld [vmem:[%s5 + $0x60] sm:$0xff]
  %v126 = vld [vmem:[%s5 + $0x68] sm:$0xff]
  %v127 = vld [vmem:[%s5 + $0x70] sm:$0xff]
  %v128 = vld [vmem:[%s5 + $0x78] sm:$0xff]
  %v129 = vld [vmem:[%s5 + $0x80] sm:$0xff]
  %v130 = vld [vmem:[%s5 + $0x88] sm:$0xff]
  %v131 = vld [vmem:[%s5 + $0x90] sm:$0xff]
  %v132 = vld [vmem:[%s5 + $0x98] sm:$0xff]
  %v133 = vld [vmem:[%s5 + $0xa0] sm:$0xff]
  %v134 = vld [vmem:[%s5 + $0xa8] sm:$0xff]
  %v135 = vld [vmem:[%s5 + $0xb0] sm:$0xff]
  %v136 = vld [vmem:[%s5 + $0xb8] sm:$0xff]
  %v137 = vld [vmem:[%s6] sm:$0xff]
  %v138 = vld [vmem:[%s6 + $0x8] sm:$0xff]
  %v139 = vld [vmem:[%s6 + $0x10] sm:$0xff]
  %v140 = vld [vmem:[%s6 + $0x18] sm:$0xff]
  %v141 = vld [vmem:[%s6 + $0x20] sm:$0xff]
  %v142 = vld [vmem:[%s6 + $0x28] sm:$0xff]
  %v143 = vld [vmem:[%s6 + $0x30] sm:$0xff]
  %v144 = vld [vmem:[%s6 + $0x38] sm:$0xff]
  %v145 = vld [vmem:[%s0] sm:$0xff]
  %v146 = vld [vmem:[%s0 + $0x8] sm:$0xff]
  %v147 = vld [vmem:[%s0 + $0x10] sm:$0xff]
  %v148 = vld [vmem:[%s0 + $0x18] sm:$0xff]
  %v149 = vld [vmem:[%s0 + $0x20] sm:$0xff]
  %v150 = vld [vmem:[%s0 + $0x28] sm:$0xff]
  %v151 = vld [vmem:[%s0 + $0x30] sm:$0xff]
  %v152 = vld [vmem:[%s0 + $0x38] sm:$0xff]
  %v153 = vld [vmem:[%s0 + $0x40] sm:$0xff]
  %v154 = vld [vmem:[%s0 + $0x48] sm:$0xff]
  %v155 = vld [vmem:[%s0 + $0x50] sm:$0xff]
  %v156 = vld [vmem:[%s0 + $0x58] sm:$0xff]
  %v157 = vld [vmem:[%s0 + $0x60] sm:$0xff]
  %v158 = vld [vmem:[%s0 + $0x68] sm:$0xff]
  %v159 = vld [vmem:[%s0 + $0x70] sm:$0xff]
  %v160 = vld [vmem:[%s0 + $0x78] sm:$0xff]
  %v161 = vld [vmem:[%s0 + $0x80] sm:$0xff]
  %v162 = vld [vmem:[%s0 + $0x88] sm:$0xff]
  %v163 = vld [vmem:[%s0 + $0x90] sm:$0xff]
  %v164 = vld [vmem:[%s0 + $0x98] sm:$0xff]
  %166 = vset.pattern.permute.xlu0 0
  %167 = vperm.xlu0 %166, %v80
  %v168 = vpop.permute.xlu0 %167
  %171 = vset.pattern.permute.xlu0 0
  %172 = vperm.xlu0 %171, %v81
  %v173 = vpop.permute.xlu0 %172
  %176 = vset.pattern.permute.xlu0 0
  %177 = vperm.xlu0 %176, %v82
  %v178 = vpop.permute.xlu0 %177
  %181 = vset.pattern.permute.xlu0 0
  %182 = vperm.xlu0 %181, %v83
  %v183 = vpop.permute.xlu0 %182
  %186 = vset.pattern.permute.xlu0 0
  %187 = vperm.xlu0 %186, %v84
  %v188 = vpop.permute.xlu0 %187
  %191 = vset.pattern.permute.xlu0 0
  %192 = vperm.xlu0 %191, %v85
  %v193 = vpop.permute.xlu0 %192
  %196 = vset.pattern.permute.xlu0 0
  %197 = vperm.xlu0 %196, %v86
  %v198 = vpop.permute.xlu0 %197
  %201 = vset.pattern.permute.xlu0 0
  %202 = vperm.xlu0 %201, %v87
  %v203 = vpop.permute.xlu0 %202
  %206 = vset.pattern.permute.xlu0 0
  %207 = vperm.xlu0 %206, %v88
  %v208 = vpop.permute.xlu0 %207
  %vm210 = vcmask 261120
  %v212 = vsel %vm210, %v45, 0
  %v215 = vsel %vm210, %v47, 0
  %v218 = vsel %vm210, %v49, 0
  %v221 = vsel %vm210, %v51, 0
  %v224 = vsel %vm210, %v53, 0
  %v227 = vsel %vm210, %v55, 0
  %v230 = vsel %vm210, %v57, 0
  %v233 = vsel %vm210, %v59, 0
  %v236 = vsel %vm210, %v61, 0
  %238 = vmatpush.msra.mxu0 %v160
  %239 = vmatpush.msra.mxu0 %v159
  %240 = vmatpush.msra.mxu0 %v158
  %241 = vmatpush.msra.mxu0 %v157
  %242 = vmatpush.msra.mxu0 %v156
  %243 = vmatpush.msra.mxu0 %v155
  %244 = vmatpush.msra.mxu0 %v154
  %245 = vmatpush.msra.mxu0 %v153
  %246 = vmatpush.msra.mxu0 %v152
  %247 = vmatpush.msra.mxu0 %v151
  %248 = vmatpush.msra.mxu0 %v150
  %249 = vmatpush.msra.mxu0 %v149
  %250 = vmatpush.msra.mxu0 %v148
  %251 = vmatpush.msra.mxu0 %v147
  %252 = vmatpush.msra.mxu0 %v146
  %253 = vmatpush.msra.mxu0 %v145
  %254 = vmatmul.f32.gmra.mxu0 %v44
  %v255 = vpop.f32.mrf.mxu0
  %v256 = vadd.f32 %v168, %v255
  %257 = vmatmul.f32.gmra.mxu0 %v46
  %v258 = vpop.f32.mrf.mxu0
  %v259 = vadd.f32 %v173, %v258
  %260 = vmatmul.f32.gmra.mxu0 %v48
  %v261 = vpop.f32.mrf.mxu0
  %v262 = vadd.f32 %v178, %v261
  %263 = vmatmul.f32.gmra.mxu0 %v50
  %v264 = vpop.f32.mrf.mxu0
  %v265 = vadd.f32 %v183, %v264
  %266 = vmatmul.f32.gmra.mxu0 %v52
  %v267 = vpop.f32.mrf.mxu0
  %v268 = vadd.f32 %v188, %v267
  %269 = vmatmul.f32.gmra.mxu0 %v54
  %v270 = vpop.f32.mrf.mxu0
  %v271 = vadd.f32 %v193, %v270
  %272 = vmatmul.f32.gmra.mxu0 %v56
  %v273 = vpop.f32.mrf.mxu0
  %v274 = vadd.f32 %v198, %v273
  %275 = vmatmul.f32.gmra.mxu0 %v58
  %v276 = vpop.f32.mrf.mxu0
  %v277 = vadd.f32 %v203, %v276
  %278 = vmatmul.f32.gmra.mxu0 %v60
  %v279 = vpop.f32.mrf.mxu0
  %v280 = vadd.f32 %v208, %v279
  %281 = vdwg.mxu0
  %282 = vmatpush.msra.mxu0 0.0
  %283 = vmatpush.msra.mxu0 0.0
  %284 = vmatpush.msra.mxu0 0.0
  %285 = vmatpush.msra.mxu0 0.0
  %286 = vmatpush.msra.mxu0 0.0
  %287 = vmatpush.msra.mxu0 0.0
  %288 = vmatpush.msra.mxu0 0.0
  %289 = vmatpush.msra.mxu0 0.0
  %290 = vmatpush.msra.mxu0 0.0
  %291 = vmatpush.msra.mxu0 0.0
  %292 = vmatpush.msra.mxu0 0.0
  %293 = vmatpush.msra.mxu0 0.0
  %294 = vmatpush.msra.mxu0 %v164
  %295 = vmatpush.msra.mxu0 %v163
  %296 = vmatpush.msra.mxu0 %v162
  %297 = vmatpush.msra.mxu0 %v161
  %298 = vmatmul.f32.gmra.mxu0 %v212
  %v299 = vpop.f32.mrf.mxu0
  %v300 = vadd.f32 %v256, %v299
  %301 = vmatmul.f32.gmra.mxu0 %v215
  %v302 = vpop.f32.mrf.mxu0
  %v303 = vadd.f32 %v259, %v302
  %304 = vmatmul.f32.gmra.mxu0 %v218
  %v305 = vpop.f32.mrf.mxu0
  %v306 = vadd.f32 %v262, %v305
  %307 = vmatmul.f32.gmra.mxu0 %v221
  %v308 = vpop.f32.mrf.mxu0
  %v309 = vadd.f32 %v265, %v308
  %310 = vmatmul.f32.gmra.mxu0 %v224
  %v311 = vpop.f32.mrf.mxu0
  %v312 = vadd.f32 %v268, %v311
  %313 = vmatmul.f32.gmra.mxu0 %v227
  %v314 = vpop.f32.mrf.mxu0
  %v315 = vadd.f32 %v271, %v314
  %316 = vmatmul.f32.gmra.mxu0 %v230
  %v317 = vpop.f32.mrf.mxu0
  %v318 = vadd.f32 %v274, %v317
  %319 = vmatmul.f32.gmra.mxu0 %v233
  %v320 = vpop.f32.mrf.mxu0
  %v321 = vadd.f32 %v277, %v320
  %322 = vmatmul.f32.gmra.mxu0 %v236
  %v323 = vpop.f32.mrf.mxu0
  %v324 = vadd.f32 %v280, %v323
  %325 = vdwg.mxu0
  %v327 = vsel %vm210, %v63, 0
  %v330 = vsel %vm210, %v65, 0
  %v333 = vsel %vm210, %v67, 0
  %v336 = vsel %vm210, %v69, 0
  %v339 = vsel %vm210, %v71, 0
  %v342 = vsel %vm210, %v73, 0
  %v345 = vsel %vm210, %v75, 0
  %v348 = vsel %vm210, %v77, 0
  %v351 = vsel %vm210, %v79, 0
  %353 = vmatpush.msra.mxu0 %v160
  %354 = vmatpush.msra.mxu0 %v159
  %355 = vmatpush.msra.mxu0 %v158
  %356 = vmatpush.msra.mxu0 %v157
  %357 = vmatpush.msra.mxu0 %v156
  %358 = vmatpush.msra.mxu0 %v155
  %359 = vmatpush.msra.mxu0 %v154
  %360 = vmatpush.msra.mxu0 %v153
  %361 = vmatpush.msra.mxu0 %v152
  %362 = vmatpush.msra.mxu0 %v151
  %363 = vmatpush.msra.mxu0 %v150
  %364 = vmatpush.msra.mxu0 %v149
  %365 = vmatpush.msra.mxu0 %v148
  %366 = vmatpush.msra.mxu0 %v147
  %367 = vmatpush.msra.mxu0 %v146
  %368 = vmatpush.msra.mxu0 %v145
  %369 = vmatmul.f32.gmra.mxu0 %v62
  %v370 = vpop.f32.mrf.mxu0
  %v371 = vadd.f32 %v168, %v370
  %372 = vmatmul.f32.gmra.mxu0 %v64
  %v373 = vpop.f32.mrf.mxu0
  %v374 = vadd.f32 %v173, %v373
  %375 = vmatmul.f32.gmra.mxu0 %v66
  %v376 = vpop.f32.mrf.mxu0
  %v377 = vadd.f32 %v178, %v376
  %378 = vmatmul.f32.gmra.mxu0 %v68
  %v379 = vpop.f32.mrf.mxu0
  %v380 = vadd.f32 %v183, %v379
  %381 = vmatmul.f32.gmra.mxu0 %v70
  %v382 = vpop.f32.mrf.mxu0
  %v383 = vadd.f32 %v188, %v382
  %384 = vmatmul.f32.gmra.mxu0 %v72
  %v385 = vpop.f32.mrf.mxu0
  %v386 = vadd.f32 %v193, %v385
  %387 = vmatmul.f32.gmra.mxu0 %v74
  %v388 = vpop.f32.mrf.mxu0
  %v389 = vadd.f32 %v198, %v388
  %390 = vmatmul.f32.gmra.mxu0 %v76
  %v391 = vpop.f32.mrf.mxu0
  %v392 = vadd.f32 %v203, %v391
  %393 = vmatmul.f32.gmra.mxu0 %v78
  %v394 = vpop.f32.mrf.mxu0
  %v395 = vadd.f32 %v208, %v394
  %396 = vdwg.mxu0
  %397 = vmatpush.msra.mxu0 0.0
  %398 = vmatpush.msra.mxu0 0.0
  %399 = vmatpush.msra.mxu0 0.0
  %400 = vmatpush.msra.mxu0 0.0
  %401 = vmatpush.msra.mxu0 0.0
  %402 = vmatpush.msra.mxu0 0.0
  %403 = vmatpush.msra.mxu0 0.0
  %404 = vmatpush.msra.mxu0 0.0
  %405 = vmatpush.msra.mxu0 0.0
  %406 = vmatpush.msra.mxu0 0.0
  %407 = vmatpush.msra.mxu0 0.0
  %408 = vmatpush.msra.mxu0 0.0
  %409 = vmatpush.msra.mxu0 %v164
  %410 = vmatpush.msra.mxu0 %v163
  %411 = vmatpush.msra.mxu0 %v162
  %412 = vmatpush.msra.mxu0 %v161
  %413 = vmatmul.f32.gmra.mxu0 %v327
  %v414 = vpop.f32.mrf.mxu0
  %v415 = vadd.f32 %v371, %v414
  %416 = vmatmul.f32.gmra.mxu0 %v330
  %v417 = vpop.f32.mrf.mxu0
  %v418 = vadd.f32 %v374, %v417
  %419 = vmatmul.f32.gmra.mxu0 %v333
  %v420 = vpop.f32.mrf.mxu0
  %v421 = vadd.f32 %v377, %v420
  %422 = vmatmul.f32.gmra.mxu0 %v336
  %v423 = vpop.f32.mrf.mxu0
  %v424 = vadd.f32 %v380, %v423
  %425 = vmatmul.f32.gmra.mxu0 %v339
  %v426 = vpop.f32.mrf.mxu0
  %v427 = vadd.f32 %v383, %v426
  %428 = vmatmul.f32.gmra.mxu0 %v342
  %v429 = vpop.f32.mrf.mxu0
  %v430 = vadd.f32 %v386, %v429
  %431 = vmatmul.f32.gmra.mxu0 %v345
  %v432 = vpop.f32.mrf.mxu0
  %v433 = vadd.f32 %v389, %v432
  %434 = vmatmul.f32.gmra.mxu0 %v348
  %v435 = vpop.f32.mrf.mxu0
  %v436 = vadd.f32 %v392, %v435
  %437 = vmatmul.f32.gmra.mxu0 %v351
  %v438 = vpop.f32.mrf.mxu0
  %v439 = vadd.f32 %v395, %v438
  %440 = vdwg.mxu0
  %v441 = vmax.f32 %v300, %v415
  %v442 = vmax.f32 %v303, %v418
  %v443 = vmax.f32 %v306, %v421
  %v444 = vmax.f32 %v309, %v424
  %v445 = vmax.f32 %v312, %v427
  %v446 = vmax.f32 %v315, %v430
  %v447 = vmax.f32 %v318, %v433
  %v448 = vmax.f32 %v321, %v436
  %v449 = vmax.f32 %v324, %v439
  %v450 = vmax.f32 %v441, 0.0
  %v451 = vmax.f32 %v442, 0.0
  %v452 = vmax.f32 %v443, 0.0
  %v453 = vmax.f32 %v444, 0.0
  %v454 = vmax.f32 %v445, 0.0
  %v455 = vmax.f32 %v446, 0.0
  %v456 = vmax.f32 %v447, 0.0
  %v457 = vmax.f32 %v448, 0.0
  %v458 = vmax.f32 %v449, 0.0
  %v459 = vld [vmem:[%s0 + $0x20] sm:$0xff]
  %v460 = vld [vmem:[%s0 + $0x28] sm:$0xff]
  %v461 = vld [vmem:[%s0 + $0x30] sm:$0xff]
  %v462 = vld [vmem:[%s0 + $0x38] sm:$0xff]
  %v463 = vld [vmem:[%s0 + $0x40] sm:$0xff]
  %v464 = vld [vmem:[%s0 + $0x48] sm:$0xff]
  %v465 = vld [vmem:[%s0 + $0x50] sm:$0xff]
  %v466 = vld [vmem:[%s0 + $0x58] sm:$0xff]
  %v467 = vld [vmem:[%s0 + $0x60] sm:$0xff]
  %v468 = vld [vmem:[%s0 + $0x68] sm:$0xff]
  %v469 = vld [vmem:[%s0 + $0x70] sm:$0xff]
  %v470 = vld [vmem:[%s0 + $0x78] sm:$0xff]
  %v471 = vld [vmem:[%s0 + $0x80] sm:$0xff]
  %v472 = vld [vmem:[%s0 + $0x88] sm:$0xff]
  %v473 = vld [vmem:[%s0 + $0x90] sm:$0xff]
  %v474 = vld [vmem:[%s0 + $0x98] sm:$0xff]
  %v475 = vld [vmem:[%s0 + $0xa0] sm:$0xff]
  %v476 = vld [vmem:[%s0 + $0xa8] sm:$0xff]
  %v477 = vld [vmem:[%s0 + $0xb0] sm:$0xff]
  %v478 = vld [vmem:[%s0 + $0xb8] sm:$0xff]
  %479 = vmatpush.msra.mxu0 %v474
  %480 = vmatpush.msra.mxu0 %v473
  %481 = vmatpush.msra.mxu0 %v472
  %482 = vmatpush.msra.mxu0 %v471
  %483 = vmatpush.msra.mxu0 %v470
  %484 = vmatpush.msra.mxu0 %v469
  %485 = vmatpush.msra.mxu0 %v468
  %486 = vmatpush.msra.mxu0 %v467
  %487 = vmatpush.msra.mxu0 %v466
  %488 = vmatpush.msra.mxu0 %v465
  %489 = vmatpush.msra.mxu0 %v464
  %490 = vmatpush.msra.mxu0 %v463
  %491 = vmatpush.msra.mxu0 %v462
  %492 = vmatpush.msra.mxu0 %v461
  %493 = vmatpush.msra.mxu0 %v460
  %494 = vmatpush.msra.mxu0 %v459
  %495 = vmatmul.f32.gmra.mxu0 %v44
  %v496 = vpop.f32.mrf.mxu0
  %v497 = vadd.f32 %v168, %v496
  %498 = vmatmul.f32.gmra.mxu0 %v46
  %v499 = vpop.f32.mrf.mxu0
  %v500 = vadd.f32 %v173, %v499
  %501 = vmatmul.f32.gmra.mxu0 %v48
  %v502 = vpop.f32.mrf.mxu0
  %v503 = vadd.f32 %v178, %v502
  %504 = vmatmul.f32.gmra.mxu0 %v50
  %v505 = vpop.f32.mrf.mxu0
  %v506 = vadd.f32 %v183, %v505
  %507 = vmatmul.f32.gmra.mxu0 %v52
  %v508 = vpop.f32.mrf.mxu0
  %v509 = vadd.f32 %v188, %v508
  %510 = vmatmul.f32.gmra.mxu0 %v54
  %v511 = vpop.f32.mrf.mxu0
  %v512 = vadd.f32 %v193, %v511
  %513 = vmatmul.f32.gmra.mxu0 %v56
  %v514 = vpop.f32.mrf.mxu0
  %v515 = vadd.f32 %v198, %v514
  %516 = vmatmul.f32.gmra.mxu0 %v58
  %v517 = vpop.f32.mrf.mxu0
  %v518 = vadd.f32 %v203, %v517
  %519 = vmatmul.f32.gmra.mxu0 %v60
  %v520 = vpop.f32.mrf.mxu0
  %v521 = vadd.f32 %v208, %v520
  %522 = vdwg.mxu0
  %523 = vmatpush.msra.mxu0 0.0
  %524 = vmatpush.msra.mxu0 0.0
  %525 = vmatpush.msra.mxu0 0.0
  %526 = vmatpush.msra.mxu0 0.0
  %527 = vmatpush.msra.mxu0 0.0
  %528 = vmatpush.msra.mxu0 0.0
  %529 = vmatpush.msra.mxu0 0.0
  %530 = vmatpush.msra.mxu0 0.0
  %531 = vmatpush.msra.mxu0 0.0
  %532 = vmatpush.msra.mxu0 0.0
  %533 = vmatpush.msra.mxu0 0.0
  %534 = vmatpush.msra.mxu0 0.0
  %535 = vmatpush.msra.mxu0 %v478
  %536 = vmatpush.msra.mxu0 %v477
  %537 = vmatpush.msra.mxu0 %v476
  %538 = vmatpush.msra.mxu0 %v475
  %539 = vmatmul.f32.gmra.mxu0 %v212
  %v540 = vpop.f32.mrf.mxu0
  %v541 = vadd.f32 %v497, %v540
  %542 = vmatmul.f32.gmra.mxu0 %v215
  %v543 = vpop.f32.mrf.mxu0
  %v544 = vadd.f32 %v500, %v543
  %545 = vmatmul.f32.gmra.mxu0 %v218
  %v546 = vpop.f32.mrf.mxu0
  %v547 = vadd.f32 %v503, %v546
  %548 = vmatmul.f32.gmra.mxu0 %v221
  %v549 = vpop.f32.mrf.mxu0
  %v550 = vadd.f32 %v506, %v549
  %551 = vmatmul.f32.gmra.mxu0 %v224
  %v552 = vpop.f32.mrf.mxu0
  %v553 = vadd.f32 %v509, %v552
  %554 = vmatmul.f32.gmra.mxu0 %v227
  %v555 = vpop.f32.mrf.mxu0
  %v556 = vadd.f32 %v512, %v555
  %557 = vmatmul.f32.gmra.mxu0 %v230
  %v558 = vpop.f32.mrf.mxu0
  %v559 = vadd.f32 %v515, %v558
  %560 = vmatmul.f32.gmra.mxu0 %v233
  %v561 = vpop.f32.mrf.mxu0
  %v562 = vadd.f32 %v518, %v561
  %563 = vmatmul.f32.gmra.mxu0 %v236
  %v564 = vpop.f32.mrf.mxu0
  %v565 = vadd.f32 %v521, %v564
  %566 = vdwg.mxu0
  %567 = vmatpush.msra.mxu0 %v474
  %568 = vmatpush.msra.mxu0 %v473
  %569 = vmatpush.msra.mxu0 %v472
  %570 = vmatpush.msra.mxu0 %v471
  %571 = vmatpush.msra.mxu0 %v470
  %572 = vmatpush.msra.mxu0 %v469
  %573 = vmatpush.msra.mxu0 %v468
  %574 = vmatpush.msra.mxu0 %v467
  %575 = vmatpush.msra.mxu0 %v466
  %576 = vmatpush.msra.mxu0 %v465
  %577 = vmatpush.msra.mxu0 %v464
  %578 = vmatpush.msra.mxu0 %v463
  %579 = vmatpush.msra.mxu0 %v462
  %580 = vmatpush.msra.mxu0 %v461
  %581 = vmatpush.msra.mxu0 %v460
  %582 = vmatpush.msra.mxu0 %v459
  %583 = vmatmul.f32.gmra.mxu0 %v62
  %v584 = vpop.f32.mrf.mxu0
  %v585 = vadd.f32 %v168, %v584
  %586 = vmatmul.f32.gmra.mxu0 %v64
  %v587 = vpop.f32.mrf.mxu0
  %v588 = vadd.f32 %v173, %v587
  %589 = vmatmul.f32.gmra.mxu0 %v66
  %v590 = vpop.f32.mrf.mxu0
  %v591 = vadd.f32 %v178, %v590
  %592 = vmatmul.f32.gmra.mxu0 %v68
  %v593 = vpop.f32.mrf.mxu0
  %v594 = vadd.f32 %v183, %v593
  %595 = vmatmul.f32.gmra.mxu0 %v70
  %v596 = vpop.f32.mrf.mxu0
  %v597 = vadd.f32 %v188, %v596
  %598 = vmatmul.f32.gmra.mxu0 %v72
  %v599 = vpop.f32.mrf.mxu0
  %v600 = vadd.f32 %v193, %v599
  %601 = vmatmul.f32.gmra.mxu0 %v74
  %v602 = vpop.f32.mrf.mxu0
  %v603 = vadd.f32 %v198, %v602
  %604 = vmatmul.f32.gmra.mxu0 %v76
  %v605 = vpop.f32.mrf.mxu0
  %v606 = vadd.f32 %v203, %v605
  %607 = vmatmul.f32.gmra.mxu0 %v78
  %v608 = vpop.f32.mrf.mxu0
  %v609 = vadd.f32 %v208, %v608
  %610 = vdwg.mxu0
  %611 = vmatpush.msra.mxu0 0.0
  %612 = vmatpush.msra.mxu0 0.0
  %613 = vmatpush.msra.mxu0 0.0
  %614 = vmatpush.msra.mxu0 0.0
  %615 = vmatpush.msra.mxu0 0.0
  %616 = vmatpush.msra.mxu0 0.0
  %617 = vmatpush.msra.mxu0 0.0
  %618 = vmatpush.msra.mxu0 0.0
  %619 = vmatpush.msra.mxu0 0.0
  %620 = vmatpush.msra.mxu0 0.0
  %621 = vmatpush.msra.mxu0 0.0
  %622 = vmatpush.msra.mxu0 0.0
  %623 = vmatpush.msra.mxu0 %v478
  %624 = vmatpush.msra.mxu0 %v477
  %625 = vmatpush.msra.mxu0 %v476
  %626 = vmatpush.msra.mxu0 %v475
  %627 = vmatmul.f32.gmra.mxu0 %v327
  %v628 = vpop.f32.mrf.mxu0
  %v629 = vadd.f32 %v585, %v628
  %630 = vmatmul.f32.gmra.mxu0 %v330
  %v631 = vpop.f32.mrf.mxu0
  %v632 = vadd.f32 %v588, %v631
  %633 = vmatmul.f32.gmra.mxu0 %v333
  %v634 = vpop.f32.mrf.mxu0
  %v635 = vadd.f32 %v591, %v634
  %636 = vmatmul.f32.gmra.mxu0 %v336
  %v637 = vpop.f32.mrf.mxu0
  %v638 = vadd.f32 %v594, %v637
  %639 = vmatmul.f32.gmra.mxu0 %v339
  %v640 = vpop.f32.mrf.mxu0
  %v641 = vadd.f32 %v597, %v640
  %642 = vmatmul.f32.gmra.mxu0 %v342
  %v643 = vpop.f32.mrf.mxu0
  %v644 = vadd.f32 %v600, %v643
  %645 = vmatmul.f32.gmra.mxu0 %v345
  %v646 = vpop.f32.mrf.mxu0
  %v647 = vadd.f32 %v603, %v646
  %648 = vmatmul.f32.gmra.mxu0 %v348
  %v649 = vpop.f32.mrf.mxu0
  %v650 = vadd.f32 %v606, %v649
  %651 = vmatmul.f32.gmra.mxu0 %v351
  %v652 = vpop.f32.mrf.mxu0
  %v653 = vadd.f32 %v609, %v652
  %654 = vdwg.mxu0
  %v655 = vmax.f32 %v541, %v629
  %v656 = vmax.f32 %v544, %v632
  %v657 = vmax.f32 %v547, %v635
  %v658 = vmax.f32 %v550, %v638
  %v659 = vmax.f32 %v553, %v641
  %v660 = vmax.f32 %v556, %v644
  %v661 = vmax.f32 %v559, %v647
  %v662 = vmax.f32 %v562, %v650
  %v663 = vmax.f32 %v565, %v653
  %v664 = vmax.f32 %v655, 0.0
  %v665 = vmax.f32 %v656, 0.0
  %v666 = vmax.f32 %v657, 0.0
  %v667 = vmax.f32 %v658, 0.0
  %v668 = vmax.f32 %v659, 0.0
  %v669 = vmax.f32 %v660, 0.0
  %v670 = vmax.f32 %v661, 0.0
  %v671 = vmax.f32 %v662, 0.0
  %v672 = vmax.f32 %v663, 0.0
  %v673 = vmax.f32 %v450, %v664
  %v674 = vmax.f32 %v451, %v665
  %v675 = vmax.f32 %v452, %v666
  %v676 = vmax.f32 %v453, %v667
  %v677 = vmax.f32 %v454, %v668
  %v678 = vmax.f32 %v455, %v669
  %v679 = vmax.f32 %v456, %v670
  %v680 = vmax.f32 %v457, %v671
  %v681 = vmax.f32 %v458, %v672
  %682 = vst [vmem:[#allocation2] sm:$0xff] %v673
  %683 = vst [vmem:[#allocation2 + $0x8] sm:$0xff] %v674
  %684 = vst [vmem:[#allocation2 + $0x10] sm:$0xff] %v675
  %685 = vst [vmem:[#allocation2 + $0x18] sm:$0xff] %v676
  %686 = vst [vmem:[#allocation2 + $0x20] sm:$0xff] %v677
  %687 = vst [vmem:[#allocation2 + $0x28] sm:$0xff] %v678
  %688 = vst [vmem:[#allocation2 + $0x30] sm:$0xff] %v679
  %689 = vst [vmem:[#allocation2 + $0x38] sm:$0xff] %v680
  %690 = vst [vmem:[#allocation2 + $0x40] sm:$0xff] %v681
  %v691 = vld [vmem:[%s0 + $0x40] sm:$0xff]
  %v692 = vld [vmem:[%s0 + $0x48] sm:$0xff]
  %v693 = vld [vmem:[%s0 + $0x50] sm:$0xff]
  %v694 = vld [vmem:[%s0 + $0x58] sm:$0xff]
  %v695 = vld [vmem:[%s0 + $0x60] sm:$0xff]
  %v696 = vld [vmem:[%s0 + $0x68] sm:$0xff]
  %v697 = vld [vmem:[%s0 + $0x70] sm:$0xff]
  %v698 = vld [vmem:[%s0 + $0x78] sm:$0xff]
  %v699 = vld [vmem:[%s0 + $0x80] sm:$0xff]
  %v700 = vld [vmem:[%s0 + $0x88] sm:$0xff]
  %v701 = vld [vmem:[%s0 + $0x90] sm:$0xff]
  %v702 = vld [vmem:[%s0 + $0x98] sm:$0xff]
  %v703 = vld [vmem:[%s0 + $0xa0] sm:$0xff]
  %v704 = vld [vmem:[%s0 + $0xa8] sm:$0xff]
  %v705 = vld [vmem:[%s0 + $0xb0] sm:$0xff]
  %v706 = vld [vmem:[%s0 + $0xb8] sm:$0xff]
  %v707 = vld [vmem:[%s0 + $0xc0] sm:$0xff]
  %v708 = vld [vmem:[%s0 + $0xc8] sm:$0xff]
  %v709 = vld [vmem:[%s0 + $0xd0] sm:$0xff]
  %v710 = vld [vmem:[%s0 + $0xd8] sm:$0xff]
  %711 = vmatpush.msra.mxu0 %v706
  %712 = vmatpush.msra.mxu0 %v705
  %713 = vmatpush.msra.mxu0 %v704
  %714 = vmatpush.msra.mxu0 %v703
  %715 = vmatpush.msra.mxu0 %v702
  %716 = vmatpush.msra.mxu0 %v701
  %717 = vmatpush.msra.mxu0 %v700
  %718 = vmatpush.msra.mxu0 %v699
  %719 = vmatpush.msra.mxu0 %v698
  %720 = vmatpush.msra.mxu0 %v697
  %721 = vmatpush.msra.mxu0 %v696
  %722 = vmatpush.msra.mxu0 %v695
  %723 = vmatpush.msra.mxu0 %v694
  %724 = vmatpush.msra.mxu0 %v693
  %725 = vmatpush.msra.mxu0 %v692
  %726 = vmatpush.msra.mxu0 %v691
  %727 = vmatmul.f32.gmra.mxu0 %v44
  %v728 = vpop.f32.mrf.mxu0
  %v729 = vadd.f32 %v168, %v728
  %730 = vmatmul.f32.gmra.mxu0 %v46
  %v731 = vpop.f32.mrf.mxu0
  %v732 = vadd.f32 %v173, %v731
  %733 = vmatmul.f32.gmra.mxu0 %v48
  %v734 = vpop.f32.mrf.mxu0
  %v735 = vadd.f32 %v178, %v734
  %736 = vmatmul.f32.gmra.mxu0 %v50
  %v737 = vpop.f32.mrf.mxu0
  %v738 = vadd.f32 %v183, %v737
  %739 = vmatmul.f32.gmra.mxu0 %v52
  %v740 = vpop.f32.mrf.mxu0
  %v741 = vadd.f32 %v188, %v740
  %742 = vmatmul.f32.gmra.mxu0 %v54
  %v743 = vpop.f32.mrf.mxu0
  %v744 = vadd.f32 %v193, %v743
  %745 = vmatmul.f32.gmra.mxu0 %v56
  %v746 = vpop.f32.mrf.mxu0
  %v747 = vadd.f32 %v198, %v746
  %748 = vmatmul.f32.gmra.mxu0 %v58
  %v749 = vpop.f32.mrf.mxu0
  %v750 = vadd.f32 %v203, %v749
  %751 = vmatmul.f32.gmra.mxu0 %v60
  %v752 = vpop.f32.mrf.mxu0
  %v753 = vadd.f32 %v208, %v752
  %754 = vdwg.mxu0
  %755 = vmatpush.msra.mxu0 0.0
  %756 = vmatpush.msra.mxu0 0.0
  %757 = vmatpush.msra.mxu0 0.0
  %758 = vmatpush.msra.mxu0 0.0
  %759 = vmatpush.msra.mxu0 0.0
  %760 = vmatpush.msra.mxu0 0.0
  %761 = vmatpush.msra.mxu0 0.0
  %762 = vmatpush.msra.mxu0 0.0
  %763 = vmatpush.msra.mxu0 0.0
  %764 = vmatpush.msra.mxu0 0.0
  %765 = vmatpush.msra.mxu0 0.0
  %766 = vmatpush.msra.mxu0 0.0
  %767 = vmatpush.msra.mxu0 %v710
  %768 = vmatpush.msra.mxu0 %v709
  %769 = vmatpush.msra.mxu0 %v708
  %770 = vmatpush.msra.mxu0 %v707
  %771 = vmatmul.f32.gmra.mxu0 %v212
  %v772 = vpop.f32.mrf.mxu0
  %v773 = vadd.f32 %v729, %v772
  %774 = vmatmul.f32.gmra.mxu0 %v215
  %v775 = vpop.f32.mrf.mxu0
  %v776 = vadd.f32 %v732, %v775
  %777 = vmatmul.f32.gmra.mxu0 %v218
  %v778 = vpop.f32.mrf.mxu0
  %v779 = vadd.f32 %v735, %v778
  %780 = vmatmul.f32.gmra.mxu0 %v221
  %v781 = vpop.f32.mrf.mxu0
  %v782 = vadd.f32 %v738, %v781
  %783 = vmatmul.f32.gmra.mxu0 %v224
  %v784 = vpop.f32.mrf.mxu0
  %v785 = vadd.f32 %v741, %v784
  %786 = vmatmul.f32.gmra.mxu0 %v227
  %v787 = vpop.f32.mrf.mxu0
  %v788 = vadd.f32 %v744, %v787
  %789 = vmatmul.f32.gmra.mxu0 %v230
  %v790 = vpop.f32.mrf.mxu0
  %v791 = vadd.f32 %v747, %v790
  %792 = vmatmul.f32.gmra.mxu0 %v233
  %v793 = vpop.f32.mrf.mxu0
  %v794 = vadd.f32 %v750, %v793
  %795 = vmatmul.f32.gmra.mxu0 %v236
  %v796 = vpop.f32.mrf.mxu0
  %v797 = vadd.f32 %v753, %v796
  %798 = vdwg.mxu0
  %799 = vmatpush.msra.mxu0 %v706
  %800 = vmatpush.msra.mxu0 %v705
  %801 = vmatpush.msra.mxu0 %v704
  %802 = vmatpush.msra.mxu0 %v703
  %803 = vmatpush.msra.mxu0 %v702
  %804 = vmatpush.msra.mxu0 %v701
  %805 = vmatpush.msra.mxu0 %v700
  %806 = vmatpush.msra.mxu0 %v699
  %807 = vmatpush.msra.mxu0 %v698
  %808 = vmatpush.msra.mxu0 %v697
  %809 = vmatpush.msra.mxu0 %v696
  %810 = vmatpush.msra.mxu0 %v695
  %811 = vmatpush.msra.mxu0 %v694
  %812 = vmatpush.msra.mxu0 %v693
  %813 = vmatpush.msra.mxu0 %v692
  %814 = vmatpush.msra.mxu0 %v691
  %815 = vmatmul.f32.gmra.mxu0 %v62
  %v816 = vpop.f32.mrf.mxu0
  %v817 = vadd.f32 %v168, %v816
  %818 = vmatmul.f32.gmra.mxu0 %v64
  %v819 = vpop.f32.mrf.mxu0
  %v820 = vadd.f32 %v173, %v819
  %821 = vmatmul.f32.gmra.mxu0 %v66
  %v822 = vpop.f32.mrf.mxu0
  %v823 = vadd.f32 %v178, %v822
  %824 = vmatmul.f32.gmra.mxu0 %v68
  %v825 = vpop.f32.mrf.mxu0
  %v826 = vadd.f32 %v183, %v825
  %827 = vmatmul.f32.gmra.mxu0 %v70
  %v828 = vpop.f32.mrf.mxu0
  %v829 = vadd.f32 %v188, %v828
  %830 = vmatmul.f32.gmra.mxu0 %v72
  %v831 = vpop.f32.mrf.mxu0
  %v832 = vadd.f32 %v193, %v831
  %833 = vmatmul.f32.gmra.mxu0 %v74
  %v834 = vpop.f32.mrf.mxu0
  %v835 = vadd.f32 %v198, %v834
  %836 = vmatmul.f32.gmra.mxu0 %v76
  %v837 = vpop.f32.mrf.mxu0
  %v838 = vadd.f32 %v203, %v837
  %839 = vmatmul.f32.gmra.mxu0 %v78
  %v840 = vpop.f32.mrf.mxu0
  %v841 = vadd.f32 %v208, %v840
  %842 = vdwg.mxu0
  %843 = vmatpush.msra.mxu0 0.0
  %844 = vmatpush.msra.mxu0 0.0
  %845 = vmatpush.msra.mxu0 0.0
  %846 = vmatpush.msra.mxu0 0.0
  %847 = vmatpush.msra.mxu0 0.0
  %848 = vmatpush.msra.mxu0 0.0
  %849 = vmatpush.msra.mxu0 0.0
  %850 = vmatpush.msra.mxu0 0.0
  %851 = vmatpush.msra.mxu0 0.0
  %852 = vmatpush.msra.mxu0 0.0
  %853 = vmatpush.msra.mxu0 0.0
  %854 = vmatpush.msra.mxu0 0.0
  %855 = vmatpush.msra.mxu0 %v710
  %856 = vmatpush.msra.mxu0 %v709
  %857 = vmatpush.msra.mxu0 %v708
  %858 = vmatpush.msra.mxu0 %v707
  %859 = vmatmul.f32.gmra.mxu0 %v327
  %v860 = vpop.f32.mrf.mxu0
  %v861 = vadd.f32 %v817, %v860
  %862 = vmatmul.f32.gmra.mxu0 %v330
  %v863 = vpop.f32.mrf.mxu0
  %v864 = vadd.f32 %v820, %v863
  %865 = vmatmul.f32.gmra.mxu0 %v333
  %v866 = vpop.f32.mrf.mxu0
  %v867 = vadd.f32 %v823, %v866
  %868 = vmatmul.f32.gmra.mxu0 %v336
  %v869 = vpop.f32.mrf.mxu0
  %v870 = vadd.f32 %v826, %v869
  %871 = vmatmul.f32.gmra.mxu0 %v339
  %v872 = vpop.f32.mrf.mxu0
  %v873 = vadd.f32 %v829, %v872
  %874 = vmatmul.f32.gmra.mxu0 %v342
  %v875 = vpop.f32.mrf.mxu0
  %v876 = vadd.f32 %v832, %v875
  %877 = vmatmul.f32.gmra.mxu0 %v345
  %v878 = vpop.f32.mrf.mxu0
  %v879 = vadd.f32 %v835, %v878
  %880 = vmatmul.f32.gmra.mxu0 %v348
  %v881 = vpop.f32.mrf.mxu0
  %v882 = vadd.f32 %v838, %v881
  %883 = vmatmul.f32.gmra.mxu0 %v351
  %v884 = vpop.f32.mrf.mxu0
  %v885 = vadd.f32 %v841, %v884
  %886 = vdwg.mxu0
  %v887 = vmax.f32 %v773, %v861
  %v888 = vmax.f32 %v776, %v864
  %v889 = vmax.f32 %v779, %v867
  %v890 = vmax.f32 %v782, %v870
  %v891 = vmax.f32 %v785, %v873
  %v892 = vmax.f32 %v788, %v876
  %v893 = vmax.f32 %v791, %v879
  %v894 = vmax.f32 %v794, %v882
  %v895 = vmax.f32 %v797, %v885
  %v896 = vmax.f32 %v887, 0.0
  %v897 = vmax.f32 %v888, 0.0
  %v898 = vmax.f32 %v889, 0.0
  %v899 = vmax.f32 %v890, 0.0
  %v900 = vmax.f32 %v891, 0.0
  %v901 = vmax.f32 %v892, 0.0
  %v902 = vmax.f32 %v893, 0.0
  %v903 = vmax.f32 %v894, 0.0
  %v904 = vmax.f32 %v895, 0.0
  %v905 = vld [vmem:[%s0 + $0x60] sm:$0xff]
  %v906 = vld [vmem:[%s0 + $0x68] sm:$0xff]
  %v907 = vld [vmem:[%s0 + $0x70] sm:$0xff]
  %v908 = vld [vmem:[%s0 + $0x78] sm:$0xff]
  %v909 = vld [vmem:[%s0 + $0x80] sm:$0xff]
  %v910 = vld [vmem:[%s0 + $0x88] sm:$0xff]
  %v911 = vld [vmem:[%s0 + $0x90] sm:$0xff]
  %v912 = vld [vmem:[%s0 + $0x98] sm:$0xff]
  %v913 = vld [vmem:[%s0 + $0xa0] sm:$0xff]
  %v914 = vld [vmem:[%s0 + $0xa8] sm:$0xff]
  %v915 = vld [vmem:[%s0 + $0xb0] sm:$0xff]
  %v916 = vld [vmem:[%s0 + $0xb8] sm:$0xff]
  %v917 = vld [vmem:[%s0 + $0xc0] sm:$0xff]
  %v918 = vld [vmem:[%s0 + $0xc8] sm:$0xff]
  %v919 = vld [vmem:[%s0 + $0xd0] sm:$0xff]
  %v920 = vld [vmem:[%s0 + $0xd8] sm:$0xff]
  %v921 = vld [vmem:[%s0 + $0xe0] sm:$0xff]
  %v922 = vld [vmem:[%s0 + $0xe8] sm:$0xff]
  %v923 = vld [vmem:[%s0 + $0xf0] sm:$0xff]
  %v924 = vld [vmem:[%s0 + $0xf8] sm:$0xff]
  %925 = vmatpush.msra.mxu0 %v920
  %926 = vmatpush.msra.mxu0 %v919
  %927 = vmatpush.msra.mxu0 %v918
  %928 = vmatpush.msra.mxu0 %v917
  %929 = vmatpush.msra.mxu0 %v916
  %930 = vmatpush.msra.mxu0 %v915
  %931 = vmatpush.msra.mxu0 %v914
  %932 = vmatpush.msra.mxu0 %v913
  %933 = vmatpush.msra.mxu0 %v912
  %934 = vmatpush.msra.mxu0 %v911
  %935 = vmatpush.msra.mxu0 %v910
  %936 = vmatpush.msra.mxu0 %v909
  %937 = vmatpush.msra.mxu0 %v908
  %938 = vmatpush.msra.mxu0 %v907
  %939 = vmatpush.msra.mxu0 %v906
  %940 = vmatpush.msra.mxu0 %v905
  %941 = vmatmul.f32.gmra.mxu0 %v44
  %v942 = vpop.f32.mrf.mxu0
  %v943 = vadd.f32 %v168, %v942
  %944 = vmatmul.f32.gmra.mxu0 %v46
  %v945 = vpop.f32.mrf.mxu0
  %v946 = vadd.f32 %v173, %v945
  %947 = vmatmul.f32.gmra.mxu0 %v48
  %v948 = vpop.f32.mrf.mxu0
  %v949 = vadd.f32 %v178, %v948
  %950 = vmatmul.f32.gmra.mxu0 %v50
  %v951 = vpop.f32.mrf.mxu0
  %v952 = vadd.f32 %v183, %v951
  %953 = vmatmul.f32.gmra.mxu0 %v52
  %v954 = vpop.f32.mrf.mxu0
  %v955 = vadd.f32 %v188, %v954
  %956 = vmatmul.f32.gmra.mxu0 %v54
  %v957 = vpop.f32.mrf.mxu0
  %v958 = vadd.f32 %v193, %v957
  %959 = vmatmul.f32.gmra.mxu0 %v56
  %v960 = vpop.f32.mrf.mxu0
  %v961 = vadd.f32 %v198, %v960
  %962 = vmatmul.f32.gmra.mxu0 %v58
  %v963 = vpop.f32.mrf.mxu0
  %v964 = vadd.f32 %v203, %v963
  %965 = vmatmul.f32.gmra.mxu0 %v60
  %v966 = vpop.f32.mrf.mxu0
  %v967 = vadd.f32 %v208, %v966
  %968 = vdwg.mxu0
  %969 = vmatpush.msra.mxu0 0.0
  %970 = vmatpush.msra.mxu0 0.0
  %971 = vmatpush.msra.mxu0 0.0
  %972 = vmatpush.msra.mxu0 0.0
  %973 = vmatpush.msra.mxu0 0.0
  %974 = vmatpush.msra.mxu0 0.0
  %975 = vmatpush.msra.mxu0 0.0
  %976 = vmatpush.msra.mxu0 0.0
  %977 = vmatpush.msra.mxu0 0.0
  %978 = vmatpush.msra.mxu0 0.0
  %979 = vmatpush.msra.mxu0 0.0
  %980 = vmatpush.msra.mxu0 0.0
  %981 = vmatpush.msra.mxu0 %v924
  %982 = vmatpush.msra.mxu0 %v923
  %983 = vmatpush.msra.mxu0 %v922
  %984 = vmatpush.msra.mxu0 %v921
  %985 = vmatmul.f32.gmra.mxu0 %v212
  %v986 = vpop.f32.mrf.mxu0
  %v987 = vadd.f32 %v943, %v986
  %988 = vmatmul.f32.gmra.mxu0 %v215
  %v989 = vpop.f32.mrf.mxu0
  %v990 = vadd.f32 %v946, %v989
  %991 = vmatmul.f32.gmra.mxu0 %v218
  %v992 = vpop.f32.mrf.mxu0
  %v993 = vadd.f32 %v949, %v992
  %994 = vmatmul.f32.gmra.mxu0 %v221
  %v995 = vpop.f32.mrf.mxu0
  %v996 = vadd.f32 %v952, %v995
  %997 = vmatmul.f32.gmra.mxu0 %v224
  %v998 = vpop.f32.mrf.mxu0
  %v999 = vadd.f32 %v955, %v998
  %1000 = vmatmul.f32.gmra.mxu0 %v227
  %v1001 = vpop.f32.mrf.mxu0
  %v1002 = vadd.f32 %v958, %v1001
  %1003 = vmatmul.f32.gmra.mxu0 %v230
  %v1004 = vpop.f32.mrf.mxu0
  %v1005 = vadd.f32 %v961, %v1004
  %1006 = vmatmul.f32.gmra.mxu0 %v233
  %v1007 = vpop.f32.mrf.mxu0
  %v1008 = vadd.f32 %v964, %v1007
  %1009 = vmatmul.f32.gmra.mxu0 %v236
  %v1010 = vpop.f32.mrf.mxu0
  %v1011 = vadd.f32 %v967, %v1010
  %1012 = vdwg.mxu0
  %1013 = vmatpush.msra.mxu0 %v920
  %1014 = vmatpush.msra.mxu0 %v919
  %1015 = vmatpush.msra.mxu0 %v918
  %1016 = vmatpush.msra.mxu0 %v917
  %1017 = vmatpush.msra.mxu0 %v916
  %1018 = vmatpush.msra.mxu0 %v915
  %1019 = vmatpush.msra.mxu0 %v914
  %1020 = vmatpush.msra.mxu0 %v913
  %1021 = vmatpush.msra.mxu0 %v912
  %1022 = vmatpush.msra.mxu0 %v911
  %1023 = vmatpush.msra.mxu0 %v910
  %1024 = vmatpush.msra.mxu0 %v909
  %1025 = vmatpush.msra.mxu0 %v908
  %1026 = vmatpush.msra.mxu0 %v907
  %1027 = vmatpush.msra.mxu0 %v906
  %1028 = vmatpush.msra.mxu0 %v905
  %1029 = vmatmul.f32.gmra.mxu0 %v62
  %v1030 = vpop.f32.mrf.mxu0
  %v1031 = vadd.f32 %v168, %v1030
  %1032 = vmatmul.f32.gmra.mxu0 %v64
  %v1033 = vpop.f32.mrf.mxu0
  %v1034 = vadd.f32 %v173, %v1033
  %1035 = vmatmul.f32.gmra.mxu0 %v66
  %v1036 = vpop.f32.mrf.mxu0
  %v1037 = vadd.f32 %v178, %v1036
  %1038 = vmatmul.f32.gmra.mxu0 %v68
  %v1039 = vpop.f32.mrf.mxu0
  %v1040 = vadd.f32 %v183, %v1039
  %1041 = vmatmul.f32.gmra.mxu0 %v70
  %v1042 = vpop.f32.mrf.mxu0
  %v1043 = vadd.f32 %v188, %v1042
  %1044 = vmatmul.f32.gmra.mxu0 %v72
  %v1045 = vpop.f32.mrf.mxu0
  %v1046 = vadd.f32 %v193, %v1045
  %1047 = vmatmul.f32.gmra.mxu0 %v74
  %v1048 = vpop.f32.mrf.mxu0
  %v1049 = vadd.f32 %v198, %v1048
  %1050 = vmatmul.f32.gmra.mxu0 %v76
  %v1051 = vpop.f32.mrf.mxu0
  %v1052 = vadd.f32 %v203, %v1051
  %1053 = vmatmul.f32.gmra.mxu0 %v78
  %v1054 = vpop.f32.mrf.mxu0
  %v1055 = vadd.f32 %v208, %v1054
  %1056 = vdwg.mxu0
  %1057 = vmatpush.msra.mxu0 0.0
  %1058 = vmatpush.msra.mxu0 0.0
  %1059 = vmatpush.msra.mxu0 0.0
  %1060 = vmatpush.msra.mxu0 0.0
  %1061 = vmatpush.msra.mxu0 0.0
  %1062 = vmatpush.msra.mxu0 0.0
  %1063 = vmatpush.msra.mxu0 0.0
  %1064 = vmatpush.msra.mxu0 0.0
  %1065 = vmatpush.msra.mxu0 0.0
  %1066 = vmatpush.msra.mxu0 0.0
  %1067 = vmatpush.msra.mxu0 0.0
  %1068 = vmatpush.msra.mxu0 0.0
  %1069 = vmatpush.msra.mxu0 %v924
  %1070 = vmatpush.msra.mxu0 %v923
  %1071 = vmatpush.msra.mxu0 %v922
  %1072 = vmatpush.msra.mxu0 %v921
  %1073 = vmatmul.f32.gmra.mxu0 %v327
  %v1074 = vpop.f32.mrf.mxu0
  %v1075 = vadd.f32 %v1031, %v1074
  %1076 = vmatmul.f32.gmra.mxu0 %v330
  %v1077 = vpop.f32.mrf.mxu0
  %v1078 = vadd.f32 %v1034, %v1077
  %1079 = vmatmul.f32.gmra.mxu0 %v333
  %v1080 = vpop.f32.mrf.mxu0
  %v1081 = vadd.f32 %v1037, %v1080
  %1082 = vmatmul.f32.gmra.mxu0 %v336
  %v1083 = vpop.f32.mrf.mxu0
  %v1084 = vadd.f32 %v1040, %v1083
  %1085 = vmatmul.f32.gmra.mxu0 %v339
  %v1086 = vpop.f32.mrf.mxu0
  %v1087 = vadd.f32 %v1043, %v1086
  %1088 = vmatmul.f32.gmra.mxu0 %v342
  %v1089 = vpop.f32.mrf.mxu0
  %v1090 = vadd.f32 %v1046, %v1089
  %1091 = vmatmul.f32.gmra.mxu0 %v345
  %v1092 = vpop.f32.mrf.mxu0
  %v1093 = vadd.f32 %v1049, %v1092
  %1094 = vmatmul.f32.gmra.mxu0 %v348
  %v1095 = vpop.f32.mrf.mxu0
  %v1096 = vadd.f32 %v1052, %v1095
  %1097 = vmatmul.f32.gmra.mxu0 %v351
  %v1098 = vpop.f32.mrf.mxu0
  %v1099 = vadd.f32 %v1055, %v1098
  %1100 = vdwg.mxu0
  %v1101 = vmax.f32 %v987, %v1075
  %v1102 = vmax.f32 %v990, %v1078
  %v1103 = vmax.f32 %v993, %v1081
  %v1104 = vmax.f32 %v996, %v1084
  %v1105 = vmax.f32 %v999, %v1087
  %v1106 = vmax.f32 %v1002, %v1090
  %v1107 = vmax.f32 %v1005, %v1093
  %v1108 = vmax.f32 %v1008, %v1096
  %v1109 = vmax.f32 %v1011, %v1099
  %v1110 = vmax.f32 %v1101, 0.0
  %v1111 = vmax.f32 %v1102, 0.0
  %v1112 = vmax.f32 %v1103, 0.0
  %v1113 = vmax.f32 %v1104, 0.0
  %v1114 = vmax.f32 %v1105, 0.0
  %v1115 = vmax.f32 %v1106, 0.0
  %v1116 = vmax.f32 %v1107, 0.0
  %v1117 = vmax.f32 %v1108, 0.0
  %v1118 = vmax.f32 %v1109, 0.0
  %v1119 = vmax.f32 %v896, %v1110
  %v1120 = vmax.f32 %v897, %v1111
  %v1121 = vmax.f32 %v898, %v1112
  %v1122 = vmax.f32 %v899, %v1113
  %v1123 = vmax.f32 %v900, %v1114
  %v1124 = vmax.f32 %v901, %v1115
  %v1125 = vmax.f32 %v902, %v1116
  %v1126 = vmax.f32 %v903, %v1117
  %v1127 = vmax.f32 %v904, %v1118
  %1128 = vst [vmem:[#allocation2 + $0x48] sm:$0xff] %v1119
  %1129 = vst [vmem:[#allocation2 + $0x50] sm:$0xff] %v1120
  %1130 = vst [vmem:[#allocation2 + $0x58] sm:$0xff] %v1121
  %1131 = vst [vmem:[#allocation2 + $0x60] sm:$0xff] %v1122
  %1132 = vst [vmem:[#allocation2 + $0x68] sm:$0xff] %v1123
  %1133 = vst [vmem:[#allocation2 + $0x70] sm:$0xff] %v1124
  %1134 = vst [vmem:[#allocation2 + $0x78] sm:$0xff] %v1125
  %1135 = vst [vmem:[#allocation2 + $0x80] sm:$0xff] %v1126
  %1136 = vst [vmem:[#allocation2 + $0x88] sm:$0xff] %v1127
  %v1137 = vld [vmem:[%s0 + $0x80] sm:$0xff]
  %v1138 = vld [vmem:[%s0 + $0x88] sm:$0xff]
  %v1139 = vld [vmem:[%s0 + $0x90] sm:$0xff]
  %v1140 = vld [vmem:[%s0 + $0x98] sm:$0xff]
  %v1141 = vld [vmem:[%s0 + $0xa0] sm:$0xff]
  %v1142 = vld [vmem:[%s0 + $0xa8] sm:$0xff]
  %v1143 = vld [vmem:[%s0 + $0xb0] sm:$0xff]
  %v1144 = vld [vmem:[%s0 + $0xb8] sm:$0xff]
  %v1145 = vld [vmem:[%s0 + $0xc0] sm:$0xff]
  %v1146 = vld [vmem:[%s0 + $0xc8] sm:$0xff]
  %v1147 = vld [vmem:[%s0 + $0xd0] sm:$0xff]
  %v1148 = vld [vmem:[%s0 + $0xd8] sm:$0xff]
  %v1149 = vld [vmem:[%s0 + $0xe0] sm:$0xff]
  %v1150 = vld [vmem:[%s0 + $0xe8] sm:$0xff]
  %v1151 = vld [vmem:[%s0 + $0xf0] sm:$0xff]
  %v1152 = vld [vmem:[%s0 + $0xf8] sm:$0xff]
  %v1153 = vld [vmem:[%s0 + $0x100] sm:$0xff]
  %v1154 = vld [vmem:[%s0 + $0x108] sm:$0xff]
  %v1155 = vld [vmem:[%s0 + $0x110] sm:$0xff]
  %v1156 = vld [vmem:[%s0 + $0x118] sm:$0xff]
  %1157 = vmatpush.msra.mxu0 %v1152
  %1158 = vmatpush.msra.mxu0 %v1151
  %1159 = vmatpush.msra.mxu0 %v1150
  %1160 = vmatpush.msra.mxu0 %v1149
  %1161 = vmatpush.msra.mxu0 %v1148
  %1162 = vmatpush.msra.mxu0 %v1147
  %1163 = vmatpush.msra.mxu0 %v1146
  %1164 = vmatpush.msra.mxu0 %v1145
  %1165 = vmatpush.msra.mxu0 %v1144
  %1166 = vmatpush.msra.mxu0 %v1143
  %1167 = vmatpush.msra.mxu0 %v1142
  %1168 = vmatpush.msra.mxu0 %v1141
  %1169 = vmatpush.msra.mxu0 %v1140
  %1170 = vmatpush.msra.mxu0 %v1139
  %1171 = vmatpush.msra.mxu0 %v1138
  %1172 = vmatpush.msra.mxu0 %v1137
  %1173 = vmatmul.f32.gmra.mxu0 %v44
  %v1174 = vpop.f32.mrf.mxu0
  %v1175 = vadd.f32 %v168, %v1174
  %1176 = vmatmul.f32.gmra.mxu0 %v46
  %v1177 = vpop.f32.mrf.mxu0
  %v1178 = vadd.f32 %v173, %v1177
  %1179 = vmatmul.f32.gmra.mxu0 %v48
  %v1180 = vpop.f32.mrf.mxu0
  %v1181 = vadd.f32 %v178, %v1180
  %1182 = vmatmul.f32.gmra.mxu0 %v50
  %v1183 = vpop.f32.mrf.mxu0
  %v1184 = vadd.f32 %v183, %v1183
  %1185 = vmatmul.f32.gmra.mxu0 %v52
  %v1186 = vpop.f32.mrf.mxu0
  %v1187 = vadd.f32 %v188, %v1186
  %1188 = vmatmul.f32.gmra.mxu0 %v54
  %v1189 = vpop.f32.mrf.mxu0
  %v1190 = vadd.f32 %v193, %v1189
  %1191 = vmatmul.f32.gmra.mxu0 %v56
  %v1192 = vpop.f32.mrf.mxu0
  %v1193 = vadd.f32 %v198, %v1192
  %1194 = vmatmul.f32.gmra.mxu0 %v58
  %v1195 = vpop.f32.mrf.mxu0
  %v1196 = vadd.f32 %v203, %v1195
  %1197 = vmatmul.f32.gmra.mxu0 %v60
  %v1198 = vpop.f32.mrf.mxu0
  %v1199 = vadd.f32 %v208, %v1198
  %1200 = vdwg.mxu0
  %1201 = vmatpush.msra.mxu0 0.0
  %1202 = vmatpush.msra.mxu0 0.0
  %1203 = vmatpush.msra.mxu0 0.0
  %1204 = vmatpush.msra.mxu0 0.0
  %1205 = vmatpush.msra.mxu0 0.0
  %1206 = vmatpush.msra.mxu0 0.0
  %1207 = vmatpush.msra.mxu0 0.0
  %1208 = vmatpush.msra.mxu0 0.0
  %1209 = vmatpush.msra.mxu0 0.0
  %1210 = vmatpush.msra.mxu0 0.0
  %1211 = vmatpush.msra.mxu0 0.0
  %1212 = vmatpush.msra.mxu0 0.0
  %1213 = vmatpush.msra.mxu0 %v1156
  %1214 = vmatpush.msra.mxu0 %v1155
  %1215 = vmatpush.msra.mxu0 %v1154
  %1216 = vmatpush.msra.mxu0 %v1153
  %1217 = vmatmul.f32.gmra.mxu0 %v212
  %v1218 = vpop.f32.mrf.mxu0
  %v1219 = vadd.f32 %v1175, %v1218
  %1220 = vmatmul.f32.gmra.mxu0 %v215
  %v1221 = vpop.f32.mrf.mxu0
  %v1222 = vadd.f32 %v1178, %v1221
  %1223 = vmatmul.f32.gmra.mxu0 %v218
  %v1224 = vpop.f32.mrf.mxu0
  %v1225 = vadd.f32 %v1181, %v1224
  %1226 = vmatmul.f32.gmra.mxu0 %v221
  %v1227 = vpop.f32.mrf.mxu0
  %v1228 = vadd.f32 %v1184, %v1227
  %1229 = vmatmul.f32.gmra.mxu0 %v224
  %v1230 = vpop.f32.mrf.mxu0
  %v1231 = vadd.f32 %v1187, %v1230
  %1232 = vmatmul.f32.gmra.mxu0 %v227
  %v1233 = vpop.f32.mrf.mxu0
  %v1234 = vadd.f32 %v1190, %v1233
  %1235 = vmatmul.f32.gmra.mxu0 %v230
  %v1236 = vpop.f32.mrf.mxu0
  %v1237 = vadd.f32 %v1193, %v1236
  %1238 = vmatmul.f32.gmra.mxu0 %v233
  %v1239 = vpop.f32.mrf.mxu0
  %v1240 = vadd.f32 %v1196, %v1239
  %1241 = vmatmul.f32.gmra.mxu0 %v236
  %v1242 = vpop.f32.mrf.mxu0
  %v1243 = vadd.f32 %v1199, %v1242
  %1244 = vdwg.mxu0
  %1245 = vmatpush.msra.mxu0 %v1152
  %1246 = vmatpush.msra.mxu0 %v1151
  %1247 = vmatpush.msra.mxu0 %v1150
  %1248 = vmatpush.msra.mxu0 %v1149
  %1249 = vmatpush.msra.mxu0 %v1148
  %1250 = vmatpush.msra.mxu0 %v1147
  %1251 = vmatpush.msra.mxu0 %v1146
  %1252 = vmatpush.msra.mxu0 %v1145
  %1253 = vmatpush.msra.mxu0 %v1144
  %1254 = vmatpush.msra.mxu0 %v1143
  %1255 = vmatpush.msra.mxu0 %v1142
  %1256 = vmatpush.msra.mxu0 %v1141
  %1257 = vmatpush.msra.mxu0 %v1140
  %1258 = vmatpush.msra.mxu0 %v1139
  %1259 = vmatpush.msra.mxu0 %v1138
  %1260 = vmatpush.msra.mxu0 %v1137
  %1261 = vmatmul.f32.gmra.mxu0 %v62
  %v1262 = vpop.f32.mrf.mxu0
  %v1263 = vadd.f32 %v168, %v1262
  %1264 = vmatmul.f32.gmra.mxu0 %v64
  %v1265 = vpop.f32.mrf.mxu0
  %v1266 = vadd.f32 %v173, %v1265
  %1267 = vmatmul.f32.gmra.mxu0 %v66
  %v1268 = vpop.f32.mrf.mxu0
  %v1269 = vadd.f32 %v178, %v1268
  %1270 = vmatmul.f32.gmra.mxu0 %v68
  %v1271 = vpop.f32.mrf.mxu0
  %v1272 = vadd.f32 %v183, %v1271
  %1273 = vmatmul.f32.gmra.mxu0 %v70
  %v1274 = vpop.f32.mrf.mxu0
  %v1275 = vadd.f32 %v188, %v1274
  %1276 = vmatmul.f32.gmra.mxu0 %v72
  %v1277 = vpop.f32.mrf.mxu0
  %v1278 = vadd.f32 %v193, %v1277
  %1279 = vmatmul.f32.gmra.mxu0 %v74
  %v1280 = vpop.f32.mrf.mxu0
  %v1281 = vadd.f32 %v198, %v1280
  %1282 = vmatmul.f32.gmra.mxu0 %v76
  %v1283 = vpop.f32.mrf.mxu0
  %v1284 = vadd.f32 %v203, %v1283
  %1285 = vmatmul.f32.gmra.mxu0 %v78
  %v1286 = vpop.f32.mrf.mxu0
  %v1287 = vadd.f32 %v208, %v1286
  %1288 = vdwg.mxu0
  %1289 = vmatpush.msra.mxu0 0.0
  %1290 = vmatpush.msra.mxu0 0.0
  %1291 = vmatpush.msra.mxu0 0.0
  %1292 = vmatpush.msra.mxu0 0.0
  %1293 = vmatpush.msra.mxu0 0.0
  %1294 = vmatpush.msra.mxu0 0.0
  %1295 = vmatpush.msra.mxu0 0.0
  %1296 = vmatpush.msra.mxu0 0.0
  %1297 = vmatpush.msra.mxu0 0.0
  %1298 = vmatpush.msra.mxu0 0.0
  %1299 = vmatpush.msra.mxu0 0.0
  %1300 = vmatpush.msra.mxu0 0.0
  %1301 = vmatpush.msra.mxu0 %v1156
  %1302 = vmatpush.msra.mxu0 %v1155
  %1303 = vmatpush.msra.mxu0 %v1154
  %1304 = vmatpush.msra.mxu0 %v1153
  %1305 = vmatmul.f32.gmra.mxu0 %v327
  %v1306 = vpop.f32.mrf.mxu0
  %v1307 = vadd.f32 %v1263, %v1306
  %1308 = vmatmul.f32.gmra.mxu0 %v330
  %v1309 = vpop.f32.mrf.mxu0
  %v1310 = vadd.f32 %v1266, %v1309
  %1311 = vmatmul.f32.gmra.mxu0 %v333
  %v1312 = vpop.f32.mrf.mxu0
  %v1313 = vadd.f32 %v1269, %v1312
  %1314 = vmatmul.f32.gmra.mxu0 %v336
  %v1315 = vpop.f32.mrf.mxu0
  %v1316 = vadd.f32 %v1272, %v1315
  %1317 = vmatmul.f32.gmra.mxu0 %v339
  %v1318 = vpop.f32.mrf.mxu0
  %v1319 = vadd.f32 %v1275, %v1318
  %1320 = vmatmul.f32.gmra.mxu0 %v342
  %v1321 = vpop.f32.mrf.mxu0
  %v1322 = vadd.f32 %v1278, %v1321
  %1323 = vmatmul.f32.gmra.mxu0 %v345
  %v1324 = vpop.f32.mrf.mxu0
  %v1325 = vadd.f32 %v1281, %v1324
  %1326 = vmatmul.f32.gmra.mxu0 %v348
  %v1327 = vpop.f32.mrf.mxu0
  %v1328 = vadd.f32 %v1284, %v1327
  %1329 = vmatmul.f32.gmra.mxu0 %v351
  %v1330 = vpop.f32.mrf.mxu0
  %v1331 = vadd.f32 %v1287, %v1330
  %1332 = vdwg.mxu0
  %v1333 = vmax.f32 %v1219, %v1307
  %v1334 = vmax.f32 %v1222, %v1310
  %v1335 = vmax.f32 %v1225, %v1313
  %v1336 = vmax.f32 %v1228, %v1316
  %v1337 = vmax.f32 %v1231, %v1319
  %v1338 = vmax.f32 %v1234, %v1322
  %v1339 = vmax.f32 %v1237, %v1325
  %v1340 = vmax.f32 %v1240, %v1328
  %v1341 = vmax.f32 %v1243, %v1331
  %v1342 = vmax.f32 %v1333, 0.0
  %v1343 = vmax.f32 %v1334, 0.0
  %v1344 = vmax.f32 %v1335, 0.0
  %v1345 = vmax.f32 %v1336, 0.0
  %v1346 = vmax.f32 %v1337, 0.0
  %v1347 = vmax.f32 %v1338, 0.0
  %v1348 = vmax.f32 %v1339, 0.0
  %v1349 = vmax.f32 %v1340, 0.0
  %v1350 = vmax.f32 %v1341, 0.0
  %v1351 = vld [vmem:[%s0 + $0xa0] sm:$0xff]
  %v1352 = vld [vmem:[%s0 + $0xa8] sm:$0xff]
  %v1353 = vld [vmem:[%s0 + $0xb0] sm:$0xff]
  %v1354 = vld [vmem:[%s0 + $0xb8] sm:$0xff]
  %v1355 = vld [vmem:[%s0 + $0xc0] sm:$0xff]
  %v1356 = vld [vmem:[%s0 + $0xc8] sm:$0xff]
  %v1357 = vld [vmem:[%s0 + $0xd0] sm:$0xff]
  %v1358 = vld [vmem:[%s0 + $0xd8] sm:$0xff]
  %v1359 = vld [vmem:[%s0 + $0xe0] sm:$0xff]
  %v1360 = vld [vmem:[%s0 + $0xe8] sm:$0xff]
  %v1361 = vld [vmem:[%s0 + $0xf0] sm:$0xff]
  %v1362 = vld [vmem:[%s0 + $0xf8] sm:$0xff]
  %v1363 = vld [vmem:[%s0 + $0x100] sm:$0xff]
  %v1364 = vld [vmem:[%s0 + $0x108] sm:$0xff]
  %v1365 = vld [vmem:[%s0 + $0x110] sm:$0xff]
  %v1366 = vld [vmem:[%s0 + $0x118] sm:$0xff]
  %v1367 = vld [vmem:[%s0 + $0x120] sm:$0xff]
  %v1368 = vld [vmem:[%s0 + $0x128] sm:$0xff]
  %v1369 = vld [vmem:[%s0 + $0x130] sm:$0xff]
  %v1370 = vld [vmem:[%s0 + $0x138] sm:$0xff]
  %1371 = vmatpush.msra.mxu0 %v1366
  %1372 = vmatpush.msra.mxu0 %v1365
  %1373 = vmatpush.msra.mxu0 %v1364
  %1374 = vmatpush.msra.mxu0 %v1363
  %1375 = vmatpush.msra.mxu0 %v1362
  %1376 = vmatpush.msra.mxu0 %v1361
  %1377 = vmatpush.msra.mxu0 %v1360
  %1378 = vmatpush.msra.mxu0 %v1359
  %1379 = vmatpush.msra.mxu0 %v1358
  %1380 = vmatpush.msra.mxu0 %v1357
  %1381 = vmatpush.msra.mxu0 %v1356
  %1382 = vmatpush.msra.mxu0 %v1355
  %1383 = vmatpush.msra.mxu0 %v1354
  %1384 = vmatpush.msra.mxu0 %v1353
  %1385 = vmatpush.msra.mxu0 %v1352
  %1386 = vmatpush.msra.mxu0 %v1351
  %1387 = vmatmul.f32.gmra.mxu0 %v44
  %v1388 = vpop.f32.mrf.mxu0
  %v1389 = vadd.f32 %v168, %v1388
  %1390 = vmatmul.f32.gmra.mxu0 %v46
  %v1391 = vpop.f32.mrf.mxu0
  %v1392 = vadd.f32 %v173, %v1391
  %1393 = vmatmul.f32.gmra.mxu0 %v48
  %v1394 = vpop.f32.mrf.mxu0
  %v1395 = vadd.f32 %v178, %v1394
  %1396 = vmatmul.f32.gmra.mxu0 %v50
  %v1397 = vpop.f32.mrf.mxu0
  %v1398 = vadd.f32 %v183, %v1397
  %1399 = vmatmul.f32.gmra.mxu0 %v52
  %v1400 = vpop.f32.mrf.mxu0
  %v1401 = vadd.f32 %v188, %v1400
  %1402 = vmatmul.f32.gmra.mxu0 %v54
  %v1403 = vpop.f32.mrf.mxu0
  %v1404 = vadd.f32 %v193, %v1403
  %1405 = vmatmul.f32.gmra.mxu0 %v56
  %v1406 = vpop.f32.mrf.mxu0
  %v1407 = vadd.f32 %v198, %v1406
  %1408 = vmatmul.f32.gmra.mxu0 %v58
  %v1409 = vpop.f32.mrf.mxu0
  %v1410 = vadd.f32 %v203, %v1409
  %1411 = vmatmul.f32.gmra.mxu0 %v60
  %v1412 = vpop.f32.mrf.mxu0
  %v1413 = vadd.f32 %v208, %v1412
  %1414 = vdwg.mxu0
  %1415 = vmatpush.msra.mxu0 0.0
  %1416 = vmatpush.msra.mxu0 0.0
  %1417 = vmatpush.msra.mxu0 0.0
  %1418 = vmatpush.msra.mxu0 0.0
  %1419 = vmatpush.msra.mxu0 0.0
  %1420 = vmatpush.msra.mxu0 0.0
  %1421 = vmatpush.msra.mxu0 0.0
  %1422 = vmatpush.msra.mxu0 0.0
  %1423 = vmatpush.msra.mxu0 0.0
  %1424 = vmatpush.msra.mxu0 0.0
  %1425 = vmatpush.msra.mxu0 0.0
  %1426 = vmatpush.msra.mxu0 0.0
  %1427 = vmatpush.msra.mxu0 %v1370
  %1428 = vmatpush.msra.mxu0 %v1369
  %1429 = vmatpush.msra.mxu0 %v1368
  %1430 = vmatpush.msra.mxu0 %v1367
  %1431 = vmatmul.f32.gmra.mxu0 %v212
  %v1432 = vpop.f32.mrf.mxu0
  %v1433 = vadd.f32 %v1389, %v1432
  %1434 = vmatmul.f32.gmra.mxu0 %v215
  %v1435 = vpop.f32.mrf.mxu0
  %v1436 = vadd.f32 %v1392, %v1435
  %1437 = vmatmul.f32.gmra.mxu0 %v218
  %v1438 = vpop.f32.mrf.mxu0
  %v1439 = vadd.f32 %v1395, %v1438
  %1440 = vmatmul.f32.gmra.mxu0 %v221
  %v1441 = vpop.f32.mrf.mxu0
  %v1442 = vadd.f32 %v1398, %v1441
  %1443 = vmatmul.f32.gmra.mxu0 %v224
  %v1444 = vpop.f32.mrf.mxu0
  %v1445 = vadd.f32 %v1401, %v1444
  %1446 = vmatmul.f32.gmra.mxu0 %v227
  %v1447 = vpop.f32.mrf.mxu0
  %v1448 = vadd.f32 %v1404, %v1447
  %1449 = vmatmul.f32.gmra.mxu0 %v230
  %v1450 = vpop.f32.mrf.mxu0
  %v1451 = vadd.f32 %v1407, %v1450
  %1452 = vmatmul.f32.gmra.mxu0 %v233
  %v1453 = vpop.f32.mrf.mxu0
  %v1454 = vadd.f32 %v1410, %v1453
  %1455 = vmatmul.f32.gmra.mxu0 %v236
  %v1456 = vpop.f32.mrf.mxu0
  %v1457 = vadd.f32 %v1413, %v1456
  %1458 = vdwg.mxu0
  %1459 = vmatpush.msra.mxu0 %v1366
  %1460 = vmatpush.msra.mxu0 %v1365
  %1461 = vmatpush.msra.mxu0 %v1364
  %1462 = vmatpush.msra.mxu0 %v1363
  %1463 = vmatpush.msra.mxu0 %v1362
  %1464 = vmatpush.msra.mxu0 %v1361
  %1465 = vmatpush.msra.mxu0 %v1360
  %1466 = vmatpush.msra.mxu0 %v1359
  %1467 = vmatpush.msra.mxu0 %v1358
  %1468 = vmatpush.msra.mxu0 %v1357
  %1469 = vmatpush.msra.mxu0 %v1356
  %1470 = vmatpush.msra.mxu0 %v1355
  %1471 = vmatpush.msra.mxu0 %v1354
  %1472 = vmatpush.msra.mxu0 %v1353
  %1473 = vmatpush.msra.mxu0 %v1352
  %1474 = vmatpush.msra.mxu0 %v1351
  %1475 = vmatmul.f32.gmra.mxu0 %v62
  %v1476 = vpop.f32.mrf.mxu0
  %v1477 = vadd.f32 %v168, %v1476
  %1478 = vmatmul.f32.gmra.mxu0 %v64
  %v1479 = vpop.f32.mrf.mxu0
  %v1480 = vadd.f32 %v173, %v1479
  %1481 = vmatmul.f32.gmra.mxu0 %v66
  %v1482 = vpop.f32.mrf.mxu0
  %v1483 = vadd.f32 %v178, %v1482
  %1484 = vmatmul.f32.gmra.mxu0 %v68
  %v1485 = vpop.f32.mrf.mxu0
  %v1486 = vadd.f32 %v183, %v1485
  %1487 = vmatmul.f32.gmra.mxu0 %v70
  %v1488 = vpop.f32.mrf.mxu0
  %v1489 = vadd.f32 %v188, %v1488
  %1490 = vmatmul.f32.gmra.mxu0 %v72
  %v1491 = vpop.f32.mrf.mxu0
  %v1492 = vadd.f32 %v193, %v1491
  %1493 = vmatmul.f32.gmra.mxu0 %v74
  %v1494 = vpop.f32.mrf.mxu0
  %v1495 = vadd.f32 %v198, %v1494
  %1496 = vmatmul.f32.gmra.mxu0 %v76
  %v1497 = vpop.f32.mrf.mxu0
  %v1498 = vadd.f32 %v203, %v1497
  %1499 = vmatmul.f32.gmra.mxu0 %v78
  %v1500 = vpop.f32.mrf.mxu0
  %v1501 = vadd.f32 %v208, %v1500
  %1502 = vdwg.mxu0
  %1503 = vmatpush.msra.mxu0 0.0
  %1504 = vmatpush.msra.mxu0 0.0
  %1505 = vmatpush.msra.mxu0 0.0
  %1506 = vmatpush.msra.mxu0 0.0
  %1507 = vmatpush.msra.mxu0 0.0
  %1508 = vmatpush.msra.mxu0 0.0
  %1509 = vmatpush.msra.mxu0 0.0
  %1510 = vmatpush.msra.mxu0 0.0
  %1511 = vmatpush.msra.mxu0 0.0
  %1512 = vmatpush.msra.mxu0 0.0
  %1513 = vmatpush.msra.mxu0 0.0
  %1514 = vmatpush.msra.mxu0 0.0
  %1515 = vmatpush.msra.mxu0 %v1370
  %1516 = vmatpush.msra.mxu0 %v1369
  %1517 = vmatpush.msra.mxu0 %v1368
  %1518 = vmatpush.msra.mxu0 %v1367
  %1519 = vmatmul.f32.gmra.mxu0 %v327
  %v1520 = vpop.f32.mrf.mxu0
  %v1521 = vadd.f32 %v1477, %v1520
  %1522 = vmatmul.f32.gmra.mxu0 %v330
  %v1523 = vpop.f32.mrf.mxu0
  %v1524 = vadd.f32 %v1480, %v1523
  %1525 = vmatmul.f32.gmra.mxu0 %v333
  %v1526 = vpop.f32.mrf.mxu0
  %v1527 = vadd.f32 %v1483, %v1526
  %1528 = vmatmul.f32.gmra.mxu0 %v336
  %v1529 = vpop.f32.mrf.mxu0
  %v1530 = vadd.f32 %v1486, %v1529
  %1531 = vmatmul.f32.gmra.mxu0 %v339
  %v1532 = vpop.f32.mrf.mxu0
  %v1533 = vadd.f32 %v1489, %v1532
  %1534 = vmatmul.f32.gmra.mxu0 %v342
  %v1535 = vpop.f32.mrf.mxu0
  %v1536 = vadd.f32 %v1492, %v1535
  %1537 = vmatmul.f32.gmra.mxu0 %v345
  %v1538 = vpop.f32.mrf.mxu0
  %v1539 = vadd.f32 %v1495, %v1538
  %1540 = vmatmul.f32.gmra.mxu0 %v348
  %v1541 = vpop.f32.mrf.mxu0
  %v1542 = vadd.f32 %v1498, %v1541
  %1543 = vmatmul.f32.gmra.mxu0 %v351
  %v1544 = vpop.f32.mrf.mxu0
  %v1545 = vadd.f32 %v1501, %v1544
  %1546 = vdwg.mxu0
  %v1547 = vmax.f32 %v1433, %v1521
  %v1548 = vmax.f32 %v1436, %v1524
  %v1549 = vmax.f32 %v1439, %v1527
  %v1550 = vmax.f32 %v1442, %v1530
  %v1551 = vmax.f32 %v1445, %v1533
  %v1552 = vmax.f32 %v1448, %v1536
  %v1553 = vmax.f32 %v1451, %v1539
  %v1554 = vmax.f32 %v1454, %v1542
  %v1555 = vmax.f32 %v1457, %v1545
  %v1556 = vmax.f32 %v1547, 0.0
  %v1557 = vmax.f32 %v1548, 0.0
  %v1558 = vmax.f32 %v1549, 0.0
  %v1559 = vmax.f32 %v1550, 0.0
  %v1560 = vmax.f32 %v1551, 0.0
  %v1561 = vmax.f32 %v1552, 0.0
  %v1562 = vmax.f32 %v1553, 0.0
  %v1563 = vmax.f32 %v1554, 0.0
  %v1564 = vmax.f32 %v1555, 0.0
  %v1565 = vmax.f32 %v1342, %v1556
  %v1566 = vmax.f32 %v1343, %v1557
  %v1567 = vmax.f32 %v1344, %v1558
  %v1568 = vmax.f32 %v1345, %v1559
  %v1569 = vmax.f32 %v1346, %v1560
  %v1570 = vmax.f32 %v1347, %v1561
  %v1571 = vmax.f32 %v1348, %v1562
  %v1572 = vmax.f32 %v1349, %v1563
  %v1573 = vmax.f32 %v1350, %v1564
  %1574 = vst [vmem:[#allocation2 + $0x90] sm:$0xff] %v1565
  %1575 = vst [vmem:[#allocation2 + $0x98] sm:$0xff] %v1566
  %1576 = vst [vmem:[#allocation2 + $0xa0] sm:$0xff] %v1567
  %1577 = vst [vmem:[#allocation2 + $0xa8] sm:$0xff] %v1568
  %1578 = vst [vmem:[#allocation2 + $0xb0] sm:$0xff] %v1569
  %1579 = vst [vmem:[#allocation2 + $0xb8] sm:$0xff] %v1570
  %1580 = vst [vmem:[#allocation2 + $0xc0] sm:$0xff] %v1571
  %1581 = vst [vmem:[#allocation2 + $0xc8] sm:$0xff] %v1572
  %1582 = vst [vmem:[#allocation2 + $0xd0] sm:$0xff] %v1573
  %v1583 = vld [vmem:[%s0 + $0xc0] sm:$0xff]
  %v1584 = vld [vmem:[%s0 + $0xc8] sm:$0xff]
  %v1585 = vld [vmem:[%s0 + $0xd0] sm:$0xff]
  %v1586 = vld [vmem:[%s0 + $0xd8] sm:$0xff]
  %v1587 = vld [vmem:[%s0 + $0xe0] sm:$0xff]
  %v1588 = vld [vmem:[%s0 + $0xe8] sm:$0xff]
  %v1589 = vld [vmem:[%s0 + $0xf0] sm:$0xff]
  %v1590 = vld [vmem:[%s0 + $0xf8] sm:$0xff]
  %v1591 = vld [vmem:[%s0 + $0x100] sm:$0xff]
  %v1592 = vld [vmem:[%s0 + $0x108] sm:$0xff]
  %v1593 = vld [vmem:[%s0 + $0x110] sm:$0xff]
  %v1594 = vld [vmem:[%s0 + $0x118] sm:$0xff]
  %v1595 = vld [vmem:[%s0 + $0x120] sm:$0xff]
  %v1596 = vld [vmem:[%s0 + $0x128] sm:$0xff]
  %v1597 = vld [vmem:[%s0 + $0x130] sm:$0xff]
  %v1598 = vld [vmem:[%s0 + $0x138] sm:$0xff]
  %v1599 = vld [vmem:[%s0 + $0x140] sm:$0xff]
  %v1600 = vld [vmem:[%s0 + $0x148] sm:$0xff]
  %v1601 = vld [vmem:[%s0 + $0x150] sm:$0xff]
  %v1602 = vld [vmem:[%s0 + $0x158] sm:$0xff]
  %1603 = vmatpush.msra.mxu0 %v1598
  %1604 = vmatpush.msra.mxu0 %v1597
  %1605 = vmatpush.msra.mxu0 %v1596
  %1606 = vmatpush.msra.mxu0 %v1595
  %1607 = vmatpush.msra.mxu0 %v1594
  %1608 = vmatpush.msra.mxu0 %v1593
  %1609 = vmatpush.msra.mxu0 %v1592
  %1610 = vmatpush.msra.mxu0 %v1591
  %1611 = vmatpush.msra.mxu0 %v1590
  %1612 = vmatpush.msra.mxu0 %v1589
  %1613 = vmatpush.msra.mxu0 %v1588
  %1614 = vmatpush.msra.mxu0 %v1587
  %1615 = vmatpush.msra.mxu0 %v1586
  %1616 = vmatpush.msra.mxu0 %v1585
  %1617 = vmatpush.msra.mxu0 %v1584
  %1618 = vmatpush.msra.mxu0 %v1583
  %1619 = vmatmul.f32.gmra.mxu0 %v44
  %v1620 = vpop.f32.mrf.mxu0
  %v1621 = vadd.f32 %v168, %v1620
  %1622 = vmatmul.f32.gmra.mxu0 %v46
  %v1623 = vpop.f32.mrf.mxu0
  %v1624 = vadd.f32 %v173, %v1623
  %1625 = vmatmul.f32.gmra.mxu0 %v48
  %v1626 = vpop.f32.mrf.mxu0
  %v1627 = vadd.f32 %v178, %v1626
  %1628 = vmatmul.f32.gmra.mxu0 %v50
  %v1629 = vpop.f32.mrf.mxu0
  %v1630 = vadd.f32 %v183, %v1629
  %1631 = vmatmul.f32.gmra.mxu0 %v52
  %v1632 = vpop.f32.mrf.mxu0
  %v1633 = vadd.f32 %v188, %v1632
  %1634 = vmatmul.f32.gmra.mxu0 %v54
  %v1635 = vpop.f32.mrf.mxu0
  %v1636 = vadd.f32 %v193, %v1635
  %1637 = vmatmul.f32.gmra.mxu0 %v56
  %v1638 = vpop.f32.mrf.mxu0
  %v1639 = vadd.f32 %v198, %v1638
  %1640 = vmatmul.f32.gmra.mxu0 %v58
  %v1641 = vpop.f32.mrf.mxu0
  %v1642 = vadd.f32 %v203, %v1641
  %1643 = vmatmul.f32.gmra.mxu0 %v60
  %v1644 = vpop.f32.mrf.mxu0
  %v1645 = vadd.f32 %v208, %v1644
  %1646 = vdwg.mxu0
  %1647 = vmatpush.msra.mxu0 0.0
  %1648 = vmatpush.msra.mxu0 0.0
  %1649 = vmatpush.msra.mxu0 0.0
  %1650 = vmatpush.msra.mxu0 0.0
  %1651 = vmatpush.msra.mxu0 0.0
  %1652 = vmatpush.msra.mxu0 0.0
  %1653 = vmatpush.msra.mxu0 0.0
  %1654 = vmatpush.msra.mxu0 0.0
  %1655 = vmatpush.msra.mxu0 0.0
  %1656 = vmatpush.msra.mxu0 0.0
  %1657 = vmatpush.msra.mxu0 0.0
  %1658 = vmatpush.msra.mxu0 0.0
  %1659 = vmatpush.msra.mxu0 %v1602
  %1660 = vmatpush.msra.mxu0 %v1601
  %1661 = vmatpush.msra.mxu0 %v1600
  %1662 = vmatpush.msra.mxu0 %v1599
  %1663 = vmatmul.f32.gmra.mxu0 %v212
  %v1664 = vpop.f32.mrf.mxu0
  %v1665 = vadd.f32 %v1621, %v1664
  %1666 = vmatmul.f32.gmra.mxu0 %v215
  %v1667 = vpop.f32.mrf.mxu0
  %v1668 = vadd.f32 %v1624, %v1667
  %1669 = vmatmul.f32.gmra.mxu0 %v218
  %v1670 = vpop.f32.mrf.mxu0
  %v1671 = vadd.f32 %v1627, %v1670
  %1672 = vmatmul.f32.gmra.mxu0 %v221
  %v1673 = vpop.f32.mrf.mxu0
  %v1674 = vadd.f32 %v1630, %v1673
  %1675 = vmatmul.f32.gmra.mxu0 %v224
  %v1676 = vpop.f32.mrf.mxu0
  %v1677 = vadd.f32 %v1633, %v1676
  %1678 = vmatmul.f32.gmra.mxu0 %v227
  %v1679 = vpop.f32.mrf.mxu0
  %v1680 = vadd.f32 %v1636, %v1679
  %1681 = vmatmul.f32.gmra.mxu0 %v230
  %v1682 = vpop.f32.mrf.mxu0
  %v1683 = vadd.f32 %v1639, %v1682
  %1684 = vmatmul.f32.gmra.mxu0 %v233
  %v1685 = vpop.f32.mrf.mxu0
  %v1686 = vadd.f32 %v1642, %v1685
  %1687 = vmatmul.f32.gmra.mxu0 %v236
  %v1688 = vpop.f32.mrf.mxu0
  %v1689 = vadd.f32 %v1645, %v1688
  %1690 = vdwg.mxu0
  %1691 = vmatpush.msra.mxu0 %v1598
  %1692 = vmatpush.msra.mxu0 %v1597
  %1693 = vmatpush.msra.mxu0 %v1596
  %1694 = vmatpush.msra.mxu0 %v1595
  %1695 = vmatpush.msra.mxu0 %v1594
  %1696 = vmatpush.msra.mxu0 %v1593
  %1697 = vmatpush.msra.mxu0 %v1592
  %1698 = vmatpush.msra.mxu0 %v1591
  %1699 = vmatpush.msra.mxu0 %v1590
  %1700 = vmatpush.msra.mxu0 %v1589
  %1701 = vmatpush.msra.mxu0 %v1588
  %1702 = vmatpush.msra.mxu0 %v1587
  %1703 = vmatpush.msra.mxu0 %v1586
  %1704 = vmatpush.msra.mxu0 %v1585
  %1705 = vmatpush.msra.mxu0 %v1584
  %1706 = vmatpush.msra.mxu0 %v1583
  %1707 = vmatmul.f32.gmra.mxu0 %v62
  %v1708 = vpop.f32.mrf.mxu0
  %v1709 = vadd.f32 %v168, %v1708
  %1710 = vmatmul.f32.gmra.mxu0 %v64
  %v1711 = vpop.f32.mrf.mxu0
  %v1712 = vadd.f32 %v173, %v1711
  %1713 = vmatmul.f32.gmra.mxu0 %v66
  %v1714 = vpop.f32.mrf.mxu0
  %v1715 = vadd.f32 %v178, %v1714
  %1716 = vmatmul.f32.gmra.mxu0 %v68
  %v1717 = vpop.f32.mrf.mxu0
  %v1718 = vadd.f32 %v183, %v1717
  %1719 = vmatmul.f32.gmra.mxu0 %v70
  %v1720 = vpop.f32.mrf.mxu0
  %v1721 = vadd.f32 %v188, %v1720
  %1722 = vmatmul.f32.gmra.mxu0 %v72
  %v1723 = vpop.f32.mrf.mxu0
  %v1724 = vadd.f32 %v193, %v1723
  %1725 = vmatmul.f32.gmra.mxu0 %v74
  %v1726 = vpop.f32.mrf.mxu0
  %v1727 = vadd.f32 %v198, %v1726
  %1728 = vmatmul.f32.gmra.mxu0 %v76
  %v1729 = vpop.f32.mrf.mxu0
  %v1730 = vadd.f32 %v203, %v1729
  %1731 = vmatmul.f32.gmra.mxu0 %v78
  %v1732 = vpop.f32.mrf.mxu0
  %v1733 = vadd.f32 %v208, %v1732
  %1734 = vdwg.mxu0
  %1735 = vmatpush.msra.mxu0 0.0
  %1736 = vmatpush.msra.mxu0 0.0
  %1737 = vmatpush.msra.mxu0 0.0
  %1738 = vmatpush.msra.mxu0 0.0
  %1739 = vmatpush.msra.mxu0 0.0
  %1740 = vmatpush.msra.mxu0 0.0
  %1741 = vmatpush.msra.mxu0 0.0
  %1742 = vmatpush.msra.mxu0 0.0
  %1743 = vmatpush.msra.mxu0 0.0
  %1744 = vmatpush.msra.mxu0 0.0
  %1745 = vmatpush.msra.mxu0 0.0
  %1746 = vmatpush.msra.mxu0 0.0
  %1747 = vmatpush.msra.mxu0 %v1602
  %1748 = vmatpush.msra.mxu0 %v1601
  %1749 = vmatpush.msra.mxu0 %v1600
  %1750 = vmatpush.msra.mxu0 %v1599
  %1751 = vmatmul.f32.gmra.mxu0 %v327
  %v1752 = vpop.f32.mrf.mxu0
  %v1753 = vadd.f32 %v1709, %v1752
  %1754 = vmatmul.f32.gmra.mxu0 %v330
  %v1755 = vpop.f32.mrf.mxu0
  %v1756 = vadd.f32 %v1712, %v1755
  %1757 = vmatmul.f32.gmra.mxu0 %v333
  %v1758 = vpop.f32.mrf.mxu0
  %v1759 = vadd.f32 %v1715, %v1758
  %1760 = vmatmul.f32.gmra.mxu0 %v336
  %v1761 = vpop.f32.mrf.mxu0
  %v1762 = vadd.f32 %v1718, %v1761
  %1763 = vmatmul.f32.gmra.mxu0 %v339
  %v1764 = vpop.f32.mrf.mxu0
  %v1765 = vadd.f32 %v1721, %v1764
  %1766 = vmatmul.f32.gmra.mxu0 %v342
  %v1767 = vpop.f32.mrf.mxu0
  %v1768 = vadd.f32 %v1724, %v1767
  %1769 = vmatmul.f32.gmra.mxu0 %v345
  %v1770 = vpop.f32.mrf.mxu0
  %v1771 = vadd.f32 %v1727, %v1770
  %1772 = vmatmul.f32.gmra.mxu0 %v348
  %v1773 = vpop.f32.mrf.mxu0
  %v1774 = vadd.f32 %v1730, %v1773
  %1775 = vmatmul.f32.gmra.mxu0 %v351
  %v1776 = vpop.f32.mrf.mxu0
  %v1777 = vadd.f32 %v1733, %v1776
  %1778 = vdwg.mxu0
  %v1779 = vmax.f32 %v1665, %v1753
  %v1780 = vmax.f32 %v1668, %v1756
  %v1781 = vmax.f32 %v1671, %v1759
  %v1782 = vmax.f32 %v1674, %v1762
  %v1783 = vmax.f32 %v1677, %v1765
  %v1784 = vmax.f32 %v1680, %v1768
  %v1785 = vmax.f32 %v1683, %v1771
  %v1786 = vmax.f32 %v1686, %v1774
  %v1787 = vmax.f32 %v1689, %v1777
  %v1788 = vmax.f32 %v1779, 0.0
  %v1789 = vmax.f32 %v1780, 0.0
  %v1790 = vmax.f32 %v1781, 0.0
  %v1791 = vmax.f32 %v1782, 0.0
  %v1792 = vmax.f32 %v1783, 0.0
  %v1793 = vmax.f32 %v1784, 0.0
  %v1794 = vmax.f32 %v1785, 0.0
  %v1795 = vmax.f32 %v1786, 0.0
  %v1796 = vmax.f32 %v1787, 0.0
  %v1797 = vld [vmem:[%s0 + $0xe0] sm:$0xff]
  %v1798 = vld [vmem:[%s0 + $0xe8] sm:$0xff]
  %v1799 = vld [vmem:[%s0 + $0xf0] sm:$0xff]
  %v1800 = vld [vmem:[%s0 + $0xf8] sm:$0xff]
  %v1801 = vld [vmem:[%s0 + $0x100] sm:$0xff]
  %v1802 = vld [vmem:[%s0 + $0x108] sm:$0xff]
  %v1803 = vld [vmem:[%s0 + $0x110] sm:$0xff]
  %v1804 = vld [vmem:[%s0 + $0x118] sm:$0xff]
  %v1805 = vld [vmem:[%s0 + $0x120] sm:$0xff]
  %v1806 = vld [vmem:[%s0 + $0x128] sm:$0xff]
  %v1807 = vld [vmem:[%s0 + $0x130] sm:$0xff]
  %v1808 = vld [vmem:[%s0 + $0x138] sm:$0xff]
  %v1809 = vld [vmem:[%s0 + $0x140] sm:$0xff]
  %v1810 = vld [vmem:[%s0 + $0x148] sm:$0xff]
  %v1811 = vld [vmem:[%s0 + $0x150] sm:$0xff]
  %v1812 = vld [vmem:[%s0 + $0x158] sm:$0xff]
  %v1813 = vld [vmem:[%s0 + $0x160] sm:$0xff]
  %v1814 = vld [vmem:[%s0 + $0x168] sm:$0xff]
  %v1815 = vld [vmem:[%s0 + $0x170] sm:$0xff]
  %v1816 = vld [vmem:[%s0 + $0x178] sm:$0xff]
  %1817 = vmatpush.msra.mxu0 %v1812
  %1818 = vmatpush.msra.mxu0 %v1811
  %1819 = vmatpush.msra.mxu0 %v1810
  %1820 = vmatpush.msra.mxu0 %v1809
  %1821 = vmatpush.msra.mxu0 %v1808
  %1822 = vmatpush.msra.mxu0 %v1807
  %1823 = vmatpush.msra.mxu0 %v1806
  %1824 = vmatpush.msra.mxu0 %v1805
  %1825 = vmatpush.msra.mxu0 %v1804
  %1826 = vmatpush.msra.mxu0 %v1803
  %1827 = vmatpush.msra.mxu0 %v1802
  %1828 = vmatpush.msra.mxu0 %v1801
  %1829 = vmatpush.msra.mxu0 %v1800
  %1830 = vmatpush.msra.mxu0 %v1799
  %1831 = vmatpush.msra.mxu0 %v1798
  %1832 = vmatpush.msra.mxu0 %v1797
  %1833 = vmatmul.f32.gmra.mxu0 %v44
  %v1834 = vpop.f32.mrf.mxu0
  %v1835 = vadd.f32 %v168, %v1834
  %1836 = vmatmul.f32.gmra.mxu0 %v46
  %v1837 = vpop.f32.mrf.mxu0
  %v1838 = vadd.f32 %v173, %v1837
  %1839 = vmatmul.f32.gmra.mxu0 %v48
  %v1840 = vpop.f32.mrf.mxu0
  %v1841 = vadd.f32 %v178, %v1840
  %1842 = vmatmul.f32.gmra.mxu0 %v50
  %v1843 = vpop.f32.mrf.mxu0
  %v1844 = vadd.f32 %v183, %v1843
  %1845 = vmatmul.f32.gmra.mxu0 %v52
  %v1846 = vpop.f32.mrf.mxu0
  %v1847 = vadd.f32 %v188, %v1846
  %1848 = vmatmul.f32.gmra.mxu0 %v54
  %v1849 = vpop.f32.mrf.mxu0
  %v1850 = vadd.f32 %v193, %v1849
  %1851 = vmatmul.f32.gmra.mxu0 %v56
  %v1852 = vpop.f32.mrf.mxu0
  %v1853 = vadd.f32 %v198, %v1852
  %1854 = vmatmul.f32.gmra.mxu0 %v58
  %v1855 = vpop.f32.mrf.mxu0
  %v1856 = vadd.f32 %v203, %v1855
  %1857 = vmatmul.f32.gmra.mxu0 %v60
  %v1858 = vpop.f32.mrf.mxu0
  %v1859 = vadd.f32 %v208, %v1858
  %1860 = vdwg.mxu0
  %1861 = vmatpush.msra.mxu0 0.0
  %1862 = vmatpush.msra.mxu0 0.0
  %1863 = vmatpush.msra.mxu0 0.0
  %1864 = vmatpush.msra.mxu0 0.0
  %1865 = vmatpush.msra.mxu0 0.0
  %1866 = vmatpush.msra.mxu0 0.0
  %1867 = vmatpush.msra.mxu0 0.0
  %1868 = vmatpush.msra.mxu0 0.0
  %1869 = vmatpush.msra.mxu0 0.0
  %1870 = vmatpush.msra.mxu0 0.0
  %1871 = vmatpush.msra.mxu0 0.0
  %1872 = vmatpush.msra.mxu0 0.0
  %1873 = vmatpush.msra.mxu0 %v1816
  %1874 = vmatpush.msra.mxu0 %v1815
  %1875 = vmatpush.msra.mxu0 %v1814
  %1876 = vmatpush.msra.mxu0 %v1813
  %1877 = vmatmul.f32.gmra.mxu0 %v212
  %v1878 = vpop.f32.mrf.mxu0
  %v1879 = vadd.f32 %v1835, %v1878
  %1880 = vmatmul.f32.gmra.mxu0 %v215
  %v1881 = vpop.f32.mrf.mxu0
  %v1882 = vadd.f32 %v1838, %v1881
  %1883 = vmatmul.f32.gmra.mxu0 %v218
  %v1884 = vpop.f32.mrf.mxu0
  %v1885 = vadd.f32 %v1841, %v1884
  %1886 = vmatmul.f32.gmra.mxu0 %v221
  %v1887 = vpop.f32.mrf.mxu0
  %v1888 = vadd.f32 %v1844, %v1887
  %1889 = vmatmul.f32.gmra.mxu0 %v224
  %v1890 = vpop.f32.mrf.mxu0
  %v1891 = vadd.f32 %v1847, %v1890
  %1892 = vmatmul.f32.gmra.mxu0 %v227
  %v1893 = vpop.f32.mrf.mxu0
  %v1894 = vadd.f32 %v1850, %v1893
  %1895 = vmatmul.f32.gmra.mxu0 %v230
  %v1896 = vpop.f32.mrf.mxu0
  %v1897 = vadd.f32 %v1853, %v1896
  %1898 = vmatmul.f32.gmra.mxu0 %v233
  %v1899 = vpop.f32.mrf.mxu0
  %v1900 = vadd.f32 %v1856, %v1899
  %1901 = vmatmul.f32.gmra.mxu0 %v236
  %v1902 = vpop.f32.mrf.mxu0
  %v1903 = vadd.f32 %v1859, %v1902
  %1904 = vdwg.mxu0
  %1905 = vmatpush.msra.mxu0 %v1812
  %1906 = vmatpush.msra.mxu0 %v1811
  %1907 = vmatpush.msra.mxu0 %v1810
  %1908 = vmatpush.msra.mxu0 %v1809
  %1909 = vmatpush.msra.mxu0 %v1808
  %1910 = vmatpush.msra.mxu0 %v1807
  %1911 = vmatpush.msra.mxu0 %v1806
  %1912 = vmatpush.msra.mxu0 %v1805
  %1913 = vmatpush.msra.mxu0 %v1804
  %1914 = vmatpush.msra.mxu0 %v1803
  %1915 = vmatpush.msra.mxu0 %v1802
  %1916 = vmatpush.msra.mxu0 %v1801
  %1917 = vmatpush.msra.mxu0 %v1800
  %1918 = vmatpush.msra.mxu0 %v1799
  %1919 = vmatpush.msra.mxu0 %v1798
  %1920 = vmatpush.msra.mxu0 %v1797
  %1921 = vmatmul.f32.gmra.mxu0 %v62
  %v1922 = vpop.f32.mrf.mxu0
  %v1923 = vadd.f32 %v168, %v1922
  %1924 = vmatmul.f32.gmra.mxu0 %v64
  %v1925 = vpop.f32.mrf.mxu0
  %v1926 = vadd.f32 %v173, %v1925
  %1927 = vmatmul.f32.gmra.mxu0 %v66
  %v1928 = vpop.f32.mrf.mxu0
  %v1929 = vadd.f32 %v178, %v1928
  %1930 = vmatmul.f32.gmra.mxu0 %v68
  %v1931 = vpop.f32.mrf.mxu0
  %v1932 = vadd.f32 %v183, %v1931
  %1933 = vmatmul.f32.gmra.mxu0 %v70
  %v1934 = vpop.f32.mrf.mxu0
  %v1935 = vadd.f32 %v188, %v1934
  %1936 = vmatmul.f32.gmra.mxu0 %v72
  %v1937 = vpop.f32.mrf.mxu0
  %v1938 = vadd.f32 %v193, %v1937
  %1939 = vmatmul.f32.gmra.mxu0 %v74
  %v1940 = vpop.f32.mrf.mxu0
  %v1941 = vadd.f32 %v198, %v1940
  %1942 = vmatmul.f32.gmra.mxu0 %v76
  %v1943 = vpop.f32.mrf.mxu0
  %v1944 = vadd.f32 %v203, %v1943
  %1945 = vmatmul.f32.gmra.mxu0 %v78
  %v1946 = vpop.f32.mrf.mxu0
  %v1947 = vadd.f32 %v208, %v1946
  %1948 = vdwg.mxu0
  %1949 = vmatpush.msra.mxu0 0.0
  %1950 = vmatpush.msra.mxu0 0.0
  %1951 = vmatpush.msra.mxu0 0.0
  %1952 = vmatpush.msra.mxu0 0.0
  %1953 = vmatpush.msra.mxu0 0.0
  %1954 = vmatpush.msra.mxu0 0.0
  %1955 = vmatpush.msra.mxu0 0.0
  %1956 = vmatpush.msra.mxu0 0.0
  %1957 = vmatpush.msra.mxu0 0.0
  %1958 = vmatpush.msra.mxu0 0.0
  %1959 = vmatpush.msra.mxu0 0.0
  %1960 = vmatpush.msra.mxu0 0.0
  %1961 = vmatpush.msra.mxu0 %v1816
  %1962 = vmatpush.msra.mxu0 %v1815
  %1963 = vmatpush.msra.mxu0 %v1814
  %1964 = vmatpush.msra.mxu0 %v1813
  %1965 = vmatmul.f32.gmra.mxu0 %v327
  %v1966 = vpop.f32.mrf.mxu0
  %v1967 = vadd.f32 %v1923, %v1966
  %1968 = vmatmul.f32.gmra.mxu0 %v330
  %v1969 = vpop.f32.mrf.mxu0
  %v1970 = vadd.f32 %v1926, %v1969
  %1971 = vmatmul.f32.gmra.mxu0 %v333
  %v1972 = vpop.f32.mrf.mxu0
  %v1973 = vadd.f32 %v1929, %v1972
  %1974 = vmatmul.f32.gmra.mxu0 %v336
  %v1975 = vpop.f32.mrf.mxu0
  %v1976 = vadd.f32 %v1932, %v1975
  %1977 = vmatmul.f32.gmra.mxu0 %v339
  %v1978 = vpop.f32.mrf.mxu0
  %v1979 = vadd.f32 %v1935, %v1978
  %1980 = vmatmul.f32.gmra.mxu0 %v342
  %v1981 = vpop.f32.mrf.mxu0
  %v1982 = vadd.f32 %v1938, %v1981
  %1983 = vmatmul.f32.gmra.mxu0 %v345
  %v1984 = vpop.f32.mrf.mxu0
  %v1985 = vadd.f32 %v1941, %v1984
  %1986 = vmatmul.f32.gmra.mxu0 %v348
  %v1987 = vpop.f32.mrf.mxu0
  %v1988 = vadd.f32 %v1944, %v1987
  %1989 = vmatmul.f32.gmra.mxu0 %v351
  %v1990 = vpop.f32.mrf.mxu0
  %v1991 = vadd.f32 %v1947, %v1990
  %1992 = vdwg.mxu0
  %v1993 = vmax.f32 %v1879, %v1967
  %v1994 = vmax.f32 %v1882, %v1970
  %v1995 = vmax.f32 %v1885, %v1973
  %v1996 = vmax.f32 %v1888, %v1976
  %v1997 = vmax.f32 %v1891, %v1979
  %v1998 = vmax.f32 %v1894, %v1982
  %v1999 = vmax.f32 %v1897, %v1985
  %v2000 = vmax.f32 %v1900, %v1988
  %v2001 = vmax.f32 %v1903, %v1991
  %v2002 = vmax.f32 %v1993, 0.0
  %v2003 = vmax.f32 %v1994, 0.0
  %v2004 = vmax.f32 %v1995, 0.0
  %v2005 = vmax.f32 %v1996, 0.0
  %v2006 = vmax.f32 %v1997, 0.0
  %v2007 = vmax.f32 %v1998, 0.0
  %v2008 = vmax.f32 %v1999, 0.0
  %v2009 = vmax.f32 %v2000, 0.0
  %v2010 = vmax.f32 %v2001, 0.0
  %v2011 = vmax.f32 %v1788, %v2002
  %v2012 = vmax.f32 %v1789, %v2003
  %v2013 = vmax.f32 %v1790, %v2004
  %v2014 = vmax.f32 %v1791, %v2005
  %v2015 = vmax.f32 %v1792, %v2006
  %v2016 = vmax.f32 %v1793, %v2007
  %v2017 = vmax.f32 %v1794, %v2008
  %v2018 = vmax.f32 %v1795, %v2009
  %v2019 = vmax.f32 %v1796, %v2010
  %2020 = vst [vmem:[#allocation2 + $0xd8] sm:$0xff] %v2011
  %2021 = vst [vmem:[#allocation2 + $0xe0] sm:$0xff] %v2012
  %2022 = vst [vmem:[#allocation2 + $0xe8] sm:$0xff] %v2013
  %2023 = vst [vmem:[#allocation2 + $0xf0] sm:$0xff] %v2014
  %2024 = vst [vmem:[#allocation2 + $0xf8] sm:$0xff] %v2015
  %2025 = vst [vmem:[#allocation2 + $0x100] sm:$0xff] %v2016
  %2026 = vst [vmem:[#allocation2 + $0x108] sm:$0xff] %v2017
  %2027 = vst [vmem:[#allocation2 + $0x110] sm:$0xff] %v2018
  %2028 = vst [vmem:[#allocation2 + $0x118] sm:$0xff] %v2019
  %v2029 = vld [vmem:[%s0 + $0x100] sm:$0xff]
  %v2030 = vld [vmem:[%s0 + $0x108] sm:$0xff]
  %v2031 = vld [vmem:[%s0 + $0x110] sm:$0xff]
  %v2032 = vld [vmem:[%s0 + $0x118] sm:$0xff]
  %v2033 = vld [vmem:[%s0 + $0x120] sm:$0xff]
  %v2034 = vld [vmem:[%s0 + $0x128] sm:$0xff]
  %v2035 = vld [vmem:[%s0 + $0x130] sm:$0xff]
  %v2036 = vld [vmem:[%s0 + $0x138] sm:$0xff]
  %v2037 = vld [vmem:[%s0 + $0x140] sm:$0xff]
  %v2038 = vld [vmem:[%s0 + $0x148] sm:$0xff]
  %v2039 = vld [vmem:[%s0 + $0x150] sm:$0xff]
  %v2040 = vld [vmem:[%s0 + $0x158] sm:$0xff]
  %v2041 = vld [vmem:[%s0 + $0x160] sm:$0xff]
  %v2042 = vld [vmem:[%s0 + $0x168] sm:$0xff]
  %v2043 = vld [vmem:[%s0 + $0x170] sm:$0xff]
  %v2044 = vld [vmem:[%s0 + $0x178] sm:$0xff]
  %v2045 = vld [vmem:[%s0 + $0x180] sm:$0xff]
  %v2046 = vld [vmem:[%s0 + $0x188] sm:$0xff]
  %v2047 = vld [vmem:[%s0 + $0x190] sm:$0xff]
  %v2048 = vld [vmem:[%s0 + $0x198] sm:$0xff]
  %2049 = vmatpush.msra.mxu0 %v2044
  %2050 = vmatpush.msra.mxu0 %v2043
  %2051 = vmatpush.msra.mxu0 %v2042
  %2052 = vmatpush.msra.mxu0 %v2041
  %2053 = vmatpush.msra.mxu0 %v2040
  %2054 = vmatpush.msra.mxu0 %v2039
  %2055 = vmatpush.msra.mxu0 %v2038
  %2056 = vmatpush.msra.mxu0 %v2037
  %2057 = vmatpush.msra.mxu0 %v2036
  %2058 = vmatpush.msra.mxu0 %v2035
  %2059 = vmatpush.msra.mxu0 %v2034
  %2060 = vmatpush.msra.mxu0 %v2033
  %2061 = vmatpush.msra.mxu0 %v2032
  %2062 = vmatpush.msra.mxu0 %v2031
  %2063 = vmatpush.msra.mxu0 %v2030
  %2064 = vmatpush.msra.mxu0 %v2029
  %2065 = vmatmul.f32.gmra.mxu0 %v44
  %v2066 = vpop.f32.mrf.mxu0
  %v2067 = vadd.f32 %v168, %v2066
  %2068 = vmatmul.f32.gmra.mxu0 %v46
  %v2069 = vpop.f32.mrf.mxu0
  %v2070 = vadd.f32 %v173, %v2069
  %2071 = vmatmul.f32.gmra.mxu0 %v48
  %v2072 = vpop.f32.mrf.mxu0
  %v2073 = vadd.f32 %v178, %v2072
  %2074 = vmatmul.f32.gmra.mxu0 %v50
  %v2075 = vpop.f32.mrf.mxu0
  %v2076 = vadd.f32 %v183, %v2075
  %2077 = vmatmul.f32.gmra.mxu0 %v52
  %v2078 = vpop.f32.mrf.mxu0
  %v2079 = vadd.f32 %v188, %v2078
  %2080 = vmatmul.f32.gmra.mxu0 %v54
  %v2081 = vpop.f32.mrf.mxu0
  %v2082 = vadd.f32 %v193, %v2081
  %2083 = vmatmul.f32.gmra.mxu0 %v56
  %v2084 = vpop.f32.mrf.mxu0
  %v2085 = vadd.f32 %v198, %v2084
  %2086 = vmatmul.f32.gmra.mxu0 %v58
  %v2087 = vpop.f32.mrf.mxu0
  %v2088 = vadd.f32 %v203, %v2087
  %2089 = vmatmul.f32.gmra.mxu0 %v60
  %v2090 = vpop.f32.mrf.mxu0
  %v2091 = vadd.f32 %v208, %v2090
  %2092 = vdwg.mxu0
  %2093 = vmatpush.msra.mxu0 0.0
  %2094 = vmatpush.msra.mxu0 0.0
  %2095 = vmatpush.msra.mxu0 0.0
  %2096 = vmatpush.msra.mxu0 0.0
  %2097 = vmatpush.msra.mxu0 0.0
  %2098 = vmatpush.msra.mxu0 0.0
  %2099 = vmatpush.msra.mxu0 0.0
  %2100 = vmatpush.msra.mxu0 0.0
  %2101 = vmatpush.msra.mxu0 0.0
  %2102 = vmatpush.msra.mxu0 0.0
  %2103 = vmatpush.msra.mxu0 0.0
  %2104 = vmatpush.msra.mxu0 0.0
  %2105 = vmatpush.msra.mxu0 %v2048
  %2106 = vmatpush.msra.mxu0 %v2047
  %2107 = vmatpush.msra.mxu0 %v2046
  %2108 = vmatpush.msra.mxu0 %v2045
  %2109 = vmatmul.f32.gmra.mxu0 %v212
  %v2110 = vpop.f32.mrf.mxu0
  %v2111 = vadd.f32 %v2067, %v2110
  %2112 = vmatmul.f32.gmra.mxu0 %v215
  %v2113 = vpop.f32.mrf.mxu0
  %v2114 = vadd.f32 %v2070, %v2113
  %2115 = vmatmul.f32.gmra.mxu0 %v218
  %v2116 = vpop.f32.mrf.mxu0
  %v2117 = vadd.f32 %v2073, %v2116
  %2118 = vmatmul.f32.gmra.mxu0 %v221
  %v2119 = vpop.f32.mrf.mxu0
  %v2120 = vadd.f32 %v2076, %v2119
  %2121 = vmatmul.f32.gmra.mxu0 %v224
  %v2122 = vpop.f32.mrf.mxu0
  %v2123 = vadd.f32 %v2079, %v2122
  %2124 = vmatmul.f32.gmra.mxu0 %v227
  %v2125 = vpop.f32.mrf.mxu0
  %v2126 = vadd.f32 %v2082, %v2125
  %2127 = vmatmul.f32.gmra.mxu0 %v230
  %v2128 = vpop.f32.mrf.mxu0
  %v2129 = vadd.f32 %v2085, %v2128
  %2130 = vmatmul.f32.gmra.mxu0 %v233
  %v2131 = vpop.f32.mrf.mxu0
  %v2132 = vadd.f32 %v2088, %v2131
  %2133 = vmatmul.f32.gmra.mxu0 %v236
  %v2134 = vpop.f32.mrf.mxu0
  %v2135 = vadd.f32 %v2091, %v2134
  %2136 = vdwg.mxu0
  %2137 = vmatpush.msra.mxu0 %v2044
  %2138 = vmatpush.msra.mxu0 %v2043
  %2139 = vmatpush.msra.mxu0 %v2042
  %2140 = vmatpush.msra.mxu0 %v2041
  %2141 = vmatpush.msra.mxu0 %v2040
  %2142 = vmatpush.msra.mxu0 %v2039
  %2143 = vmatpush.msra.mxu0 %v2038
  %2144 = vmatpush.msra.mxu0 %v2037
  %2145 = vmatpush.msra.mxu0 %v2036
  %2146 = vmatpush.msra.mxu0 %v2035
  %2147 = vmatpush.msra.mxu0 %v2034
  %2148 = vmatpush.msra.mxu0 %v2033
  %2149 = vmatpush.msra.mxu0 %v2032
  %2150 = vmatpush.msra.mxu0 %v2031
  %2151 = vmatpush.msra.mxu0 %v2030
  %2152 = vmatpush.msra.mxu0 %v2029
  %2153 = vmatmul.f32.gmra.mxu0 %v62
  %v2154 = vpop.f32.mrf.mxu0
  %v2155 = vadd.f32 %v168, %v2154
  %2156 = vmatmul.f32.gmra.mxu0 %v64
  %v2157 = vpop.f32.mrf.mxu0
  %v2158 = vadd.f32 %v173, %v2157
  %2159 = vmatmul.f32.gmra.mxu0 %v66
  %v2160 = vpop.f32.mrf.mxu0
  %v2161 = vadd.f32 %v178, %v2160
  %2162 = vmatmul.f32.gmra.mxu0 %v68
  %v2163 = vpop.f32.mrf.mxu0
  %v2164 = vadd.f32 %v183, %v2163
  %2165 = vmatmul.f32.gmra.mxu0 %v70
  %v2166 = vpop.f32.mrf.mxu0
  %v2167 = vadd.f32 %v188, %v2166
  %2168 = vmatmul.f32.gmra.mxu0 %v72
  %v2169 = vpop.f32.mrf.mxu0
  %v2170 = vadd.f32 %v193, %v2169
  %2171 = vmatmul.f32.gmra.mxu0 %v74
  %v2172 = vpop.f32.mrf.mxu0
  %v2173 = vadd.f32 %v198, %v2172
  %2174 = vmatmul.f32.gmra.mxu0 %v76
  %v2175 = vpop.f32.mrf.mxu0
  %v2176 = vadd.f32 %v203, %v2175
  %2177 = vmatmul.f32.gmra.mxu0 %v78
  %v2178 = vpop.f32.mrf.mxu0
  %v2179 = vadd.f32 %v208, %v2178
  %2180 = vdwg.mxu0
  %2181 = vmatpush.msra.mxu0 0.0
  %2182 = vmatpush.msra.mxu0 0.0
  %2183 = vmatpush.msra.mxu0 0.0
  %2184 = vmatpush.msra.mxu0 0.0
  %2185 = vmatpush.msra.mxu0 0.0
  %2186 = vmatpush.msra.mxu0 0.0
  %2187 = vmatpush.msra.mxu0 0.0
  %2188 = vmatpush.msra.mxu0 0.0
  %2189 = vmatpush.msra.mxu0 0.0
  %2190 = vmatpush.msra.mxu0 0.0
  %2191 = vmatpush.msra.mxu0 0.0
  %2192 = vmatpush.msra.mxu0 0.0
  %2193 = vmatpush.msra.mxu0 %v2048
  %2194 = vmatpush.msra.mxu0 %v2047
  %2195 = vmatpush.msra.mxu0 %v2046
  %2196 = vmatpush.msra.mxu0 %v2045
  %2197 = vmatmul.f32.gmra.mxu0 %v327
  %v2198 = vpop.f32.mrf.mxu0
  %v2199 = vadd.f32 %v2155, %v2198
  %2200 = vmatmul.f32.gmra.mxu0 %v330
  %v2201 = vpop.f32.mrf.mxu0
  %v2202 = vadd.f32 %v2158, %v2201
  %2203 = vmatmul.f32.gmra.mxu0 %v333
  %v2204 = vpop.f32.mrf.mxu0
  %v2205 = vadd.f32 %v2161, %v2204
  %2206 = vmatmul.f32.gmra.mxu0 %v336
  %v2207 = vpop.f32.mrf.mxu0
  %v2208 = vadd.f32 %v2164, %v2207
  %2209 = vmatmul.f32.gmra.mxu0 %v339
  %v2210 = vpop.f32.mrf.mxu0
  %v2211 = vadd.f32 %v2167, %v2210
  %2212 = vmatmul.f32.gmra.mxu0 %v342
  %v2213 = vpop.f32.mrf.mxu0
  %v2214 = vadd.f32 %v2170, %v2213
  %2215 = vmatmul.f32.gmra.mxu0 %v345
  %v2216 = vpop.f32.mrf.mxu0
  %v2217 = vadd.f32 %v2173, %v2216
  %2218 = vmatmul.f32.gmra.mxu0 %v348
  %v2219 = vpop.f32.mrf.mxu0
  %v2220 = vadd.f32 %v2176, %v2219
  %2221 = vmatmul.f32.gmra.mxu0 %v351
  %v2222 = vpop.f32.mrf.mxu0
  %v2223 = vadd.f32 %v2179, %v2222
  %2224 = vdwg.mxu0
  %v2225 = vmax.f32 %v2111, %v2199
  %v2226 = vmax.f32 %v2114, %v2202
  %v2227 = vmax.f32 %v2117, %v2205
  %v2228 = vmax.f32 %v2120, %v2208
  %v2229 = vmax.f32 %v2123, %v2211
  %v2230 = vmax.f32 %v2126, %v2214
  %v2231 = vmax.f32 %v2129, %v2217
  %v2232 = vmax.f32 %v2132, %v2220
  %v2233 = vmax.f32 %v2135, %v2223
  %v2234 = vmax.f32 %v2225, 0.0
  %v2235 = vmax.f32 %v2226, 0.0
  %v2236 = vmax.f32 %v2227, 0.0
  %v2237 = vmax.f32 %v2228, 0.0
  %v2238 = vmax.f32 %v2229, 0.0
  %v2239 = vmax.f32 %v2230, 0.0
  %v2240 = vmax.f32 %v2231, 0.0
  %v2241 = vmax.f32 %v2232, 0.0
  %v2242 = vmax.f32 %v2233, 0.0
  %v2243 = vld [vmem:[%s0 + $0x120] sm:$0xff]
  %v2244 = vld [vmem:[%s0 + $0x128] sm:$0xff]
  %v2245 = vld [vmem:[%s0 + $0x130] sm:$0xff]
  %v2246 = vld [vmem:[%s0 + $0x138] sm:$0xff]
  %v2247 = vld [vmem:[%s0 + $0x140] sm:$0xff]
  %v2248 = vld [vmem:[%s0 + $0x148] sm:$0xff]
  %v2249 = vld [vmem:[%s0 + $0x150] sm:$0xff]
  %v2250 = vld [vmem:[%s0 + $0x158] sm:$0xff]
  %v2251 = vld [vmem:[%s0 + $0x160] sm:$0xff]
  %v2252 = vld [vmem:[%s0 + $0x168] sm:$0xff]
  %v2253 = vld [vmem:[%s0 + $0x170] sm:$0xff]
  %v2254 = vld [vmem:[%s0 + $0x178] sm:$0xff]
  %v2255 = vld [vmem:[%s0 + $0x180] sm:$0xff]
  %v2256 = vld [vmem:[%s0 + $0x188] sm:$0xff]
  %v2257 = vld [vmem:[%s0 + $0x190] sm:$0xff]
  %v2258 = vld [vmem:[%s0 + $0x198] sm:$0xff]
  %v2259 = vld [vmem:[%s0 + $0x1a0] sm:$0xff]
  %v2260 = vld [vmem:[%s0 + $0x1a8] sm:$0xff]
  %v2261 = vld [vmem:[%s0 + $0x1b0] sm:$0xff]
  %v2262 = vld [vmem:[%s0 + $0x1b8] sm:$0xff]
  %2263 = vmatpush.msra.mxu0 %v2258
  %2264 = vmatpush.msra.mxu0 %v2257
  %2265 = vmatpush.msra.mxu0 %v2256
  %2266 = vmatpush.msra.mxu0 %v2255
  %2267 = vmatpush.msra.mxu0 %v2254
  %2268 = vmatpush.msra.mxu0 %v2253
  %2269 = vmatpush.msra.mxu0 %v2252
  %2270 = vmatpush.msra.mxu0 %v2251
  %2271 = vmatpush.msra.mxu0 %v2250
  %2272 = vmatpush.msra.mxu0 %v2249
  %2273 = vmatpush.msra.mxu0 %v2248
  %2274 = vmatpush.msra.mxu0 %v2247
  %2275 = vmatpush.msra.mxu0 %v2246
  %2276 = vmatpush.msra.mxu0 %v2245
  %2277 = vmatpush.msra.mxu0 %v2244
  %2278 = vmatpush.msra.mxu0 %v2243
  %2279 = vmatmul.f32.gmra.mxu0 %v44
  %v2280 = vpop.f32.mrf.mxu0
  %v2281 = vadd.f32 %v168, %v2280
  %2282 = vmatmul.f32.gmra.mxu0 %v46
  %v2283 = vpop.f32.mrf.mxu0
  %v2284 = vadd.f32 %v173, %v2283
  %2285 = vmatmul.f32.gmra.mxu0 %v48
  %v2286 = vpop.f32.mrf.mxu0
  %v2287 = vadd.f32 %v178, %v2286
  %2288 = vmatmul.f32.gmra.mxu0 %v50
  %v2289 = vpop.f32.mrf.mxu0
  %v2290 = vadd.f32 %v183, %v2289
  %2291 = vmatmul.f32.gmra.mxu0 %v52
  %v2292 = vpop.f32.mrf.mxu0
  %v2293 = vadd.f32 %v188, %v2292
  %2294 = vmatmul.f32.gmra.mxu0 %v54
  %v2295 = vpop.f32.mrf.mxu0
  %v2296 = vadd.f32 %v193, %v2295
  %2297 = vmatmul.f32.gmra.mxu0 %v56
  %v2298 = vpop.f32.mrf.mxu0
  %v2299 = vadd.f32 %v198, %v2298
  %2300 = vmatmul.f32.gmra.mxu0 %v58
  %v2301 = vpop.f32.mrf.mxu0
  %v2302 = vadd.f32 %v203, %v2301
  %2303 = vmatmul.f32.gmra.mxu0 %v60
  %v2304 = vpop.f32.mrf.mxu0
  %v2305 = vadd.f32 %v208, %v2304
  %2306 = vdwg.mxu0
  %2307 = vmatpush.msra.mxu0 0.0
  %2308 = vmatpush.msra.mxu0 0.0
  %2309 = vmatpush.msra.mxu0 0.0
  %2310 = vmatpush.msra.mxu0 0.0
  %2311 = vmatpush.msra.mxu0 0.0
  %2312 = vmatpush.msra.mxu0 0.0
  %2313 = vmatpush.msra.mxu0 0.0
  %2314 = vmatpush.msra.mxu0 0.0
  %2315 = vmatpush.msra.mxu0 0.0
  %2316 = vmatpush.msra.mxu0 0.0
  %2317 = vmatpush.msra.mxu0 0.0
  %2318 = vmatpush.msra.mxu0 0.0
  %2319 = vmatpush.msra.mxu0 %v2262
  %2320 = vmatpush.msra.mxu0 %v2261
  %2321 = vmatpush.msra.mxu0 %v2260
  %2322 = vmatpush.msra.mxu0 %v2259
  %2323 = vmatmul.f32.gmra.mxu0 %v212
  %v2324 = vpop.f32.mrf.mxu0
  %v2325 = vadd.f32 %v2281, %v2324
  %2326 = vmatmul.f32.gmra.mxu0 %v215
  %v2327 = vpop.f32.mrf.mxu0
  %v2328 = vadd.f32 %v2284, %v2327
  %2329 = vmatmul.f32.gmra.mxu0 %v218
  %v2330 = vpop.f32.mrf.mxu0
  %v2331 = vadd.f32 %v2287, %v2330
  %2332 = vmatmul.f32.gmra.mxu0 %v221
  %v2333 = vpop.f32.mrf.mxu0
  %v2334 = vadd.f32 %v2290, %v2333
  %2335 = vmatmul.f32.gmra.mxu0 %v224
  %v2336 = vpop.f32.mrf.mxu0
  %v2337 = vadd.f32 %v2293, %v2336
  %2338 = vmatmul.f32.gmra.mxu0 %v227
  %v2339 = vpop.f32.mrf.mxu0
  %v2340 = vadd.f32 %v2296, %v2339
  %2341 = vmatmul.f32.gmra.mxu0 %v230
  %v2342 = vpop.f32.mrf.mxu0
  %v2343 = vadd.f32 %v2299, %v2342
  %2344 = vmatmul.f32.gmra.mxu0 %v233
  %v2345 = vpop.f32.mrf.mxu0
  %v2346 = vadd.f32 %v2302, %v2345
  %2347 = vmatmul.f32.gmra.mxu0 %v236
  %v2348 = vpop.f32.mrf.mxu0
  %v2349 = vadd.f32 %v2305, %v2348
  %2350 = vdwg.mxu0
  %2351 = vmatpush.msra.mxu0 %v2258
  %2352 = vmatpush.msra.mxu0 %v2257
  %2353 = vmatpush.msra.mxu0 %v2256
  %2354 = vmatpush.msra.mxu0 %v2255
  %2355 = vmatpush.msra.mxu0 %v2254
  %2356 = vmatpush.msra.mxu0 %v2253
  %2357 = vmatpush.msra.mxu0 %v2252
  %2358 = vmatpush.msra.mxu0 %v2251
  %2359 = vmatpush.msra.mxu0 %v2250
  %2360 = vmatpush.msra.mxu0 %v2249
  %2361 = vmatpush.msra.mxu0 %v2248
  %2362 = vmatpush.msra.mxu0 %v2247
  %2363 = vmatpush.msra.mxu0 %v2246
  %2364 = vmatpush.msra.mxu0 %v2245
  %2365 = vmatpush.msra.mxu0 %v2244
  %2366 = vmatpush.msra.mxu0 %v2243
  %2367 = vmatmul.f32.gmra.mxu0 %v62
  %v2368 = vpop.f32.mrf.mxu0
  %v2369 = vadd.f32 %v168, %v2368
  %2370 = vmatmul.f32.gmra.mxu0 %v64
  %v2371 = vpop.f32.mrf.mxu0
  %v2372 = vadd.f32 %v173, %v2371
  %2373 = vmatmul.f32.gmra.mxu0 %v66
  %v2374 = vpop.f32.mrf.mxu0
  %v2375 = vadd.f32 %v178, %v2374
  %2376 = vmatmul.f32.gmra.mxu0 %v68
  %v2377 = vpop.f32.mrf.mxu0
  %v2378 = vadd.f32 %v183, %v2377
  %2379 = vmatmul.f32.gmra.mxu0 %v70
  %v2380 = vpop.f32.mrf.mxu0
  %v2381 = vadd.f32 %v188, %v2380
  %2382 = vmatmul.f32.gmra.mxu0 %v72
  %v2383 = vpop.f32.mrf.mxu0
  %v2384 = vadd.f32 %v193, %v2383
  %2385 = vmatmul.f32.gmra.mxu0 %v74
  %v2386 = vpop.f32.mrf.mxu0
  %v2387 = vadd.f32 %v198, %v2386
  %2388 = vmatmul.f32.gmra.mxu0 %v76
  %v2389 = vpop.f32.mrf.mxu0
  %v2390 = vadd.f32 %v203, %v2389
  %2391 = vmatmul.f32.gmra.mxu0 %v78
  %v2392 = vpop.f32.mrf.mxu0
  %v2393 = vadd.f32 %v208, %v2392
  %2394 = vdwg.mxu0
  %2395 = vmatpush.msra.mxu0 0.0
  %2396 = vmatpush.msra.mxu0 0.0
  %2397 = vmatpush.msra.mxu0 0.0
  %2398 = vmatpush.msra.mxu0 0.0
  %2399 = vmatpush.msra.mxu0 0.0
  %2400 = vmatpush.msra.mxu0 0.0
  %2401 = vmatpush.msra.mxu0 0.0
  %2402 = vmatpush.msra.mxu0 0.0
  %2403 = vmatpush.msra.mxu0 0.0
  %2404 = vmatpush.msra.mxu0 0.0
  %2405 = vmatpush.msra.mxu0 0.0
  %2406 = vmatpush.msra.mxu0 0.0
  %2407 = vmatpush.msra.mxu0 %v2262
  %2408 = vmatpush.msra.mxu0 %v2261
  %2409 = vmatpush.msra.mxu0 %v2260
  %2410 = vmatpush.msra.mxu0 %v2259
  %2411 = vmatmul.f32.gmra.mxu0 %v327
  %v2412 = vpop.f32.mrf.mxu0
  %v2413 = vadd.f32 %v2369, %v2412
  %2414 = vmatmul.f32.gmra.mxu0 %v330
  %v2415 = vpop.f32.mrf.mxu0
  %v2416 = vadd.f32 %v2372, %v2415
  %2417 = vmatmul.f32.gmra.mxu0 %v333
  %v2418 = vpop.f32.mrf.mxu0
  %v2419 = vadd.f32 %v2375, %v2418
  %2420 = vmatmul.f32.gmra.mxu0 %v336
  %v2421 = vpop.f32.mrf.mxu0
  %v2422 = vadd.f32 %v2378, %v2421
  %2423 = vmatmul.f32.gmra.mxu0 %v339
  %v2424 = vpop.f32.mrf.mxu0
  %v2425 = vadd.f32 %v2381, %v2424
  %2426 = vmatmul.f32.gmra.mxu0 %v342
  %v2427 = vpop.f32.mrf.mxu0
  %v2428 = vadd.f32 %v2384, %v2427
  %2429 = vmatmul.f32.gmra.mxu0 %v345
  %v2430 = vpop.f32.mrf.mxu0
  %v2431 = vadd.f32 %v2387, %v2430
  %2432 = vmatmul.f32.gmra.mxu0 %v348
  %v2433 = vpop.f32.mrf.mxu0
  %v2434 = vadd.f32 %v2390, %v2433
  %2435 = vmatmul.f32.gmra.mxu0 %v351
  %v2436 = vpop.f32.mrf.mxu0
  %v2437 = vadd.f32 %v2393, %v2436
  %2438 = vdwg.mxu0
  %v2439 = vmax.f32 %v2325, %v2413
  %v2440 = vmax.f32 %v2328, %v2416
  %v2441 = vmax.f32 %v2331, %v2419
  %v2442 = vmax.f32 %v2334, %v2422
  %v2443 = vmax.f32 %v2337, %v2425
  %v2444 = vmax.f32 %v2340, %v2428
  %v2445 = vmax.f32 %v2343, %v2431
  %v2446 = vmax.f32 %v2346, %v2434
  %v2447 = vmax.f32 %v2349, %v2437
  %v2448 = vmax.f32 %v2439, 0.0
  %v2449 = vmax.f32 %v2440, 0.0
  %v2450 = vmax.f32 %v2441, 0.0
  %v2451 = vmax.f32 %v2442, 0.0
  %v2452 = vmax.f32 %v2443, 0.0
  %v2453 = vmax.f32 %v2444, 0.0
  %v2454 = vmax.f32 %v2445, 0.0
  %v2455 = vmax.f32 %v2446, 0.0
  %v2456 = vmax.f32 %v2447, 0.0
  %v2457 = vmax.f32 %v2234, %v2448
  %v2458 = vmax.f32 %v2235, %v2449
  %v2459 = vmax.f32 %v2236, %v2450
  %v2460 = vmax.f32 %v2237, %v2451
  %v2461 = vmax.f32 %v2238, %v2452
  %v2462 = vmax.f32 %v2239, %v2453
  %v2463 = vmax.f32 %v2240, %v2454
  %v2464 = vmax.f32 %v2241, %v2455
  %v2465 = vmax.f32 %v2242, %v2456
  %2466 = vst [vmem:[#allocation2 + $0x120] sm:$0xff] %v2457
  %2467 = vst [vmem:[#allocation2 + $0x128] sm:$0xff] %v2458
  %2468 = vst [vmem:[#allocation2 + $0x130] sm:$0xff] %v2459
  %2469 = vst [vmem:[#allocation2 + $0x138] sm:$0xff] %v2460
  %2470 = vst [vmem:[#allocation2 + $0x140] sm:$0xff] %v2461
  %2471 = vst [vmem:[#allocation2 + $0x148] sm:$0xff] %v2462
  %2472 = vst [vmem:[#allocation2 + $0x150] sm:$0xff] %v2463
  %2473 = vst [vmem:[#allocation2 + $0x158] sm:$0xff] %v2464
  %2474 = vst [vmem:[#allocation2 + $0x160] sm:$0xff] %v2465
  %v2475 = vld [vmem:[%s0 + $0x140] sm:$0xff]
  %v2476 = vld [vmem:[%s0 + $0x148] sm:$0xff]
  %v2477 = vld [vmem:[%s0 + $0x150] sm:$0xff]
  %v2478 = vld [vmem:[%s0 + $0x158] sm:$0xff]
  %v2479 = vld [vmem:[%s0 + $0x160] sm:$0xff]
  %v2480 = vld [vmem:[%s0 + $0x168] sm:$0xff]
  %v2481 = vld [vmem:[%s0 + $0x170] sm:$0xff]
  %v2482 = vld [vmem:[%s0 + $0x178] sm:$0xff]
  %v2483 = vld [vmem:[%s0 + $0x180] sm:$0xff]
  %v2484 = vld [vmem:[%s0 + $0x188] sm:$0xff]
  %v2485 = vld [vmem:[%s0 + $0x190] sm:$0xff]
  %v2486 = vld [vmem:[%s0 + $0x198] sm:$0xff]
  %v2487 = vld [vmem:[%s0 + $0x1a0] sm:$0xff]
  %v2488 = vld [vmem:[%s0 + $0x1a8] sm:$0xff]
  %v2489 = vld [vmem:[%s0 + $0x1b0] sm:$0xff]
  %v2490 = vld [vmem:[%s0 + $0x1b8] sm:$0xff]
  %v2491 = vld [vmem:[%s0 + $0x1c0] sm:$0xff]
  %v2492 = vld [vmem:[%s0 + $0x1c8] sm:$0xff]
  %v2493 = vld [vmem:[%s0 + $0x1d0] sm:$0xff]
  %v2494 = vld [vmem:[%s0 + $0x1d8] sm:$0xff]
  %2495 = vmatpush.msra.mxu0 %v2490
  %2496 = vmatpush.msra.mxu0 %v2489
  %2497 = vmatpush.msra.mxu0 %v2488
  %2498 = vmatpush.msra.mxu0 %v2487
  %2499 = vmatpush.msra.mxu0 %v2486
  %2500 = vmatpush.msra.mxu0 %v2485
  %2501 = vmatpush.msra.mxu0 %v2484
  %2502 = vmatpush.msra.mxu0 %v2483
  %2503 = vmatpush.msra.mxu0 %v2482
  %2504 = vmatpush.msra.mxu0 %v2481
  %2505 = vmatpush.msra.mxu0 %v2480
  %2506 = vmatpush.msra.mxu0 %v2479
  %2507 = vmatpush.msra.mxu0 %v2478
  %2508 = vmatpush.msra.mxu0 %v2477
  %2509 = vmatpush.msra.mxu0 %v2476
  %2510 = vmatpush.msra.mxu0 %v2475
  %2511 = vmatmul.f32.gmra.mxu0 %v44
  %v2512 = vpop.f32.mrf.mxu0
  %v2513 = vadd.f32 %v168, %v2512
  %2514 = vmatmul.f32.gmra.mxu0 %v46
  %v2515 = vpop.f32.mrf.mxu0
  %v2516 = vadd.f32 %v173, %v2515
  %2517 = vmatmul.f32.gmra.mxu0 %v48
  %v2518 = vpop.f32.mrf.mxu0
  %v2519 = vadd.f32 %v178, %v2518
  %2520 = vmatmul.f32.gmra.mxu0 %v50
  %v2521 = vpop.f32.mrf.mxu0
  %v2522 = vadd.f32 %v183, %v2521
  %2523 = vmatmul.f32.gmra.mxu0 %v52
  %v2524 = vpop.f32.mrf.mxu0
  %v2525 = vadd.f32 %v188, %v2524
  %2526 = vmatmul.f32.gmra.mxu0 %v54
  %v2527 = vpop.f32.mrf.mxu0
  %v2528 = vadd.f32 %v193, %v2527
  %2529 = vmatmul.f32.gmra.mxu0 %v56
  %v2530 = vpop.f32.mrf.mxu0
  %v2531 = vadd.f32 %v198, %v2530
  %2532 = vmatmul.f32.gmra.mxu0 %v58
  %v2533 = vpop.f32.mrf.mxu0
  %v2534 = vadd.f32 %v203, %v2533
  %2535 = vmatmul.f32.gmra.mxu0 %v60
  %v2536 = vpop.f32.mrf.mxu0
  %v2537 = vadd.f32 %v208, %v2536
  %2538 = vdwg.mxu0
  %2539 = vmatpush.msra.mxu0 0.0
  %2540 = vmatpush.msra.mxu0 0.0
  %2541 = vmatpush.msra.mxu0 0.0
  %2542 = vmatpush.msra.mxu0 0.0
  %2543 = vmatpush.msra.mxu0 0.0
  %2544 = vmatpush.msra.mxu0 0.0
  %2545 = vmatpush.msra.mxu0 0.0
  %2546 = vmatpush.msra.mxu0 0.0
  %2547 = vmatpush.msra.mxu0 0.0
  %2548 = vmatpush.msra.mxu0 0.0
  %2549 = vmatpush.msra.mxu0 0.0
  %2550 = vmatpush.msra.mxu0 0.0
  %2551 = vmatpush.msra.mxu0 %v2494
  %2552 = vmatpush.msra.mxu0 %v2493
  %2553 = vmatpush.msra.mxu0 %v2492
  %2554 = vmatpush.msra.mxu0 %v2491
  %2555 = vmatmul.f32.gmra.mxu0 %v212
  %v2556 = vpop.f32.mrf.mxu0
  %v2557 = vadd.f32 %v2513, %v2556
  %2558 = vmatmul.f32.gmra.mxu0 %v215
  %v2559 = vpop.f32.mrf.mxu0
  %v2560 = vadd.f32 %v2516, %v2559
  %2561 = vmatmul.f32.gmra.mxu0 %v218
  %v2562 = vpop.f32.mrf.mxu0
  %v2563 = vadd.f32 %v2519, %v2562
  %2564 = vmatmul.f32.gmra.mxu0 %v221
  %v2565 = vpop.f32.mrf.mxu0
  %v2566 = vadd.f32 %v2522, %v2565
  %2567 = vmatmul.f32.gmra.mxu0 %v224
  %v2568 = vpop.f32.mrf.mxu0
  %v2569 = vadd.f32 %v2525, %v2568
  %2570 = vmatmul.f32.gmra.mxu0 %v227
  %v2571 = vpop.f32.mrf.mxu0
  %v2572 = vadd.f32 %v2528, %v2571
  %2573 = vmatmul.f32.gmra.mxu0 %v230
  %v2574 = vpop.f32.mrf.mxu0
  %v2575 = vadd.f32 %v2531, %v2574
  %2576 = vmatmul.f32.gmra.mxu0 %v233
  %v2577 = vpop.f32.mrf.mxu0
  %v2578 = vadd.f32 %v2534, %v2577
  %2579 = vmatmul.f32.gmra.mxu0 %v236
  %v2580 = vpop.f32.mrf.mxu0
  %v2581 = vadd.f32 %v2537, %v2580
  %2582 = vdwg.mxu0
  %2583 = vmatpush.msra.mxu0 %v2490
  %2584 = vmatpush.msra.mxu0 %v2489
  %2585 = vmatpush.msra.mxu0 %v2488
  %2586 = vmatpush.msra.mxu0 %v2487
  %2587 = vmatpush.msra.mxu0 %v2486
  %2588 = vmatpush.msra.mxu0 %v2485
  %2589 = vmatpush.msra.mxu0 %v2484
  %2590 = vmatpush.msra.mxu0 %v2483
  %2591 = vmatpush.msra.mxu0 %v2482
  %2592 = vmatpush.msra.mxu0 %v2481
  %2593 = vmatpush.msra.mxu0 %v2480
  %2594 = vmatpush.msra.mxu0 %v2479
  %2595 = vmatpush.msra.mxu0 %v2478
  %2596 = vmatpush.msra.mxu0 %v2477
  %2597 = vmatpush.msra.mxu0 %v2476
  %2598 = vmatpush.msra.mxu0 %v2475
  %2599 = vmatmul.f32.gmra.mxu0 %v62
  %v2600 = vpop.f32.mrf.mxu0
  %v2601 = vadd.f32 %v168, %v2600
  %2602 = vmatmul.f32.gmra.mxu0 %v64
  %v2603 = vpop.f32.mrf.mxu0
  %v2604 = vadd.f32 %v173, %v2603
  %2605 = vmatmul.f32.gmra.mxu0 %v66
  %v2606 = vpop.f32.mrf.mxu0
  %v2607 = vadd.f32 %v178, %v2606
  %2608 = vmatmul.f32.gmra.mxu0 %v68
  %v2609 = vpop.f32.mrf.mxu0
  %v2610 = vadd.f32 %v183, %v2609
  %2611 = vmatmul.f32.gmra.mxu0 %v70
  %v2612 = vpop.f32.mrf.mxu0
  %v2613 = vadd.f32 %v188, %v2612
  %2614 = vmatmul.f32.gmra.mxu0 %v72
  %v2615 = vpop.f32.mrf.mxu0
  %v2616 = vadd.f32 %v193, %v2615
  %2617 = vmatmul.f32.gmra.mxu0 %v74
  %v2618 = vpop.f32.mrf.mxu0
  %v2619 = vadd.f32 %v198, %v2618
  %2620 = vmatmul.f32.gmra.mxu0 %v76
  %v2621 = vpop.f32.mrf.mxu0
  %v2622 = vadd.f32 %v203, %v2621
  %2623 = vmatmul.f32.gmra.mxu0 %v78
  %v2624 = vpop.f32.mrf.mxu0
  %v2625 = vadd.f32 %v208, %v2624
  %2626 = vdwg.mxu0
  %2627 = vmatpush.msra.mxu0 0.0
  %2628 = vmatpush.msra.mxu0 0.0
  %2629 = vmatpush.msra.mxu0 0.0
  %2630 = vmatpush.msra.mxu0 0.0
  %2631 = vmatpush.msra.mxu0 0.0
  %2632 = vmatpush.msra.mxu0 0.0
  %2633 = vmatpush.msra.mxu0 0.0
  %2634 = vmatpush.msra.mxu0 0.0
  %2635 = vmatpush.msra.mxu0 0.0
  %2636 = vmatpush.msra.mxu0 0.0
  %2637 = vmatpush.msra.mxu0 0.0
  %2638 = vmatpush.msra.mxu0 0.0
  %2639 = vmatpush.msra.mxu0 %v2494
  %2640 = vmatpush.msra.mxu0 %v2493
  %2641 = vmatpush.msra.mxu0 %v2492
  %2642 = vmatpush.msra.mxu0 %v2491
  %2643 = vmatmul.f32.gmra.mxu0 %v327
  %v2644 = vpop.f32.mrf.mxu0
  %v2645 = vadd.f32 %v2601, %v2644
  %2646 = vmatmul.f32.gmra.mxu0 %v330
  %v2647 = vpop.f32.mrf.mxu0
  %v2648 = vadd.f32 %v2604, %v2647
  %2649 = vmatmul.f32.gmra.mxu0 %v333
  %v2650 = vpop.f32.mrf.mxu0
  %v2651 = vadd.f32 %v2607, %v2650
  %2652 = vmatmul.f32.gmra.mxu0 %v336
  %v2653 = vpop.f32.mrf.mxu0
  %v2654 = vadd.f32 %v2610, %v2653
  %2655 = vmatmul.f32.gmra.mxu0 %v339
  %v2656 = vpop.f32.mrf.mxu0
  %v2657 = vadd.f32 %v2613, %v2656
  %2658 = vmatmul.f32.gmra.mxu0 %v342
  %v2659 = vpop.f32.mrf.mxu0
  %v2660 = vadd.f32 %v2616, %v2659
  %2661 = vmatmul.f32.gmra.mxu0 %v345
  %v2662 = vpop.f32.mrf.mxu0
  %v2663 = vadd.f32 %v2619, %v2662
  %2664 = vmatmul.f32.gmra.mxu0 %v348
  %v2665 = vpop.f32.mrf.mxu0
  %v2666 = vadd.f32 %v2622, %v2665
  %2667 = vmatmul.f32.gmra.mxu0 %v351
  %v2668 = vpop.f32.mrf.mxu0
  %v2669 = vadd.f32 %v2625, %v2668
  %2670 = vdwg.mxu0
  %v2671 = vmax.f32 %v2557, %v2645
  %v2672 = vmax.f32 %v2560, %v2648
  %v2673 = vmax.f32 %v2563, %v2651
  %v2674 = vmax.f32 %v2566, %v2654
  %v2675 = vmax.f32 %v2569, %v2657
  %v2676 = vmax.f32 %v2572, %v2660
  %v2677 = vmax.f32 %v2575, %v2663
  %v2678 = vmax.f32 %v2578, %v2666
  %v2679 = vmax.f32 %v2581, %v2669
  %v2680 = vmax.f32 %v2671, 0.0
  %v2681 = vmax.f32 %v2672, 0.0
  %v2682 = vmax.f32 %v2673, 0.0
  %v2683 = vmax.f32 %v2674, 0.0
  %v2684 = vmax.f32 %v2675, 0.0
  %v2685 = vmax.f32 %v2676, 0.0
  %v2686 = vmax.f32 %v2677, 0.0
  %v2687 = vmax.f32 %v2678, 0.0
  %v2688 = vmax.f32 %v2679, 0.0
  %v2689 = vld [vmem:[%s0 + $0x160] sm:$0xff]
  %v2690 = vld [vmem:[%s0 + $0x168] sm:$0xff]
  %v2691 = vld [vmem:[%s0 + $0x170] sm:$0xff]
  %v2692 = vld [vmem:[%s0 + $0x178] sm:$0xff]
  %v2693 = vld [vmem:[%s0 + $0x180] sm:$0xff]
  %v2694 = vld [vmem:[%s0 + $0x188] sm:$0xff]
  %v2695 = vld [vmem:[%s0 + $0x190] sm:$0xff]
  %v2696 = vld [vmem:[%s0 + $0x198] sm:$0xff]
  %v2697 = vld [vmem:[%s0 + $0x1a0] sm:$0xff]
  %v2698 = vld [vmem:[%s0 + $0x1a8] sm:$0xff]
  %v2699 = vld [vmem:[%s0 + $0x1b0] sm:$0xff]
  %v2700 = vld [vmem:[%s0 + $0x1b8] sm:$0xff]
  %v2701 = vld [vmem:[%s0 + $0x1c0] sm:$0xff]
  %v2702 = vld [vmem:[%s0 + $0x1c8] sm:$0xff]
  %v2703 = vld [vmem:[%s0 + $0x1d0] sm:$0xff]
  %v2704 = vld [vmem:[%s0 + $0x1d8] sm:$0xff]
  %v2705 = vld [vmem:[%s0 + $0x1e0] sm:$0xff]
  %v2706 = vld [vmem:[%s0 + $0x1e8] sm:$0xff]
  %v2707 = vld [vmem:[%s0 + $0x1f0] sm:$0xff]
  %v2708 = vld [vmem:[%s0 + $0x1f8] sm:$0xff]
  %2709 = vmatpush.msra.mxu0 %v2704
  %2710 = vmatpush.msra.mxu0 %v2703
  %2711 = vmatpush.msra.mxu0 %v2702
  %2712 = vmatpush.msra.mxu0 %v2701
  %2713 = vmatpush.msra.mxu0 %v2700
  %2714 = vmatpush.msra.mxu0 %v2699
  %2715 = vmatpush.msra.mxu0 %v2698
  %2716 = vmatpush.msra.mxu0 %v2697
  %2717 = vmatpush.msra.mxu0 %v2696
  %2718 = vmatpush.msra.mxu0 %v2695
  %2719 = vmatpush.msra.mxu0 %v2694
  %2720 = vmatpush.msra.mxu0 %v2693
  %2721 = vmatpush.msra.mxu0 %v2692
  %2722 = vmatpush.msra.mxu0 %v2691
  %2723 = vmatpush.msra.mxu0 %v2690
  %2724 = vmatpush.msra.mxu0 %v2689
  %2725 = vmatmul.f32.gmra.mxu0 %v44
  %v2726 = vpop.f32.mrf.mxu0
  %v2727 = vadd.f32 %v168, %v2726
  %2728 = vmatmul.f32.gmra.mxu0 %v46
  %v2729 = vpop.f32.mrf.mxu0
  %v2730 = vadd.f32 %v173, %v2729
  %2731 = vmatmul.f32.gmra.mxu0 %v48
  %v2732 = vpop.f32.mrf.mxu0
  %v2733 = vadd.f32 %v178, %v2732
  %2734 = vmatmul.f32.gmra.mxu0 %v50
  %v2735 = vpop.f32.mrf.mxu0
  %v2736 = vadd.f32 %v183, %v2735
  %2737 = vmatmul.f32.gmra.mxu0 %v52
  %v2738 = vpop.f32.mrf.mxu0
  %v2739 = vadd.f32 %v188, %v2738
  %2740 = vmatmul.f32.gmra.mxu0 %v54
  %v2741 = vpop.f32.mrf.mxu0
  %v2742 = vadd.f32 %v193, %v2741
  %2743 = vmatmul.f32.gmra.mxu0 %v56
  %v2744 = vpop.f32.mrf.mxu0
  %v2745 = vadd.f32 %v198, %v2744
  %2746 = vmatmul.f32.gmra.mxu0 %v58
  %v2747 = vpop.f32.mrf.mxu0
  %v2748 = vadd.f32 %v203, %v2747
  %2749 = vmatmul.f32.gmra.mxu0 %v60
  %v2750 = vpop.f32.mrf.mxu0
  %v2751 = vadd.f32 %v208, %v2750
  %2752 = vdwg.mxu0
  %2753 = vmatpush.msra.mxu0 0.0
  %2754 = vmatpush.msra.mxu0 0.0
  %2755 = vmatpush.msra.mxu0 0.0
  %2756 = vmatpush.msra.mxu0 0.0
  %2757 = vmatpush.msra.mxu0 0.0
  %2758 = vmatpush.msra.mxu0 0.0
  %2759 = vmatpush.msra.mxu0 0.0
  %2760 = vmatpush.msra.mxu0 0.0
  %2761 = vmatpush.msra.mxu0 0.0
  %2762 = vmatpush.msra.mxu0 0.0
  %2763 = vmatpush.msra.mxu0 0.0
  %2764 = vmatpush.msra.mxu0 0.0
  %2765 = vmatpush.msra.mxu0 %v2708
  %2766 = vmatpush.msra.mxu0 %v2707
  %2767 = vmatpush.msra.mxu0 %v2706
  %2768 = vmatpush.msra.mxu0 %v2705
  %2769 = vmatmul.f32.gmra.mxu0 %v212
  %v2770 = vpop.f32.mrf.mxu0
  %v2771 = vadd.f32 %v2727, %v2770
  %2772 = vmatmul.f32.gmra.mxu0 %v215
  %v2773 = vpop.f32.mrf.mxu0
  %v2774 = vadd.f32 %v2730, %v2773
  %2775 = vmatmul.f32.gmra.mxu0 %v218
  %v2776 = vpop.f32.mrf.mxu0
  %v2777 = vadd.f32 %v2733, %v2776
  %2778 = vmatmul.f32.gmra.mxu0 %v221
  %v2779 = vpop.f32.mrf.mxu0
  %v2780 = vadd.f32 %v2736, %v2779
  %2781 = vmatmul.f32.gmra.mxu0 %v224
  %v2782 = vpop.f32.mrf.mxu0
  %v2783 = vadd.f32 %v2739, %v2782
  %2784 = vmatmul.f32.gmra.mxu0 %v227
  %v2785 = vpop.f32.mrf.mxu0
  %v2786 = vadd.f32 %v2742, %v2785
  %2787 = vmatmul.f32.gmra.mxu0 %v230
  %v2788 = vpop.f32.mrf.mxu0
  %v2789 = vadd.f32 %v2745, %v2788
  %2790 = vmatmul.f32.gmra.mxu0 %v233
  %v2791 = vpop.f32.mrf.mxu0
  %v2792 = vadd.f32 %v2748, %v2791
  %2793 = vmatmul.f32.gmra.mxu0 %v236
  %v2794 = vpop.f32.mrf.mxu0
  %v2795 = vadd.f32 %v2751, %v2794
  %2796 = vdwg.mxu0
  %2797 = vmatpush.msra.mxu0 %v2704
  %2798 = vmatpush.msra.mxu0 %v2703
  %2799 = vmatpush.msra.mxu0 %v2702
  %2800 = vmatpush.msra.mxu0 %v2701
  %2801 = vmatpush.msra.mxu0 %v2700
  %2802 = vmatpush.msra.mxu0 %v2699
  %2803 = vmatpush.msra.mxu0 %v2698
  %2804 = vmatpush.msra.mxu0 %v2697
  %2805 = vmatpush.msra.mxu0 %v2696
  %2806 = vmatpush.msra.mxu0 %v2695
  %2807 = vmatpush.msra.mxu0 %v2694
  %2808 = vmatpush.msra.mxu0 %v2693
  %2809 = vmatpush.msra.mxu0 %v2692
  %2810 = vmatpush.msra.mxu0 %v2691
  %2811 = vmatpush.msra.mxu0 %v2690
  %2812 = vmatpush.msra.mxu0 %v2689
  %2813 = vmatmul.f32.gmra.mxu0 %v62
  %v2814 = vpop.f32.mrf.mxu0
  %v2815 = vadd.f32 %v168, %v2814
  %2816 = vmatmul.f32.gmra.mxu0 %v64
  %v2817 = vpop.f32.mrf.mxu0
  %v2818 = vadd.f32 %v173, %v2817
  %2819 = vmatmul.f32.gmra.mxu0 %v66
  %v2820 = vpop.f32.mrf.mxu0
  %v2821 = vadd.f32 %v178, %v2820
  %2822 = vmatmul.f32.gmra.mxu0 %v68
  %v2823 = vpop.f32.mrf.mxu0
  %v2824 = vadd.f32 %v183, %v2823
  %2825 = vmatmul.f32.gmra.mxu0 %v70
  %v2826 = vpop.f32.mrf.mxu0
  %v2827 = vadd.f32 %v188, %v2826
  %2828 = vmatmul.f32.gmra.mxu0 %v72
  %v2829 = vpop.f32.mrf.mxu0
  %v2830 = vadd.f32 %v193, %v2829
  %2831 = vmatmul.f32.gmra.mxu0 %v74
  %v2832 = vpop.f32.mrf.mxu0
  %v2833 = vadd.f32 %v198, %v2832
  %2834 = vmatmul.f32.gmra.mxu0 %v76
  %v2835 = vpop.f32.mrf.mxu0
  %v2836 = vadd.f32 %v203, %v2835
  %2837 = vmatmul.f32.gmra.mxu0 %v78
  %v2838 = vpop.f32.mrf.mxu0
  %v2839 = vadd.f32 %v208, %v2838
  %2840 = vdwg.mxu0
  %2841 = vmatpush.msra.mxu0 0.0
  %2842 = vmatpush.msra.mxu0 0.0
  %2843 = vmatpush.msra.mxu0 0.0
  %2844 = vmatpush.msra.mxu0 0.0
  %2845 = vmatpush.msra.mxu0 0.0
  %2846 = vmatpush.msra.mxu0 0.0
  %2847 = vmatpush.msra.mxu0 0.0
  %2848 = vmatpush.msra.mxu0 0.0
  %2849 = vmatpush.msra.mxu0 0.0
  %2850 = vmatpush.msra.mxu0 0.0
  %2851 = vmatpush.msra.mxu0 0.0
  %2852 = vmatpush.msra.mxu0 0.0
  %2853 = vmatpush.msra.mxu0 %v2708
  %2854 = vmatpush.msra.mxu0 %v2707
  %2855 = vmatpush.msra.mxu0 %v2706
  %2856 = vmatpush.msra.mxu0 %v2705
  %2857 = vmatmul.f32.gmra.mxu0 %v327
  %v2858 = vpop.f32.mrf.mxu0
  %v2859 = vadd.f32 %v2815, %v2858
  %2860 = vmatmul.f32.gmra.mxu0 %v330
  %v2861 = vpop.f32.mrf.mxu0
  %v2862 = vadd.f32 %v2818, %v2861
  %2863 = vmatmul.f32.gmra.mxu0 %v333
  %v2864 = vpop.f32.mrf.mxu0
  %v2865 = vadd.f32 %v2821, %v2864
  %2866 = vmatmul.f32.gmra.mxu0 %v336
  %v2867 = vpop.f32.mrf.mxu0
  %v2868 = vadd.f32 %v2824, %v2867
  %2869 = vmatmul.f32.gmra.mxu0 %v339
  %v2870 = vpop.f32.mrf.mxu0
  %v2871 = vadd.f32 %v2827, %v2870
  %2872 = vmatmul.f32.gmra.mxu0 %v342
  %v2873 = vpop.f32.mrf.mxu0
  %v2874 = vadd.f32 %v2830, %v2873
  %2875 = vmatmul.f32.gmra.mxu0 %v345
  %v2876 = vpop.f32.mrf.mxu0
  %v2877 = vadd.f32 %v2833, %v2876
  %2878 = vmatmul.f32.gmra.mxu0 %v348
  %v2879 = vpop.f32.mrf.mxu0
  %v2880 = vadd.f32 %v2836, %v2879
  %2881 = vmatmul.f32.gmra.mxu0 %v351
  %v2882 = vpop.f32.mrf.mxu0
  %v2883 = vadd.f32 %v2839, %v2882
  %2884 = vdwg.mxu0
  %v2885 = vmax.f32 %v2771, %v2859
  %v2886 = vmax.f32 %v2774, %v2862
  %v2887 = vmax.f32 %v2777, %v2865
  %v2888 = vmax.f32 %v2780, %v2868
  %v2889 = vmax.f32 %v2783, %v2871
  %v2890 = vmax.f32 %v2786, %v2874
  %v2891 = vmax.f32 %v2789, %v2877
  %v2892 = vmax.f32 %v2792, %v2880
  %v2893 = vmax.f32 %v2795, %v2883
  %v2894 = vmax.f32 %v2885, 0.0
  %v2895 = vmax.f32 %v2886, 0.0
  %v2896 = vmax.f32 %v2887, 0.0
  %v2897 = vmax.f32 %v2888, 0.0
  %v2898 = vmax.f32 %v2889, 0.0
  %v2899 = vmax.f32 %v2890, 0.0
  %v2900 = vmax.f32 %v2891, 0.0
  %v2901 = vmax.f32 %v2892, 0.0
  %v2902 = vmax.f32 %v2893, 0.0
  %v2903 = vmax.f32 %v2680, %v2894
  %v2904 = vmax.f32 %v2681, %v2895
  %v2905 = vmax.f32 %v2682, %v2896
  %v2906 = vmax.f32 %v2683, %v2897
  %v2907 = vmax.f32 %v2684, %v2898
  %v2908 = vmax.f32 %v2685, %v2899
  %v2909 = vmax.f32 %v2686, %v2900
  %v2910 = vmax.f32 %v2687, %v2901
  %v2911 = vmax.f32 %v2688, %v2902
  %2912 = vst [vmem:[#allocation2 + $0x168] sm:$0xff] %v2903
  %2913 = vst [vmem:[#allocation2 + $0x170] sm:$0xff] %v2904
  %2914 = vst [vmem:[#allocation2 + $0x178] sm:$0xff] %v2905
  %2915 = vst [vmem:[#allocation2 + $0x180] sm:$0xff] %v2906
  %2916 = vst [vmem:[#allocation2 + $0x188] sm:$0xff] %v2907
  %2917 = vst [vmem:[#allocation2 + $0x190] sm:$0xff] %v2908
  %2918 = vst [vmem:[#allocation2 + $0x198] sm:$0xff] %v2909
  %2919 = vst [vmem:[#allocation2 + $0x1a0] sm:$0xff] %v2910
  %2920 = vst [vmem:[#allocation2 + $0x1a8] sm:$0xff] %v2911
  %v2921 = vld [vmem:[%s0 + $0x180] sm:$0xff]
  %v2922 = vld [vmem:[%s0 + $0x188] sm:$0xff]
  %v2923 = vld [vmem:[%s0 + $0x190] sm:$0xff]
  %v2924 = vld [vmem:[%s0 + $0x198] sm:$0xff]
  %v2925 = vld [vmem:[%s0 + $0x1a0] sm:$0xff]
  %v2926 = vld [vmem:[%s0 + $0x1a8] sm:$0xff]
  %v2927 = vld [vmem:[%s0 + $0x1b0] sm:$0xff]
  %v2928 = vld [vmem:[%s0 + $0x1b8] sm:$0xff]
  %v2929 = vld [vmem:[%s0 + $0x1c0] sm:$0xff]
  %v2930 = vld [vmem:[%s0 + $0x1c8] sm:$0xff]
  %v2931 = vld [vmem:[%s0 + $0x1d0] sm:$0xff]
  %v2932 = vld [vmem:[%s0 + $0x1d8] sm:$0xff]
  %v2933 = vld [vmem:[%s0 + $0x1e0] sm:$0xff]
  %v2934 = vld [vmem:[%s0 + $0x1e8] sm:$0xff]
  %v2935 = vld [vmem:[%s0 + $0x1f0] sm:$0xff]
  %v2936 = vld [vmem:[%s0 + $0x1f8] sm:$0xff]
  %v2937 = vld [vmem:[%s0 + $0x200] sm:$0xff]
  %v2938 = vld [vmem:[%s0 + $0x208] sm:$0xff]
  %v2939 = vld [vmem:[%s0 + $0x210] sm:$0xff]
  %v2940 = vld [vmem:[%s0 + $0x218] sm:$0xff]
  %2941 = vmatpush.msra.mxu0 %v2936
  %2942 = vmatpush.msra.mxu0 %v2935
  %2943 = vmatpush.msra.mxu0 %v2934
  %2944 = vmatpush.msra.mxu0 %v2933
  %2945 = vmatpush.msra.mxu0 %v2932
  %2946 = vmatpush.msra.mxu0 %v2931
  %2947 = vmatpush.msra.mxu0 %v2930
  %2948 = vmatpush.msra.mxu0 %v2929
  %2949 = vmatpush.msra.mxu0 %v2928
  %2950 = vmatpush.msra.mxu0 %v2927
  %2951 = vmatpush.msra.mxu0 %v2926
  %2952 = vmatpush.msra.mxu0 %v2925
  %2953 = vmatpush.msra.mxu0 %v2924
  %2954 = vmatpush.msra.mxu0 %v2923
  %2955 = vmatpush.msra.mxu0 %v2922
  %2956 = vmatpush.msra.mxu0 %v2921
  %2957 = vmatmul.f32.gmra.mxu0 %v44
  %v2958 = vpop.f32.mrf.mxu0
  %v2959 = vadd.f32 %v168, %v2958
  %2960 = vmatmul.f32.gmra.mxu0 %v46
  %v2961 = vpop.f32.mrf.mxu0
  %v2962 = vadd.f32 %v173, %v2961
  %2963 = vmatmul.f32.gmra.mxu0 %v48
  %v2964 = vpop.f32.mrf.mxu0
  %v2965 = vadd.f32 %v178, %v2964
  %2966 = vmatmul.f32.gmra.mxu0 %v50
  %v2967 = vpop.f32.mrf.mxu0
  %v2968 = vadd.f32 %v183, %v2967
  %2969 = vmatmul.f32.gmra.mxu0 %v52
  %v2970 = vpop.f32.mrf.mxu0
  %v2971 = vadd.f32 %v188, %v2970
  %2972 = vmatmul.f32.gmra.mxu0 %v54
  %v2973 = vpop.f32.mrf.mxu0
  %v2974 = vadd.f32 %v193, %v2973
  %2975 = vmatmul.f32.gmra.mxu0 %v56
  %v2976 = vpop.f32.mrf.mxu0
  %v2977 = vadd.f32 %v198, %v2976
  %2978 = vmatmul.f32.gmra.mxu0 %v58
  %v2979 = vpop.f32.mrf.mxu0
  %v2980 = vadd.f32 %v203, %v2979
  %2981 = vmatmul.f32.gmra.mxu0 %v60
  %v2982 = vpop.f32.mrf.mxu0
  %v2983 = vadd.f32 %v208, %v2982
  %2984 = vdwg.mxu0
  %2985 = vmatpush.msra.mxu0 0.0
  %2986 = vmatpush.msra.mxu0 0.0
  %2987 = vmatpush.msra.mxu0 0.0
  %2988 = vmatpush.msra.mxu0 0.0
  %2989 = vmatpush.msra.mxu0 0.0
  %2990 = vmatpush.msra.mxu0 0.0
  %2991 = vmatpush.msra.mxu0 0.0
  %2992 = vmatpush.msra.mxu0 0.0
  %2993 = vmatpush.msra.mxu0 0.0
  %2994 = vmatpush.msra.mxu0 0.0
  %2995 = vmatpush.msra.mxu0 0.0
  %2996 = vmatpush.msra.mxu0 0.0
  %2997 = vmatpush.msra.mxu0 %v2940
  %2998 = vmatpush.msra.mxu0 %v2939
  %2999 = vmatpush.msra.mxu0 %v2938
  %3000 = vmatpush.msra.mxu0 %v2937
  %3001 = vmatmul.f32.gmra.mxu0 %v212
  %v3002 = vpop.f32.mrf.mxu0
  %v3003 = vadd.f32 %v2959, %v3002
  %3004 = vmatmul.f32.gmra.mxu0 %v215
  %v3005 = vpop.f32.mrf.mxu0
  %v3006 = vadd.f32 %v2962, %v3005
  %3007 = vmatmul.f32.gmra.mxu0 %v218
  %v3008 = vpop.f32.mrf.mxu0
  %v3009 = vadd.f32 %v2965, %v3008
  %3010 = vmatmul.f32.gmra.mxu0 %v221
  %v3011 = vpop.f32.mrf.mxu0
  %v3012 = vadd.f32 %v2968, %v3011
  %3013 = vmatmul.f32.gmra.mxu0 %v224
  %v3014 = vpop.f32.mrf.mxu0
  %v3015 = vadd.f32 %v2971, %v3014
  %3016 = vmatmul.f32.gmra.mxu0 %v227
  %v3017 = vpop.f32.mrf.mxu0
  %v3018 = vadd.f32 %v2974, %v3017
  %3019 = vmatmul.f32.gmra.mxu0 %v230
  %v3020 = vpop.f32.mrf.mxu0
  %v3021 = vadd.f32 %v2977, %v3020
  %3022 = vmatmul.f32.gmra.mxu0 %v233
  %v3023 = vpop.f32.mrf.mxu0
  %v3024 = vadd.f32 %v2980, %v3023
  %3025 = vmatmul.f32.gmra.mxu0 %v236
  %v3026 = vpop.f32.mrf.mxu0
  %v3027 = vadd.f32 %v2983, %v3026
  %3028 = vdwg.mxu0
  %3029 = vmatpush.msra.mxu0 %v2936
  %3030 = vmatpush.msra.mxu0 %v2935
  %3031 = vmatpush.msra.mxu0 %v2934
  %3032 = vmatpush.msra.mxu0 %v2933
  %3033 = vmatpush.msra.mxu0 %v2932
  %3034 = vmatpush.msra.mxu0 %v2931
  %3035 = vmatpush.msra.mxu0 %v2930
  %3036 = vmatpush.msra.mxu0 %v2929
  %3037 = vmatpush.msra.mxu0 %v2928
  %3038 = vmatpush.msra.mxu0 %v2927
  %3039 = vmatpush.msra.mxu0 %v2926
  %3040 = vmatpush.msra.mxu0 %v2925
  %3041 = vmatpush.msra.mxu0 %v2924
  %3042 = vmatpush.msra.mxu0 %v2923
  %3043 = vmatpush.msra.mxu0 %v2922
  %3044 = vmatpush.msra.mxu0 %v2921
  %3045 = vmatmul.f32.gmra.mxu0 %v62
  %v3046 = vpop.f32.mrf.mxu0
  %v3047 = vadd.f32 %v168, %v3046
  %3048 = vmatmul.f32.gmra.mxu0 %v64
  %v3049 = vpop.f32.mrf.mxu0
  %v3050 = vadd.f32 %v173, %v3049
  %3051 = vmatmul.f32.gmra.mxu0 %v66
  %v3052 = vpop.f32.mrf.mxu0
  %v3053 = vadd.f32 %v178, %v3052
  %3054 = vmatmul.f32.gmra.mxu0 %v68
  %v3055 = vpop.f32.mrf.mxu0
  %v3056 = vadd.f32 %v183, %v3055
  %3057 = vmatmul.f32.gmra.mxu0 %v70
  %v3058 = vpop.f32.mrf.mxu0
  %v3059 = vadd.f32 %v188, %v3058
  %3060 = vmatmul.f32.gmra.mxu0 %v72
  %v3061 = vpop.f32.mrf.mxu0
  %v3062 = vadd.f32 %v193, %v3061
  %3063 = vmatmul.f32.gmra.mxu0 %v74
  %v3064 = vpop.f32.mrf.mxu0
  %v3065 = vadd.f32 %v198, %v3064
  %3066 = vmatmul.f32.gmra.mxu0 %v76
  %v3067 = vpop.f32.mrf.mxu0
  %v3068 = vadd.f32 %v203, %v3067
  %3069 = vmatmul.f32.gmra.mxu0 %v78
  %v3070 = vpop.f32.mrf.mxu0
  %v3071 = vadd.f32 %v208, %v3070
  %3072 = vdwg.mxu0
  %3073 = vmatpush.msra.mxu0 0.0
  %3074 = vmatpush.msra.mxu0 0.0
  %3075 = vmatpush.msra.mxu0 0.0
  %3076 = vmatpush.msra.mxu0 0.0
  %3077 = vmatpush.msra.mxu0 0.0
  %3078 = vmatpush.msra.mxu0 0.0
  %3079 = vmatpush.msra.mxu0 0.0
  %3080 = vmatpush.msra.mxu0 0.0
  %3081 = vmatpush.msra.mxu0 0.0
  %3082 = vmatpush.msra.mxu0 0.0
  %3083 = vmatpush.msra.mxu0 0.0
  %3084 = vmatpush.msra.mxu0 0.0
  %3085 = vmatpush.msra.mxu0 %v2940
  %3086 = vmatpush.msra.mxu0 %v2939
  %3087 = vmatpush.msra.mxu0 %v2938
  %3088 = vmatpush.msra.mxu0 %v2937
  %3089 = vmatmul.f32.gmra.mxu0 %v327
  %v3090 = vpop.f32.mrf.mxu0
  %v3091 = vadd.f32 %v3047, %v3090
  %3092 = vmatmul.f32.gmra.mxu0 %v330
  %v3093 = vpop.f32.mrf.mxu0
  %v3094 = vadd.f32 %v3050, %v3093
  %3095 = vmatmul.f32.gmra.mxu0 %v333
  %v3096 = vpop.f32.mrf.mxu0
  %v3097 = vadd.f32 %v3053, %v3096
  %3098 = vmatmul.f32.gmra.mxu0 %v336
  %v3099 = vpop.f32.mrf.mxu0
  %v3100 = vadd.f32 %v3056, %v3099
  %3101 = vmatmul.f32.gmra.mxu0 %v339
  %v3102 = vpop.f32.mrf.mxu0
  %v3103 = vadd.f32 %v3059, %v3102
  %3104 = vmatmul.f32.gmra.mxu0 %v342
  %v3105 = vpop.f32.mrf.mxu0
  %v3106 = vadd.f32 %v3062, %v3105
  %3107 = vmatmul.f32.gmra.mxu0 %v345
  %v3108 = vpop.f32.mrf.mxu0
  %v3109 = vadd.f32 %v3065, %v3108
  %3110 = vmatmul.f32.gmra.mxu0 %v348
  %v3111 = vpop.f32.mrf.mxu0
  %v3112 = vadd.f32 %v3068, %v3111
  %3113 = vmatmul.f32.gmra.mxu0 %v351
  %v3114 = vpop.f32.mrf.mxu0
  %v3115 = vadd.f32 %v3071, %v3114
  %3116 = vdwg.mxu0
  %v3117 = vmax.f32 %v3003, %v3091
  %v3118 = vmax.f32 %v3006, %v3094
  %v3119 = vmax.f32 %v3009, %v3097
  %v3120 = vmax.f32 %v3012, %v3100
  %v3121 = vmax.f32 %v3015, %v3103
  %v3122 = vmax.f32 %v3018, %v3106
  %v3123 = vmax.f32 %v3021, %v3109
  %v3124 = vmax.f32 %v3024, %v3112
  %v3125 = vmax.f32 %v3027, %v3115
  %v3126 = vmax.f32 %v3117, 0.0
  %v3127 = vmax.f32 %v3118, 0.0
  %v3128 = vmax.f32 %v3119, 0.0
  %v3129 = vmax.f32 %v3120, 0.0
  %v3130 = vmax.f32 %v3121, 0.0
  %v3131 = vmax.f32 %v3122, 0.0
  %v3132 = vmax.f32 %v3123, 0.0
  %v3133 = vmax.f32 %v3124, 0.0
  %v3134 = vmax.f32 %v3125, 0.0
  %v3135 = vld [vmem:[%s0 + $0x1a0] sm:$0xff]
  %v3136 = vld [vmem:[%s0 + $0x1a8] sm:$0xff]
  %v3137 = vld [vmem:[%s0 + $0x1b0] sm:$0xff]
  %v3138 = vld [vmem:[%s0 + $0x1b8] sm:$0xff]
  %v3139 = vld [vmem:[%s0 + $0x1c0] sm:$0xff]
  %v3140 = vld [vmem:[%s0 + $0x1c8] sm:$0xff]
  %v3141 = vld [vmem:[%s0 + $0x1d0] sm:$0xff]
  %v3142 = vld [vmem:[%s0 + $0x1d8] sm:$0xff]
  %v3143 = vld [vmem:[%s0 + $0x1e0] sm:$0xff]
  %v3144 = vld [vmem:[%s0 + $0x1e8] sm:$0xff]
  %v3145 = vld [vmem:[%s0 + $0x1f0] sm:$0xff]
  %v3146 = vld [vmem:[%s0 + $0x1f8] sm:$0xff]
  %v3147 = vld [vmem:[%s0 + $0x200] sm:$0xff]
  %v3148 = vld [vmem:[%s0 + $0x208] sm:$0xff]
  %v3149 = vld [vmem:[%s0 + $0x210] sm:$0xff]
  %v3150 = vld [vmem:[%s0 + $0x218] sm:$0xff]
  %v3151 = vld [vmem:[%s0 + $0x220] sm:$0xff]
  %v3152 = vld [vmem:[%s0 + $0x228] sm:$0xff]
  %v3153 = vld [vmem:[%s0 + $0x230] sm:$0xff]
  %v3154 = vld [vmem:[%s0 + $0x238] sm:$0xff]
  %3155 = vmatpush.msra.mxu0 %v3150
  %3156 = vmatpush.msra.mxu0 %v3149
  %3157 = vmatpush.msra.mxu0 %v3148
  %3158 = vmatpush.msra.mxu0 %v3147
  %3159 = vmatpush.msra.mxu0 %v3146
  %3160 = vmatpush.msra.mxu0 %v3145
  %3161 = vmatpush.msra.mxu0 %v3144
  %3162 = vmatpush.msra.mxu0 %v3143
  %3163 = vmatpush.msra.mxu0 %v3142
  %3164 = vmatpush.msra.mxu0 %v3141
  %3165 = vmatpush.msra.mxu0 %v3140
  %3166 = vmatpush.msra.mxu0 %v3139
  %3167 = vmatpush.msra.mxu0 %v3138
  %3168 = vmatpush.msra.mxu0 %v3137
  %3169 = vmatpush.msra.mxu0 %v3136
  %3170 = vmatpush.msra.mxu0 %v3135
  %3171 = vmatmul.f32.gmra.mxu0 %v44
  %v3172 = vpop.f32.mrf.mxu0
  %v3173 = vadd.f32 %v168, %v3172
  %3174 = vmatmul.f32.gmra.mxu0 %v46
  %v3175 = vpop.f32.mrf.mxu0
  %v3176 = vadd.f32 %v173, %v3175
  %3177 = vmatmul.f32.gmra.mxu0 %v48
  %v3178 = vpop.f32.mrf.mxu0
  %v3179 = vadd.f32 %v178, %v3178
  %3180 = vmatmul.f32.gmra.mxu0 %v50
  %v3181 = vpop.f32.mrf.mxu0
  %v3182 = vadd.f32 %v183, %v3181
  %3183 = vmatmul.f32.gmra.mxu0 %v52
  %v3184 = vpop.f32.mrf.mxu0
  %v3185 = vadd.f32 %v188, %v3184
  %3186 = vmatmul.f32.gmra.mxu0 %v54
  %v3187 = vpop.f32.mrf.mxu0
  %v3188 = vadd.f32 %v193, %v3187
  %3189 = vmatmul.f32.gmra.mxu0 %v56
  %v3190 = vpop.f32.mrf.mxu0
  %v3191 = vadd.f32 %v198, %v3190
  %3192 = vmatmul.f32.gmra.mxu0 %v58
  %v3193 = vpop.f32.mrf.mxu0
  %v3194 = vadd.f32 %v203, %v3193
  %3195 = vmatmul.f32.gmra.mxu0 %v60
  %v3196 = vpop.f32.mrf.mxu0
  %v3197 = vadd.f32 %v208, %v3196
  %3198 = vdwg.mxu0
  %3199 = vmatpush.msra.mxu0 0.0
  %3200 = vmatpush.msra.mxu0 0.0
  %3201 = vmatpush.msra.mxu0 0.0
  %3202 = vmatpush.msra.mxu0 0.0
  %3203 = vmatpush.msra.mxu0 0.0
  %3204 = vmatpush.msra.mxu0 0.0
  %3205 = vmatpush.msra.mxu0 0.0
  %3206 = vmatpush.msra.mxu0 0.0
  %3207 = vmatpush.msra.mxu0 0.0
  %3208 = vmatpush.msra.mxu0 0.0
  %3209 = vmatpush.msra.mxu0 0.0
  %3210 = vmatpush.msra.mxu0 0.0
  %3211 = vmatpush.msra.mxu0 %v3154
  %3212 = vmatpush.msra.mxu0 %v3153
  %3213 = vmatpush.msra.mxu0 %v3152
  %3214 = vmatpush.msra.mxu0 %v3151
  %3215 = vmatmul.f32.gmra.mxu0 %v212
  %v3216 = vpop.f32.mrf.mxu0
  %v3217 = vadd.f32 %v3173, %v3216
  %3218 = vmatmul.f32.gmra.mxu0 %v215
  %v3219 = vpop.f32.mrf.mxu0
  %v3220 = vadd.f32 %v3176, %v3219
  %3221 = vmatmul.f32.gmra.mxu0 %v218
  %v3222 = vpop.f32.mrf.mxu0
  %v3223 = vadd.f32 %v3179, %v3222
  %3224 = vmatmul.f32.gmra.mxu0 %v221
  %v3225 = vpop.f32.mrf.mxu0
  %v3226 = vadd.f32 %v3182, %v3225
  %3227 = vmatmul.f32.gmra.mxu0 %v224
  %v3228 = vpop.f32.mrf.mxu0
  %v3229 = vadd.f32 %v3185, %v3228
  %3230 = vmatmul.f32.gmra.mxu0 %v227
  %v3231 = vpop.f32.mrf.mxu0
  %v3232 = vadd.f32 %v3188, %v3231
  %3233 = vmatmul.f32.gmra.mxu0 %v230
  %v3234 = vpop.f32.mrf.mxu0
  %v3235 = vadd.f32 %v3191, %v3234
  %3236 = vmatmul.f32.gmra.mxu0 %v233
  %v3237 = vpop.f32.mrf.mxu0
  %v3238 = vadd.f32 %v3194, %v3237
  %3239 = vmatmul.f32.gmra.mxu0 %v236
  %v3240 = vpop.f32.mrf.mxu0
  %v3241 = vadd.f32 %v3197, %v3240
  %3242 = vdwg.mxu0
  %3243 = vmatpush.msra.mxu0 %v3150
  %3244 = vmatpush.msra.mxu0 %v3149
  %3245 = vmatpush.msra.mxu0 %v3148
  %3246 = vmatpush.msra.mxu0 %v3147
  %3247 = vmatpush.msra.mxu0 %v3146
  %3248 = vmatpush.msra.mxu0 %v3145
  %3249 = vmatpush.msra.mxu0 %v3144
  %3250 = vmatpush.msra.mxu0 %v3143
  %3251 = vmatpush.msra.mxu0 %v3142
  %3252 = vmatpush.msra.mxu0 %v3141
  %3253 = vmatpush.msra.mxu0 %v3140
  %3254 = vmatpush.msra.mxu0 %v3139
  %3255 = vmatpush.msra.mxu0 %v3138
  %3256 = vmatpush.msra.mxu0 %v3137
  %3257 = vmatpush.msra.mxu0 %v3136
  %3258 = vmatpush.msra.mxu0 %v3135
  %3259 = vmatmul.f32.gmra.mxu0 %v62
  %v3260 = vpop.f32.mrf.mxu0
  %v3261 = vadd.f32 %v168, %v3260
  %3262 = vmatmul.f32.gmra.mxu0 %v64
  %v3263 = vpop.f32.mrf.mxu0
  %v3264 = vadd.f32 %v173, %v3263
  %3265 = vmatmul.f32.gmra.mxu0 %v66
  %v3266 = vpop.f32.mrf.mxu0
  %v3267 = vadd.f32 %v178, %v3266
  %3268 = vmatmul.f32.gmra.mxu0 %v68
  %v3269 = vpop.f32.mrf.mxu0
  %v3270 = vadd.f32 %v183, %v3269
  %3271 = vmatmul.f32.gmra.mxu0 %v70
  %v3272 = vpop.f32.mrf.mxu0
  %v3273 = vadd.f32 %v188, %v3272
  %3274 = vmatmul.f32.gmra.mxu0 %v72
  %v3275 = vpop.f32.mrf.mxu0
  %v3276 = vadd.f32 %v193, %v3275
  %3277 = vmatmul.f32.gmra.mxu0 %v74
  %v3278 = vpop.f32.mrf.mxu0
  %v3279 = vadd.f32 %v198, %v3278
  %3280 = vmatmul.f32.gmra.mxu0 %v76
  %v3281 = vpop.f32.mrf.mxu0
  %v3282 = vadd.f32 %v203, %v3281
  %3283 = vmatmul.f32.gmra.mxu0 %v78
  %v3284 = vpop.f32.mrf.mxu0
  %v3285 = vadd.f32 %v208, %v3284
  %3286 = vdwg.mxu0
  %3287 = vmatpush.msra.mxu0 0.0
  %3288 = vmatpush.msra.mxu0 0.0
  %3289 = vmatpush.msra.mxu0 0.0
  %3290 = vmatpush.msra.mxu0 0.0
  %3291 = vmatpush.msra.mxu0 0.0
  %3292 = vmatpush.msra.mxu0 0.0
  %3293 = vmatpush.msra.mxu0 0.0
  %3294 = vmatpush.msra.mxu0 0.0
  %3295 = vmatpush.msra.mxu0 0.0
  %3296 = vmatpush.msra.mxu0 0.0
  %3297 = vmatpush.msra.mxu0 0.0
  %3298 = vmatpush.msra.mxu0 0.0
  %3299 = vmatpush.msra.mxu0 %v3154
  %3300 = vmatpush.msra.mxu0 %v3153
  %3301 = vmatpush.msra.mxu0 %v3152
  %3302 = vmatpush.msra.mxu0 %v3151
  %3303 = vmatmul.f32.gmra.mxu0 %v327
  %v3304 = vpop.f32.mrf.mxu0
  %v3305 = vadd.f32 %v3261, %v3304
  %3306 = vmatmul.f32.gmra.mxu0 %v330
  %v3307 = vpop.f32.mrf.mxu0
  %v3308 = vadd.f32 %v3264, %v3307
  %3309 = vmatmul.f32.gmra.mxu0 %v333
  %v3310 = vpop.f32.mrf.mxu0
  %v3311 = vadd.f32 %v3267, %v3310
  %3312 = vmatmul.f32.gmra.mxu0 %v336
  %v3313 = vpop.f32.mrf.mxu0
  %v3314 = vadd.f32 %v3270, %v3313
  %3315 = vmatmul.f32.gmra.mxu0 %v339
  %v3316 = vpop.f32.mrf.mxu0
  %v3317 = vadd.f32 %v3273, %v3316
  %3318 = vmatmul.f32.gmra.mxu0 %v342
  %v3319 = vpop.f32.mrf.mxu0
  %v3320 = vadd.f32 %v3276, %v3319
  %3321 = vmatmul.f32.gmra.mxu0 %v345
  %v3322 = vpop.f32.mrf.mxu0
  %v3323 = vadd.f32 %v3279, %v3322
  %3324 = vmatmul.f32.gmra.mxu0 %v348
  %v3325 = vpop.f32.mrf.mxu0
  %v3326 = vadd.f32 %v3282, %v3325
  %3327 = vmatmul.f32.gmra.mxu0 %v351
  %v3328 = vpop.f32.mrf.mxu0
  %v3329 = vadd.f32 %v3285, %v3328
  %3330 = vdwg.mxu0
  %v3331 = vmax.f32 %v3217, %v3305
  %v3332 = vmax.f32 %v3220, %v3308
  %v3333 = vmax.f32 %v3223, %v3311
  %v3334 = vmax.f32 %v3226, %v3314
  %v3335 = vmax.f32 %v3229, %v3317
  %v3336 = vmax.f32 %v3232, %v3320
  %v3337 = vmax.f32 %v3235, %v3323
  %v3338 = vmax.f32 %v3238, %v3326
  %v3339 = vmax.f32 %v3241, %v3329
  %v3340 = vmax.f32 %v3331, 0.0
  %v3341 = vmax.f32 %v3332, 0.0
  %v3342 = vmax.f32 %v3333, 0.0
  %v3343 = vmax.f32 %v3334, 0.0
  %v3344 = vmax.f32 %v3335, 0.0
  %v3345 = vmax.f32 %v3336, 0.0
  %v3346 = vmax.f32 %v3337, 0.0
  %v3347 = vmax.f32 %v3338, 0.0
  %v3348 = vmax.f32 %v3339, 0.0
  %v3349 = vmax.f32 %v3126, %v3340
  %v3350 = vmax.f32 %v3127, %v3341
  %v3351 = vmax.f32 %v3128, %v3342
  %v3352 = vmax.f32 %v3129, %v3343
  %v3353 = vmax.f32 %v3130, %v3344
  %v3354 = vmax.f32 %v3131, %v3345
  %v3355 = vmax.f32 %v3132, %v3346
  %v3356 = vmax.f32 %v3133, %v3347
  %v3357 = vmax.f32 %v3134, %v3348
  %3358 = vst [vmem:[#allocation2 + $0x1b0] sm:$0xff] %v3349
  %3359 = vst [vmem:[#allocation2 + $0x1b8] sm:$0xff] %v3350
  %3360 = vst [vmem:[#allocation2 + $0x1c0] sm:$0xff] %v3351
  %3361 = vst [vmem:[#allocation2 + $0x1c8] sm:$0xff] %v3352
  %3362 = vst [vmem:[#allocation2 + $0x1d0] sm:$0xff] %v3353
  %3363 = vst [vmem:[#allocation2 + $0x1d8] sm:$0xff] %v3354
  %3364 = vst [vmem:[#allocation2 + $0x1e0] sm:$0xff] %v3355
  %3365 = vst [vmem:[#allocation2 + $0x1e8] sm:$0xff] %v3356
  %3366 = vst [vmem:[#allocation2 + $0x1f0] sm:$0xff] %v3357
  %v3367 = vld [vmem:[%s0 + $0x1c0] sm:$0xff]
  %v3368 = vld [vmem:[%s0 + $0x1c8] sm:$0xff]
  %v3369 = vld [vmem:[%s0 + $0x1d0] sm:$0xff]
  %v3370 = vld [vmem:[%s0 + $0x1d8] sm:$0xff]
  %v3371 = vld [vmem:[%s0 + $0x1e0] sm:$0xff]
  %v3372 = vld [vmem:[%s0 + $0x1e8] sm:$0xff]
  %v3373 = vld [vmem:[%s0 + $0x1f0] sm:$0xff]
  %v3374 = vld [vmem:[%s0 + $0x1f8] sm:$0xff]
  %v3375 = vld [vmem:[%s0 + $0x200] sm:$0xff]
  %v3376 = vld [vmem:[%s0 + $0x208] sm:$0xff]
  %v3377 = vld [vmem:[%s0 + $0x210] sm:$0xff]
  %v3378 = vld [vmem:[%s0 + $0x218] sm:$0xff]
  %v3379 = vld [vmem:[%s0 + $0x220] sm:$0xff]
  %v3380 = vld [vmem:[%s0 + $0x228] sm:$0xff]
  %v3381 = vld [vmem:[%s0 + $0x230] sm:$0xff]
  %v3382 = vld [vmem:[%s0 + $0x238] sm:$0xff]
  %v3383 = vld [vmem:[%s0 + $0x240] sm:$0xff]
  %v3384 = vld [vmem:[%s0 + $0x248] sm:$0xff]
  %v3385 = vld [vmem:[%s0 + $0x250] sm:$0xff]
  %v3386 = vld [vmem:[%s0 + $0x258] sm:$0xff]
  %3387 = vmatpush.msra.mxu0 %v3382
  %3388 = vmatpush.msra.mxu0 %v3381
  %3389 = vmatpush.msra.mxu0 %v3380
  %3390 = vmatpush.msra.mxu0 %v3379
  %3391 = vmatpush.msra.mxu0 %v3378
  %3392 = vmatpush.msra.mxu0 %v3377
  %3393 = vmatpush.msra.mxu0 %v3376
  %3394 = vmatpush.msra.mxu0 %v3375
  %3395 = vmatpush.msra.mxu0 %v3374
  %3396 = vmatpush.msra.mxu0 %v3373
  %3397 = vmatpush.msra.mxu0 %v3372
  %3398 = vmatpush.msra.mxu0 %v3371
  %3399 = vmatpush.msra.mxu0 %v3370
  %3400 = vmatpush.msra.mxu0 %v3369
  %3401 = vmatpush.msra.mxu0 %v3368
  %3402 = vmatpush.msra.mxu0 %v3367
  %3403 = vmatmul.f32.gmra.mxu0 %v44
  %v3404 = vpop.f32.mrf.mxu0
  %v3405 = vadd.f32 %v168, %v3404
  %3406 = vmatmul.f32.gmra.mxu0 %v46
  %v3407 = vpop.f32.mrf.mxu0
  %v3408 = vadd.f32 %v173, %v3407
  %3409 = vmatmul.f32.gmra.mxu0 %v48
  %v3410 = vpop.f32.mrf.mxu0
  %v3411 = vadd.f32 %v178, %v3410
  %3412 = vmatmul.f32.gmra.mxu0 %v50
  %v3413 = vpop.f32.mrf.mxu0
  %v3414 = vadd.f32 %v183, %v3413
  %3415 = vmatmul.f32.gmra.mxu0 %v52
  %v3416 = vpop.f32.mrf.mxu0
  %v3417 = vadd.f32 %v188, %v3416
  %3418 = vmatmul.f32.gmra.mxu0 %v54
  %v3419 = vpop.f32.mrf.mxu0
  %v3420 = vadd.f32 %v193, %v3419
  %3421 = vmatmul.f32.gmra.mxu0 %v56
  %v3422 = vpop.f32.mrf.mxu0
  %v3423 = vadd.f32 %v198, %v3422
  %3424 = vmatmul.f32.gmra.mxu0 %v58
  %v3425 = vpop.f32.mrf.mxu0
  %v3426 = vadd.f32 %v203, %v3425
  %3427 = vmatmul.f32.gmra.mxu0 %v60
  %v3428 = vpop.f32.mrf.mxu0
  %v3429 = vadd.f32 %v208, %v3428
  %3430 = vdwg.mxu0
  %3431 = vmatpush.msra.mxu0 0.0
  %3432 = vmatpush.msra.mxu0 0.0
  %3433 = vmatpush.msra.mxu0 0.0
  %3434 = vmatpush.msra.mxu0 0.0
  %3435 = vmatpush.msra.mxu0 0.0
  %3436 = vmatpush.msra.mxu0 0.0
  %3437 = vmatpush.msra.mxu0 0.0
  %3438 = vmatpush.msra.mxu0 0.0
  %3439 = vmatpush.msra.mxu0 0.0
  %3440 = vmatpush.msra.mxu0 0.0
  %3441 = vmatpush.msra.mxu0 0.0
  %3442 = vmatpush.msra.mxu0 0.0
  %3443 = vmatpush.msra.mxu0 %v3386
  %3444 = vmatpush.msra.mxu0 %v3385
  %3445 = vmatpush.msra.mxu0 %v3384
  %3446 = vmatpush.msra.mxu0 %v3383
  %3447 = vmatmul.f32.gmra.mxu0 %v212
  %v3448 = vpop.f32.mrf.mxu0
  %v3449 = vadd.f32 %v3405, %v3448
  %3450 = vmatmul.f32.gmra.mxu0 %v215
  %v3451 = vpop.f32.mrf.mxu0
  %v3452 = vadd.f32 %v3408, %v3451
  %3453 = vmatmul.f32.gmra.mxu0 %v218
  %v3454 = vpop.f32.mrf.mxu0
  %v3455 = vadd.f32 %v3411, %v3454
  %3456 = vmatmul.f32.gmra.mxu0 %v221
  %v3457 = vpop.f32.mrf.mxu0
  %v3458 = vadd.f32 %v3414, %v3457
  %3459 = vmatmul.f32.gmra.mxu0 %v224
  %v3460 = vpop.f32.mrf.mxu0
  %v3461 = vadd.f32 %v3417, %v3460
  %3462 = vmatmul.f32.gmra.mxu0 %v227
  %v3463 = vpop.f32.mrf.mxu0
  %v3464 = vadd.f32 %v3420, %v3463
  %3465 = vmatmul.f32.gmra.mxu0 %v230
  %v3466 = vpop.f32.mrf.mxu0
  %v3467 = vadd.f32 %v3423, %v3466
  %3468 = vmatmul.f32.gmra.mxu0 %v233
  %v3469 = vpop.f32.mrf.mxu0
  %v3470 = vadd.f32 %v3426, %v3469
  %3471 = vmatmul.f32.gmra.mxu0 %v236
  %v3472 = vpop.f32.mrf.mxu0
  %v3473 = vadd.f32 %v3429, %v3472
  %3474 = vdwg.mxu0
  %3475 = vmatpush.msra.mxu0 %v3382
  %3476 = vmatpush.msra.mxu0 %v3381
  %3477 = vmatpush.msra.mxu0 %v3380
  %3478 = vmatpush.msra.mxu0 %v3379
  %3479 = vmatpush.msra.mxu0 %v3378
  %3480 = vmatpush.msra.mxu0 %v3377
  %3481 = vmatpush.msra.mxu0 %v3376
  %3482 = vmatpush.msra.mxu0 %v3375
  %3483 = vmatpush.msra.mxu0 %v3374
  %3484 = vmatpush.msra.mxu0 %v3373
  %3485 = vmatpush.msra.mxu0 %v3372
  %3486 = vmatpush.msra.mxu0 %v3371
  %3487 = vmatpush.msra.mxu0 %v3370
  %3488 = vmatpush.msra.mxu0 %v3369
  %3489 = vmatpush.msra.mxu0 %v3368
  %3490 = vmatpush.msra.mxu0 %v3367
  %3491 = vmatmul.f32.gmra.mxu0 %v62
  %v3492 = vpop.f32.mrf.mxu0
  %v3493 = vadd.f32 %v168, %v3492
  %3494 = vmatmul.f32.gmra.mxu0 %v64
  %v3495 = vpop.f32.mrf.mxu0
  %v3496 = vadd.f32 %v173, %v3495
  %3497 = vmatmul.f32.gmra.mxu0 %v66
  %v3498 = vpop.f32.mrf.mxu0
  %v3499 = vadd.f32 %v178, %v3498
  %3500 = vmatmul.f32.gmra.mxu0 %v68
  %v3501 = vpop.f32.mrf.mxu0
  %v3502 = vadd.f32 %v183, %v3501
  %3503 = vmatmul.f32.gmra.mxu0 %v70
  %v3504 = vpop.f32.mrf.mxu0
  %v3505 = vadd.f32 %v188, %v3504
  %3506 = vmatmul.f32.gmra.mxu0 %v72
  %v3507 = vpop.f32.mrf.mxu0
  %v3508 = vadd.f32 %v193, %v3507
  %3509 = vmatmul.f32.gmra.mxu0 %v74
  %v3510 = vpop.f32.mrf.mxu0
  %v3511 = vadd.f32 %v198, %v3510
  %3512 = vmatmul.f32.gmra.mxu0 %v76
  %v3513 = vpop.f32.mrf.mxu0
  %v3514 = vadd.f32 %v203, %v3513
  %3515 = vmatmul.f32.gmra.mxu0 %v78
  %v3516 = vpop.f32.mrf.mxu0
  %v3517 = vadd.f32 %v208, %v3516
  %3518 = vdwg.mxu0
  %3519 = vmatpush.msra.mxu0 0.0
  %3520 = vmatpush.msra.mxu0 0.0
  %3521 = vmatpush.msra.mxu0 0.0
  %3522 = vmatpush.msra.mxu0 0.0
  %3523 = vmatpush.msra.mxu0 0.0
  %3524 = vmatpush.msra.mxu0 0.0
  %3525 = vmatpush.msra.mxu0 0.0
  %3526 = vmatpush.msra.mxu0 0.0
  %3527 = vmatpush.msra.mxu0 0.0
  %3528 = vmatpush.msra.mxu0 0.0
  %3529 = vmatpush.msra.mxu0 0.0
  %3530 = vmatpush.msra.mxu0 0.0
  %3531 = vmatpush.msra.mxu0 %v3386
  %3532 = vmatpush.msra.mxu0 %v3385
  %3533 = vmatpush.msra.mxu0 %v3384
  %3534 = vmatpush.msra.mxu0 %v3383
  %3535 = vmatmul.f32.gmra.mxu0 %v327
  %v3536 = vpop.f32.mrf.mxu0
  %v3537 = vadd.f32 %v3493, %v3536
  %3538 = vmatmul.f32.gmra.mxu0 %v330
  %v3539 = vpop.f32.mrf.mxu0
  %v3540 = vadd.f32 %v3496, %v3539
  %3541 = vmatmul.f32.gmra.mxu0 %v333
  %v3542 = vpop.f32.mrf.mxu0
  %v3543 = vadd.f32 %v3499, %v3542
  %3544 = vmatmul.f32.gmra.mxu0 %v336
  %v3545 = vpop.f32.mrf.mxu0
  %v3546 = vadd.f32 %v3502, %v3545
  %3547 = vmatmul.f32.gmra.mxu0 %v339
  %v3548 = vpop.f32.mrf.mxu0
  %v3549 = vadd.f32 %v3505, %v3548
  %3550 = vmatmul.f32.gmra.mxu0 %v342
  %v3551 = vpop.f32.mrf.mxu0
  %v3552 = vadd.f32 %v3508, %v3551
  %3553 = vmatmul.f32.gmra.mxu0 %v345
  %v3554 = vpop.f32.mrf.mxu0
  %v3555 = vadd.f32 %v3511, %v3554
  %3556 = vmatmul.f32.gmra.mxu0 %v348
  %v3557 = vpop.f32.mrf.mxu0
  %v3558 = vadd.f32 %v3514, %v3557
  %3559 = vmatmul.f32.gmra.mxu0 %v351
  %v3560 = vpop.f32.mrf.mxu0
  %v3561 = vadd.f32 %v3517, %v3560
  %3562 = vdwg.mxu0
  %v3563 = vmax.f32 %v3449, %v3537
  %v3564 = vmax.f32 %v3452, %v3540
  %v3565 = vmax.f32 %v3455, %v3543
  %v3566 = vmax.f32 %v3458, %v3546
  %v3567 = vmax.f32 %v3461, %v3549
  %v3568 = vmax.f32 %v3464, %v3552
  %v3569 = vmax.f32 %v3467, %v3555
  %v3570 = vmax.f32 %v3470, %v3558
  %v3571 = vmax.f32 %v3473, %v3561
  %v3572 = vmax.f32 %v3563, 0.0
  %v3573 = vmax.f32 %v3564, 0.0
  %v3574 = vmax.f32 %v3565, 0.0
  %v3575 = vmax.f32 %v3566, 0.0
  %v3576 = vmax.f32 %v3567, 0.0
  %v3577 = vmax.f32 %v3568, 0.0
  %v3578 = vmax.f32 %v3569, 0.0
  %v3579 = vmax.f32 %v3570, 0.0
  %v3580 = vmax.f32 %v3571, 0.0
  %v3581 = vld [vmem:[%s0 + $0x1e0] sm:$0xff]
  %v3582 = vld [vmem:[%s0 + $0x1e8] sm:$0xff]
  %v3583 = vld [vmem:[%s0 + $0x1f0] sm:$0xff]
  %v3584 = vld [vmem:[%s0 + $0x1f8] sm:$0xff]
  %v3585 = vld [vmem:[%s0 + $0x200] sm:$0xff]
  %v3586 = vld [vmem:[%s0 + $0x208] sm:$0xff]
  %v3587 = vld [vmem:[%s0 + $0x210] sm:$0xff]
  %v3588 = vld [vmem:[%s0 + $0x218] sm:$0xff]
  %v3589 = vld [vmem:[%s0 + $0x220] sm:$0xff]
  %v3590 = vld [vmem:[%s0 + $0x228] sm:$0xff]
  %v3591 = vld [vmem:[%s0 + $0x230] sm:$0xff]
  %v3592 = vld [vmem:[%s0 + $0x238] sm:$0xff]
  %v3593 = vld [vmem:[%s0 + $0x240] sm:$0xff]
  %v3594 = vld [vmem:[%s0 + $0x248] sm:$0xff]
  %v3595 = vld [vmem:[%s0 + $0x250] sm:$0xff]
  %v3596 = vld [vmem:[%s0 + $0x258] sm:$0xff]
  %v3597 = vld [vmem:[%s0 + $0x260] sm:$0xff]
  %v3598 = vld [vmem:[%s0 + $0x268] sm:$0xff]
  %v3599 = vld [vmem:[%s0 + $0x270] sm:$0xff]
  %v3600 = vld [vmem:[%s0 + $0x278] sm:$0xff]
  %3601 = vmatpush.msra.mxu0 %v3596
  %3602 = vmatpush.msra.mxu0 %v3595
  %3603 = vmatpush.msra.mxu0 %v3594
  %3604 = vmatpush.msra.mxu0 %v3593
  %3605 = vmatpush.msra.mxu0 %v3592
  %3606 = vmatpush.msra.mxu0 %v3591
  %3607 = vmatpush.msra.mxu0 %v3590
  %3608 = vmatpush.msra.mxu0 %v3589
  %3609 = vmatpush.msra.mxu0 %v3588
  %3610 = vmatpush.msra.mxu0 %v3587
  %3611 = vmatpush.msra.mxu0 %v3586
  %3612 = vmatpush.msra.mxu0 %v3585
  %3613 = vmatpush.msra.mxu0 %v3584
  %3614 = vmatpush.msra.mxu0 %v3583
  %3615 = vmatpush.msra.mxu0 %v3582
  %3616 = vmatpush.msra.mxu0 %v3581
  %3617 = vmatmul.f32.gmra.mxu0 %v44
  %v3618 = vpop.f32.mrf.mxu0
  %v3619 = vadd.f32 %v168, %v3618
  %3620 = vmatmul.f32.gmra.mxu0 %v46
  %v3621 = vpop.f32.mrf.mxu0
  %v3622 = vadd.f32 %v173, %v3621
  %3623 = vmatmul.f32.gmra.mxu0 %v48
  %v3624 = vpop.f32.mrf.mxu0
  %v3625 = vadd.f32 %v178, %v3624
  %3626 = vmatmul.f32.gmra.mxu0 %v50
  %v3627 = vpop.f32.mrf.mxu0
  %v3628 = vadd.f32 %v183, %v3627
  %3629 = vmatmul.f32.gmra.mxu0 %v52
  %v3630 = vpop.f32.mrf.mxu0
  %v3631 = vadd.f32 %v188, %v3630
  %3632 = vmatmul.f32.gmra.mxu0 %v54
  %v3633 = vpop.f32.mrf.mxu0
  %v3634 = vadd.f32 %v193, %v3633
  %3635 = vmatmul.f32.gmra.mxu0 %v56
  %v3636 = vpop.f32.mrf.mxu0
  %v3637 = vadd.f32 %v198, %v3636
  %3638 = vmatmul.f32.gmra.mxu0 %v58
  %v3639 = vpop.f32.mrf.mxu0
  %v3640 = vadd.f32 %v203, %v3639
  %3641 = vmatmul.f32.gmra.mxu0 %v60
  %v3642 = vpop.f32.mrf.mxu0
  %v3643 = vadd.f32 %v208, %v3642
  %3644 = vdwg.mxu0
  %3645 = vmatpush.msra.mxu0 0.0
  %3646 = vmatpush.msra.mxu0 0.0
  %3647 = vmatpush.msra.mxu0 0.0
  %3648 = vmatpush.msra.mxu0 0.0
  %3649 = vmatpush.msra.mxu0 0.0
  %3650 = vmatpush.msra.mxu0 0.0
  %3651 = vmatpush.msra.mxu0 0.0
  %3652 = vmatpush.msra.mxu0 0.0
  %3653 = vmatpush.msra.mxu0 0.0
  %3654 = vmatpush.msra.mxu0 0.0
  %3655 = vmatpush.msra.mxu0 0.0
  %3656 = vmatpush.msra.mxu0 0.0
  %3657 = vmatpush.msra.mxu0 %v3600
  %3658 = vmatpush.msra.mxu0 %v3599
  %3659 = vmatpush.msra.mxu0 %v3598
  %3660 = vmatpush.msra.mxu0 %v3597
  %3661 = vmatmul.f32.gmra.mxu0 %v212
  %v3662 = vpop.f32.mrf.mxu0
  %v3663 = vadd.f32 %v3619, %v3662
  %3664 = vmatmul.f32.gmra.mxu0 %v215
  %v3665 = vpop.f32.mrf.mxu0
  %v3666 = vadd.f32 %v3622, %v3665
  %3667 = vmatmul.f32.gmra.mxu0 %v218
  %v3668 = vpop.f32.mrf.mxu0
  %v3669 = vadd.f32 %v3625, %v3668
  %3670 = vmatmul.f32.gmra.mxu0 %v221
  %v3671 = vpop.f32.mrf.mxu0
  %v3672 = vadd.f32 %v3628, %v3671
  %3673 = vmatmul.f32.gmra.mxu0 %v224
  %v3674 = vpop.f32.mrf.mxu0
  %v3675 = vadd.f32 %v3631, %v3674
  %3676 = vmatmul.f32.gmra.mxu0 %v227
  %v3677 = vpop.f32.mrf.mxu0
  %v3678 = vadd.f32 %v3634, %v3677
  %3679 = vmatmul.f32.gmra.mxu0 %v230
  %v3680 = vpop.f32.mrf.mxu0
  %v3681 = vadd.f32 %v3637, %v3680
  %3682 = vmatmul.f32.gmra.mxu0 %v233
  %v3683 = vpop.f32.mrf.mxu0
  %v3684 = vadd.f32 %v3640, %v3683
  %3685 = vmatmul.f32.gmra.mxu0 %v236
  %v3686 = vpop.f32.mrf.mxu0
  %v3687 = vadd.f32 %v3643, %v3686
  %3688 = vdwg.mxu0
  %3689 = vmatpush.msra.mxu0 %v3596
  %3690 = vmatpush.msra.mxu0 %v3595
  %3691 = vmatpush.msra.mxu0 %v3594
  %3692 = vmatpush.msra.mxu0 %v3593
  %3693 = vmatpush.msra.mxu0 %v3592
  %3694 = vmatpush.msra.mxu0 %v3591
  %3695 = vmatpush.msra.mxu0 %v3590
  %3696 = vmatpush.msra.mxu0 %v3589
  %3697 = vmatpush.msra.mxu0 %v3588
  %3698 = vmatpush.msra.mxu0 %v3587
  %3699 = vmatpush.msra.mxu0 %v3586
  %3700 = vmatpush.msra.mxu0 %v3585
  %3701 = vmatpush.msra.mxu0 %v3584
  %3702 = vmatpush.msra.mxu0 %v3583
  %3703 = vmatpush.msra.mxu0 %v3582
  %3704 = vmatpush.msra.mxu0 %v3581
  %3705 = vmatmul.f32.gmra.mxu0 %v62
  %v3706 = vpop.f32.mrf.mxu0
  %v3707 = vadd.f32 %v168, %v3706
  %3708 = vmatmul.f32.gmra.mxu0 %v64
  %v3709 = vpop.f32.mrf.mxu0
  %v3710 = vadd.f32 %v173, %v3709
  %3711 = vmatmul.f32.gmra.mxu0 %v66
  %v3712 = vpop.f32.mrf.mxu0
  %v3713 = vadd.f32 %v178, %v3712
  %3714 = vmatmul.f32.gmra.mxu0 %v68
  %v3715 = vpop.f32.mrf.mxu0
  %v3716 = vadd.f32 %v183, %v3715
  %3717 = vmatmul.f32.gmra.mxu0 %v70
  %v3718 = vpop.f32.mrf.mxu0
  %v3719 = vadd.f32 %v188, %v3718
  %3720 = vmatmul.f32.gmra.mxu0 %v72
  %v3721 = vpop.f32.mrf.mxu0
  %v3722 = vadd.f32 %v193, %v3721
  %3723 = vmatmul.f32.gmra.mxu0 %v74
  %v3724 = vpop.f32.mrf.mxu0
  %v3725 = vadd.f32 %v198, %v3724
  %3726 = vmatmul.f32.gmra.mxu0 %v76
  %v3727 = vpop.f32.mrf.mxu0
  %v3728 = vadd.f32 %v203, %v3727
  %3729 = vmatmul.f32.gmra.mxu0 %v78
  %v3730 = vpop.f32.mrf.mxu0
  %v3731 = vadd.f32 %v208, %v3730
  %3732 = vdwg.mxu0
  %3733 = vmatpush.msra.mxu0 0.0
  %3734 = vmatpush.msra.mxu0 0.0
  %3735 = vmatpush.msra.mxu0 0.0
  %3736 = vmatpush.msra.mxu0 0.0
  %3737 = vmatpush.msra.mxu0 0.0
  %3738 = vmatpush.msra.mxu0 0.0
  %3739 = vmatpush.msra.mxu0 0.0
  %3740 = vmatpush.msra.mxu0 0.0
  %3741 = vmatpush.msra.mxu0 0.0
  %3742 = vmatpush.msra.mxu0 0.0
  %3743 = vmatpush.msra.mxu0 0.0
  %3744 = vmatpush.msra.mxu0 0.0
  %3745 = vmatpush.msra.mxu0 %v3600
  %3746 = vmatpush.msra.mxu0 %v3599
  %3747 = vmatpush.msra.mxu0 %v3598
  %3748 = vmatpush.msra.mxu0 %v3597
  %3749 = vmatmul.f32.gmra.mxu0 %v327
  %v3750 = vpop.f32.mrf.mxu0
  %v3751 = vadd.f32 %v3707, %v3750
  %3752 = vmatmul.f32.gmra.mxu0 %v330
  %v3753 = vpop.f32.mrf.mxu0
  %v3754 = vadd.f32 %v3710, %v3753
  %3755 = vmatmul.f32.gmra.mxu0 %v333
  %v3756 = vpop.f32.mrf.mxu0
  %v3757 = vadd.f32 %v3713, %v3756
  %3758 = vmatmul.f32.gmra.mxu0 %v336
  %v3759 = vpop.f32.mrf.mxu0
  %v3760 = vadd.f32 %v3716, %v3759
  %3761 = vmatmul.f32.gmra.mxu0 %v339
  %v3762 = vpop.f32.mrf.mxu0
  %v3763 = vadd.f32 %v3719, %v3762
  %3764 = vmatmul.f32.gmra.mxu0 %v342
  %v3765 = vpop.f32.mrf.mxu0
  %v3766 = vadd.f32 %v3722, %v3765
  %3767 = vmatmul.f32.gmra.mxu0 %v345
  %v3768 = vpop.f32.mrf.mxu0
  %v3769 = vadd.f32 %v3725, %v3768
  %3770 = vmatmul.f32.gmra.mxu0 %v348
  %v3771 = vpop.f32.mrf.mxu0
  %v3772 = vadd.f32 %v3728, %v3771
  %3773 = vmatmul.f32.gmra.mxu0 %v351
  %v3774 = vpop.f32.mrf.mxu0
  %v3775 = vadd.f32 %v3731, %v3774
  %3776 = vdwg.mxu0
  %v3777 = vmax.f32 %v3663, %v3751
  %v3778 = vmax.f32 %v3666, %v3754
  %v3779 = vmax.f32 %v3669, %v3757
  %v3780 = vmax.f32 %v3672, %v3760
  %v3781 = vmax.f32 %v3675, %v3763
  %v3782 = vmax.f32 %v3678, %v3766
  %v3783 = vmax.f32 %v3681, %v3769
  %v3784 = vmax.f32 %v3684, %v3772
  %v3785 = vmax.f32 %v3687, %v3775
  %v3786 = vmax.f32 %v3777, 0.0
  %v3787 = vmax.f32 %v3778, 0.0
  %v3788 = vmax.f32 %v3779, 0.0
  %v3789 = vmax.f32 %v3780, 0.0
  %v3790 = vmax.f32 %v3781, 0.0
  %v3791 = vmax.f32 %v3782, 0.0
  %v3792 = vmax.f32 %v3783, 0.0
  %v3793 = vmax.f32 %v3784, 0.0
  %v3794 = vmax.f32 %v3785, 0.0
  %v3795 = vmax.f32 %v3572, %v3786
  %v3796 = vmax.f32 %v3573, %v3787
  %v3797 = vmax.f32 %v3574, %v3788
  %v3798 = vmax.f32 %v3575, %v3789
  %v3799 = vmax.f32 %v3576, %v3790
  %v3800 = vmax.f32 %v3577, %v3791
  %v3801 = vmax.f32 %v3578, %v3792
  %v3802 = vmax.f32 %v3579, %v3793
  %v3803 = vmax.f32 %v3580, %v3794
  %3804 = vst [vmem:[#allocation2 + $0x1f8] sm:$0xff] %v3795
  %3805 = vst [vmem:[#allocation2 + $0x200] sm:$0xff] %v3796
  %3806 = vst [vmem:[#allocation2 + $0x208] sm:$0xff] %v3797
  %3807 = vst [vmem:[#allocation2 + $0x210] sm:$0xff] %v3798
  %3808 = vst [vmem:[#allocation2 + $0x218] sm:$0xff] %v3799
  %3809 = vst [vmem:[#allocation2 + $0x220] sm:$0xff] %v3800
  %3810 = vst [vmem:[#allocation2 + $0x228] sm:$0xff] %v3801
  %3811 = vst [vmem:[#allocation2 + $0x230] sm:$0xff] %v3802
  %3812 = vst [vmem:[#allocation2 + $0x238] sm:$0xff] %v3803
  %v3813 = vld [vmem:[%s0 + $0x200] sm:$0xff]
  %v3814 = vld [vmem:[%s0 + $0x208] sm:$0xff]
  %v3815 = vld [vmem:[%s0 + $0x210] sm:$0xff]
  %v3816 = vld [vmem:[%s0 + $0x218] sm:$0xff]
  %v3817 = vld [vmem:[%s0 + $0x220] sm:$0xff]
  %v3818 = vld [vmem:[%s0 + $0x228] sm:$0xff]
  %v3819 = vld [vmem:[%s0 + $0x230] sm:$0xff]
  %v3820 = vld [vmem:[%s0 + $0x238] sm:$0xff]
  %v3821 = vld [vmem:[%s0 + $0x240] sm:$0xff]
  %v3822 = vld [vmem:[%s0 + $0x248] sm:$0xff]
  %v3823 = vld [vmem:[%s0 + $0x250] sm:$0xff]
  %v3824 = vld [vmem:[%s0 + $0x258] sm:$0xff]
  %v3825 = vld [vmem:[%s0 + $0x260] sm:$0xff]
  %v3826 = vld [vmem:[%s0 + $0x268] sm:$0xff]
  %v3827 = vld [vmem:[%s0 + $0x270] sm:$0xff]
  %v3828 = vld [vmem:[%s0 + $0x278] sm:$0xff]
  %v3829 = vld [vmem:[%s0 + $0x280] sm:$0xff]
  %v3830 = vld [vmem:[%s0 + $0x288] sm:$0xff]
  %v3831 = vld [vmem:[%s0 + $0x290] sm:$0xff]
  %v3832 = vld [vmem:[%s0 + $0x298] sm:$0xff]
  %3833 = vmatpush.msra.mxu0 %v3828
  %3834 = vmatpush.msra.mxu0 %v3827
  %3835 = vmatpush.msra.mxu0 %v3826
  %3836 = vmatpush.msra.mxu0 %v3825
  %3837 = vmatpush.msra.mxu0 %v3824
  %3838 = vmatpush.msra.mxu0 %v3823
  %3839 = vmatpush.msra.mxu0 %v3822
  %3840 = vmatpush.msra.mxu0 %v3821
  %3841 = vmatpush.msra.mxu0 %v3820
  %3842 = vmatpush.msra.mxu0 %v3819
  %3843 = vmatpush.msra.mxu0 %v3818
  %3844 = vmatpush.msra.mxu0 %v3817
  %3845 = vmatpush.msra.mxu0 %v3816
  %3846 = vmatpush.msra.mxu0 %v3815
  %3847 = vmatpush.msra.mxu0 %v3814
  %3848 = vmatpush.msra.mxu0 %v3813
  %3849 = vmatmul.f32.gmra.mxu0 %v44
  %v3850 = vpop.f32.mrf.mxu0
  %v3851 = vadd.f32 %v168, %v3850
  %3852 = vmatmul.f32.gmra.mxu0 %v46
  %v3853 = vpop.f32.mrf.mxu0
  %v3854 = vadd.f32 %v173, %v3853
  %3855 = vmatmul.f32.gmra.mxu0 %v48
  %v3856 = vpop.f32.mrf.mxu0
  %v3857 = vadd.f32 %v178, %v3856
  %3858 = vmatmul.f32.gmra.mxu0 %v50
  %v3859 = vpop.f32.mrf.mxu0
  %v3860 = vadd.f32 %v183, %v3859
  %3861 = vmatmul.f32.gmra.mxu0 %v52
  %v3862 = vpop.f32.mrf.mxu0
  %v3863 = vadd.f32 %v188, %v3862
  %3864 = vmatmul.f32.gmra.mxu0 %v54
  %v3865 = vpop.f32.mrf.mxu0
  %v3866 = vadd.f32 %v193, %v3865
  %3867 = vmatmul.f32.gmra.mxu0 %v56
  %v3868 = vpop.f32.mrf.mxu0
  %v3869 = vadd.f32 %v198, %v3868
  %3870 = vmatmul.f32.gmra.mxu0 %v58
  %v3871 = vpop.f32.mrf.mxu0
  %v3872 = vadd.f32 %v203, %v3871
  %3873 = vmatmul.f32.gmra.mxu0 %v60
  %v3874 = vpop.f32.mrf.mxu0
  %v3875 = vadd.f32 %v208, %v3874
  %3876 = vdwg.mxu0
  %3877 = vmatpush.msra.mxu0 0.0
  %3878 = vmatpush.msra.mxu0 0.0
  %3879 = vmatpush.msra.mxu0 0.0
  %3880 = vmatpush.msra.mxu0 0.0
  %3881 = vmatpush.msra.mxu0 0.0
  %3882 = vmatpush.msra.mxu0 0.0
  %3883 = vmatpush.msra.mxu0 0.0
  %3884 = vmatpush.msra.mxu0 0.0
  %3885 = vmatpush.msra.mxu0 0.0
  %3886 = vmatpush.msra.mxu0 0.0
  %3887 = vmatpush.msra.mxu0 0.0
  %3888 = vmatpush.msra.mxu0 0.0
  %3889 = vmatpush.msra.mxu0 %v3832
  %3890 = vmatpush.msra.mxu0 %v3831
  %3891 = vmatpush.msra.mxu0 %v3830
  %3892 = vmatpush.msra.mxu0 %v3829
  %3893 = vmatmul.f32.gmra.mxu0 %v212
  %v3894 = vpop.f32.mrf.mxu0
  %v3895 = vadd.f32 %v3851, %v3894
  %3896 = vmatmul.f32.gmra.mxu0 %v215
  %v3897 = vpop.f32.mrf.mxu0
  %v3898 = vadd.f32 %v3854, %v3897
  %3899 = vmatmul.f32.gmra.mxu0 %v218
  %v3900 = vpop.f32.mrf.mxu0
  %v3901 = vadd.f32 %v3857, %v3900
  %3902 = vmatmul.f32.gmra.mxu0 %v221
  %v3903 = vpop.f32.mrf.mxu0
  %v3904 = vadd.f32 %v3860, %v3903
  %3905 = vmatmul.f32.gmra.mxu0 %v224
  %v3906 = vpop.f32.mrf.mxu0
  %v3907 = vadd.f32 %v3863, %v3906
  %3908 = vmatmul.f32.gmra.mxu0 %v227
  %v3909 = vpop.f32.mrf.mxu0
  %v3910 = vadd.f32 %v3866, %v3909
  %3911 = vmatmul.f32.gmra.mxu0 %v230
  %v3912 = vpop.f32.mrf.mxu0
  %v3913 = vadd.f32 %v3869, %v3912
  %3914 = vmatmul.f32.gmra.mxu0 %v233
  %v3915 = vpop.f32.mrf.mxu0
  %v3916 = vadd.f32 %v3872, %v3915
  %3917 = vmatmul.f32.gmra.mxu0 %v236
  %v3918 = vpop.f32.mrf.mxu0
  %v3919 = vadd.f32 %v3875, %v3918
  %3920 = vdwg.mxu0
  %3921 = vmatpush.msra.mxu0 %v3828
  %3922 = vmatpush.msra.mxu0 %v3827
  %3923 = vmatpush.msra.mxu0 %v3826
  %3924 = vmatpush.msra.mxu0 %v3825
  %3925 = vmatpush.msra.mxu0 %v3824
  %3926 = vmatpush.msra.mxu0 %v3823
  %3927 = vmatpush.msra.mxu0 %v3822
  %3928 = vmatpush.msra.mxu0 %v3821
  %3929 = vmatpush.msra.mxu0 %v3820
  %3930 = vmatpush.msra.mxu0 %v3819
  %3931 = vmatpush.msra.mxu0 %v3818
  %3932 = vmatpush.msra.mxu0 %v3817
  %3933 = vmatpush.msra.mxu0 %v3816
  %3934 = vmatpush.msra.mxu0 %v3815
  %3935 = vmatpush.msra.mxu0 %v3814
  %3936 = vmatpush.msra.mxu0 %v3813
  %3937 = vmatmul.f32.gmra.mxu0 %v62
  %v3938 = vpop.f32.mrf.mxu0
  %v3939 = vadd.f32 %v168, %v3938
  %3940 = vmatmul.f32.gmra.mxu0 %v64
  %v3941 = vpop.f32.mrf.mxu0
  %v3942 = vadd.f32 %v173, %v3941
  %3943 = vmatmul.f32.gmra.mxu0 %v66
  %v3944 = vpop.f32.mrf.mxu0
  %v3945 = vadd.f32 %v178, %v3944
  %3946 = vmatmul.f32.gmra.mxu0 %v68
  %v3947 = vpop.f32.mrf.mxu0
  %v3948 = vadd.f32 %v183, %v3947
  %3949 = vmatmul.f32.gmra.mxu0 %v70
  %v3950 = vpop.f32.mrf.mxu0
  %v3951 = vadd.f32 %v188, %v3950
  %3952 = vmatmul.f32.gmra.mxu0 %v72
  %v3953 = vpop.f32.mrf.mxu0
  %v3954 = vadd.f32 %v193, %v3953
  %3955 = vmatmul.f32.gmra.mxu0 %v74
  %v3956 = vpop.f32.mrf.mxu0
  %v3957 = vadd.f32 %v198, %v3956
  %3958 = vmatmul.f32.gmra.mxu0 %v76
  %v3959 = vpop.f32.mrf.mxu0
  %v3960 = vadd.f32 %v203, %v3959
  %3961 = vmatmul.f32.gmra.mxu0 %v78
  %v3962 = vpop.f32.mrf.mxu0
  %v3963 = vadd.f32 %v208, %v3962
  %3964 = vdwg.mxu0
  %3965 = vmatpush.msra.mxu0 0.0
  %3966 = vmatpush.msra.mxu0 0.0
  %3967 = vmatpush.msra.mxu0 0.0
  %3968 = vmatpush.msra.mxu0 0.0
  %3969 = vmatpush.msra.mxu0 0.0
  %3970 = vmatpush.msra.mxu0 0.0
  %3971 = vmatpush.msra.mxu0 0.0
  %3972 = vmatpush.msra.mxu0 0.0
  %3973 = vmatpush.msra.mxu0 0.0
  %3974 = vmatpush.msra.mxu0 0.0
  %3975 = vmatpush.msra.mxu0 0.0
  %3976 = vmatpush.msra.mxu0 0.0
  %3977 = vmatpush.msra.mxu0 %v3832
  %3978 = vmatpush.msra.mxu0 %v3831
  %3979 = vmatpush.msra.mxu0 %v3830
  %3980 = vmatpush.msra.mxu0 %v3829
  %3981 = vmatmul.f32.gmra.mxu0 %v327
  %v3982 = vpop.f32.mrf.mxu0
  %v3983 = vadd.f32 %v3939, %v3982
  %3984 = vmatmul.f32.gmra.mxu0 %v330
  %v3985 = vpop.f32.mrf.mxu0
  %v3986 = vadd.f32 %v3942, %v3985
  %3987 = vmatmul.f32.gmra.mxu0 %v333
  %v3988 = vpop.f32.mrf.mxu0
  %v3989 = vadd.f32 %v3945, %v3988
  %3990 = vmatmul.f32.gmra.mxu0 %v336
  %v3991 = vpop.f32.mrf.mxu0
  %v3992 = vadd.f32 %v3948, %v3991
  %3993 = vmatmul.f32.gmra.mxu0 %v339
  %v3994 = vpop.f32.mrf.mxu0
  %v3995 = vadd.f32 %v3951, %v3994
  %3996 = vmatmul.f32.gmra.mxu0 %v342
  %v3997 = vpop.f32.mrf.mxu0
  %v3998 = vadd.f32 %v3954, %v3997
  %3999 = vmatmul.f32.gmra.mxu0 %v345
  %v4000 = vpop.f32.mrf.mxu0
  %v4001 = vadd.f32 %v3957, %v4000
  %4002 = vmatmul.f32.gmra.mxu0 %v348
  %v4003 = vpop.f32.mrf.mxu0
  %v4004 = vadd.f32 %v3960, %v4003
  %4005 = vmatmul.f32.gmra.mxu0 %v351
  %v4006 = vpop.f32.mrf.mxu0
  %v4007 = vadd.f32 %v3963, %v4006
  %4008 = vdwg.mxu0
  %v4009 = vmax.f32 %v3895, %v3983
  %v4010 = vmax.f32 %v3898, %v3986
  %v4011 = vmax.f32 %v3901, %v3989
  %v4012 = vmax.f32 %v3904, %v3992
  %v4013 = vmax.f32 %v3907, %v3995
  %v4014 = vmax.f32 %v3910, %v3998
  %v4015 = vmax.f32 %v3913, %v4001
  %v4016 = vmax.f32 %v3916, %v4004
  %v4017 = vmax.f32 %v3919, %v4007
  %v4018 = vmax.f32 %v4009, 0.0
  %v4019 = vmax.f32 %v4010, 0.0
  %v4020 = vmax.f32 %v4011, 0.0
  %v4021 = vmax.f32 %v4012, 0.0
  %v4022 = vmax.f32 %v4013, 0.0
  %v4023 = vmax.f32 %v4014, 0.0
  %v4024 = vmax.f32 %v4015, 0.0
  %v4025 = vmax.f32 %v4016, 0.0
  %v4026 = vmax.f32 %v4017, 0.0
  %v4027 = vld [vmem:[%s0 + $0x220] sm:$0xff]
  %v4028 = vld [vmem:[%s0 + $0x228] sm:$0xff]
  %v4029 = vld [vmem:[%s0 + $0x230] sm:$0xff]
  %v4030 = vld [vmem:[%s0 + $0x238] sm:$0xff]
  %v4031 = vld [vmem:[%s0 + $0x240] sm:$0xff]
  %v4032 = vld [vmem:[%s0 + $0x248] sm:$0xff]
  %v4033 = vld [vmem:[%s0 + $0x250] sm:$0xff]
  %v4034 = vld [vmem:[%s0 + $0x258] sm:$0xff]
  %v4035 = vld [vmem:[%s0 + $0x260] sm:$0xff]
  %v4036 = vld [vmem:[%s0 + $0x268] sm:$0xff]
  %v4037 = vld [vmem:[%s0 + $0x270] sm:$0xff]
  %v4038 = vld [vmem:[%s0 + $0x278] sm:$0xff]
  %v4039 = vld [vmem:[%s0 + $0x280] sm:$0xff]
  %v4040 = vld [vmem:[%s0 + $0x288] sm:$0xff]
  %v4041 = vld [vmem:[%s0 + $0x290] sm:$0xff]
  %v4042 = vld [vmem:[%s0 + $0x298] sm:$0xff]
  %v4043 = vld [vmem:[%s0 + $0x2a0] sm:$0xff]
  %v4044 = vld [vmem:[%s0 + $0x2a8] sm:$0xff]
  %v4045 = vld [vmem:[%s0 + $0x2b0] sm:$0xff]
  %v4046 = vld [vmem:[%s0 + $0x2b8] sm:$0xff]
  %4047 = vmatpush.msra.mxu0 %v4042
  %4048 = vmatpush.msra.mxu0 %v4041
  %4049 = vmatpush.msra.mxu0 %v4040
  %4050 = vmatpush.msra.mxu0 %v4039
  %4051 = vmatpush.msra.mxu0 %v4038
  %4052 = vmatpush.msra.mxu0 %v4037
  %4053 = vmatpush.msra.mxu0 %v4036
  %4054 = vmatpush.msra.mxu0 %v4035
  %4055 = vmatpush.msra.mxu0 %v4034
  %4056 = vmatpush.msra.mxu0 %v4033
  %4057 = vmatpush.msra.mxu0 %v4032
  %4058 = vmatpush.msra.mxu0 %v4031
  %4059 = vmatpush.msra.mxu0 %v4030
  %4060 = vmatpush.msra.mxu0 %v4029
  %4061 = vmatpush.msra.mxu0 %v4028
  %4062 = vmatpush.msra.mxu0 %v4027
  %4063 = vmatmul.f32.gmra.mxu0 %v44
  %v4064 = vpop.f32.mrf.mxu0
  %v4065 = vadd.f32 %v168, %v4064
  %4066 = vmatmul.f32.gmra.mxu0 %v46
  %v4067 = vpop.f32.mrf.mxu0
  %v4068 = vadd.f32 %v173, %v4067
  %4069 = vmatmul.f32.gmra.mxu0 %v48
  %v4070 = vpop.f32.mrf.mxu0
  %v4071 = vadd.f32 %v178, %v4070
  %4072 = vmatmul.f32.gmra.mxu0 %v50
  %v4073 = vpop.f32.mrf.mxu0
  %v4074 = vadd.f32 %v183, %v4073
  %4075 = vmatmul.f32.gmra.mxu0 %v52
  %v4076 = vpop.f32.mrf.mxu0
  %v4077 = vadd.f32 %v188, %v4076
  %4078 = vmatmul.f32.gmra.mxu0 %v54
  %v4079 = vpop.f32.mrf.mxu0
  %v4080 = vadd.f32 %v193, %v4079
  %4081 = vmatmul.f32.gmra.mxu0 %v56
  %v4082 = vpop.f32.mrf.mxu0
  %v4083 = vadd.f32 %v198, %v4082
  %4084 = vmatmul.f32.gmra.mxu0 %v58
  %v4085 = vpop.f32.mrf.mxu0
  %v4086 = vadd.f32 %v203, %v4085
  %4087 = vmatmul.f32.gmra.mxu0 %v60
  %v4088 = vpop.f32.mrf.mxu0
  %v4089 = vadd.f32 %v208, %v4088
  %4090 = vdwg.mxu0
  %4091 = vmatpush.msra.mxu0 0.0
  %4092 = vmatpush.msra.mxu0 0.0
  %4093 = vmatpush.msra.mxu0 0.0
  %4094 = vmatpush.msra.mxu0 0.0
  %4095 = vmatpush.msra.mxu0 0.0
  %4096 = vmatpush.msra.mxu0 0.0
  %4097 = vmatpush.msra.mxu0 0.0
  %4098 = vmatpush.msra.mxu0 0.0
  %4099 = vmatpush.msra.mxu0 0.0
  %4100 = vmatpush.msra.mxu0 0.0
  %4101 = vmatpush.msra.mxu0 0.0
  %4102 = vmatpush.msra.mxu0 0.0
  %4103 = vmatpush.msra.mxu0 %v4046
  %4104 = vmatpush.msra.mxu0 %v4045
  %4105 = vmatpush.msra.mxu0 %v4044
  %4106 = vmatpush.msra.mxu0 %v4043
  %4107 = vmatmul.f32.gmra.mxu0 %v212
  %v4108 = vpop.f32.mrf.mxu0
  %v4109 = vadd.f32 %v4065, %v4108
  %4110 = vmatmul.f32.gmra.mxu0 %v215
  %v4111 = vpop.f32.mrf.mxu0
  %v4112 = vadd.f32 %v4068, %v4111
  %4113 = vmatmul.f32.gmra.mxu0 %v218
  %v4114 = vpop.f32.mrf.mxu0
  %v4115 = vadd.f32 %v4071, %v4114
  %4116 = vmatmul.f32.gmra.mxu0 %v221
  %v4117 = vpop.f32.mrf.mxu0
  %v4118 = vadd.f32 %v4074, %v4117
  %4119 = vmatmul.f32.gmra.mxu0 %v224
  %v4120 = vpop.f32.mrf.mxu0
  %v4121 = vadd.f32 %v4077, %v4120
  %4122 = vmatmul.f32.gmra.mxu0 %v227
  %v4123 = vpop.f32.mrf.mxu0
  %v4124 = vadd.f32 %v4080, %v4123
  %4125 = vmatmul.f32.gmra.mxu0 %v230
  %v4126 = vpop.f32.mrf.mxu0
  %v4127 = vadd.f32 %v4083, %v4126
  %4128 = vmatmul.f32.gmra.mxu0 %v233
  %v4129 = vpop.f32.mrf.mxu0
  %v4130 = vadd.f32 %v4086, %v4129
  %4131 = vmatmul.f32.gmra.mxu0 %v236
  %v4132 = vpop.f32.mrf.mxu0
  %v4133 = vadd.f32 %v4089, %v4132
  %4134 = vdwg.mxu0
  %4135 = vmatpush.msra.mxu0 %v4042
  %4136 = vmatpush.msra.mxu0 %v4041
  %4137 = vmatpush.msra.mxu0 %v4040
  %4138 = vmatpush.msra.mxu0 %v4039
  %4139 = vmatpush.msra.mxu0 %v4038
  %4140 = vmatpush.msra.mxu0 %v4037
  %4141 = vmatpush.msra.mxu0 %v4036
  %4142 = vmatpush.msra.mxu0 %v4035
  %4143 = vmatpush.msra.mxu0 %v4034
  %4144 = vmatpush.msra.mxu0 %v4033
  %4145 = vmatpush.msra.mxu0 %v4032
  %4146 = vmatpush.msra.mxu0 %v4031
  %4147 = vmatpush.msra.mxu0 %v4030
  %4148 = vmatpush.msra.mxu0 %v4029
  %4149 = vmatpush.msra.mxu0 %v4028
  %4150 = vmatpush.msra.mxu0 %v4027
  %4151 = vmatmul.f32.gmra.mxu0 %v62
  %v4152 = vpop.f32.mrf.mxu0
  %v4153 = vadd.f32 %v168, %v4152
  %4154 = vmatmul.f32.gmra.mxu0 %v64
  %v4155 = vpop.f32.mrf.mxu0
  %v4156 = vadd.f32 %v173, %v4155
  %4157 = vmatmul.f32.gmra.mxu0 %v66
  %v4158 = vpop.f32.mrf.mxu0
  %v4159 = vadd.f32 %v178, %v4158
  %4160 = vmatmul.f32.gmra.mxu0 %v68
  %v4161 = vpop.f32.mrf.mxu0
  %v4162 = vadd.f32 %v183, %v4161
  %4163 = vmatmul.f32.gmra.mxu0 %v70
  %v4164 = vpop.f32.mrf.mxu0
  %v4165 = vadd.f32 %v188, %v4164
  %4166 = vmatmul.f32.gmra.mxu0 %v72
  %v4167 = vpop.f32.mrf.mxu0
  %v4168 = vadd.f32 %v193, %v4167
  %4169 = vmatmul.f32.gmra.mxu0 %v74
  %v4170 = vpop.f32.mrf.mxu0
  %v4171 = vadd.f32 %v198, %v4170
  %4172 = vmatmul.f32.gmra.mxu0 %v76
  %v4173 = vpop.f32.mrf.mxu0
  %v4174 = vadd.f32 %v203, %v4173
  %4175 = vmatmul.f32.gmra.mxu0 %v78
  %v4176 = vpop.f32.mrf.mxu0
  %v4177 = vadd.f32 %v208, %v4176
  %4178 = vdwg.mxu0
  %4179 = vmatpush.msra.mxu0 0.0
  %4180 = vmatpush.msra.mxu0 0.0
  %4181 = vmatpush.msra.mxu0 0.0
  %4182 = vmatpush.msra.mxu0 0.0
  %4183 = vmatpush.msra.mxu0 0.0
  %4184 = vmatpush.msra.mxu0 0.0
  %4185 = vmatpush.msra.mxu0 0.0
  %4186 = vmatpush.msra.mxu0 0.0
  %4187 = vmatpush.msra.mxu0 0.0
  %4188 = vmatpush.msra.mxu0 0.0
  %4189 = vmatpush.msra.mxu0 0.0
  %4190 = vmatpush.msra.mxu0 0.0
  %4191 = vmatpush.msra.mxu0 %v4046
  %4192 = vmatpush.msra.mxu0 %v4045
  %4193 = vmatpush.msra.mxu0 %v4044
  %4194 = vmatpush.msra.mxu0 %v4043
  %4195 = vmatmul.f32.gmra.mxu0 %v327
  %v4196 = vpop.f32.mrf.mxu0
  %v4197 = vadd.f32 %v4153, %v4196
  %4198 = vmatmul.f32.gmra.mxu0 %v330
  %v4199 = vpop.f32.mrf.mxu0
  %v4200 = vadd.f32 %v4156, %v4199
  %4201 = vmatmul.f32.gmra.mxu0 %v333
  %v4202 = vpop.f32.mrf.mxu0
  %v4203 = vadd.f32 %v4159, %v4202
  %4204 = vmatmul.f32.gmra.mxu0 %v336
  %v4205 = vpop.f32.mrf.mxu0
  %v4206 = vadd.f32 %v4162, %v4205
  %4207 = vmatmul.f32.gmra.mxu0 %v339
  %v4208 = vpop.f32.mrf.mxu0
  %v4209 = vadd.f32 %v4165, %v4208
  %4210 = vmatmul.f32.gmra.mxu0 %v342
  %v4211 = vpop.f32.mrf.mxu0
  %v4212 = vadd.f32 %v4168, %v4211
  %4213 = vmatmul.f32.gmra.mxu0 %v345
  %v4214 = vpop.f32.mrf.mxu0
  %v4215 = vadd.f32 %v4171, %v4214
  %4216 = vmatmul.f32.gmra.mxu0 %v348
  %v4217 = vpop.f32.mrf.mxu0
  %v4218 = vadd.f32 %v4174, %v4217
  %4219 = vmatmul.f32.gmra.mxu0 %v351
  %v4220 = vpop.f32.mrf.mxu0
  %v4221 = vadd.f32 %v4177, %v4220
  %4222 = vdwg.mxu0
  %v4223 = vmax.f32 %v4109, %v4197
  %v4224 = vmax.f32 %v4112, %v4200
  %v4225 = vmax.f32 %v4115, %v4203
  %v4226 = vmax.f32 %v4118, %v4206
  %v4227 = vmax.f32 %v4121, %v4209
  %v4228 = vmax.f32 %v4124, %v4212
  %v4229 = vmax.f32 %v4127, %v4215
  %v4230 = vmax.f32 %v4130, %v4218
  %v4231 = vmax.f32 %v4133, %v4221
  %v4232 = vmax.f32 %v4223, 0.0
  %v4233 = vmax.f32 %v4224, 0.0
  %v4234 = vmax.f32 %v4225, 0.0
  %v4235 = vmax.f32 %v4226, 0.0
  %v4236 = vmax.f32 %v4227, 0.0
  %v4237 = vmax.f32 %v4228, 0.0
  %v4238 = vmax.f32 %v4229, 0.0
  %v4239 = vmax.f32 %v4230, 0.0
  %v4240 = vmax.f32 %v4231, 0.0
  %v4241 = vmax.f32 %v4018, %v4232
  %v4242 = vmax.f32 %v4019, %v4233
  %v4243 = vmax.f32 %v4020, %v4234
  %v4244 = vmax.f32 %v4021, %v4235
  %v4245 = vmax.f32 %v4022, %v4236
  %v4246 = vmax.f32 %v4023, %v4237
  %v4247 = vmax.f32 %v4024, %v4238
  %v4248 = vmax.f32 %v4025, %v4239
  %v4249 = vmax.f32 %v4026, %v4240
  %4250 = vst [vmem:[#allocation2 + $0x240] sm:$0xff] %v4241
  %4251 = vst [vmem:[#allocation2 + $0x248] sm:$0xff] %v4242
  %4252 = vst [vmem:[#allocation2 + $0x250] sm:$0xff] %v4243
  %4253 = vst [vmem:[#allocation2 + $0x258] sm:$0xff] %v4244
  %4254 = vst [vmem:[#allocation2 + $0x260] sm:$0xff] %v4245
  %4255 = vst [vmem:[#allocation2 + $0x268] sm:$0xff] %v4246
  %4256 = vst [vmem:[#allocation2 + $0x270] sm:$0xff] %v4247
  %4257 = vst [vmem:[#allocation2 + $0x278] sm:$0xff] %v4248
  %4258 = vst [vmem:[#allocation2 + $0x280] sm:$0xff] %v4249
  %v4259 = vld [vmem:[%s0 + $0x240] sm:$0xff]
  %v4260 = vld [vmem:[%s0 + $0x248] sm:$0xff]
  %v4261 = vld [vmem:[%s0 + $0x250] sm:$0xff]
  %v4262 = vld [vmem:[%s0 + $0x258] sm:$0xff]
  %v4263 = vld [vmem:[%s0 + $0x260] sm:$0xff]
  %v4264 = vld [vmem:[%s0 + $0x268] sm:$0xff]
  %v4265 = vld [vmem:[%s0 + $0x270] sm:$0xff]
  %v4266 = vld [vmem:[%s0 + $0x278] sm:$0xff]
  %v4267 = vld [vmem:[%s0 + $0x280] sm:$0xff]
  %v4268 = vld [vmem:[%s0 + $0x288] sm:$0xff]
  %v4269 = vld [vmem:[%s0 + $0x290] sm:$0xff]
  %v4270 = vld [vmem:[%s0 + $0x298] sm:$0xff]
  %v4271 = vld [vmem:[%s0 + $0x2a0] sm:$0xff]
  %v4272 = vld [vmem:[%s0 + $0x2a8] sm:$0xff]
  %v4273 = vld [vmem:[%s0 + $0x2b0] sm:$0xff]
  %v4274 = vld [vmem:[%s0 + $0x2b8] sm:$0xff]
  %v4275 = vld [vmem:[%s0 + $0x2c0] sm:$0xff]
  %v4276 = vld [vmem:[%s0 + $0x2c8] sm:$0xff]
  %v4277 = vld [vmem:[%s0 + $0x2d0] sm:$0xff]
  %v4278 = vld [vmem:[%s0 + $0x2d8] sm:$0xff]
  %4279 = vmatpush.msra.mxu0 %v4274
  %4280 = vmatpush.msra.mxu0 %v4273
  %4281 = vmatpush.msra.mxu0 %v4272
  %4282 = vmatpush.msra.mxu0 %v4271
  %4283 = vmatpush.msra.mxu0 %v4270
  %4284 = vmatpush.msra.mxu0 %v4269
  %4285 = vmatpush.msra.mxu0 %v4268
  %4286 = vmatpush.msra.mxu0 %v4267
  %4287 = vmatpush.msra.mxu0 %v4266
  %4288 = vmatpush.msra.mxu0 %v4265
  %4289 = vmatpush.msra.mxu0 %v4264
  %4290 = vmatpush.msra.mxu0 %v4263
  %4291 = vmatpush.msra.mxu0 %v4262
  %4292 = vmatpush.msra.mxu0 %v4261
  %4293 = vmatpush.msra.mxu0 %v4260
  %4294 = vmatpush.msra.mxu0 %v4259
  %4295 = vmatmul.f32.gmra.mxu0 %v44
  %v4296 = vpop.f32.mrf.mxu0
  %v4297 = vadd.f32 %v168, %v4296
  %4298 = vmatmul.f32.gmra.mxu0 %v46
  %v4299 = vpop.f32.mrf.mxu0
  %v4300 = vadd.f32 %v173, %v4299
  %4301 = vmatmul.f32.gmra.mxu0 %v48
  %v4302 = vpop.f32.mrf.mxu0
  %v4303 = vadd.f32 %v178, %v4302
  %4304 = vmatmul.f32.gmra.mxu0 %v50
  %v4305 = vpop.f32.mrf.mxu0
  %v4306 = vadd.f32 %v183, %v4305
  %4307 = vmatmul.f32.gmra.mxu0 %v52
  %v4308 = vpop.f32.mrf.mxu0
  %v4309 = vadd.f32 %v188, %v4308
  %4310 = vmatmul.f32.gmra.mxu0 %v54
  %v4311 = vpop.f32.mrf.mxu0
  %v4312 = vadd.f32 %v193, %v4311
  %4313 = vmatmul.f32.gmra.mxu0 %v56
  %v4314 = vpop.f32.mrf.mxu0
  %v4315 = vadd.f32 %v198, %v4314
  %4316 = vmatmul.f32.gmra.mxu0 %v58
  %v4317 = vpop.f32.mrf.mxu0
  %v4318 = vadd.f32 %v203, %v4317
  %4319 = vmatmul.f32.gmra.mxu0 %v60
  %v4320 = vpop.f32.mrf.mxu0
  %v4321 = vadd.f32 %v208, %v4320
  %4322 = vdwg.mxu0
  %4323 = vmatpush.msra.mxu0 0.0
  %4324 = vmatpush.msra.mxu0 0.0
  %4325 = vmatpush.msra.mxu0 0.0
  %4326 = vmatpush.msra.mxu0 0.0
  %4327 = vmatpush.msra.mxu0 0.0
  %4328 = vmatpush.msra.mxu0 0.0
  %4329 = vmatpush.msra.mxu0 0.0
  %4330 = vmatpush.msra.mxu0 0.0
  %4331 = vmatpush.msra.mxu0 0.0
  %4332 = vmatpush.msra.mxu0 0.0
  %4333 = vmatpush.msra.mxu0 0.0
  %4334 = vmatpush.msra.mxu0 0.0
  %4335 = vmatpush.msra.mxu0 %v4278
  %4336 = vmatpush.msra.mxu0 %v4277
  %4337 = vmatpush.msra.mxu0 %v4276
  %4338 = vmatpush.msra.mxu0 %v4275
  %4339 = vmatmul.f32.gmra.mxu0 %v212
  %v4340 = vpop.f32.mrf.mxu0
  %v4341 = vadd.f32 %v4297, %v4340
  %4342 = vmatmul.f32.gmra.mxu0 %v215
  %v4343 = vpop.f32.mrf.mxu0
  %v4344 = vadd.f32 %v4300, %v4343
  %4345 = vmatmul.f32.gmra.mxu0 %v218
  %v4346 = vpop.f32.mrf.mxu0
  %v4347 = vadd.f32 %v4303, %v4346
  %4348 = vmatmul.f32.gmra.mxu0 %v221
  %v4349 = vpop.f32.mrf.mxu0
  %v4350 = vadd.f32 %v4306, %v4349
  %4351 = vmatmul.f32.gmra.mxu0 %v224
  %v4352 = vpop.f32.mrf.mxu0
  %v4353 = vadd.f32 %v4309, %v4352
  %4354 = vmatmul.f32.gmra.mxu0 %v227
  %v4355 = vpop.f32.mrf.mxu0
  %v4356 = vadd.f32 %v4312, %v4355
  %4357 = vmatmul.f32.gmra.mxu0 %v230
  %v4358 = vpop.f32.mrf.mxu0
  %v4359 = vadd.f32 %v4315, %v4358
  %4360 = vmatmul.f32.gmra.mxu0 %v233
  %v4361 = vpop.f32.mrf.mxu0
  %v4362 = vadd.f32 %v4318, %v4361
  %4363 = vmatmul.f32.gmra.mxu0 %v236
  %v4364 = vpop.f32.mrf.mxu0
  %v4365 = vadd.f32 %v4321, %v4364
  %4366 = vdwg.mxu0
  %4367 = vmatpush.msra.mxu0 %v4274
  %4368 = vmatpush.msra.mxu0 %v4273
  %4369 = vmatpush.msra.mxu0 %v4272
  %4370 = vmatpush.msra.mxu0 %v4271
  %4371 = vmatpush.msra.mxu0 %v4270
  %4372 = vmatpush.msra.mxu0 %v4269
  %4373 = vmatpush.msra.mxu0 %v4268
  %4374 = vmatpush.msra.mxu0 %v4267
  %4375 = vmatpush.msra.mxu0 %v4266
  %4376 = vmatpush.msra.mxu0 %v4265
  %4377 = vmatpush.msra.mxu0 %v4264
  %4378 = vmatpush.msra.mxu0 %v4263
  %4379 = vmatpush.msra.mxu0 %v4262
  %4380 = vmatpush.msra.mxu0 %v4261
  %4381 = vmatpush.msra.mxu0 %v4260
  %4382 = vmatpush.msra.mxu0 %v4259
  %4383 = vmatmul.f32.gmra.mxu0 %v62
  %v4384 = vpop.f32.mrf.mxu0
  %v4385 = vadd.f32 %v168, %v4384
  %4386 = vmatmul.f32.gmra.mxu0 %v64
  %v4387 = vpop.f32.mrf.mxu0
  %v4388 = vadd.f32 %v173, %v4387
  %4389 = vmatmul.f32.gmra.mxu0 %v66
  %v4390 = vpop.f32.mrf.mxu0
  %v4391 = vadd.f32 %v178, %v4390
  %4392 = vmatmul.f32.gmra.mxu0 %v68
  %v4393 = vpop.f32.mrf.mxu0
  %v4394 = vadd.f32 %v183, %v4393
  %4395 = vmatmul.f32.gmra.mxu0 %v70
  %v4396 = vpop.f32.mrf.mxu0
  %v4397 = vadd.f32 %v188, %v4396
  %4398 = vmatmul.f32.gmra.mxu0 %v72
  %v4399 = vpop.f32.mrf.mxu0
  %v4400 = vadd.f32 %v193, %v4399
  %4401 = vmatmul.f32.gmra.mxu0 %v74
  %v4402 = vpop.f32.mrf.mxu0
  %v4403 = vadd.f32 %v198, %v4402
  %4404 = vmatmul.f32.gmra.mxu0 %v76
  %v4405 = vpop.f32.mrf.mxu0
  %v4406 = vadd.f32 %v203, %v4405
  %4407 = vmatmul.f32.gmra.mxu0 %v78
  %v4408 = vpop.f32.mrf.mxu0
  %v4409 = vadd.f32 %v208, %v4408
  %4410 = vdwg.mxu0
  %4411 = vmatpush.msra.mxu0 0.0
  %4412 = vmatpush.msra.mxu0 0.0
  %4413 = vmatpush.msra.mxu0 0.0
  %4414 = vmatpush.msra.mxu0 0.0
  %4415 = vmatpush.msra.mxu0 0.0
  %4416 = vmatpush.msra.mxu0 0.0
  %4417 = vmatpush.msra.mxu0 0.0
  %4418 = vmatpush.msra.mxu0 0.0
  %4419 = vmatpush.msra.mxu0 0.0
  %4420 = vmatpush.msra.mxu0 0.0
  %4421 = vmatpush.msra.mxu0 0.0
  %4422 = vmatpush.msra.mxu0 0.0
  %4423 = vmatpush.msra.mxu0 %v4278
  %4424 = vmatpush.msra.mxu0 %v4277
  %4425 = vmatpush.msra.mxu0 %v4276
  %4426 = vmatpush.msra.mxu0 %v4275
  %4427 = vmatmul.f32.gmra.mxu0 %v327
  %v4428 = vpop.f32.mrf.mxu0
  %v4429 = vadd.f32 %v4385, %v4428
  %4430 = vmatmul.f32.gmra.mxu0 %v330
  %v4431 = vpop.f32.mrf.mxu0
  %v4432 = vadd.f32 %v4388, %v4431
  %4433 = vmatmul.f32.gmra.mxu0 %v333
  %v4434 = vpop.f32.mrf.mxu0
  %v4435 = vadd.f32 %v4391, %v4434
  %4436 = vmatmul.f32.gmra.mxu0 %v336
  %v4437 = vpop.f32.mrf.mxu0
  %v4438 = vadd.f32 %v4394, %v4437
  %4439 = vmatmul.f32.gmra.mxu0 %v339
  %v4440 = vpop.f32.mrf.mxu0
  %v4441 = vadd.f32 %v4397, %v4440
  %4442 = vmatmul.f32.gmra.mxu0 %v342
  %v4443 = vpop.f32.mrf.mxu0
  %v4444 = vadd.f32 %v4400, %v4443
  %4445 = vmatmul.f32.gmra.mxu0 %v345
  %v4446 = vpop.f32.mrf.mxu0
  %v4447 = vadd.f32 %v4403, %v4446
  %4448 = vmatmul.f32.gmra.mxu0 %v348
  %v4449 = vpop.f32.mrf.mxu0
  %v4450 = vadd.f32 %v4406, %v4449
  %4451 = vmatmul.f32.gmra.mxu0 %v351
  %v4452 = vpop.f32.mrf.mxu0
  %v4453 = vadd.f32 %v4409, %v4452
  %4454 = vdwg.mxu0
  %v4455 = vmax.f32 %v4341, %v4429
  %v4456 = vmax.f32 %v4344, %v4432
  %v4457 = vmax.f32 %v4347, %v4435
  %v4458 = vmax.f32 %v4350, %v4438
  %v4459 = vmax.f32 %v4353, %v4441
  %v4460 = vmax.f32 %v4356, %v4444
  %v4461 = vmax.f32 %v4359, %v4447
  %v4462 = vmax.f32 %v4362, %v4450
  %v4463 = vmax.f32 %v4365, %v4453
  %v4464 = vmax.f32 %v4455, 0.0
  %v4465 = vmax.f32 %v4456, 0.0
  %v4466 = vmax.f32 %v4457, 0.0
  %v4467 = vmax.f32 %v4458, 0.0
  %v4468 = vmax.f32 %v4459, 0.0
  %v4469 = vmax.f32 %v4460, 0.0
  %v4470 = vmax.f32 %v4461, 0.0
  %v4471 = vmax.f32 %v4462, 0.0
  %v4472 = vmax.f32 %v4463, 0.0
  %v4473 = vld [vmem:[%s0 + $0x260] sm:$0xff]
  %v4474 = vld [vmem:[%s0 + $0x268] sm:$0xff]
  %v4475 = vld [vmem:[%s0 + $0x270] sm:$0xff]
  %v4476 = vld [vmem:[%s0 + $0x278] sm:$0xff]
  %v4477 = vld [vmem:[%s0 + $0x280] sm:$0xff]
  %v4478 = vld [vmem:[%s0 + $0x288] sm:$0xff]
  %v4479 = vld [vmem:[%s0 + $0x290] sm:$0xff]
  %v4480 = vld [vmem:[%s0 + $0x298] sm:$0xff]
  %v4481 = vld [vmem:[%s0 + $0x2a0] sm:$0xff]
  %v4482 = vld [vmem:[%s0 + $0x2a8] sm:$0xff]
  %v4483 = vld [vmem:[%s0 + $0x2b0] sm:$0xff]
  %v4484 = vld [vmem:[%s0 + $0x2b8] sm:$0xff]
  %v4485 = vld [vmem:[%s0 + $0x2c0] sm:$0xff]
  %v4486 = vld [vmem:[%s0 + $0x2c8] sm:$0xff]
  %v4487 = vld [vmem:[%s0 + $0x2d0] sm:$0xff]
  %v4488 = vld [vmem:[%s0 + $0x2d8] sm:$0xff]
  %v4489 = vld [vmem:[%s0 + $0x2e0] sm:$0xff]
  %v4490 = vld [vmem:[%s0 + $0x2e8] sm:$0xff]
  %v4491 = vld [vmem:[%s0 + $0x2f0] sm:$0xff]
  %v4492 = vld [vmem:[%s0 + $0x2f8] sm:$0xff]
  %4493 = vmatpush.msra.mxu0 %v4488
  %4494 = vmatpush.msra.mxu0 %v4487
  %4495 = vmatpush.msra.mxu0 %v4486
  %4496 = vmatpush.msra.mxu0 %v4485
  %4497 = vmatpush.msra.mxu0 %v4484
  %4498 = vmatpush.msra.mxu0 %v4483
  %4499 = vmatpush.msra.mxu0 %v4482
  %4500 = vmatpush.msra.mxu0 %v4481
  %4501 = vmatpush.msra.mxu0 %v4480
  %4502 = vmatpush.msra.mxu0 %v4479
  %4503 = vmatpush.msra.mxu0 %v4478
  %4504 = vmatpush.msra.mxu0 %v4477
  %4505 = vmatpush.msra.mxu0 %v4476
  %4506 = vmatpush.msra.mxu0 %v4475
  %4507 = vmatpush.msra.mxu0 %v4474
  %4508 = vmatpush.msra.mxu0 %v4473
  %4509 = vmatmul.f32.gmra.mxu0 %v44
  %v4510 = vpop.f32.mrf.mxu0
  %v4511 = vadd.f32 %v168, %v4510
  %4512 = vmatmul.f32.gmra.mxu0 %v46
  %v4513 = vpop.f32.mrf.mxu0
  %v4514 = vadd.f32 %v173, %v4513
  %4515 = vmatmul.f32.gmra.mxu0 %v48
  %v4516 = vpop.f32.mrf.mxu0
  %v4517 = vadd.f32 %v178, %v4516
  %4518 = vmatmul.f32.gmra.mxu0 %v50
  %v4519 = vpop.f32.mrf.mxu0
  %v4520 = vadd.f32 %v183, %v4519
  %4521 = vmatmul.f32.gmra.mxu0 %v52
  %v4522 = vpop.f32.mrf.mxu0
  %v4523 = vadd.f32 %v188, %v4522
  %4524 = vmatmul.f32.gmra.mxu0 %v54
  %v4525 = vpop.f32.mrf.mxu0
  %v4526 = vadd.f32 %v193, %v4525
  %4527 = vmatmul.f32.gmra.mxu0 %v56
  %v4528 = vpop.f32.mrf.mxu0
  %v4529 = vadd.f32 %v198, %v4528
  %4530 = vmatmul.f32.gmra.mxu0 %v58
  %v4531 = vpop.f32.mrf.mxu0
  %v4532 = vadd.f32 %v203, %v4531
  %4533 = vmatmul.f32.gmra.mxu0 %v60
  %v4534 = vpop.f32.mrf.mxu0
  %v4535 = vadd.f32 %v208, %v4534
  %4536 = vdwg.mxu0
  %4537 = vmatpush.msra.mxu0 0.0
  %4538 = vmatpush.msra.mxu0 0.0
  %4539 = vmatpush.msra.mxu0 0.0
  %4540 = vmatpush.msra.mxu0 0.0
  %4541 = vmatpush.msra.mxu0 0.0
  %4542 = vmatpush.msra.mxu0 0.0
  %4543 = vmatpush.msra.mxu0 0.0
  %4544 = vmatpush.msra.mxu0 0.0
  %4545 = vmatpush.msra.mxu0 0.0
  %4546 = vmatpush.msra.mxu0 0.0
  %4547 = vmatpush.msra.mxu0 0.0
  %4548 = vmatpush.msra.mxu0 0.0
  %4549 = vmatpush.msra.mxu0 %v4492
  %4550 = vmatpush.msra.mxu0 %v4491
  %4551 = vmatpush.msra.mxu0 %v4490
  %4552 = vmatpush.msra.mxu0 %v4489
  %4553 = vmatmul.f32.gmra.mxu0 %v212
  %v4554 = vpop.f32.mrf.mxu0
  %v4555 = vadd.f32 %v4511, %v4554
  %4556 = vmatmul.f32.gmra.mxu0 %v215
  %v4557 = vpop.f32.mrf.mxu0
  %v4558 = vadd.f32 %v4514, %v4557
  %4559 = vmatmul.f32.gmra.mxu0 %v218
  %v4560 = vpop.f32.mrf.mxu0
  %v4561 = vadd.f32 %v4517, %v4560
  %4562 = vmatmul.f32.gmra.mxu0 %v221
  %v4563 = vpop.f32.mrf.mxu0
  %v4564 = vadd.f32 %v4520, %v4563
  %4565 = vmatmul.f32.gmra.mxu0 %v224
  %v4566 = vpop.f32.mrf.mxu0
  %v4567 = vadd.f32 %v4523, %v4566
  %4568 = vmatmul.f32.gmra.mxu0 %v227
  %v4569 = vpop.f32.mrf.mxu0
  %v4570 = vadd.f32 %v4526, %v4569
  %4571 = vmatmul.f32.gmra.mxu0 %v230
  %v4572 = vpop.f32.mrf.mxu0
  %v4573 = vadd.f32 %v4529, %v4572
  %4574 = vmatmul.f32.gmra.mxu0 %v233
  %v4575 = vpop.f32.mrf.mxu0
  %v4576 = vadd.f32 %v4532, %v4575
  %4577 = vmatmul.f32.gmra.mxu0 %v236
  %v4578 = vpop.f32.mrf.mxu0
  %v4579 = vadd.f32 %v4535, %v4578
  %4580 = vdwg.mxu0
  %4581 = vmatpush.msra.mxu0 %v4488
  %4582 = vmatpush.msra.mxu0 %v4487
  %4583 = vmatpush.msra.mxu0 %v4486
  %4584 = vmatpush.msra.mxu0 %v4485
  %4585 = vmatpush.msra.mxu0 %v4484
  %4586 = vmatpush.msra.mxu0 %v4483
  %4587 = vmatpush.msra.mxu0 %v4482
  %4588 = vmatpush.msra.mxu0 %v4481
  %4589 = vmatpush.msra.mxu0 %v4480
  %4590 = vmatpush.msra.mxu0 %v4479
  %4591 = vmatpush.msra.mxu0 %v4478
  %4592 = vmatpush.msra.mxu0 %v4477
  %4593 = vmatpush.msra.mxu0 %v4476
  %4594 = vmatpush.msra.mxu0 %v4475
  %4595 = vmatpush.msra.mxu0 %v4474
  %4596 = vmatpush.msra.mxu0 %v4473
  %4597 = vmatmul.f32.gmra.mxu0 %v62
  %v4598 = vpop.f32.mrf.mxu0
  %v4599 = vadd.f32 %v168, %v4598
  %4600 = vmatmul.f32.gmra.mxu0 %v64
  %v4601 = vpop.f32.mrf.mxu0
  %v4602 = vadd.f32 %v173, %v4601
  %4603 = vmatmul.f32.gmra.mxu0 %v66
  %v4604 = vpop.f32.mrf.mxu0
  %v4605 = vadd.f32 %v178, %v4604
  %4606 = vmatmul.f32.gmra.mxu0 %v68
  %v4607 = vpop.f32.mrf.mxu0
  %v4608 = vadd.f32 %v183, %v4607
  %4609 = vmatmul.f32.gmra.mxu0 %v70
  %v4610 = vpop.f32.mrf.mxu0
  %v4611 = vadd.f32 %v188, %v4610
  %4612 = vmatmul.f32.gmra.mxu0 %v72
  %v4613 = vpop.f32.mrf.mxu0
  %v4614 = vadd.f32 %v193, %v4613
  %4615 = vmatmul.f32.gmra.mxu0 %v74
  %v4616 = vpop.f32.mrf.mxu0
  %v4617 = vadd.f32 %v198, %v4616
  %4618 = vmatmul.f32.gmra.mxu0 %v76
  %v4619 = vpop.f32.mrf.mxu0
  %v4620 = vadd.f32 %v203, %v4619
  %4621 = vmatmul.f32.gmra.mxu0 %v78
  %v4622 = vpop.f32.mrf.mxu0
  %v4623 = vadd.f32 %v208, %v4622
  %4624 = vdwg.mxu0
  %4625 = vmatpush.msra.mxu0 0.0
  %4626 = vmatpush.msra.mxu0 0.0
  %4627 = vmatpush.msra.mxu0 0.0
  %4628 = vmatpush.msra.mxu0 0.0
  %4629 = vmatpush.msra.mxu0 0.0
  %4630 = vmatpush.msra.mxu0 0.0
  %4631 = vmatpush.msra.mxu0 0.0
  %4632 = vmatpush.msra.mxu0 0.0
  %4633 = vmatpush.msra.mxu0 0.0
  %4634 = vmatpush.msra.mxu0 0.0
  %4635 = vmatpush.msra.mxu0 0.0
  %4636 = vmatpush.msra.mxu0 0.0
  %4637 = vmatpush.msra.mxu0 %v4492
  %4638 = vmatpush.msra.mxu0 %v4491
  %4639 = vmatpush.msra.mxu0 %v4490
  %4640 = vmatpush.msra.mxu0 %v4489
  %4641 = vmatmul.f32.gmra.mxu0 %v327
  %v4642 = vpop.f32.mrf.mxu0
  %v4643 = vadd.f32 %v4599, %v4642
  %4644 = vmatmul.f32.gmra.mxu0 %v330
  %v4645 = vpop.f32.mrf.mxu0
  %v4646 = vadd.f32 %v4602, %v4645
  %4647 = vmatmul.f32.gmra.mxu0 %v333
  %v4648 = vpop.f32.mrf.mxu0
  %v4649 = vadd.f32 %v4605, %v4648
  %4650 = vmatmul.f32.gmra.mxu0 %v336
  %v4651 = vpop.f32.mrf.mxu0
  %v4652 = vadd.f32 %v4608, %v4651
  %4653 = vmatmul.f32.gmra.mxu0 %v339
  %v4654 = vpop.f32.mrf.mxu0
  %v4655 = vadd.f32 %v4611, %v4654
  %4656 = vmatmul.f32.gmra.mxu0 %v342
  %v4657 = vpop.f32.mrf.mxu0
  %v4658 = vadd.f32 %v4614, %v4657
  %4659 = vmatmul.f32.gmra.mxu0 %v345
  %v4660 = vpop.f32.mrf.mxu0
  %v4661 = vadd.f32 %v4617, %v4660
  %4662 = vmatmul.f32.gmra.mxu0 %v348
  %v4663 = vpop.f32.mrf.mxu0
  %v4664 = vadd.f32 %v4620, %v4663
  %4665 = vmatmul.f32.gmra.mxu0 %v351
  %v4666 = vpop.f32.mrf.mxu0
  %v4667 = vadd.f32 %v4623, %v4666
  %4668 = vdwg.mxu0
  %v4669 = vmax.f32 %v4555, %v4643
  %v4670 = vmax.f32 %v4558, %v4646
  %v4671 = vmax.f32 %v4561, %v4649
  %v4672 = vmax.f32 %v4564, %v4652
  %v4673 = vmax.f32 %v4567, %v4655
  %v4674 = vmax.f32 %v4570, %v4658
  %v4675 = vmax.f32 %v4573, %v4661
  %v4676 = vmax.f32 %v4576, %v4664
  %v4677 = vmax.f32 %v4579, %v4667
  %v4678 = vmax.f32 %v4669, 0.0
  %v4679 = vmax.f32 %v4670, 0.0
  %v4680 = vmax.f32 %v4671, 0.0
  %v4681 = vmax.f32 %v4672, 0.0
  %v4682 = vmax.f32 %v4673, 0.0
  %v4683 = vmax.f32 %v4674, 0.0
  %v4684 = vmax.f32 %v4675, 0.0
  %v4685 = vmax.f32 %v4676, 0.0
  %v4686 = vmax.f32 %v4677, 0.0
  %v4687 = vmax.f32 %v4464, %v4678
  %v4688 = vmax.f32 %v4465, %v4679
  %v4689 = vmax.f32 %v4466, %v4680
  %v4690 = vmax.f32 %v4467, %v4681
  %v4691 = vmax.f32 %v4468, %v4682
  %v4692 = vmax.f32 %v4469, %v4683
  %v4693 = vmax.f32 %v4470, %v4684
  %v4694 = vmax.f32 %v4471, %v4685
  %v4695 = vmax.f32 %v4472, %v4686
  %4696 = vst [vmem:[#allocation2 + $0x288] sm:$0xff] %v4687
  %4697 = vst [vmem:[#allocation2 + $0x290] sm:$0xff] %v4688
  %4698 = vst [vmem:[#allocation2 + $0x298] sm:$0xff] %v4689
  %4699 = vst [vmem:[#allocation2 + $0x2a0] sm:$0xff] %v4690
  %4700 = vst [vmem:[#allocation2 + $0x2a8] sm:$0xff] %v4691
  %4701 = vst [vmem:[#allocation2 + $0x2b0] sm:$0xff] %v4692
  %4702 = vst [vmem:[#allocation2 + $0x2b8] sm:$0xff] %v4693
  %4703 = vst [vmem:[#allocation2 + $0x2c0] sm:$0xff] %v4694
  %4704 = vst [vmem:[#allocation2 + $0x2c8] sm:$0xff] %v4695
  %v4705 = vld [vmem:[%s0 + $0x280] sm:$0xff]
  %v4706 = vld [vmem:[%s0 + $0x288] sm:$0xff]
  %v4707 = vld [vmem:[%s0 + $0x290] sm:$0xff]
  %v4708 = vld [vmem:[%s0 + $0x298] sm:$0xff]
  %v4709 = vld [vmem:[%s0 + $0x2a0] sm:$0xff]
  %v4710 = vld [vmem:[%s0 + $0x2a8] sm:$0xff]
  %v4711 = vld [vmem:[%s0 + $0x2b0] sm:$0xff]
  %v4712 = vld [vmem:[%s0 + $0x2b8] sm:$0xff]
  %v4713 = vld [vmem:[%s0 + $0x2c0] sm:$0xff]
  %v4714 = vld [vmem:[%s0 + $0x2c8] sm:$0xff]
  %v4715 = vld [vmem:[%s0 + $0x2d0] sm:$0xff]
  %v4716 = vld [vmem:[%s0 + $0x2d8] sm:$0xff]
  %v4717 = vld [vmem:[%s0 + $0x2e0] sm:$0xff]
  %v4718 = vld [vmem:[%s0 + $0x2e8] sm:$0xff]
  %v4719 = vld [vmem:[%s0 + $0x2f0] sm:$0xff]
  %v4720 = vld [vmem:[%s0 + $0x2f8] sm:$0xff]
  %v4721 = vld [vmem:[%s0 + $0x300] sm:$0xff]
  %v4722 = vld [vmem:[%s0 + $0x308] sm:$0xff]
  %v4723 = vld [vmem:[%s0 + $0x310] sm:$0xff]
  %v4724 = vld [vmem:[%s0 + $0x318] sm:$0xff]
  %4725 = vmatpush.msra.mxu0 %v4720
  %4726 = vmatpush.msra.mxu0 %v4719
  %4727 = vmatpush.msra.mxu0 %v4718
  %4728 = vmatpush.msra.mxu0 %v4717
  %4729 = vmatpush.msra.mxu0 %v4716
  %4730 = vmatpush.msra.mxu0 %v4715
  %4731 = vmatpush.msra.mxu0 %v4714
  %4732 = vmatpush.msra.mxu0 %v4713
  %4733 = vmatpush.msra.mxu0 %v4712
  %4734 = vmatpush.msra.mxu0 %v4711
  %4735 = vmatpush.msra.mxu0 %v4710
  %4736 = vmatpush.msra.mxu0 %v4709
  %4737 = vmatpush.msra.mxu0 %v4708
  %4738 = vmatpush.msra.mxu0 %v4707
  %4739 = vmatpush.msra.mxu0 %v4706
  %4740 = vmatpush.msra.mxu0 %v4705
  %4741 = vmatmul.f32.gmra.mxu0 %v44
  %v4742 = vpop.f32.mrf.mxu0
  %v4743 = vadd.f32 %v168, %v4742
  %4744 = vmatmul.f32.gmra.mxu0 %v46
  %v4745 = vpop.f32.mrf.mxu0
  %v4746 = vadd.f32 %v173, %v4745
  %4747 = vmatmul.f32.gmra.mxu0 %v48
  %v4748 = vpop.f32.mrf.mxu0
  %v4749 = vadd.f32 %v178, %v4748
  %4750 = vmatmul.f32.gmra.mxu0 %v50
  %v4751 = vpop.f32.mrf.mxu0
  %v4752 = vadd.f32 %v183, %v4751
  %4753 = vmatmul.f32.gmra.mxu0 %v52
  %v4754 = vpop.f32.mrf.mxu0
  %v4755 = vadd.f32 %v188, %v4754
  %4756 = vmatmul.f32.gmra.mxu0 %v54
  %v4757 = vpop.f32.mrf.mxu0
  %v4758 = vadd.f32 %v193, %v4757
  %4759 = vmatmul.f32.gmra.mxu0 %v56
  %v4760 = vpop.f32.mrf.mxu0
  %v4761 = vadd.f32 %v198, %v4760
  %4762 = vmatmul.f32.gmra.mxu0 %v58
  %v4763 = vpop.f32.mrf.mxu0
  %v4764 = vadd.f32 %v203, %v4763
  %4765 = vmatmul.f32.gmra.mxu0 %v60
  %v4766 = vpop.f32.mrf.mxu0
  %v4767 = vadd.f32 %v208, %v4766
  %4768 = vdwg.mxu0
  %4769 = vmatpush.msra.mxu0 0.0
  %4770 = vmatpush.msra.mxu0 0.0
  %4771 = vmatpush.msra.mxu0 0.0
  %4772 = vmatpush.msra.mxu0 0.0
  %4773 = vmatpush.msra.mxu0 0.0
  %4774 = vmatpush.msra.mxu0 0.0
  %4775 = vmatpush.msra.mxu0 0.0
  %4776 = vmatpush.msra.mxu0 0.0
  %4777 = vmatpush.msra.mxu0 0.0
  %4778 = vmatpush.msra.mxu0 0.0
  %4779 = vmatpush.msra.mxu0 0.0
  %4780 = vmatpush.msra.mxu0 0.0
  %4781 = vmatpush.msra.mxu0 %v4724
  %4782 = vmatpush.msra.mxu0 %v4723
  %4783 = vmatpush.msra.mxu0 %v4722
  %4784 = vmatpush.msra.mxu0 %v4721
  %4785 = vmatmul.f32.gmra.mxu0 %v212
  %v4786 = vpop.f32.mrf.mxu0
  %v4787 = vadd.f32 %v4743, %v4786
  %4788 = vmatmul.f32.gmra.mxu0 %v215
  %v4789 = vpop.f32.mrf.mxu0
  %v4790 = vadd.f32 %v4746, %v4789
  %4791 = vmatmul.f32.gmra.mxu0 %v218
  %v4792 = vpop.f32.mrf.mxu0
  %v4793 = vadd.f32 %v4749, %v4792
  %4794 = vmatmul.f32.gmra.mxu0 %v221
  %v4795 = vpop.f32.mrf.mxu0
  %v4796 = vadd.f32 %v4752, %v4795
  %4797 = vmatmul.f32.gmra.mxu0 %v224
  %v4798 = vpop.f32.mrf.mxu0
  %v4799 = vadd.f32 %v4755, %v4798
  %4800 = vmatmul.f32.gmra.mxu0 %v227
  %v4801 = vpop.f32.mrf.mxu0
  %v4802 = vadd.f32 %v4758, %v4801
  %4803 = vmatmul.f32.gmra.mxu0 %v230
  %v4804 = vpop.f32.mrf.mxu0
  %v4805 = vadd.f32 %v4761, %v4804
  %4806 = vmatmul.f32.gmra.mxu0 %v233
  %v4807 = vpop.f32.mrf.mxu0
  %v4808 = vadd.f32 %v4764, %v4807
  %4809 = vmatmul.f32.gmra.mxu0 %v236
  %v4810 = vpop.f32.mrf.mxu0
  %v4811 = vadd.f32 %v4767, %v4810
  %4812 = vdwg.mxu0
  %4813 = vmatpush.msra.mxu0 %v4720
  %4814 = vmatpush.msra.mxu0 %v4719
  %4815 = vmatpush.msra.mxu0 %v4718
  %4816 = vmatpush.msra.mxu0 %v4717
  %4817 = vmatpush.msra.mxu0 %v4716
  %4818 = vmatpush.msra.mxu0 %v4715
  %4819 = vmatpush.msra.mxu0 %v4714
  %4820 = vmatpush.msra.mxu0 %v4713
  %4821 = vmatpush.msra.mxu0 %v4712
  %4822 = vmatpush.msra.mxu0 %v4711
  %4823 = vmatpush.msra.mxu0 %v4710
  %4824 = vmatpush.msra.mxu0 %v4709
  %4825 = vmatpush.msra.mxu0 %v4708
  %4826 = vmatpush.msra.mxu0 %v4707
  %4827 = vmatpush.msra.mxu0 %v4706
  %4828 = vmatpush.msra.mxu0 %v4705
  %4829 = vmatmul.f32.gmra.mxu0 %v62
  %v4830 = vpop.f32.mrf.mxu0
  %v4831 = vadd.f32 %v168, %v4830
  %4832 = vmatmul.f32.gmra.mxu0 %v64
  %v4833 = vpop.f32.mrf.mxu0
  %v4834 = vadd.f32 %v173, %v4833
  %4835 = vmatmul.f32.gmra.mxu0 %v66
  %v4836 = vpop.f32.mrf.mxu0
  %v4837 = vadd.f32 %v178, %v4836
  %4838 = vmatmul.f32.gmra.mxu0 %v68
  %v4839 = vpop.f32.mrf.mxu0
  %v4840 = vadd.f32 %v183, %v4839
  %4841 = vmatmul.f32.gmra.mxu0 %v70
  %v4842 = vpop.f32.mrf.mxu0
  %v4843 = vadd.f32 %v188, %v4842
  %4844 = vmatmul.f32.gmra.mxu0 %v72
  %v4845 = vpop.f32.mrf.mxu0
  %v4846 = vadd.f32 %v193, %v4845
  %4847 = vmatmul.f32.gmra.mxu0 %v74
  %v4848 = vpop.f32.mrf.mxu0
  %v4849 = vadd.f32 %v198, %v4848
  %4850 = vmatmul.f32.gmra.mxu0 %v76
  %v4851 = vpop.f32.mrf.mxu0
  %v4852 = vadd.f32 %v203, %v4851
  %4853 = vmatmul.f32.gmra.mxu0 %v78
  %v4854 = vpop.f32.mrf.mxu0
  %v4855 = vadd.f32 %v208, %v4854
  %4856 = vdwg.mxu0
  %4857 = vmatpush.msra.mxu0 0.0
  %4858 = vmatpush.msra.mxu0 0.0
  %4859 = vmatpush.msra.mxu0 0.0
  %4860 = vmatpush.msra.mxu0 0.0
  %4861 = vmatpush.msra.mxu0 0.0
  %4862 = vmatpush.msra.mxu0 0.0
  %4863 = vmatpush.msra.mxu0 0.0
  %4864 = vmatpush.msra.mxu0 0.0
  %4865 = vmatpush.msra.mxu0 0.0
  %4866 = vmatpush.msra.mxu0 0.0
  %4867 = vmatpush.msra.mxu0 0.0
  %4868 = vmatpush.msra.mxu0 0.0
  %4869 = vmatpush.msra.mxu0 %v4724
  %4870 = vmatpush.msra.mxu0 %v4723
  %4871 = vmatpush.msra.mxu0 %v4722
  %4872 = vmatpush.msra.mxu0 %v4721
  %4873 = vmatmul.f32.gmra.mxu0 %v327
  %v4874 = vpop.f32.mrf.mxu0
  %v4875 = vadd.f32 %v4831, %v4874
  %4876 = vmatmul.f32.gmra.mxu0 %v330
  %v4877 = vpop.f32.mrf.mxu0
  %v4878 = vadd.f32 %v4834, %v4877
  %4879 = vmatmul.f32.gmra.mxu0 %v333
  %v4880 = vpop.f32.mrf.mxu0
  %v4881 = vadd.f32 %v4837, %v4880
  %4882 = vmatmul.f32.gmra.mxu0 %v336
  %v4883 = vpop.f32.mrf.mxu0
  %v4884 = vadd.f32 %v4840, %v4883
  %4885 = vmatmul.f32.gmra.mxu0 %v339
  %v4886 = vpop.f32.mrf.mxu0
  %v4887 = vadd.f32 %v4843, %v4886
  %4888 = vmatmul.f32.gmra.mxu0 %v342
  %v4889 = vpop.f32.mrf.mxu0
  %v4890 = vadd.f32 %v4846, %v4889
  %4891 = vmatmul.f32.gmra.mxu0 %v345
  %v4892 = vpop.f32.mrf.mxu0
  %v4893 = vadd.f32 %v4849, %v4892
  %4894 = vmatmul.f32.gmra.mxu0 %v348
  %v4895 = vpop.f32.mrf.mxu0
  %v4896 = vadd.f32 %v4852, %v4895
  %4897 = vmatmul.f32.gmra.mxu0 %v351
  %v4898 = vpop.f32.mrf.mxu0
  %v4899 = vadd.f32 %v4855, %v4898
  %4900 = vdwg.mxu0
  %v4901 = vmax.f32 %v4787, %v4875
  %v4902 = vmax.f32 %v4790, %v4878
  %v4903 = vmax.f32 %v4793, %v4881
  %v4904 = vmax.f32 %v4796, %v4884
  %v4905 = vmax.f32 %v4799, %v4887
  %v4906 = vmax.f32 %v4802, %v4890
  %v4907 = vmax.f32 %v4805, %v4893
  %v4908 = vmax.f32 %v4808, %v4896
  %v4909 = vmax.f32 %v4811, %v4899
  %v4910 = vmax.f32 %v4901, 0.0
  %v4911 = vmax.f32 %v4902, 0.0
  %v4912 = vmax.f32 %v4903, 0.0
  %v4913 = vmax.f32 %v4904, 0.0
  %v4914 = vmax.f32 %v4905, 0.0
  %v4915 = vmax.f32 %v4906, 0.0
  %v4916 = vmax.f32 %v4907, 0.0
  %v4917 = vmax.f32 %v4908, 0.0
  %v4918 = vmax.f32 %v4909, 0.0
  %v4919 = vld [vmem:[%s0 + $0x2a0] sm:$0xff]
  %v4920 = vld [vmem:[%s0 + $0x2a8] sm:$0xff]
  %v4921 = vld [vmem:[%s0 + $0x2b0] sm:$0xff]
  %v4922 = vld [vmem:[%s0 + $0x2b8] sm:$0xff]
  %v4923 = vld [vmem:[%s0 + $0x2c0] sm:$0xff]
  %v4924 = vld [vmem:[%s0 + $0x2c8] sm:$0xff]
  %v4925 = vld [vmem:[%s0 + $0x2d0] sm:$0xff]
  %v4926 = vld [vmem:[%s0 + $0x2d8] sm:$0xff]
  %v4927 = vld [vmem:[%s0 + $0x2e0] sm:$0xff]
  %v4928 = vld [vmem:[%s0 + $0x2e8] sm:$0xff]
  %v4929 = vld [vmem:[%s0 + $0x2f0] sm:$0xff]
  %v4930 = vld [vmem:[%s0 + $0x2f8] sm:$0xff]
  %v4931 = vld [vmem:[%s0 + $0x300] sm:$0xff]
  %v4932 = vld [vmem:[%s0 + $0x308] sm:$0xff]
  %v4933 = vld [vmem:[%s0 + $0x310] sm:$0xff]
  %v4934 = vld [vmem:[%s0 + $0x318] sm:$0xff]
  %v4935 = vld [vmem:[%s0 + $0x320] sm:$0xff]
  %v4936 = vld [vmem:[%s0 + $0x328] sm:$0xff]
  %v4937 = vld [vmem:[%s0 + $0x330] sm:$0xff]
  %v4938 = vld [vmem:[%s0 + $0x338] sm:$0xff]
  %4939 = vmatpush.msra.mxu0 %v4934
  %4940 = vmatpush.msra.mxu0 %v4933
  %4941 = vmatpush.msra.mxu0 %v4932
  %4942 = vmatpush.msra.mxu0 %v4931
  %4943 = vmatpush.msra.mxu0 %v4930
  %4944 = vmatpush.msra.mxu0 %v4929
  %4945 = vmatpush.msra.mxu0 %v4928
  %4946 = vmatpush.msra.mxu0 %v4927
  %4947 = vmatpush.msra.mxu0 %v4926
  %4948 = vmatpush.msra.mxu0 %v4925
  %4949 = vmatpush.msra.mxu0 %v4924
  %4950 = vmatpush.msra.mxu0 %v4923
  %4951 = vmatpush.msra.mxu0 %v4922
  %4952 = vmatpush.msra.mxu0 %v4921
  %4953 = vmatpush.msra.mxu0 %v4920
  %4954 = vmatpush.msra.mxu0 %v4919
  %4955 = vmatmul.f32.gmra.mxu0 %v44
  %v4956 = vpop.f32.mrf.mxu0
  %v4957 = vadd.f32 %v168, %v4956
  %4958 = vmatmul.f32.gmra.mxu0 %v46
  %v4959 = vpop.f32.mrf.mxu0
  %v4960 = vadd.f32 %v173, %v4959
  %4961 = vmatmul.f32.gmra.mxu0 %v48
  %v4962 = vpop.f32.mrf.mxu0
  %v4963 = vadd.f32 %v178, %v4962
  %4964 = vmatmul.f32.gmra.mxu0 %v50
  %v4965 = vpop.f32.mrf.mxu0
  %v4966 = vadd.f32 %v183, %v4965
  %4967 = vmatmul.f32.gmra.mxu0 %v52
  %v4968 = vpop.f32.mrf.mxu0
  %v4969 = vadd.f32 %v188, %v4968
  %4970 = vmatmul.f32.gmra.mxu0 %v54
  %v4971 = vpop.f32.mrf.mxu0
  %v4972 = vadd.f32 %v193, %v4971
  %4973 = vmatmul.f32.gmra.mxu0 %v56
  %v4974 = vpop.f32.mrf.mxu0
  %v4975 = vadd.f32 %v198, %v4974
  %4976 = vmatmul.f32.gmra.mxu0 %v58
  %v4977 = vpop.f32.mrf.mxu0
  %v4978 = vadd.f32 %v203, %v4977
  %4979 = vmatmul.f32.gmra.mxu0 %v60
  %v4980 = vpop.f32.mrf.mxu0
  %v4981 = vadd.f32 %v208, %v4980
  %4982 = vdwg.mxu0
  %4983 = vmatpush.msra.mxu0 0.0
  %4984 = vmatpush.msra.mxu0 0.0
  %4985 = vmatpush.msra.mxu0 0.0
  %4986 = vmatpush.msra.mxu0 0.0
  %4987 = vmatpush.msra.mxu0 0.0
  %4988 = vmatpush.msra.mxu0 0.0
  %4989 = vmatpush.msra.mxu0 0.0
  %4990 = vmatpush.msra.mxu0 0.0
  %4991 = vmatpush.msra.mxu0 0.0
  %4992 = vmatpush.msra.mxu0 0.0
  %4993 = vmatpush.msra.mxu0 0.0
  %4994 = vmatpush.msra.mxu0 0.0
  %4995 = vmatpush.msra.mxu0 %v4938
  %4996 = vmatpush.msra.mxu0 %v4937
  %4997 = vmatpush.msra.mxu0 %v4936
  %4998 = vmatpush.msra.mxu0 %v4935
  %4999 = vmatmul.f32.gmra.mxu0 %v212
  %v5000 = vpop.f32.mrf.mxu0
  %v5001 = vadd.f32 %v4957, %v5000
  %5002 = vmatmul.f32.gmra.mxu0 %v215
  %v5003 = vpop.f32.mrf.mxu0
  %v5004 = vadd.f32 %v4960, %v5003
  %5005 = vmatmul.f32.gmra.mxu0 %v218
  %v5006 = vpop.f32.mrf.mxu0
  %v5007 = vadd.f32 %v4963, %v5006
  %5008 = vmatmul.f32.gmra.mxu0 %v221
  %v5009 = vpop.f32.mrf.mxu0
  %v5010 = vadd.f32 %v4966, %v5009
  %5011 = vmatmul.f32.gmra.mxu0 %v224
  %v5012 = vpop.f32.mrf.mxu0
  %v5013 = vadd.f32 %v4969, %v5012
  %5014 = vmatmul.f32.gmra.mxu0 %v227
  %v5015 = vpop.f32.mrf.mxu0
  %v5016 = vadd.f32 %v4972, %v5015
  %5017 = vmatmul.f32.gmra.mxu0 %v230
  %v5018 = vpop.f32.mrf.mxu0
  %v5019 = vadd.f32 %v4975, %v5018
  %5020 = vmatmul.f32.gmra.mxu0 %v233
  %v5021 = vpop.f32.mrf.mxu0
  %v5022 = vadd.f32 %v4978, %v5021
  %5023 = vmatmul.f32.gmra.mxu0 %v236
  %v5024 = vpop.f32.mrf.mxu0
  %v5025 = vadd.f32 %v4981, %v5024
  %5026 = vdwg.mxu0
  %5027 = vmatpush.msra.mxu0 %v4934
  %5028 = vmatpush.msra.mxu0 %v4933
  %5029 = vmatpush.msra.mxu0 %v4932
  %5030 = vmatpush.msra.mxu0 %v4931
  %5031 = vmatpush.msra.mxu0 %v4930
  %5032 = vmatpush.msra.mxu0 %v4929
  %5033 = vmatpush.msra.mxu0 %v4928
  %5034 = vmatpush.msra.mxu0 %v4927
  %5035 = vmatpush.msra.mxu0 %v4926
  %5036 = vmatpush.msra.mxu0 %v4925
  %5037 = vmatpush.msra.mxu0 %v4924
  %5038 = vmatpush.msra.mxu0 %v4923
  %5039 = vmatpush.msra.mxu0 %v4922
  %5040 = vmatpush.msra.mxu0 %v4921
  %5041 = vmatpush.msra.mxu0 %v4920
  %5042 = vmatpush.msra.mxu0 %v4919
  %5043 = vmatmul.f32.gmra.mxu0 %v62
  %v5044 = vpop.f32.mrf.mxu0
  %v5045 = vadd.f32 %v168, %v5044
  %5046 = vmatmul.f32.gmra.mxu0 %v64
  %v5047 = vpop.f32.mrf.mxu0
  %v5048 = vadd.f32 %v173, %v5047
  %5049 = vmatmul.f32.gmra.mxu0 %v66
  %v5050 = vpop.f32.mrf.mxu0
  %v5051 = vadd.f32 %v178, %v5050
  %5052 = vmatmul.f32.gmra.mxu0 %v68
  %v5053 = vpop.f32.mrf.mxu0
  %v5054 = vadd.f32 %v183, %v5053
  %5055 = vmatmul.f32.gmra.mxu0 %v70
  %v5056 = vpop.f32.mrf.mxu0
  %v5057 = vadd.f32 %v188, %v5056
  %5058 = vmatmul.f32.gmra.mxu0 %v72
  %v5059 = vpop.f32.mrf.mxu0
  %v5060 = vadd.f32 %v193, %v5059
  %5061 = vmatmul.f32.gmra.mxu0 %v74
  %v5062 = vpop.f32.mrf.mxu0
  %v5063 = vadd.f32 %v198, %v5062
  %5064 = vmatmul.f32.gmra.mxu0 %v76
  %v5065 = vpop.f32.mrf.mxu0
  %v5066 = vadd.f32 %v203, %v5065
  %5067 = vmatmul.f32.gmra.mxu0 %v78
  %v5068 = vpop.f32.mrf.mxu0
  %v5069 = vadd.f32 %v208, %v5068
  %5070 = vdwg.mxu0
  %5071 = vmatpush.msra.mxu0 0.0
  %5072 = vmatpush.msra.mxu0 0.0
  %5073 = vmatpush.msra.mxu0 0.0
  %5074 = vmatpush.msra.mxu0 0.0
  %5075 = vmatpush.msra.mxu0 0.0
  %5076 = vmatpush.msra.mxu0 0.0
  %5077 = vmatpush.msra.mxu0 0.0
  %5078 = vmatpush.msra.mxu0 0.0
  %5079 = vmatpush.msra.mxu0 0.0
  %5080 = vmatpush.msra.mxu0 0.0
  %5081 = vmatpush.msra.mxu0 0.0
  %5082 = vmatpush.msra.mxu0 0.0
  %5083 = vmatpush.msra.mxu0 %v4938
  %5084 = vmatpush.msra.mxu0 %v4937
  %5085 = vmatpush.msra.mxu0 %v4936
  %5086 = vmatpush.msra.mxu0 %v4935
  %5087 = vmatmul.f32.gmra.mxu0 %v327
  %v5088 = vpop.f32.mrf.mxu0
  %v5089 = vadd.f32 %v5045, %v5088
  %5090 = vmatmul.f32.gmra.mxu0 %v330
  %v5091 = vpop.f32.mrf.mxu0
  %v5092 = vadd.f32 %v5048, %v5091
  %5093 = vmatmul.f32.gmra.mxu0 %v333
  %v5094 = vpop.f32.mrf.mxu0
  %v5095 = vadd.f32 %v5051, %v5094
  %5096 = vmatmul.f32.gmra.mxu0 %v336
  %v5097 = vpop.f32.mrf.mxu0
  %v5098 = vadd.f32 %v5054, %v5097
  %5099 = vmatmul.f32.gmra.mxu0 %v339
  %v5100 = vpop.f32.mrf.mxu0
  %v5101 = vadd.f32 %v5057, %v5100
  %5102 = vmatmul.f32.gmra.mxu0 %v342
  %v5103 = vpop.f32.mrf.mxu0
  %v5104 = vadd.f32 %v5060, %v5103
  %5105 = vmatmul.f32.gmra.mxu0 %v345
  %v5106 = vpop.f32.mrf.mxu0
  %v5107 = vadd.f32 %v5063, %v5106
  %5108 = vmatmul.f32.gmra.mxu0 %v348
  %v5109 = vpop.f32.mrf.mxu0
  %v5110 = vadd.f32 %v5066, %v5109
  %5111 = vmatmul.f32.gmra.mxu0 %v351
  %v5112 = vpop.f32.mrf.mxu0
  %v5113 = vadd.f32 %v5069, %v5112
  %5114 = vdwg.mxu0
  %v5115 = vmax.f32 %v5001, %v5089
  %v5116 = vmax.f32 %v5004, %v5092
  %v5117 = vmax.f32 %v5007, %v5095
  %v5118 = vmax.f32 %v5010, %v5098
  %v5119 = vmax.f32 %v5013, %v5101
  %v5120 = vmax.f32 %v5016, %v5104
  %v5121 = vmax.f32 %v5019, %v5107
  %v5122 = vmax.f32 %v5022, %v5110
  %v5123 = vmax.f32 %v5025, %v5113
  %v5124 = vmax.f32 %v5115, 0.0
  %v5125 = vmax.f32 %v5116, 0.0
  %v5126 = vmax.f32 %v5117, 0.0
  %v5127 = vmax.f32 %v5118, 0.0
  %v5128 = vmax.f32 %v5119, 0.0
  %v5129 = vmax.f32 %v5120, 0.0
  %v5130 = vmax.f32 %v5121, 0.0
  %v5131 = vmax.f32 %v5122, 0.0
  %v5132 = vmax.f32 %v5123, 0.0
  %v5133 = vmax.f32 %v4910, %v5124
  %v5134 = vmax.f32 %v4911, %v5125
  %v5135 = vmax.f32 %v4912, %v5126
  %v5136 = vmax.f32 %v4913, %v5127
  %v5137 = vmax.f32 %v4914, %v5128
  %v5138 = vmax.f32 %v4915, %v5129
  %v5139 = vmax.f32 %v4916, %v5130
  %v5140 = vmax.f32 %v4917, %v5131
  %v5141 = vmax.f32 %v4918, %v5132
  %5142 = vst [vmem:[#allocation2 + $0x2d0] sm:$0xff] %v5133
  %5143 = vst [vmem:[#allocation2 + $0x2d8] sm:$0xff] %v5134
  %5144 = vst [vmem:[#allocation2 + $0x2e0] sm:$0xff] %v5135
  %5145 = vst [vmem:[#allocation2 + $0x2e8] sm:$0xff] %v5136
  %5146 = vst [vmem:[#allocation2 + $0x2f0] sm:$0xff] %v5137
  %5147 = vst [vmem:[#allocation2 + $0x2f8] sm:$0xff] %v5138
  %5148 = vst [vmem:[#allocation2 + $0x300] sm:$0xff] %v5139
  %5149 = vst [vmem:[#allocation2 + $0x308] sm:$0xff] %v5140
  %5150 = vst [vmem:[#allocation2 + $0x310] sm:$0xff] %v5141
  %v5151 = vld [vmem:[%s0 + $0x2c0] sm:$0xff]
  %v5152 = vld [vmem:[%s0 + $0x2c8] sm:$0xff]
  %v5153 = vld [vmem:[%s0 + $0x2d0] sm:$0xff]
  %v5154 = vld [vmem:[%s0 + $0x2d8] sm:$0xff]
  %v5155 = vld [vmem:[%s0 + $0x2e0] sm:$0xff]
  %v5156 = vld [vmem:[%s0 + $0x2e8] sm:$0xff]
  %v5157 = vld [vmem:[%s0 + $0x2f0] sm:$0xff]
  %v5158 = vld [vmem:[%s0 + $0x2f8] sm:$0xff]
  %v5159 = vld [vmem:[%s0 + $0x300] sm:$0xff]
  %v5160 = vld [vmem:[%s0 + $0x308] sm:$0xff]
  %v5161 = vld [vmem:[%s0 + $0x310] sm:$0xff]
  %v5162 = vld [vmem:[%s0 + $0x318] sm:$0xff]
  %v5163 = vld [vmem:[%s0 + $0x320] sm:$0xff]
  %v5164 = vld [vmem:[%s0 + $0x328] sm:$0xff]
  %v5165 = vld [vmem:[%s0 + $0x330] sm:$0xff]
  %v5166 = vld [vmem:[%s0 + $0x338] sm:$0xff]
  %v5167 = vld [vmem:[%s0 + $0x340] sm:$0xff]
  %v5168 = vld [vmem:[%s0 + $0x348] sm:$0xff]
  %v5169 = vld [vmem:[%s0 + $0x350] sm:$0xff]
  %v5170 = vld [vmem:[%s0 + $0x358] sm:$0xff]
  %5171 = vmatpush.msra.mxu0 %v5166
  %5172 = vmatpush.msra.mxu0 %v5165
  %5173 = vmatpush.msra.mxu0 %v5164
  %5174 = vmatpush.msra.mxu0 %v5163
  %5175 = vmatpush.msra.mxu0 %v5162
  %5176 = vmatpush.msra.mxu0 %v5161
  %5177 = vmatpush.msra.mxu0 %v5160
  %5178 = vmatpush.msra.mxu0 %v5159
  %5179 = vmatpush.msra.mxu0 %v5158
  %5180 = vmatpush.msra.mxu0 %v5157
  %5181 = vmatpush.msra.mxu0 %v5156
  %5182 = vmatpush.msra.mxu0 %v5155
  %5183 = vmatpush.msra.mxu0 %v5154
  %5184 = vmatpush.msra.mxu0 %v5153
  %5185 = vmatpush.msra.mxu0 %v5152
  %5186 = vmatpush.msra.mxu0 %v5151
  %5187 = vmatmul.f32.gmra.mxu0 %v44
  %v5188 = vpop.f32.mrf.mxu0
  %v5189 = vadd.f32 %v168, %v5188
  %5190 = vmatmul.f32.gmra.mxu0 %v46
  %v5191 = vpop.f32.mrf.mxu0
  %v5192 = vadd.f32 %v173, %v5191
  %5193 = vmatmul.f32.gmra.mxu0 %v48
  %v5194 = vpop.f32.mrf.mxu0
  %v5195 = vadd.f32 %v178, %v5194
  %5196 = vmatmul.f32.gmra.mxu0 %v50
  %v5197 = vpop.f32.mrf.mxu0
  %v5198 = vadd.f32 %v183, %v5197
  %5199 = vmatmul.f32.gmra.mxu0 %v52
  %v5200 = vpop.f32.mrf.mxu0
  %v5201 = vadd.f32 %v188, %v5200
  %5202 = vmatmul.f32.gmra.mxu0 %v54
  %v5203 = vpop.f32.mrf.mxu0
  %v5204 = vadd.f32 %v193, %v5203
  %5205 = vmatmul.f32.gmra.mxu0 %v56
  %v5206 = vpop.f32.mrf.mxu0
  %v5207 = vadd.f32 %v198, %v5206
  %5208 = vmatmul.f32.gmra.mxu0 %v58
  %v5209 = vpop.f32.mrf.mxu0
  %v5210 = vadd.f32 %v203, %v5209
  %5211 = vmatmul.f32.gmra.mxu0 %v60
  %v5212 = vpop.f32.mrf.mxu0
  %v5213 = vadd.f32 %v208, %v5212
  %5214 = vdwg.mxu0
  %5215 = vmatpush.msra.mxu0 0.0
  %5216 = vmatpush.msra.mxu0 0.0
  %5217 = vmatpush.msra.mxu0 0.0
  %5218 = vmatpush.msra.mxu0 0.0
  %5219 = vmatpush.msra.mxu0 0.0
  %5220 = vmatpush.msra.mxu0 0.0
  %5221 = vmatpush.msra.mxu0 0.0
  %5222 = vmatpush.msra.mxu0 0.0
  %5223 = vmatpush.msra.mxu0 0.0
  %5224 = vmatpush.msra.mxu0 0.0
  %5225 = vmatpush.msra.mxu0 0.0
  %5226 = vmatpush.msra.mxu0 0.0
  %5227 = vmatpush.msra.mxu0 %v5170
  %5228 = vmatpush.msra.mxu0 %v5169
  %5229 = vmatpush.msra.mxu0 %v5168
  %5230 = vmatpush.msra.mxu0 %v5167
  %5231 = vmatmul.f32.gmra.mxu0 %v212
  %v5232 = vpop.f32.mrf.mxu0
  %v5233 = vadd.f32 %v5189, %v5232
  %5234 = vmatmul.f32.gmra.mxu0 %v215
  %v5235 = vpop.f32.mrf.mxu0
  %v5236 = vadd.f32 %v5192, %v5235
  %5237 = vmatmul.f32.gmra.mxu0 %v218
  %v5238 = vpop.f32.mrf.mxu0
  %v5239 = vadd.f32 %v5195, %v5238
  %5240 = vmatmul.f32.gmra.mxu0 %v221
  %v5241 = vpop.f32.mrf.mxu0
  %v5242 = vadd.f32 %v5198, %v5241
  %5243 = vmatmul.f32.gmra.mxu0 %v224
  %v5244 = vpop.f32.mrf.mxu0
  %v5245 = vadd.f32 %v5201, %v5244
  %5246 = vmatmul.f32.gmra.mxu0 %v227
  %v5247 = vpop.f32.mrf.mxu0
  %v5248 = vadd.f32 %v5204, %v5247
  %5249 = vmatmul.f32.gmra.mxu0 %v230
  %v5250 = vpop.f32.mrf.mxu0
  %v5251 = vadd.f32 %v5207, %v5250
  %5252 = vmatmul.f32.gmra.mxu0 %v233
  %v5253 = vpop.f32.mrf.mxu0
  %v5254 = vadd.f32 %v5210, %v5253
  %5255 = vmatmul.f32.gmra.mxu0 %v236
  %v5256 = vpop.f32.mrf.mxu0
  %v5257 = vadd.f32 %v5213, %v5256
  %5258 = vdwg.mxu0
  %5259 = vmatpush.msra.mxu0 %v5166
  %5260 = vmatpush.msra.mxu0 %v5165
  %5261 = vmatpush.msra.mxu0 %v5164
  %5262 = vmatpush.msra.mxu0 %v5163
  %5263 = vmatpush.msra.mxu0 %v5162
  %5264 = vmatpush.msra.mxu0 %v5161
  %5265 = vmatpush.msra.mxu0 %v5160
  %5266 = vmatpush.msra.mxu0 %v5159
  %5267 = vmatpush.msra.mxu0 %v5158
  %5268 = vmatpush.msra.mxu0 %v5157
  %5269 = vmatpush.msra.mxu0 %v5156
  %5270 = vmatpush.msra.mxu0 %v5155
  %5271 = vmatpush.msra.mxu0 %v5154
  %5272 = vmatpush.msra.mxu0 %v5153
  %5273 = vmatpush.msra.mxu0 %v5152
  %5274 = vmatpush.msra.mxu0 %v5151
  %5275 = vmatmul.f32.gmra.mxu0 %v62
  %v5276 = vpop.f32.mrf.mxu0
  %v5277 = vadd.f32 %v168, %v5276
  %5278 = vmatmul.f32.gmra.mxu0 %v64
  %v5279 = vpop.f32.mrf.mxu0
  %v5280 = vadd.f32 %v173, %v5279
  %5281 = vmatmul.f32.gmra.mxu0 %v66
  %v5282 = vpop.f32.mrf.mxu0
  %v5283 = vadd.f32 %v178, %v5282
  %5284 = vmatmul.f32.gmra.mxu0 %v68
  %v5285 = vpop.f32.mrf.mxu0
  %v5286 = vadd.f32 %v183, %v5285
  %5287 = vmatmul.f32.gmra.mxu0 %v70
  %v5288 = vpop.f32.mrf.mxu0
  %v5289 = vadd.f32 %v188, %v5288
  %5290 = vmatmul.f32.gmra.mxu0 %v72
  %v5291 = vpop.f32.mrf.mxu0
  %v5292 = vadd.f32 %v193, %v5291
  %5293 = vmatmul.f32.gmra.mxu0 %v74
  %v5294 = vpop.f32.mrf.mxu0
  %v5295 = vadd.f32 %v198, %v5294
  %5296 = vmatmul.f32.gmra.mxu0 %v76
  %v5297 = vpop.f32.mrf.mxu0
  %v5298 = vadd.f32 %v203, %v5297
  %5299 = vmatmul.f32.gmra.mxu0 %v78
  %v5300 = vpop.f32.mrf.mxu0
  %v5301 = vadd.f32 %v208, %v5300
  %5302 = vdwg.mxu0
  %5303 = vmatpush.msra.mxu0 0.0
  %5304 = vmatpush.msra.mxu0 0.0
  %5305 = vmatpush.msra.mxu0 0.0
  %5306 = vmatpush.msra.mxu0 0.0
  %5307 = vmatpush.msra.mxu0 0.0
  %5308 = vmatpush.msra.mxu0 0.0
  %5309 = vmatpush.msra.mxu0 0.0
  %5310 = vmatpush.msra.mxu0 0.0
  %5311 = vmatpush.msra.mxu0 0.0
  %5312 = vmatpush.msra.mxu0 0.0
  %5313 = vmatpush.msra.mxu0 0.0
  %5314 = vmatpush.msra.mxu0 0.0
  %5315 = vmatpush.msra.mxu0 %v5170
  %5316 = vmatpush.msra.mxu0 %v5169
  %5317 = vmatpush.msra.mxu0 %v5168
  %5318 = vmatpush.msra.mxu0 %v5167
  %5319 = vmatmul.f32.gmra.mxu0 %v327
  %v5320 = vpop.f32.mrf.mxu0
  %v5321 = vadd.f32 %v5277, %v5320
  %5322 = vmatmul.f32.gmra.mxu0 %v330
  %v5323 = vpop.f32.mrf.mxu0
  %v5324 = vadd.f32 %v5280, %v5323
  %5325 = vmatmul.f32.gmra.mxu0 %v333
  %v5326 = vpop.f32.mrf.mxu0
  %v5327 = vadd.f32 %v5283, %v5326
  %5328 = vmatmul.f32.gmra.mxu0 %v336
  %v5329 = vpop.f32.mrf.mxu0
  %v5330 = vadd.f32 %v5286, %v5329
  %5331 = vmatmul.f32.gmra.mxu0 %v339
  %v5332 = vpop.f32.mrf.mxu0
  %v5333 = vadd.f32 %v5289, %v5332
  %5334 = vmatmul.f32.gmra.mxu0 %v342
  %v5335 = vpop.f32.mrf.mxu0
  %v5336 = vadd.f32 %v5292, %v5335
  %5337 = vmatmul.f32.gmra.mxu0 %v345
  %v5338 = vpop.f32.mrf.mxu0
  %v5339 = vadd.f32 %v5295, %v5338
  %5340 = vmatmul.f32.gmra.mxu0 %v348
  %v5341 = vpop.f32.mrf.mxu0
  %v5342 = vadd.f32 %v5298, %v5341
  %5343 = vmatmul.f32.gmra.mxu0 %v351
  %v5344 = vpop.f32.mrf.mxu0
  %v5345 = vadd.f32 %v5301, %v5344
  %5346 = vdwg.mxu0
  %v5347 = vmax.f32 %v5233, %v5321
  %v5348 = vmax.f32 %v5236, %v5324
  %v5349 = vmax.f32 %v5239, %v5327
  %v5350 = vmax.f32 %v5242, %v5330
  %v5351 = vmax.f32 %v5245, %v5333
  %v5352 = vmax.f32 %v5248, %v5336
  %v5353 = vmax.f32 %v5251, %v5339
  %v5354 = vmax.f32 %v5254, %v5342
  %v5355 = vmax.f32 %v5257, %v5345
  %v5356 = vmax.f32 %v5347, 0.0
  %v5357 = vmax.f32 %v5348, 0.0
  %v5358 = vmax.f32 %v5349, 0.0
  %v5359 = vmax.f32 %v5350, 0.0
  %v5360 = vmax.f32 %v5351, 0.0
  %v5361 = vmax.f32 %v5352, 0.0
  %v5362 = vmax.f32 %v5353, 0.0
  %v5363 = vmax.f32 %v5354, 0.0
  %v5364 = vmax.f32 %v5355, 0.0
  %v5365 = vld [vmem:[%s0 + $0x2e0] sm:$0xff]
  %v5366 = vld [vmem:[%s0 + $0x2e8] sm:$0xff]
  %v5367 = vld [vmem:[%s0 + $0x2f0] sm:$0xff]
  %v5368 = vld [vmem:[%s0 + $0x2f8] sm:$0xff]
  %v5369 = vld [vmem:[%s0 + $0x300] sm:$0xff]
  %v5370 = vld [vmem:[%s0 + $0x308] sm:$0xff]
  %v5371 = vld [vmem:[%s0 + $0x310] sm:$0xff]
  %v5372 = vld [vmem:[%s0 + $0x318] sm:$0xff]
  %v5373 = vld [vmem:[%s0 + $0x320] sm:$0xff]
  %v5374 = vld [vmem:[%s0 + $0x328] sm:$0xff]
  %v5375 = vld [vmem:[%s0 + $0x330] sm:$0xff]
  %v5376 = vld [vmem:[%s0 + $0x338] sm:$0xff]
  %v5377 = vld [vmem:[%s0 + $0x340] sm:$0xff]
  %v5378 = vld [vmem:[%s0 + $0x348] sm:$0xff]
  %v5379 = vld [vmem:[%s0 + $0x350] sm:$0xff]
  %v5380 = vld [vmem:[%s0 + $0x358] sm:$0xff]
  %v5381 = vld [vmem:[%s0 + $0x360] sm:$0xff]
  %v5382 = vld [vmem:[%s0 + $0x368] sm:$0xff]
  %v5383 = vld [vmem:[%s0 + $0x370] sm:$0xff]
  %v5384 = vld [vmem:[%s0 + $0x378] sm:$0xff]
  %5385 = vmatpush.msra.mxu0 %v5380
  %5386 = vmatpush.msra.mxu0 %v5379
  %5387 = vmatpush.msra.mxu0 %v5378
  %5388 = vmatpush.msra.mxu0 %v5377
  %5389 = vmatpush.msra.mxu0 %v5376
  %5390 = vmatpush.msra.mxu0 %v5375
  %5391 = vmatpush.msra.mxu0 %v5374
  %5392 = vmatpush.msra.mxu0 %v5373
  %5393 = vmatpush.msra.mxu0 %v5372
  %5394 = vmatpush.msra.mxu0 %v5371
  %5395 = vmatpush.msra.mxu0 %v5370
  %5396 = vmatpush.msra.mxu0 %v5369
  %5397 = vmatpush.msra.mxu0 %v5368
  %5398 = vmatpush.msra.mxu0 %v5367
  %5399 = vmatpush.msra.mxu0 %v5366
  %5400 = vmatpush.msra.mxu0 %v5365
  %5401 = vmatmul.f32.gmra.mxu0 %v44
  %v5402 = vpop.f32.mrf.mxu0
  %v5403 = vadd.f32 %v168, %v5402
  %5404 = vmatmul.f32.gmra.mxu0 %v46
  %v5405 = vpop.f32.mrf.mxu0
  %v5406 = vadd.f32 %v173, %v5405
  %5407 = vmatmul.f32.gmra.mxu0 %v48
  %v5408 = vpop.f32.mrf.mxu0
  %v5409 = vadd.f32 %v178, %v5408
  %5410 = vmatmul.f32.gmra.mxu0 %v50
  %v5411 = vpop.f32.mrf.mxu0
  %v5412 = vadd.f32 %v183, %v5411
  %5413 = vmatmul.f32.gmra.mxu0 %v52
  %v5414 = vpop.f32.mrf.mxu0
  %v5415 = vadd.f32 %v188, %v5414
  %5416 = vmatmul.f32.gmra.mxu0 %v54
  %v5417 = vpop.f32.mrf.mxu0
  %v5418 = vadd.f32 %v193, %v5417
  %5419 = vmatmul.f32.gmra.mxu0 %v56
  %v5420 = vpop.f32.mrf.mxu0
  %v5421 = vadd.f32 %v198, %v5420
  %5422 = vmatmul.f32.gmra.mxu0 %v58
  %v5423 = vpop.f32.mrf.mxu0
  %v5424 = vadd.f32 %v203, %v5423
  %5425 = vmatmul.f32.gmra.mxu0 %v60
  %v5426 = vpop.f32.mrf.mxu0
  %v5427 = vadd.f32 %v208, %v5426
  %5428 = vdwg.mxu0
  %5429 = vmatpush.msra.mxu0 0.0
  %5430 = vmatpush.msra.mxu0 0.0
  %5431 = vmatpush.msra.mxu0 0.0
  %5432 = vmatpush.msra.mxu0 0.0
  %5433 = vmatpush.msra.mxu0 0.0
  %5434 = vmatpush.msra.mxu0 0.0
  %5435 = vmatpush.msra.mxu0 0.0
  %5436 = vmatpush.msra.mxu0 0.0
  %5437 = vmatpush.msra.mxu0 0.0
  %5438 = vmatpush.msra.mxu0 0.0
  %5439 = vmatpush.msra.mxu0 0.0
  %5440 = vmatpush.msra.mxu0 0.0
  %5441 = vmatpush.msra.mxu0 %v5384
  %5442 = vmatpush.msra.mxu0 %v5383
  %5443 = vmatpush.msra.mxu0 %v5382
  %5444 = vmatpush.msra.mxu0 %v5381
  %5445 = vmatmul.f32.gmra.mxu0 %v212
  %v5446 = vpop.f32.mrf.mxu0
  %v5447 = vadd.f32 %v5403, %v5446
  %5448 = vmatmul.f32.gmra.mxu0 %v215
  %v5449 = vpop.f32.mrf.mxu0
  %v5450 = vadd.f32 %v5406, %v5449
  %5451 = vmatmul.f32.gmra.mxu0 %v218
  %v5452 = vpop.f32.mrf.mxu0
  %v5453 = vadd.f32 %v5409, %v5452
  %5454 = vmatmul.f32.gmra.mxu0 %v221
  %v5455 = vpop.f32.mrf.mxu0
  %v5456 = vadd.f32 %v5412, %v5455
  %5457 = vmatmul.f32.gmra.mxu0 %v224
  %v5458 = vpop.f32.mrf.mxu0
  %v5459 = vadd.f32 %v5415, %v5458
  %5460 = vmatmul.f32.gmra.mxu0 %v227
  %v5461 = vpop.f32.mrf.mxu0
  %v5462 = vadd.f32 %v5418, %v5461
  %5463 = vmatmul.f32.gmra.mxu0 %v230
  %v5464 = vpop.f32.mrf.mxu0
  %v5465 = vadd.f32 %v5421, %v5464
  %5466 = vmatmul.f32.gmra.mxu0 %v233
  %v5467 = vpop.f32.mrf.mxu0
  %v5468 = vadd.f32 %v5424, %v5467
  %5469 = vmatmul.f32.gmra.mxu0 %v236
  %v5470 = vpop.f32.mrf.mxu0
  %v5471 = vadd.f32 %v5427, %v5470
  %5472 = vdwg.mxu0
  %5473 = vmatpush.msra.mxu0 %v5380
  %5474 = vmatpush.msra.mxu0 %v5379
  %5475 = vmatpush.msra.mxu0 %v5378
  %5476 = vmatpush.msra.mxu0 %v5377
  %5477 = vmatpush.msra.mxu0 %v5376
  %5478 = vmatpush.msra.mxu0 %v5375
  %5479 = vmatpush.msra.mxu0 %v5374
  %5480 = vmatpush.msra.mxu0 %v5373
  %5481 = vmatpush.msra.mxu0 %v5372
  %5482 = vmatpush.msra.mxu0 %v5371
  %5483 = vmatpush.msra.mxu0 %v5370
  %5484 = vmatpush.msra.mxu0 %v5369
  %5485 = vmatpush.msra.mxu0 %v5368
  %5486 = vmatpush.msra.mxu0 %v5367
  %5487 = vmatpush.msra.mxu0 %v5366
  %5488 = vmatpush.msra.mxu0 %v5365
  %5489 = vmatmul.f32.gmra.mxu0 %v62
  %v5490 = vpop.f32.mrf.mxu0
  %v5491 = vadd.f32 %v168, %v5490
  %5492 = vmatmul.f32.gmra.mxu0 %v64
  %v5493 = vpop.f32.mrf.mxu0
  %v5494 = vadd.f32 %v173, %v5493
  %5495 = vmatmul.f32.gmra.mxu0 %v66
  %v5496 = vpop.f32.mrf.mxu0
  %v5497 = vadd.f32 %v178, %v5496
  %5498 = vmatmul.f32.gmra.mxu0 %v68
  %v5499 = vpop.f32.mrf.mxu0
  %v5500 = vadd.f32 %v183, %v5499
  %5501 = vmatmul.f32.gmra.mxu0 %v70
  %v5502 = vpop.f32.mrf.mxu0
  %v5503 = vadd.f32 %v188, %v5502
  %5504 = vmatmul.f32.gmra.mxu0 %v72
  %v5505 = vpop.f32.mrf.mxu0
  %v5506 = vadd.f32 %v193, %v5505
  %5507 = vmatmul.f32.gmra.mxu0 %v74
  %v5508 = vpop.f32.mrf.mxu0
  %v5509 = vadd.f32 %v198, %v5508
  %5510 = vmatmul.f32.gmra.mxu0 %v76
  %v5511 = vpop.f32.mrf.mxu0
  %v5512 = vadd.f32 %v203, %v5511
  %5513 = vmatmul.f32.gmra.mxu0 %v78
  %v5514 = vpop.f32.mrf.mxu0
  %v5515 = vadd.f32 %v208, %v5514
  %5516 = vdwg.mxu0
  %5517 = vmatpush.msra.mxu0 0.0
  %5518 = vmatpush.msra.mxu0 0.0
  %5519 = vmatpush.msra.mxu0 0.0
  %5520 = vmatpush.msra.mxu0 0.0
  %5521 = vmatpush.msra.mxu0 0.0
  %5522 = vmatpush.msra.mxu0 0.0
  %5523 = vmatpush.msra.mxu0 0.0
  %5524 = vmatpush.msra.mxu0 0.0
  %5525 = vmatpush.msra.mxu0 0.0
  %5526 = vmatpush.msra.mxu0 0.0
  %5527 = vmatpush.msra.mxu0 0.0
  %5528 = vmatpush.msra.mxu0 0.0
  %5529 = vmatpush.msra.mxu0 %v5384
  %5530 = vmatpush.msra.mxu0 %v5383
  %5531 = vmatpush.msra.mxu0 %v5382
  %5532 = vmatpush.msra.mxu0 %v5381
  %5533 = vmatmul.f32.gmra.mxu0 %v327
  %v5534 = vpop.f32.mrf.mxu0
  %v5535 = vadd.f32 %v5491, %v5534
  %5536 = vmatmul.f32.gmra.mxu0 %v330
  %v5537 = vpop.f32.mrf.mxu0
  %v5538 = vadd.f32 %v5494, %v5537
  %5539 = vmatmul.f32.gmra.mxu0 %v333
  %v5540 = vpop.f32.mrf.mxu0
  %v5541 = vadd.f32 %v5497, %v5540
  %5542 = vmatmul.f32.gmra.mxu0 %v336
  %v5543 = vpop.f32.mrf.mxu0
  %v5544 = vadd.f32 %v5500, %v5543
  %5545 = vmatmul.f32.gmra.mxu0 %v339
  %v5546 = vpop.f32.mrf.mxu0
  %v5547 = vadd.f32 %v5503, %v5546
  %5548 = vmatmul.f32.gmra.mxu0 %v342
  %v5549 = vpop.f32.mrf.mxu0
  %v5550 = vadd.f32 %v5506, %v5549
  %5551 = vmatmul.f32.gmra.mxu0 %v345
  %v5552 = vpop.f32.mrf.mxu0
  %v5553 = vadd.f32 %v5509, %v5552
  %5554 = vmatmul.f32.gmra.mxu0 %v348
  %v5555 = vpop.f32.mrf.mxu0
  %v5556 = vadd.f32 %v5512, %v5555
  %5557 = vmatmul.f32.gmra.mxu0 %v351
  %v5558 = vpop.f32.mrf.mxu0
  %v5559 = vadd.f32 %v5515, %v5558
  %5560 = vdwg.mxu0
  %v5561 = vmax.f32 %v5447, %v5535
  %v5562 = vmax.f32 %v5450, %v5538
  %v5563 = vmax.f32 %v5453, %v5541
  %v5564 = vmax.f32 %v5456, %v5544
  %v5565 = vmax.f32 %v5459, %v5547
  %v5566 = vmax.f32 %v5462, %v5550
  %v5567 = vmax.f32 %v5465, %v5553
  %v5568 = vmax.f32 %v5468, %v5556
  %v5569 = vmax.f32 %v5471, %v5559
  %v5570 = vmax.f32 %v5561, 0.0
  %v5571 = vmax.f32 %v5562, 0.0
  %v5572 = vmax.f32 %v5563, 0.0
  %v5573 = vmax.f32 %v5564, 0.0
  %v5574 = vmax.f32 %v5565, 0.0
  %v5575 = vmax.f32 %v5566, 0.0
  %v5576 = vmax.f32 %v5567, 0.0
  %v5577 = vmax.f32 %v5568, 0.0
  %v5578 = vmax.f32 %v5569, 0.0
  %v5579 = vmax.f32 %v5356, %v5570
  %v5580 = vmax.f32 %v5357, %v5571
  %v5581 = vmax.f32 %v5358, %v5572
  %v5582 = vmax.f32 %v5359, %v5573
  %v5583 = vmax.f32 %v5360, %v5574
  %v5584 = vmax.f32 %v5361, %v5575
  %v5585 = vmax.f32 %v5362, %v5576
  %v5586 = vmax.f32 %v5363, %v5577
  %v5587 = vmax.f32 %v5364, %v5578
  %5588 = vst [vmem:[#allocation2 + $0x318] sm:$0xff] %v5579
  %5589 = vst [vmem:[#allocation2 + $0x320] sm:$0xff] %v5580
  %5590 = vst [vmem:[#allocation2 + $0x328] sm:$0xff] %v5581
  %5591 = vst [vmem:[#allocation2 + $0x330] sm:$0xff] %v5582
  %5592 = vst [vmem:[#allocation2 + $0x338] sm:$0xff] %v5583
  %5593 = vst [vmem:[#allocation2 + $0x340] sm:$0xff] %v5584
  %5594 = vst [vmem:[#allocation2 + $0x348] sm:$0xff] %v5585
  %5595 = vst [vmem:[#allocation2 + $0x350] sm:$0xff] %v5586
  %5596 = vst [vmem:[#allocation2 + $0x358] sm:$0xff] %v5587
  %v5597 = vld [vmem:[#allocation2] sm:$0xff]
  %v5598 = vld [vmem:[#allocation2 + $0x8] sm:$0xff]
  %v5599 = vld [vmem:[#allocation2 + $0x10] sm:$0xff]
  %v5600 = vld [vmem:[#allocation2 + $0x18] sm:$0xff]
  %v5601 = vld [vmem:[#allocation2 + $0x20] sm:$0xff]
  %v5602 = vld [vmem:[#allocation2 + $0x28] sm:$0xff]
  %v5603 = vld [vmem:[#allocation2 + $0x30] sm:$0xff]
  %v5604 = vld [vmem:[#allocation2 + $0x38] sm:$0xff]
  %v5605 = vld [vmem:[#allocation2 + $0x40] sm:$0xff]
  %v5606 = vld [vmem:[#allocation2 + $0x48] sm:$0xff]
  %v5607 = vld [vmem:[#allocation2 + $0x50] sm:$0xff]
  %v5608 = vld [vmem:[#allocation2 + $0x58] sm:$0xff]
  %v5609 = vld [vmem:[#allocation2 + $0x60] sm:$0xff]
  %v5610 = vld [vmem:[#allocation2 + $0x68] sm:$0xff]
  %v5611 = vld [vmem:[#allocation2 + $0x70] sm:$0xff]
  %v5612 = vld [vmem:[#allocation2 + $0x78] sm:$0xff]
  %v5613 = vld [vmem:[#allocation2 + $0x80] sm:$0xff]
  %v5614 = vld [vmem:[#allocation2 + $0x88] sm:$0xff]
  %v5615 = vld [vmem:[#allocation2 + $0x90] sm:$0xff]
  %v5616 = vld [vmem:[#allocation2 + $0x98] sm:$0xff]
  %v5617 = vld [vmem:[#allocation2 + $0xa0] sm:$0xff]
  %v5618 = vld [vmem:[#allocation2 + $0xa8] sm:$0xff]
  %v5619 = vld [vmem:[#allocation2 + $0xb0] sm:$0xff]
  %v5620 = vld [vmem:[#allocation2 + $0xb8] sm:$0xff]
  %v5621 = vld [vmem:[#allocation2 + $0xc0] sm:$0xff]
  %v5622 = vld [vmem:[#allocation2 + $0xc8] sm:$0xff]
  %v5623 = vld [vmem:[#allocation2 + $0xd0] sm:$0xff]
  %v5624 = vld [vmem:[#allocation2 + $0xd8] sm:$0xff]
  %v5625 = vld [vmem:[#allocation2 + $0xe0] sm:$0xff]
  %v5626 = vld [vmem:[#allocation2 + $0xe8] sm:$0xff]
  %v5627 = vld [vmem:[#allocation2 + $0xf0] sm:$0xff]
  %v5628 = vld [vmem:[#allocation2 + $0xf8] sm:$0xff]
  %v5629 = vld [vmem:[#allocation2 + $0x100] sm:$0xff]
  %v5630 = vld [vmem:[#allocation2 + $0x108] sm:$0xff]
  %v5631 = vld [vmem:[#allocation2 + $0x110] sm:$0xff]
  %v5632 = vld [vmem:[#allocation2 + $0x118] sm:$0xff]
  %v5633 = vld [vmem:[#allocation2 + $0x120] sm:$0xff]
  %v5634 = vld [vmem:[#allocation2 + $0x128] sm:$0xff]
  %v5635 = vld [vmem:[#allocation2 + $0x130] sm:$0xff]
  %v5636 = vld [vmem:[#allocation2 + $0x138] sm:$0xff]
  %v5637 = vld [vmem:[#allocation2 + $0x140] sm:$0xff]
  %v5638 = vld [vmem:[#allocation2 + $0x148] sm:$0xff]
  %v5639 = vld [vmem:[#allocation2 + $0x150] sm:$0xff]
  %v5640 = vld [vmem:[#allocation2 + $0x158] sm:$0xff]
  %v5641 = vld [vmem:[#allocation2 + $0x160] sm:$0xff]
  %5643 = vset.pattern.permute.xlu0 0
  %5644 = vperm.xlu0 %5643, %v137
  %v5645 = vpop.permute.xlu0 %5644
  %5648 = vset.pattern.permute.xlu0 0
  %5649 = vperm.xlu0 %5648, %v138
  %v5650 = vpop.permute.xlu0 %5649
  %5653 = vset.pattern.permute.xlu0 0
  %5654 = vperm.xlu0 %5653, %v139
  %v5655 = vpop.permute.xlu0 %5654
  %5658 = vset.pattern.permute.xlu0 0
  %5659 = vperm.xlu0 %5658, %v140
  %v5660 = vpop.permute.xlu0 %5659
  %5663 = vset.pattern.permute.xlu0 0
  %5664 = vperm.xlu0 %5663, %v141
  %v5665 = vpop.permute.xlu0 %5664
  %5668 = vset.pattern.permute.xlu0 0
  %5669 = vperm.xlu0 %5668, %v142
  %v5670 = vpop.permute.xlu0 %5669
  %5673 = vset.pattern.permute.xlu0 0
  %5674 = vperm.xlu0 %5673, %v143
  %v5675 = vpop.permute.xlu0 %5674
  %5678 = vset.pattern.permute.xlu0 0
  %5679 = vperm.xlu0 %5678, %v144
  %v5680 = vpop.permute.xlu0 %5679
  %vm5682 = vcmask 850944
  %v5684 = vsel %vm5682, %v91, 0
  %v5687 = vsel %vm5682, %v94, 0
  %v5690 = vsel %vm5682, %v97, 0
  %v5693 = vsel %vm5682, %v100, 0
  %v5696 = vsel %vm5682, %v103, 0
  %v5699 = vsel %vm5682, %v106, 0
  %v5702 = vsel %vm5682, %v109, 0
  %v5705 = vsel %vm5682, %v112, 0
  %5707 = vmatpush.msra.mxu0 %v5612
  %5708 = vmatpush.msra.mxu0 %v5611
  %5709 = vmatpush.msra.mxu0 %v5610
  %5710 = vmatpush.msra.mxu0 %v5609
  %5711 = vmatpush.msra.mxu0 %v5608
  %5712 = vmatpush.msra.mxu0 %v5607
  %5713 = vmatpush.msra.mxu0 %v5606
  %5714 = vmatpush.msra.mxu0 %v5605
  %5715 = vmatpush.msra.mxu0 %v5604
  %5716 = vmatpush.msra.mxu0 %v5603
  %5717 = vmatpush.msra.mxu0 %v5602
  %5718 = vmatpush.msra.mxu0 %v5601
  %5719 = vmatpush.msra.mxu0 %v5600
  %5720 = vmatpush.msra.mxu0 %v5599
  %5721 = vmatpush.msra.mxu0 %v5598
  %5722 = vmatpush.msra.mxu0 %v5597
  %5723 = vmatmul.f32.gmra.mxu0 %v89
  %v5724 = vpop.f32.mrf.mxu0
  %v5725 = vadd.f32 %v5645, %v5724
  %5726 = vmatmul.f32.gmra.mxu0 %v92
  %v5727 = vpop.f32.mrf.mxu0
  %v5728 = vadd.f32 %v5650, %v5727
  %5729 = vmatmul.f32.gmra.mxu0 %v95
  %v5730 = vpop.f32.mrf.mxu0
  %v5731 = vadd.f32 %v5655, %v5730
  %5732 = vmatmul.f32.gmra.mxu0 %v98
  %v5733 = vpop.f32.mrf.mxu0
  %v5734 = vadd.f32 %v5660, %v5733
  %5735 = vmatmul.f32.gmra.mxu0 %v101
  %v5736 = vpop.f32.mrf.mxu0
  %v5737 = vadd.f32 %v5665, %v5736
  %5738 = vmatmul.f32.gmra.mxu0 %v104
  %v5739 = vpop.f32.mrf.mxu0
  %v5740 = vadd.f32 %v5670, %v5739
  %5741 = vmatmul.f32.gmra.mxu0 %v107
  %v5742 = vpop.f32.mrf.mxu0
  %v5743 = vadd.f32 %v5675, %v5742
  %5744 = vmatmul.f32.gmra.mxu0 %v110
  %v5745 = vpop.f32.mrf.mxu0
  %v5746 = vadd.f32 %v5680, %v5745
  %5747 = vdwg.mxu0
  %5748 = vmatpush.msra.mxu0 %v5628
  %5749 = vmatpush.msra.mxu0 %v5627
  %5750 = vmatpush.msra.mxu0 %v5626
  %5751 = vmatpush.msra.mxu0 %v5625
  %5752 = vmatpush.msra.mxu0 %v5624
  %5753 = vmatpush.msra.mxu0 %v5623
  %5754 = vmatpush.msra.mxu0 %v5622
  %5755 = vmatpush.msra.mxu0 %v5621
  %5756 = vmatpush.msra.mxu0 %v5620
  %5757 = vmatpush.msra.mxu0 %v5619
  %5758 = vmatpush.msra.mxu0 %v5618
  %5759 = vmatpush.msra.mxu0 %v5617
  %5760 = vmatpush.msra.mxu0 %v5616
  %5761 = vmatpush.msra.mxu0 %v5615
  %5762 = vmatpush.msra.mxu0 %v5614
  %5763 = vmatpush.msra.mxu0 %v5613
  %5764 = vmatmul.f32.gmra.mxu0 %v90
  %v5765 = vpop.f32.mrf.mxu0
  %v5766 = vadd.f32 %v5725, %v5765
  %5767 = vmatmul.f32.gmra.mxu0 %v93
  %v5768 = vpop.f32.mrf.mxu0
  %v5769 = vadd.f32 %v5728, %v5768
  %5770 = vmatmul.f32.gmra.mxu0 %v96
  %v5771 = vpop.f32.mrf.mxu0
  %v5772 = vadd.f32 %v5731, %v5771
  %5773 = vmatmul.f32.gmra.mxu0 %v99
  %v5774 = vpop.f32.mrf.mxu0
  %v5775 = vadd.f32 %v5734, %v5774
  %5776 = vmatmul.f32.gmra.mxu0 %v102
  %v5777 = vpop.f32.mrf.mxu0
  %v5778 = vadd.f32 %v5737, %v5777
  %5779 = vmatmul.f32.gmra.mxu0 %v105
  %v5780 = vpop.f32.mrf.mxu0
  %v5781 = vadd.f32 %v5740, %v5780
  %5782 = vmatmul.f32.gmra.mxu0 %v108
  %v5783 = vpop.f32.mrf.mxu0
  %v5784 = vadd.f32 %v5743, %v5783
  %5785 = vmatmul.f32.gmra.mxu0 %v111
  %v5786 = vpop.f32.mrf.mxu0
  %v5787 = vadd.f32 %v5746, %v5786
  %5788 = vdwg.mxu0
  %5789 = vmatpush.msra.mxu0 0.0
  %5790 = vmatpush.msra.mxu0 0.0
  %5791 = vmatpush.msra.mxu0 0.0
  %5792 = vmatpush.msra.mxu0 %v5641
  %5793 = vmatpush.msra.mxu0 %v5640
  %5794 = vmatpush.msra.mxu0 %v5639
  %5795 = vmatpush.msra.mxu0 %v5638
  %5796 = vmatpush.msra.mxu0 %v5637
  %5797 = vmatpush.msra.mxu0 %v5636
  %5798 = vmatpush.msra.mxu0 %v5635
  %5799 = vmatpush.msra.mxu0 %v5634
  %5800 = vmatpush.msra.mxu0 %v5633
  %5801 = vmatpush.msra.mxu0 %v5632
  %5802 = vmatpush.msra.mxu0 %v5631
  %5803 = vmatpush.msra.mxu0 %v5630
  %5804 = vmatpush.msra.mxu0 %v5629
  %5805 = vmatmul.f32.gmra.mxu0 %v5684
  %v5806 = vpop.f32.mrf.mxu0
  %v5807 = vadd.f32 %v5766, %v5806
  %5808 = vmatmul.f32.gmra.mxu0 %v5687
  %v5809 = vpop.f32.mrf.mxu0
  %v5810 = vadd.f32 %v5769, %v5809
  %5811 = vmatmul.f32.gmra.mxu0 %v5690
  %v5812 = vpop.f32.mrf.mxu0
  %v5813 = vadd.f32 %v5772, %v5812
  %5814 = vmatmul.f32.gmra.mxu0 %v5693
  %v5815 = vpop.f32.mrf.mxu0
  %v5816 = vadd.f32 %v5775, %v5815
  %5817 = vmatmul.f32.gmra.mxu0 %v5696
  %v5818 = vpop.f32.mrf.mxu0
  %v5819 = vadd.f32 %v5778, %v5818
  %5820 = vmatmul.f32.gmra.mxu0 %v5699
  %v5821 = vpop.f32.mrf.mxu0
  %v5822 = vadd.f32 %v5781, %v5821
  %5823 = vmatmul.f32.gmra.mxu0 %v5702
  %v5824 = vpop.f32.mrf.mxu0
  %v5825 = vadd.f32 %v5784, %v5824
  %5826 = vmatmul.f32.gmra.mxu0 %v5705
  %v5827 = vpop.f32.mrf.mxu0
  %v5828 = vadd.f32 %v5787, %v5827
  %5829 = vdwg.mxu0
  %v5831 = vsel %vm5682, %v115, 0
  %v5834 = vsel %vm5682, %v118, 0
  %v5837 = vsel %vm5682, %v121, 0
  %v5840 = vsel %vm5682, %v124, 0
  %v5843 = vsel %vm5682, %v127, 0
  %v5846 = vsel %vm5682, %v130, 0
  %v5849 = vsel %vm5682, %v133, 0
  %v5852 = vsel %vm5682, %v136, 0
  %5854 = vmatpush.msra.mxu0 %v5612
  %5855 = vmatpush.msra.mxu0 %v5611
  %5856 = vmatpush.msra.mxu0 %v5610
  %5857 = vmatpush.msra.mxu0 %v5609
  %5858 = vmatpush.msra.mxu0 %v5608
  %5859 = vmatpush.msra.mxu0 %v5607
  %5860 = vmatpush.msra.mxu0 %v5606
  %5861 = vmatpush.msra.mxu0 %v5605
  %5862 = vmatpush.msra.mxu0 %v5604
  %5863 = vmatpush.msra.mxu0 %v5603
  %5864 = vmatpush.msra.mxu0 %v5602
  %5865 = vmatpush.msra.mxu0 %v5601
  %5866 = vmatpush.msra.mxu0 %v5600
  %5867 = vmatpush.msra.mxu0 %v5599
  %5868 = vmatpush.msra.mxu0 %v5598
  %5869 = vmatpush.msra.mxu0 %v5597
  %5870 = vmatmul.f32.gmra.mxu0 %v113
  %v5871 = vpop.f32.mrf.mxu0
  %v5872 = vadd.f32 %v5645, %v5871
  %5873 = vmatmul.f32.gmra.mxu0 %v116
  %v5874 = vpop.f32.mrf.mxu0
  %v5875 = vadd.f32 %v5650, %v5874
  %5876 = vmatmul.f32.gmra.mxu0 %v119
  %v5877 = vpop.f32.mrf.mxu0
  %v5878 = vadd.f32 %v5655, %v5877
  %5879 = vmatmul.f32.gmra.mxu0 %v122
  %v5880 = vpop.f32.mrf.mxu0
  %v5881 = vadd.f32 %v5660, %v5880
  %5882 = vmatmul.f32.gmra.mxu0 %v125
  %v5883 = vpop.f32.mrf.mxu0
  %v5884 = vadd.f32 %v5665, %v5883
  %5885 = vmatmul.f32.gmra.mxu0 %v128
  %v5886 = vpop.f32.mrf.mxu0
  %v5887 = vadd.f32 %v5670, %v5886
  %5888 = vmatmul.f32.gmra.mxu0 %v131
  %v5889 = vpop.f32.mrf.mxu0
  %v5890 = vadd.f32 %v5675, %v5889
  %5891 = vmatmul.f32.gmra.mxu0 %v134
  %v5892 = vpop.f32.mrf.mxu0
  %v5893 = vadd.f32 %v5680, %v5892
  %5894 = vdwg.mxu0
  %5895 = vmatpush.msra.mxu0 %v5628
  %5896 = vmatpush.msra.mxu0 %v5627
  %5897 = vmatpush.msra.mxu0 %v5626
  %5898 = vmatpush.msra.mxu0 %v5625
  %5899 = vmatpush.msra.mxu0 %v5624
  %5900 = vmatpush.msra.mxu0 %v5623
  %5901 = vmatpush.msra.mxu0 %v5622
  %5902 = vmatpush.msra.mxu0 %v5621
  %5903 = vmatpush.msra.mxu0 %v5620
  %5904 = vmatpush.msra.mxu0 %v5619
  %5905 = vmatpush.msra.mxu0 %v5618
  %5906 = vmatpush.msra.mxu0 %v5617
  %5907 = vmatpush.msra.mxu0 %v5616
  %5908 = vmatpush.msra.mxu0 %v5615
  %5909 = vmatpush.msra.mxu0 %v5614
  %5910 = vmatpush.msra.mxu0 %v5613
  %5911 = vmatmul.f32.gmra.mxu0 %v114
  %v5912 = vpop.f32.mrf.mxu0
  %v5913 = vadd.f32 %v5872, %v5912
  %5914 = vmatmul.f32.gmra.mxu0 %v117
  %v5915 = vpop.f32.mrf.mxu0
  %v5916 = vadd.f32 %v5875, %v5915
  %5917 = vmatmul.f32.gmra.mxu0 %v120
  %v5918 = vpop.f32.mrf.mxu0
  %v5919 = vadd.f32 %v5878, %v5918
  %5920 = vmatmul.f32.gmra.mxu0 %v123
  %v5921 = vpop.f32.mrf.mxu0
  %v5922 = vadd.f32 %v5881, %v5921
  %5923 = vmatmul.f32.gmra.mxu0 %v126
  %v5924 = vpop.f32.mrf.mxu0
  %v5925 = vadd.f32 %v5884, %v5924
  %5926 = vmatmul.f32.gmra.mxu0 %v129
  %v5927 = vpop.f32.mrf.mxu0
  %v5928 = vadd.f32 %v5887, %v5927
  %5929 = vmatmul.f32.gmra.mxu0 %v132
  %v5930 = vpop.f32.mrf.mxu0
  %v5931 = vadd.f32 %v5890, %v5930
  %5932 = vmatmul.f32.gmra.mxu0 %v135
  %v5933 = vpop.f32.mrf.mxu0
  %v5934 = vadd.f32 %v5893, %v5933
  %5935 = vdwg.mxu0
  %5936 = vmatpush.msra.mxu0 0.0
  %5937 = vmatpush.msra.mxu0 0.0
  %5938 = vmatpush.msra.mxu0 0.0
  %5939 = vmatpush.msra.mxu0 %v5641
  %5940 = vmatpush.msra.mxu0 %v5640
  %5941 = vmatpush.msra.mxu0 %v5639
  %5942 = vmatpush.msra.mxu0 %v5638
  %5943 = vmatpush.msra.mxu0 %v5637
  %5944 = vmatpush.msra.mxu0 %v5636
  %5945 = vmatpush.msra.mxu0 %v5635
  %5946 = vmatpush.msra.mxu0 %v5634
  %5947 = vmatpush.msra.mxu0 %v5633
  %5948 = vmatpush.msra.mxu0 %v5632
  %5949 = vmatpush.msra.mxu0 %v5631
  %5950 = vmatpush.msra.mxu0 %v5630
  %5951 = vmatpush.msra.mxu0 %v5629
  %5952 = vmatmul.f32.gmra.mxu0 %v5831
  %v5953 = vpop.f32.mrf.mxu0
  %v5954 = vadd.f32 %v5913, %v5953
  %5955 = vmatmul.f32.gmra.mxu0 %v5834
  %v5956 = vpop.f32.mrf.mxu0
  %v5957 = vadd.f32 %v5916, %v5956
  %5958 = vmatmul.f32.gmra.mxu0 %v5837
  %v5959 = vpop.f32.mrf.mxu0
  %v5960 = vadd.f32 %v5919, %v5959
  %5961 = vmatmul.f32.gmra.mxu0 %v5840
  %v5962 = vpop.f32.mrf.mxu0
  %v5963 = vadd.f32 %v5922, %v5962
  %5964 = vmatmul.f32.gmra.mxu0 %v5843
  %v5965 = vpop.f32.mrf.mxu0
  %v5966 = vadd.f32 %v5925, %v5965
  %5967 = vmatmul.f32.gmra.mxu0 %v5846
  %v5968 = vpop.f32.mrf.mxu0
  %v5969 = vadd.f32 %v5928, %v5968
  %5970 = vmatmul.f32.gmra.mxu0 %v5849
  %v5971 = vpop.f32.mrf.mxu0
  %v5972 = vadd.f32 %v5931, %v5971
  %5973 = vmatmul.f32.gmra.mxu0 %v5852
  %v5974 = vpop.f32.mrf.mxu0
  %v5975 = vadd.f32 %v5934, %v5974
  %5976 = vdwg.mxu0
  %v5977 = vmax.f32 %v5807, %v5954
  %v5978 = vmax.f32 %v5810, %v5957
  %v5979 = vmax.f32 %v5813, %v5960
  %v5980 = vmax.f32 %v5816, %v5963
  %v5981 = vmax.f32 %v5819, %v5966
  %v5982 = vmax.f32 %v5822, %v5969
  %v5983 = vmax.f32 %v5825, %v5972
  %v5984 = vmax.f32 %v5828, %v5975
  %v5985 = vmax.f32 %v5977, 0.0
  %v5986 = vmax.f32 %v5978, 0.0
  %v5987 = vmax.f32 %v5979, 0.0
  %v5988 = vmax.f32 %v5980, 0.0
  %v5989 = vmax.f32 %v5981, 0.0
  %v5990 = vmax.f32 %v5982, 0.0
  %v5991 = vmax.f32 %v5983, 0.0
  %v5992 = vmax.f32 %v5984, 0.0
  %v5993 = vld [vmem:[#allocation2 + $0x48] sm:$0xff]
  %v5994 = vld [vmem:[#allocation2 + $0x50] sm:$0xff]
  %v5995 = vld [vmem:[#allocation2 + $0x58] sm:$0xff]
  %v5996 = vld [vmem:[#allocation2 + $0x60] sm:$0xff]
  %v5997 = vld [vmem:[#allocation2 + $0x68] sm:$0xff]
  %v5998 = vld [vmem:[#allocation2 + $0x70] sm:$0xff]
  %v5999 = vld [vmem:[#allocation2 + $0x78] sm:$0xff]
  %v6000 = vld [vmem:[#allocation2 + $0x80] sm:$0xff]
  %v6001 = vld [vmem:[#allocation2 + $0x88] sm:$0xff]
  %v6002 = vld [vmem:[#allocation2 + $0x90] sm:$0xff]
  %v6003 = vld [vmem:[#allocation2 + $0x98] sm:$0xff]
  %v6004 = vld [vmem:[#allocation2 + $0xa0] sm:$0xff]
  %v6005 = vld [vmem:[#allocation2 + $0xa8] sm:$0xff]
  %v6006 = vld [vmem:[#allocation2 + $0xb0] sm:$0xff]
  %v6007 = vld [vmem:[#allocation2 + $0xb8] sm:$0xff]
  %v6008 = vld [vmem:[#allocation2 + $0xc0] sm:$0xff]
  %v6009 = vld [vmem:[#allocation2 + $0xc8] sm:$0xff]
  %v6010 = vld [vmem:[#allocation2 + $0xd0] sm:$0xff]
  %v6011 = vld [vmem:[#allocation2 + $0xd8] sm:$0xff]
  %v6012 = vld [vmem:[#allocation2 + $0xe0] sm:$0xff]
  %v6013 = vld [vmem:[#allocation2 + $0xe8] sm:$0xff]
  %v6014 = vld [vmem:[#allocation2 + $0xf0] sm:$0xff]
  %v6015 = vld [vmem:[#allocation2 + $0xf8] sm:$0xff]
  %v6016 = vld [vmem:[#allocation2 + $0x100] sm:$0xff]
  %v6017 = vld [vmem:[#allocation2 + $0x108] sm:$0xff]
  %v6018 = vld [vmem:[#allocation2 + $0x110] sm:$0xff]
  %v6019 = vld [vmem:[#allocation2 + $0x118] sm:$0xff]
  %v6020 = vld [vmem:[#allocation2 + $0x120] sm:$0xff]
  %v6021 = vld [vmem:[#allocation2 + $0x128] sm:$0xff]
  %v6022 = vld [vmem:[#allocation2 + $0x130] sm:$0xff]
  %v6023 = vld [vmem:[#allocation2 + $0x138] sm:$0xff]
  %v6024 = vld [vmem:[#allocation2 + $0x140] sm:$0xff]
  %v6025 = vld [vmem:[#allocation2 + $0x148] sm:$0xff]
  %v6026 = vld [vmem:[#allocation2 + $0x150] sm:$0xff]
  %v6027 = vld [vmem:[#allocation2 + $0x158] sm:$0xff]
  %v6028 = vld [vmem:[#allocation2 + $0x160] sm:$0xff]
  %v6029 = vld [vmem:[#allocation2 + $0x168] sm:$0xff]
  %v6030 = vld [vmem:[#allocation2 + $0x170] sm:$0xff]
  %v6031 = vld [vmem:[#allocation2 + $0x178] sm:$0xff]
  %v6032 = vld [vmem:[#allocation2 + $0x180] sm:$0xff]
  %v6033 = vld [vmem:[#allocation2 + $0x188] sm:$0xff]
  %v6034 = vld [vmem:[#allocation2 + $0x190] sm:$0xff]
  %v6035 = vld [vmem:[#allocation2 + $0x198] sm:$0xff]
  %v6036 = vld [vmem:[#allocation2 + $0x1a0] sm:$0xff]
  %v6037 = vld [vmem:[#allocation2 + $0x1a8] sm:$0xff]
  %6038 = vmatpush.msra.mxu0 %v6008
  %6039 = vmatpush.msra.mxu0 %v6007
  %6040 = vmatpush.msra.mxu0 %v6006
  %6041 = vmatpush.msra.mxu0 %v6005
  %6042 = vmatpush.msra.mxu0 %v6004
  %6043 = vmatpush.msra.mxu0 %v6003
  %6044 = vmatpush.msra.mxu0 %v6002
  %6045 = vmatpush.msra.mxu0 %v6001
  %6046 = vmatpush.msra.mxu0 %v6000
  %6047 = vmatpush.msra.mxu0 %v5999
  %6048 = vmatpush.msra.mxu0 %v5998
  %6049 = vmatpush.msra.mxu0 %v5997
  %6050 = vmatpush.msra.mxu0 %v5996
  %6051 = vmatpush.msra.mxu0 %v5995
  %6052 = vmatpush.msra.mxu0 %v5994
  %6053 = vmatpush.msra.mxu0 %v5993
  %6054 = vmatmul.f32.gmra.mxu0 %v89
  %v6055 = vpop.f32.mrf.mxu0
  %v6056 = vadd.f32 %v5645, %v6055
  %6057 = vmatmul.f32.gmra.mxu0 %v92
  %v6058 = vpop.f32.mrf.mxu0
  %v6059 = vadd.f32 %v5650, %v6058
  %6060 = vmatmul.f32.gmra.mxu0 %v95
  %v6061 = vpop.f32.mrf.mxu0
  %v6062 = vadd.f32 %v5655, %v6061
  %6063 = vmatmul.f32.gmra.mxu0 %v98
  %v6064 = vpop.f32.mrf.mxu0
  %v6065 = vadd.f32 %v5660, %v6064
  %6066 = vmatmul.f32.gmra.mxu0 %v101
  %v6067 = vpop.f32.mrf.mxu0
  %v6068 = vadd.f32 %v5665, %v6067
  %6069 = vmatmul.f32.gmra.mxu0 %v104
  %v6070 = vpop.f32.mrf.mxu0
  %v6071 = vadd.f32 %v5670, %v6070
  %6072 = vmatmul.f32.gmra.mxu0 %v107
  %v6073 = vpop.f32.mrf.mxu0
  %v6074 = vadd.f32 %v5675, %v6073
  %6075 = vmatmul.f32.gmra.mxu0 %v110
  %v6076 = vpop.f32.mrf.mxu0
  %v6077 = vadd.f32 %v5680, %v6076
  %6078 = vdwg.mxu0
  %6079 = vmatpush.msra.mxu0 %v6024
  %6080 = vmatpush.msra.mxu0 %v6023
  %6081 = vmatpush.msra.mxu0 %v6022
  %6082 = vmatpush.msra.mxu0 %v6021
  %6083 = vmatpush.msra.mxu0 %v6020
  %6084 = vmatpush.msra.mxu0 %v6019
  %6085 = vmatpush.msra.mxu0 %v6018
  %6086 = vmatpush.msra.mxu0 %v6017
  %6087 = vmatpush.msra.mxu0 %v6016
  %6088 = vmatpush.msra.mxu0 %v6015
  %6089 = vmatpush.msra.mxu0 %v6014
  %6090 = vmatpush.msra.mxu0 %v6013
  %6091 = vmatpush.msra.mxu0 %v6012
  %6092 = vmatpush.msra.mxu0 %v6011
  %6093 = vmatpush.msra.mxu0 %v6010
  %6094 = vmatpush.msra.mxu0 %v6009
  %6095 = vmatmul.f32.gmra.mxu0 %v90
  %v6096 = vpop.f32.mrf.mxu0
  %v6097 = vadd.f32 %v6056, %v6096
  %6098 = vmatmul.f32.gmra.mxu0 %v93
  %v6099 = vpop.f32.mrf.mxu0
  %v6100 = vadd.f32 %v6059, %v6099
  %6101 = vmatmul.f32.gmra.mxu0 %v96
  %v6102 = vpop.f32.mrf.mxu0
  %v6103 = vadd.f32 %v6062, %v6102
  %6104 = vmatmul.f32.gmra.mxu0 %v99
  %v6105 = vpop.f32.mrf.mxu0
  %v6106 = vadd.f32 %v6065, %v6105
  %6107 = vmatmul.f32.gmra.mxu0 %v102
  %v6108 = vpop.f32.mrf.mxu0
  %v6109 = vadd.f32 %v6068, %v6108
  %6110 = vmatmul.f32.gmra.mxu0 %v105
  %v6111 = vpop.f32.mrf.mxu0
  %v6112 = vadd.f32 %v6071, %v6111
  %6113 = vmatmul.f32.gmra.mxu0 %v108
  %v6114 = vpop.f32.mrf.mxu0
  %v6115 = vadd.f32 %v6074, %v6114
  %6116 = vmatmul.f32.gmra.mxu0 %v111
  %v6117 = vpop.f32.mrf.mxu0
  %v6118 = vadd.f32 %v6077, %v6117
  %6119 = vdwg.mxu0
  %6120 = vmatpush.msra.mxu0 0.0
  %6121 = vmatpush.msra.mxu0 0.0
  %6122 = vmatpush.msra.mxu0 0.0
  %6123 = vmatpush.msra.mxu0 %v6037
  %6124 = vmatpush.msra.mxu0 %v6036
  %6125 = vmatpush.msra.mxu0 %v6035
  %6126 = vmatpush.msra.mxu0 %v6034
  %6127 = vmatpush.msra.mxu0 %v6033
  %6128 = vmatpush.msra.mxu0 %v6032
  %6129 = vmatpush.msra.mxu0 %v6031
  %6130 = vmatpush.msra.mxu0 %v6030
  %6131 = vmatpush.msra.mxu0 %v6029
  %6132 = vmatpush.msra.mxu0 %v6028
  %6133 = vmatpush.msra.mxu0 %v6027
  %6134 = vmatpush.msra.mxu0 %v6026
  %6135 = vmatpush.msra.mxu0 %v6025
  %6136 = vmatmul.f32.gmra.mxu0 %v5684
  %v6137 = vpop.f32.mrf.mxu0
  %v6138 = vadd.f32 %v6097, %v6137
  %6139 = vmatmul.f32.gmra.mxu0 %v5687
  %v6140 = vpop.f32.mrf.mxu0
  %v6141 = vadd.f32 %v6100, %v6140
  %6142 = vmatmul.f32.gmra.mxu0 %v5690
  %v6143 = vpop.f32.mrf.mxu0
  %v6144 = vadd.f32 %v6103, %v6143
  %6145 = vmatmul.f32.gmra.mxu0 %v5693
  %v6146 = vpop.f32.mrf.mxu0
  %v6147 = vadd.f32 %v6106, %v6146
  %6148 = vmatmul.f32.gmra.mxu0 %v5696
  %v6149 = vpop.f32.mrf.mxu0
  %v6150 = vadd.f32 %v6109, %v6149
  %6151 = vmatmul.f32.gmra.mxu0 %v5699
  %v6152 = vpop.f32.mrf.mxu0
  %v6153 = vadd.f32 %v6112, %v6152
  %6154 = vmatmul.f32.gmra.mxu0 %v5702
  %v6155 = vpop.f32.mrf.mxu0
  %v6156 = vadd.f32 %v6115, %v6155
  %6157 = vmatmul.f32.gmra.mxu0 %v5705
  %v6158 = vpop.f32.mrf.mxu0
  %v6159 = vadd.f32 %v6118, %v6158
  %6160 = vdwg.mxu0
  %6161 = vmatpush.msra.mxu0 %v6008
  %6162 = vmatpush.msra.mxu0 %v6007
  %6163 = vmatpush.msra.mxu0 %v6006
  %6164 = vmatpush.msra.mxu0 %v6005
  %6165 = vmatpush.msra.mxu0 %v6004
  %6166 = vmatpush.msra.mxu0 %v6003
  %6167 = vmatpush.msra.mxu0 %v6002
  %6168 = vmatpush.msra.mxu0 %v6001
  %6169 = vmatpush.msra.mxu0 %v6000
  %6170 = vmatpush.msra.mxu0 %v5999
  %6171 = vmatpush.msra.mxu0 %v5998
  %6172 = vmatpush.msra.mxu0 %v5997
  %6173 = vmatpush.msra.mxu0 %v5996
  %6174 = vmatpush.msra.mxu0 %v5995
  %6175 = vmatpush.msra.mxu0 %v5994
  %6176 = vmatpush.msra.mxu0 %v5993
  %6177 = vmatmul.f32.gmra.mxu0 %v113
  %v6178 = vpop.f32.mrf.mxu0
  %v6179 = vadd.f32 %v5645, %v6178
  %6180 = vmatmul.f32.gmra.mxu0 %v116
  %v6181 = vpop.f32.mrf.mxu0
  %v6182 = vadd.f32 %v5650, %v6181
  %6183 = vmatmul.f32.gmra.mxu0 %v119
  %v6184 = vpop.f32.mrf.mxu0
  %v6185 = vadd.f32 %v5655, %v6184
  %6186 = vmatmul.f32.gmra.mxu0 %v122
  %v6187 = vpop.f32.mrf.mxu0
  %v6188 = vadd.f32 %v5660, %v6187
  %6189 = vmatmul.f32.gmra.mxu0 %v125
  %v6190 = vpop.f32.mrf.mxu0
  %v6191 = vadd.f32 %v5665, %v6190
  %6192 = vmatmul.f32.gmra.mxu0 %v128
  %v6193 = vpop.f32.mrf.mxu0
  %v6194 = vadd.f32 %v5670, %v6193
  %6195 = vmatmul.f32.gmra.mxu0 %v131
  %v6196 = vpop.f32.mrf.mxu0
  %v6197 = vadd.f32 %v5675, %v6196
  %6198 = vmatmul.f32.gmra.mxu0 %v134
  %v6199 = vpop.f32.mrf.mxu0
  %v6200 = vadd.f32 %v5680, %v6199
  %6201 = vdwg.mxu0
  %6202 = vmatpush.msra.mxu0 %v6024
  %6203 = vmatpush.msra.mxu0 %v6023
  %6204 = vmatpush.msra.mxu0 %v6022
  %6205 = vmatpush.msra.mxu0 %v6021
  %6206 = vmatpush.msra.mxu0 %v6020
  %6207 = vmatpush.msra.mxu0 %v6019
  %6208 = vmatpush.msra.mxu0 %v6018
  %6209 = vmatpush.msra.mxu0 %v6017
  %6210 = vmatpush.msra.mxu0 %v6016
  %6211 = vmatpush.msra.mxu0 %v6015
  %6212 = vmatpush.msra.mxu0 %v6014
  %6213 = vmatpush.msra.mxu0 %v6013
  %6214 = vmatpush.msra.mxu0 %v6012
  %6215 = vmatpush.msra.mxu0 %v6011
  %6216 = vmatpush.msra.mxu0 %v6010
  %6217 = vmatpush.msra.mxu0 %v6009
  %6218 = vmatmul.f32.gmra.mxu0 %v114
  %v6219 = vpop.f32.mrf.mxu0
  %v6220 = vadd.f32 %v6179, %v6219
  %6221 = vmatmul.f32.gmra.mxu0 %v117
  %v6222 = vpop.f32.mrf.mxu0
  %v6223 = vadd.f32 %v6182, %v6222
  %6224 = vmatmul.f32.gmra.mxu0 %v120
  %v6225 = vpop.f32.mrf.mxu0
  %v6226 = vadd.f32 %v6185, %v6225
  %6227 = vmatmul.f32.gmra.mxu0 %v123
  %v6228 = vpop.f32.mrf.mxu0
  %v6229 = vadd.f32 %v6188, %v6228
  %6230 = vmatmul.f32.gmra.mxu0 %v126
  %v6231 = vpop.f32.mrf.mxu0
  %v6232 = vadd.f32 %v6191, %v6231
  %6233 = vmatmul.f32.gmra.mxu0 %v129
  %v6234 = vpop.f32.mrf.mxu0
  %v6235 = vadd.f32 %v6194, %v6234
  %6236 = vmatmul.f32.gmra.mxu0 %v132
  %v6237 = vpop.f32.mrf.mxu0
  %v6238 = vadd.f32 %v6197, %v6237
  %6239 = vmatmul.f32.gmra.mxu0 %v135
  %v6240 = vpop.f32.mrf.mxu0
  %v6241 = vadd.f32 %v6200, %v6240
  %6242 = vdwg.mxu0
  %6243 = vmatpush.msra.mxu0 0.0
  %6244 = vmatpush.msra.mxu0 0.0
  %6245 = vmatpush.msra.mxu0 0.0
  %6246 = vmatpush.msra.mxu0 %v6037
  %6247 = vmatpush.msra.mxu0 %v6036
  %6248 = vmatpush.msra.mxu0 %v6035
  %6249 = vmatpush.msra.mxu0 %v6034
  %6250 = vmatpush.msra.mxu0 %v6033
  %6251 = vmatpush.msra.mxu0 %v6032
  %6252 = vmatpush.msra.mxu0 %v6031
  %6253 = vmatpush.msra.mxu0 %v6030
  %6254 = vmatpush.msra.mxu0 %v6029
  %6255 = vmatpush.msra.mxu0 %v6028
  %6256 = vmatpush.msra.mxu0 %v6027
  %6257 = vmatpush.msra.mxu0 %v6026
  %6258 = vmatpush.msra.mxu0 %v6025
  %6259 = vmatmul.f32.gmra.mxu0 %v5831
  %v6260 = vpop.f32.mrf.mxu0
  %v6261 = vadd.f32 %v6220, %v6260
  %6262 = vmatmul.f32.gmra.mxu0 %v5834
  %v6263 = vpop.f32.mrf.mxu0
  %v6264 = vadd.f32 %v6223, %v6263
  %6265 = vmatmul.f32.gmra.mxu0 %v5837
  %v6266 = vpop.f32.mrf.mxu0
  %v6267 = vadd.f32 %v6226, %v6266
  %6268 = vmatmul.f32.gmra.mxu0 %v5840
  %v6269 = vpop.f32.mrf.mxu0
  %v6270 = vadd.f32 %v6229, %v6269
  %6271 = vmatmul.f32.gmra.mxu0 %v5843
  %v6272 = vpop.f32.mrf.mxu0
  %v6273 = vadd.f32 %v6232, %v6272
  %6274 = vmatmul.f32.gmra.mxu0 %v5846
  %v6275 = vpop.f32.mrf.mxu0
  %v6276 = vadd.f32 %v6235, %v6275
  %6277 = vmatmul.f32.gmra.mxu0 %v5849
  %v6278 = vpop.f32.mrf.mxu0
  %v6279 = vadd.f32 %v6238, %v6278
  %6280 = vmatmul.f32.gmra.mxu0 %v5852
  %v6281 = vpop.f32.mrf.mxu0
  %v6282 = vadd.f32 %v6241, %v6281
  %6283 = vdwg.mxu0
  %v6284 = vmax.f32 %v6138, %v6261
  %v6285 = vmax.f32 %v6141, %v6264
  %v6286 = vmax.f32 %v6144, %v6267
  %v6287 = vmax.f32 %v6147, %v6270
  %v6288 = vmax.f32 %v6150, %v6273
  %v6289 = vmax.f32 %v6153, %v6276
  %v6290 = vmax.f32 %v6156, %v6279
  %v6291 = vmax.f32 %v6159, %v6282
  %v6292 = vmax.f32 %v6284, 0.0
  %v6293 = vmax.f32 %v6285, 0.0
  %v6294 = vmax.f32 %v6286, 0.0
  %v6295 = vmax.f32 %v6287, 0.0
  %v6296 = vmax.f32 %v6288, 0.0
  %v6297 = vmax.f32 %v6289, 0.0
  %v6298 = vmax.f32 %v6290, 0.0
  %v6299 = vmax.f32 %v6291, 0.0
  %v6300 = vmax.f32 %v5985, %v6292
  %v6301 = vmax.f32 %v5986, %v6293
  %v6302 = vmax.f32 %v5987, %v6294
  %v6303 = vmax.f32 %v5988, %v6295
  %v6304 = vmax.f32 %v5989, %v6296
  %v6305 = vmax.f32 %v5990, %v6297
  %v6306 = vmax.f32 %v5991, %v6298
  %v6307 = vmax.f32 %v5992, %v6299
  %6308 = vst [vmem:[#allocation3] sm:$0xff] %v6300
  %6309 = vst [vmem:[#allocation3 + $0x8] sm:$0xff] %v6301
  %6310 = vst [vmem:[#allocation3 + $0x10] sm:$0xff] %v6302
  %6311 = vst [vmem:[#allocation3 + $0x18] sm:$0xff] %v6303
  %6312 = vst [vmem:[#allocation3 + $0x20] sm:$0xff] %v6304
  %6313 = vst [vmem:[#allocation3 + $0x28] sm:$0xff] %v6305
  %6314 = vst [vmem:[#allocation3 + $0x30] sm:$0xff] %v6306
  %6315 = vst [vmem:[#allocation3 + $0x38] sm:$0xff] %v6307
  %v6316 = vld [vmem:[#allocation2 + $0x90] sm:$0xff]
  %v6317 = vld [vmem:[#allocation2 + $0x98] sm:$0xff]
  %v6318 = vld [vmem:[#allocation2 + $0xa0] sm:$0xff]
  %v6319 = vld [vmem:[#allocation2 + $0xa8] sm:$0xff]
  %v6320 = vld [vmem:[#allocation2 + $0xb0] sm:$0xff]
  %v6321 = vld [vmem:[#allocation2 + $0xb8] sm:$0xff]
  %v6322 = vld [vmem:[#allocation2 + $0xc0] sm:$0xff]
  %v6323 = vld [vmem:[#allocation2 + $0xc8] sm:$0xff]
  %v6324 = vld [vmem:[#allocation2 + $0xd0] sm:$0xff]
  %v6325 = vld [vmem:[#allocation2 + $0xd8] sm:$0xff]
  %v6326 = vld [vmem:[#allocation2 + $0xe0] sm:$0xff]
  %v6327 = vld [vmem:[#allocation2 + $0xe8] sm:$0xff]
  %v6328 = vld [vmem:[#allocation2 + $0xf0] sm:$0xff]
  %v6329 = vld [vmem:[#allocation2 + $0xf8] sm:$0xff]
  %v6330 = vld [vmem:[#allocation2 + $0x100] sm:$0xff]
  %v6331 = vld [vmem:[#allocation2 + $0x108] sm:$0xff]
  %v6332 = vld [vmem:[#allocation2 + $0x110] sm:$0xff]
  %v6333 = vld [vmem:[#allocation2 + $0x118] sm:$0xff]
  %v6334 = vld [vmem:[#allocation2 + $0x120] sm:$0xff]
  %v6335 = vld [vmem:[#allocation2 + $0x128] sm:$0xff]
  %v6336 = vld [vmem:[#allocation2 + $0x130] sm:$0xff]
  %v6337 = vld [vmem:[#allocation2 + $0x138] sm:$0xff]
  %v6338 = vld [vmem:[#allocation2 + $0x140] sm:$0xff]
  %v6339 = vld [vmem:[#allocation2 + $0x148] sm:$0xff]
  %v6340 = vld [vmem:[#allocation2 + $0x150] sm:$0xff]
  %v6341 = vld [vmem:[#allocation2 + $0x158] sm:$0xff]
  %v6342 = vld [vmem:[#allocation2 + $0x160] sm:$0xff]
  %v6343 = vld [vmem:[#allocation2 + $0x168] sm:$0xff]
  %v6344 = vld [vmem:[#allocation2 + $0x170] sm:$0xff]
  %v6345 = vld [vmem:[#allocation2 + $0x178] sm:$0xff]
  %v6346 = vld [vmem:[#allocation2 + $0x180] sm:$0xff]
  %v6347 = vld [vmem:[#allocation2 + $0x188] sm:$0xff]
  %v6348 = vld [vmem:[#allocation2 + $0x190] sm:$0xff]
  %v6349 = vld [vmem:[#allocation2 + $0x198] sm:$0xff]
  %v6350 = vld [vmem:[#allocation2 + $0x1a0] sm:$0xff]
  %v6351 = vld [vmem:[#allocation2 + $0x1a8] sm:$0xff]
  %v6352 = vld [vmem:[#allocation2 + $0x1b0] sm:$0xff]
  %v6353 = vld [vmem:[#allocation2 + $0x1b8] sm:$0xff]
  %v6354 = vld [vmem:[#allocation2 + $0x1c0] sm:$0xff]
  %v6355 = vld [vmem:[#allocation2 + $0x1c8] sm:$0xff]
  %v6356 = vld [vmem:[#allocation2 + $0x1d0] sm:$0xff]
  %v6357 = vld [vmem:[#allocation2 + $0x1d8] sm:$0xff]
  %v6358 = vld [vmem:[#allocation2 + $0x1e0] sm:$0xff]
  %v6359 = vld [vmem:[#allocation2 + $0x1e8] sm:$0xff]
  %v6360 = vld [vmem:[#allocation2 + $0x1f0] sm:$0xff]
  %6361 = vmatpush.msra.mxu0 %v6331
  %6362 = vmatpush.msra.mxu0 %v6330
  %6363 = vmatpush.msra.mxu0 %v6329
  %6364 = vmatpush.msra.mxu0 %v6328
  %6365 = vmatpush.msra.mxu0 %v6327
  %6366 = vmatpush.msra.mxu0 %v6326
  %6367 = vmatpush.msra.mxu0 %v6325
  %6368 = vmatpush.msra.mxu0 %v6324
  %6369 = vmatpush.msra.mxu0 %v6323
  %6370 = vmatpush.msra.mxu0 %v6322
  %6371 = vmatpush.msra.mxu0 %v6321
  %6372 = vmatpush.msra.mxu0 %v6320
  %6373 = vmatpush.msra.mxu0 %v6319
  %6374 = vmatpush.msra.mxu0 %v6318
  %6375 = vmatpush.msra.mxu0 %v6317
  %6376 = vmatpush.msra.mxu0 %v6316
  %6377 = vmatmul.f32.gmra.mxu0 %v89
  %v6378 = vpop.f32.mrf.mxu0
  %v6379 = vadd.f32 %v5645, %v6378
  %6380 = vmatmul.f32.gmra.mxu0 %v92
  %v6381 = vpop.f32.mrf.mxu0
  %v6382 = vadd.f32 %v5650, %v6381
  %6383 = vmatmul.f32.gmra.mxu0 %v95
  %v6384 = vpop.f32.mrf.mxu0
  %v6385 = vadd.f32 %v5655, %v6384
  %6386 = vmatmul.f32.gmra.mxu0 %v98
  %v6387 = vpop.f32.mrf.mxu0
  %v6388 = vadd.f32 %v5660, %v6387
  %6389 = vmatmul.f32.gmra.mxu0 %v101
  %v6390 = vpop.f32.mrf.mxu0
  %v6391 = vadd.f32 %v5665, %v6390
  %6392 = vmatmul.f32.gmra.mxu0 %v104
  %v6393 = vpop.f32.mrf.mxu0
  %v6394 = vadd.f32 %v5670, %v6393
  %6395 = vmatmul.f32.gmra.mxu0 %v107
  %v6396 = vpop.f32.mrf.mxu0
  %v6397 = vadd.f32 %v5675, %v6396
  %6398 = vmatmul.f32.gmra.mxu0 %v110
  %v6399 = vpop.f32.mrf.mxu0
  %v6400 = vadd.f32 %v5680, %v6399
  %6401 = vdwg.mxu0
  %6402 = vmatpush.msra.mxu0 %v6347
  %6403 = vmatpush.msra.mxu0 %v6346
  %6404 = vmatpush.msra.mxu0 %v6345
  %6405 = vmatpush.msra.mxu0 %v6344
  %6406 = vmatpush.msra.mxu0 %v6343
  %6407 = vmatpush.msra.mxu0 %v6342
  %6408 = vmatpush.msra.mxu0 %v6341
  %6409 = vmatpush.msra.mxu0 %v6340
  %6410 = vmatpush.msra.mxu0 %v6339
  %6411 = vmatpush.msra.mxu0 %v6338
  %6412 = vmatpush.msra.mxu0 %v6337
  %6413 = vmatpush.msra.mxu0 %v6336
  %6414 = vmatpush.msra.mxu0 %v6335
  %6415 = vmatpush.msra.mxu0 %v6334
  %6416 = vmatpush.msra.mxu0 %v6333
  %6417 = vmatpush.msra.mxu0 %v6332
  %6418 = vmatmul.f32.gmra.mxu0 %v90
  %v6419 = vpop.f32.mrf.mxu0
  %v6420 = vadd.f32 %v6379, %v6419
  %6421 = vmatmul.f32.gmra.mxu0 %v93
  %v6422 = vpop.f32.mrf.mxu0
  %v6423 = vadd.f32 %v6382, %v6422
  %6424 = vmatmul.f32.gmra.mxu0 %v96
  %v6425 = vpop.f32.mrf.mxu0
  %v6426 = vadd.f32 %v6385, %v6425
  %6427 = vmatmul.f32.gmra.mxu0 %v99
  %v6428 = vpop.f32.mrf.mxu0
  %v6429 = vadd.f32 %v6388, %v6428
  %6430 = vmatmul.f32.gmra.mxu0 %v102
  %v6431 = vpop.f32.mrf.mxu0
  %v6432 = vadd.f32 %v6391, %v6431
  %6433 = vmatmul.f32.gmra.mxu0 %v105
  %v6434 = vpop.f32.mrf.mxu0
  %v6435 = vadd.f32 %v6394, %v6434
  %6436 = vmatmul.f32.gmra.mxu0 %v108
  %v6437 = vpop.f32.mrf.mxu0
  %v6438 = vadd.f32 %v6397, %v6437
  %6439 = vmatmul.f32.gmra.mxu0 %v111
  %v6440 = vpop.f32.mrf.mxu0
  %v6441 = vadd.f32 %v6400, %v6440
  %6442 = vdwg.mxu0
  %6443 = vmatpush.msra.mxu0 0.0
  %6444 = vmatpush.msra.mxu0 0.0
  %6445 = vmatpush.msra.mxu0 0.0
  %6446 = vmatpush.msra.mxu0 %v6360
  %6447 = vmatpush.msra.mxu0 %v6359
  %6448 = vmatpush.msra.mxu0 %v6358
  %6449 = vmatpush.msra.mxu0 %v6357
  %6450 = vmatpush.msra.mxu0 %v6356
  %6451 = vmatpush.msra.mxu0 %v6355
  %6452 = vmatpush.msra.mxu0 %v6354
  %6453 = vmatpush.msra.mxu0 %v6353
  %6454 = vmatpush.msra.mxu0 %v6352
  %6455 = vmatpush.msra.mxu0 %v6351
  %6456 = vmatpush.msra.mxu0 %v6350
  %6457 = vmatpush.msra.mxu0 %v6349
  %6458 = vmatpush.msra.mxu0 %v6348
  %6459 = vmatmul.f32.gmra.mxu0 %v5684
  %v6460 = vpop.f32.mrf.mxu0
  %v6461 = vadd.f32 %v6420, %v6460
  %6462 = vmatmul.f32.gmra.mxu0 %v5687
  %v6463 = vpop.f32.mrf.mxu0
  %v6464 = vadd.f32 %v6423, %v6463
  %6465 = vmatmul.f32.gmra.mxu0 %v5690
  %v6466 = vpop.f32.mrf.mxu0
  %v6467 = vadd.f32 %v6426, %v6466
  %6468 = vmatmul.f32.gmra.mxu0 %v5693
  %v6469 = vpop.f32.mrf.mxu0
  %v6470 = vadd.f32 %v6429, %v6469
  %6471 = vmatmul.f32.gmra.mxu0 %v5696
  %v6472 = vpop.f32.mrf.mxu0
  %v6473 = vadd.f32 %v6432, %v6472
  %6474 = vmatmul.f32.gmra.mxu0 %v5699
  %v6475 = vpop.f32.mrf.mxu0
  %v6476 = vadd.f32 %v6435, %v6475
  %6477 = vmatmul.f32.gmra.mxu0 %v5702
  %v6478 = vpop.f32.mrf.mxu0
  %v6479 = vadd.f32 %v6438, %v6478
  %6480 = vmatmul.f32.gmra.mxu0 %v5705
  %v6481 = vpop.f32.mrf.mxu0
  %v6482 = vadd.f32 %v6441, %v6481
  %6483 = vdwg.mxu0
  %6484 = vmatpush.msra.mxu0 %v6331
  %6485 = vmatpush.msra.mxu0 %v6330
  %6486 = vmatpush.msra.mxu0 %v6329
  %6487 = vmatpush.msra.mxu0 %v6328
  %6488 = vmatpush.msra.mxu0 %v6327
  %6489 = vmatpush.msra.mxu0 %v6326
  %6490 = vmatpush.msra.mxu0 %v6325
  %6491 = vmatpush.msra.mxu0 %v6324
  %6492 = vmatpush.msra.mxu0 %v6323
  %6493 = vmatpush.msra.mxu0 %v6322
  %6494 = vmatpush.msra.mxu0 %v6321
  %6495 = vmatpush.msra.mxu0 %v6320
  %6496 = vmatpush.msra.mxu0 %v6319
  %6497 = vmatpush.msra.mxu0 %v6318
  %6498 = vmatpush.msra.mxu0 %v6317
  %6499 = vmatpush.msra.mxu0 %v6316
  %6500 = vmatmul.f32.gmra.mxu0 %v113
  %v6501 = vpop.f32.mrf.mxu0
  %v6502 = vadd.f32 %v5645, %v6501
  %6503 = vmatmul.f32.gmra.mxu0 %v116
  %v6504 = vpop.f32.mrf.mxu0
  %v6505 = vadd.f32 %v5650, %v6504
  %6506 = vmatmul.f32.gmra.mxu0 %v119
  %v6507 = vpop.f32.mrf.mxu0
  %v6508 = vadd.f32 %v5655, %v6507
  %6509 = vmatmul.f32.gmra.mxu0 %v122
  %v6510 = vpop.f32.mrf.mxu0
  %v6511 = vadd.f32 %v5660, %v6510
  %6512 = vmatmul.f32.gmra.mxu0 %v125
  %v6513 = vpop.f32.mrf.mxu0
  %v6514 = vadd.f32 %v5665, %v6513
  %6515 = vmatmul.f32.gmra.mxu0 %v128
  %v6516 = vpop.f32.mrf.mxu0
  %v6517 = vadd.f32 %v5670, %v6516
  %6518 = vmatmul.f32.gmra.mxu0 %v131
  %v6519 = vpop.f32.mrf.mxu0
  %v6520 = vadd.f32 %v5675, %v6519
  %6521 = vmatmul.f32.gmra.mxu0 %v134
  %v6522 = vpop.f32.mrf.mxu0
  %v6523 = vadd.f32 %v5680, %v6522
  %6524 = vdwg.mxu0
  %6525 = vmatpush.msra.mxu0 %v6347
  %6526 = vmatpush.msra.mxu0 %v6346
  %6527 = vmatpush.msra.mxu0 %v6345
  %6528 = vmatpush.msra.mxu0 %v6344
  %6529 = vmatpush.msra.mxu0 %v6343
  %6530 = vmatpush.msra.mxu0 %v6342
  %6531 = vmatpush.msra.mxu0 %v6341
  %6532 = vmatpush.msra.mxu0 %v6340
  %6533 = vmatpush.msra.mxu0 %v6339
  %6534 = vmatpush.msra.mxu0 %v6338
  %6535 = vmatpush.msra.mxu0 %v6337
  %6536 = vmatpush.msra.mxu0 %v6336
  %6537 = vmatpush.msra.mxu0 %v6335
  %6538 = vmatpush.msra.mxu0 %v6334
  %6539 = vmatpush.msra.mxu0 %v6333
  %6540 = vmatpush.msra.mxu0 %v6332
  %6541 = vmatmul.f32.gmra.mxu0 %v114
  %v6542 = vpop.f32.mrf.mxu0
  %v6543 = vadd.f32 %v6502, %v6542
  %6544 = vmatmul.f32.gmra.mxu0 %v117
  %v6545 = vpop.f32.mrf.mxu0
  %v6546 = vadd.f32 %v6505, %v6545
  %6547 = vmatmul.f32.gmra.mxu0 %v120
  %v6548 = vpop.f32.mrf.mxu0
  %v6549 = vadd.f32 %v6508, %v6548
  %6550 = vmatmul.f32.gmra.mxu0 %v123
  %v6551 = vpop.f32.mrf.mxu0
  %v6552 = vadd.f32 %v6511, %v6551
  %6553 = vmatmul.f32.gmra.mxu0 %v126
  %v6554 = vpop.f32.mrf.mxu0
  %v6555 = vadd.f32 %v6514, %v6554
  %6556 = vmatmul.f32.gmra.mxu0 %v129
  %v6557 = vpop.f32.mrf.mxu0
  %v6558 = vadd.f32 %v6517, %v6557
  %6559 = vmatmul.f32.gmra.mxu0 %v132
  %v6560 = vpop.f32.mrf.mxu0
  %v6561 = vadd.f32 %v6520, %v6560
  %6562 = vmatmul.f32.gmra.mxu0 %v135
  %v6563 = vpop.f32.mrf.mxu0
  %v6564 = vadd.f32 %v6523, %v6563
  %6565 = vdwg.mxu0
  %6566 = vmatpush.msra.mxu0 0.0
  %6567 = vmatpush.msra.mxu0 0.0
  %6568 = vmatpush.msra.mxu0 0.0
  %6569 = vmatpush.msra.mxu0 %v6360
  %6570 = vmatpush.msra.mxu0 %v6359
  %6571 = vmatpush.msra.mxu0 %v6358
  %6572 = vmatpush.msra.mxu0 %v6357
  %6573 = vmatpush.msra.mxu0 %v6356
  %6574 = vmatpush.msra.mxu0 %v6355
  %6575 = vmatpush.msra.mxu0 %v6354
  %6576 = vmatpush.msra.mxu0 %v6353
  %6577 = vmatpush.msra.mxu0 %v6352
  %6578 = vmatpush.msra.mxu0 %v6351
  %6579 = vmatpush.msra.mxu0 %v6350
  %6580 = vmatpush.msra.mxu0 %v6349
  %6581 = vmatpush.msra.mxu0 %v6348
  %6582 = vmatmul.f32.gmra.mxu0 %v5831
  %v6583 = vpop.f32.mrf.mxu0
  %v6584 = vadd.f32 %v6543, %v6583
  %6585 = vmatmul.f32.gmra.mxu0 %v5834
  %v6586 = vpop.f32.mrf.mxu0
  %v6587 = vadd.f32 %v6546, %v6586
  %6588 = vmatmul.f32.gmra.mxu0 %v5837
  %v6589 = vpop.f32.mrf.mxu0
  %v6590 = vadd.f32 %v6549, %v6589
  %6591 = vmatmul.f32.gmra.mxu0 %v5840
  %v6592 = vpop.f32.mrf.mxu0
  %v6593 = vadd.f32 %v6552, %v6592
  %6594 = vmatmul.f32.gmra.mxu0 %v5843
  %v6595 = vpop.f32.mrf.mxu0
  %v6596 = vadd.f32 %v6555, %v6595
  %6597 = vmatmul.f32.gmra.mxu0 %v5846
  %v6598 = vpop.f32.mrf.mxu0
  %v6599 = vadd.f32 %v6558, %v6598
  %6600 = vmatmul.f32.gmra.mxu0 %v5849
  %v6601 = vpop.f32.mrf.mxu0
  %v6602 = vadd.f32 %v6561, %v6601
  %6603 = vmatmul.f32.gmra.mxu0 %v5852
  %v6604 = vpop.f32.mrf.mxu0
  %v6605 = vadd.f32 %v6564, %v6604
  %6606 = vdwg.mxu0
  %v6607 = vmax.f32 %v6461, %v6584
  %v6608 = vmax.f32 %v6464, %v6587
  %v6609 = vmax.f32 %v6467, %v6590
  %v6610 = vmax.f32 %v6470, %v6593
  %v6611 = vmax.f32 %v6473, %v6596
  %v6612 = vmax.f32 %v6476, %v6599
  %v6613 = vmax.f32 %v6479, %v6602
  %v6614 = vmax.f32 %v6482, %v6605
  %v6615 = vmax.f32 %v6607, 0.0
  %v6616 = vmax.f32 %v6608, 0.0
  %v6617 = vmax.f32 %v6609, 0.0
  %v6618 = vmax.f32 %v6610, 0.0
  %v6619 = vmax.f32 %v6611, 0.0
  %v6620 = vmax.f32 %v6612, 0.0
  %v6621 = vmax.f32 %v6613, 0.0
  %v6622 = vmax.f32 %v6614, 0.0
  %v6623 = vld [vmem:[#allocation2 + $0xd8] sm:$0xff]
  %v6624 = vld [vmem:[#allocation2 + $0xe0] sm:$0xff]
  %v6625 = vld [vmem:[#allocation2 + $0xe8] sm:$0xff]
  %v6626 = vld [vmem:[#allocation2 + $0xf0] sm:$0xff]
  %v6627 = vld [vmem:[#allocation2 + $0xf8] sm:$0xff]
  %v6628 = vld [vmem:[#allocation2 + $0x100] sm:$0xff]
  %v6629 = vld [vmem:[#allocation2 + $0x108] sm:$0xff]
  %v6630 = vld [vmem:[#allocation2 + $0x110] sm:$0xff]
  %v6631 = vld [vmem:[#allocation2 + $0x118] sm:$0xff]
  %v6632 = vld [vmem:[#allocation2 + $0x120] sm:$0xff]
  %v6633 = vld [vmem:[#allocation2 + $0x128] sm:$0xff]
  %v6634 = vld [vmem:[#allocation2 + $0x130] sm:$0xff]
  %v6635 = vld [vmem:[#allocation2 + $0x138] sm:$0xff]
  %v6636 = vld [vmem:[#allocation2 + $0x140] sm:$0xff]
  %v6637 = vld [vmem:[#allocation2 + $0x148] sm:$0xff]
  %v6638 = vld [vmem:[#allocation2 + $0x150] sm:$0xff]
  %v6639 = vld [vmem:[#allocation2 + $0x158] sm:$0xff]
  %v6640 = vld [vmem:[#allocation2 + $0x160] sm:$0xff]
  %v6641 = vld [vmem:[#allocation2 + $0x168] sm:$0xff]
  %v6642 = vld [vmem:[#allocation2 + $0x170] sm:$0xff]
  %v6643 = vld [vmem:[#allocation2 + $0x178] sm:$0xff]
  %v6644 = vld [vmem:[#allocation2 + $0x180] sm:$0xff]
  %v6645 = vld [vmem:[#allocation2 + $0x188] sm:$0xff]
  %v6646 = vld [vmem:[#allocation2 + $0x190] sm:$0xff]
  %v6647 = vld [vmem:[#allocation2 + $0x198] sm:$0xff]
  %v6648 = vld [vmem:[#allocation2 + $0x1a0] sm:$0xff]
  %v6649 = vld [vmem:[#allocation2 + $0x1a8] sm:$0xff]
  %v6650 = vld [vmem:[#allocation2 + $0x1b0] sm:$0xff]
  %v6651 = vld [vmem:[#allocation2 + $0x1b8] sm:$0xff]
  %v6652 = vld [vmem:[#allocation2 + $0x1c0] sm:$0xff]
  %v6653 = vld [vmem:[#allocation2 + $0x1c8] sm:$0xff]
  %v6654 = vld [vmem:[#allocation2 + $0x1d0] sm:$0xff]
  %v6655 = vld [vmem:[#allocation2 + $0x1d8] sm:$0xff]
  %v6656 = vld [vmem:[#allocation2 + $0x1e0] sm:$0xff]
  %v6657 = vld [vmem:[#allocation2 + $0x1e8] sm:$0xff]
  %v6658 = vld [vmem:[#allocation2 + $0x1f0] sm:$0xff]
  %v6659 = vld [vmem:[#allocation2 + $0x1f8] sm:$0xff]
  %v6660 = vld [vmem:[#allocation2 + $0x200] sm:$0xff]
  %v6661 = vld [vmem:[#allocation2 + $0x208] sm:$0xff]
  %v6662 = vld [vmem:[#allocation2 + $0x210] sm:$0xff]
  %v6663 = vld [vmem:[#allocation2 + $0x218] sm:$0xff]
  %v6664 = vld [vmem:[#allocation2 + $0x220] sm:$0xff]
  %v6665 = vld [vmem:[#allocation2 + $0x228] sm:$0xff]
  %v6666 = vld [vmem:[#allocation2 + $0x230] sm:$0xff]
  %v6667 = vld [vmem:[#allocation2 + $0x238] sm:$0xff]
  %6668 = vmatpush.msra.mxu0 %v6638
  %6669 = vmatpush.msra.mxu0 %v6637
  %6670 = vmatpush.msra.mxu0 %v6636
  %6671 = vmatpush.msra.mxu0 %v6635
  %6672 = vmatpush.msra.mxu0 %v6634
  %6673 = vmatpush.msra.mxu0 %v6633
  %6674 = vmatpush.msra.mxu0 %v6632
  %6675 = vmatpush.msra.mxu0 %v6631
  %6676 = vmatpush.msra.mxu0 %v6630
  %6677 = vmatpush.msra.mxu0 %v6629
  %6678 = vmatpush.msra.mxu0 %v6628
  %6679 = vmatpush.msra.mxu0 %v6627
  %6680 = vmatpush.msra.mxu0 %v6626
  %6681 = vmatpush.msra.mxu0 %v6625
  %6682 = vmatpush.msra.mxu0 %v6624
  %6683 = vmatpush.msra.mxu0 %v6623
  %6684 = vmatmul.f32.gmra.mxu0 %v89
  %v6685 = vpop.f32.mrf.mxu0
  %v6686 = vadd.f32 %v5645, %v6685
  %6687 = vmatmul.f32.gmra.mxu0 %v92
  %v6688 = vpop.f32.mrf.mxu0
  %v6689 = vadd.f32 %v5650, %v6688
  %6690 = vmatmul.f32.gmra.mxu0 %v95
  %v6691 = vpop.f32.mrf.mxu0
  %v6692 = vadd.f32 %v5655, %v6691
  %6693 = vmatmul.f32.gmra.mxu0 %v98
  %v6694 = vpop.f32.mrf.mxu0
  %v6695 = vadd.f32 %v5660, %v6694
  %6696 = vmatmul.f32.gmra.mxu0 %v101
  %v6697 = vpop.f32.mrf.mxu0
  %v6698 = vadd.f32 %v5665, %v6697
  %6699 = vmatmul.f32.gmra.mxu0 %v104
  %v6700 = vpop.f32.mrf.mxu0
  %v6701 = vadd.f32 %v5670, %v6700
  %6702 = vmatmul.f32.gmra.mxu0 %v107
  %v6703 = vpop.f32.mrf.mxu0
  %v6704 = vadd.f32 %v5675, %v6703
  %6705 = vmatmul.f32.gmra.mxu0 %v110
  %v6706 = vpop.f32.mrf.mxu0
  %v6707 = vadd.f32 %v5680, %v6706
  %6708 = vdwg.mxu0
  %6709 = vmatpush.msra.mxu0 %v6654
  %6710 = vmatpush.msra.mxu0 %v6653
  %6711 = vmatpush.msra.mxu0 %v6652
  %6712 = vmatpush.msra.mxu0 %v6651
  %6713 = vmatpush.msra.mxu0 %v6650
  %6714 = vmatpush.msra.mxu0 %v6649
  %6715 = vmatpush.msra.mxu0 %v6648
  %6716 = vmatpush.msra.mxu0 %v6647
  %6717 = vmatpush.msra.mxu0 %v6646
  %6718 = vmatpush.msra.mxu0 %v6645
  %6719 = vmatpush.msra.mxu0 %v6644
  %6720 = vmatpush.msra.mxu0 %v6643
  %6721 = vmatpush.msra.mxu0 %v6642
  %6722 = vmatpush.msra.mxu0 %v6641
  %6723 = vmatpush.msra.mxu0 %v6640
  %6724 = vmatpush.msra.mxu0 %v6639
  %6725 = vmatmul.f32.gmra.mxu0 %v90
  %v6726 = vpop.f32.mrf.mxu0
  %v6727 = vadd.f32 %v6686, %v6726
  %6728 = vmatmul.f32.gmra.mxu0 %v93
  %v6729 = vpop.f32.mrf.mxu0
  %v6730 = vadd.f32 %v6689, %v6729
  %6731 = vmatmul.f32.gmra.mxu0 %v96
  %v6732 = vpop.f32.mrf.mxu0
  %v6733 = vadd.f32 %v6692, %v6732
  %6734 = vmatmul.f32.gmra.mxu0 %v99
  %v6735 = vpop.f32.mrf.mxu0
  %v6736 = vadd.f32 %v6695, %v6735
  %6737 = vmatmul.f32.gmra.mxu0 %v102
  %v6738 = vpop.f32.mrf.mxu0
  %v6739 = vadd.f32 %v6698, %v6738
  %6740 = vmatmul.f32.gmra.mxu0 %v105
  %v6741 = vpop.f32.mrf.mxu0
  %v6742 = vadd.f32 %v6701, %v6741
  %6743 = vmatmul.f32.gmra.mxu0 %v108
  %v6744 = vpop.f32.mrf.mxu0
  %v6745 = vadd.f32 %v6704, %v6744
  %6746 = vmatmul.f32.gmra.mxu0 %v111
  %v6747 = vpop.f32.mrf.mxu0
  %v6748 = vadd.f32 %v6707, %v6747
  %6749 = vdwg.mxu0
  %6750 = vmatpush.msra.mxu0 0.0
  %6751 = vmatpush.msra.mxu0 0.0
  %6752 = vmatpush.msra.mxu0 0.0
  %6753 = vmatpush.msra.mxu0 %v6667
  %6754 = vmatpush.msra.mxu0 %v6666
  %6755 = vmatpush.msra.mxu0 %v6665
  %6756 = vmatpush.msra.mxu0 %v6664
  %6757 = vmatpush.msra.mxu0 %v6663
  %6758 = vmatpush.msra.mxu0 %v6662
  %6759 = vmatpush.msra.mxu0 %v6661
  %6760 = vmatpush.msra.mxu0 %v6660
  %6761 = vmatpush.msra.mxu0 %v6659
  %6762 = vmatpush.msra.mxu0 %v6658
  %6763 = vmatpush.msra.mxu0 %v6657
  %6764 = vmatpush.msra.mxu0 %v6656
  %6765 = vmatpush.msra.mxu0 %v6655
  %6766 = vmatmul.f32.gmra.mxu0 %v5684
  %v6767 = vpop.f32.mrf.mxu0
  %v6768 = vadd.f32 %v6727, %v6767
  %6769 = vmatmul.f32.gmra.mxu0 %v5687
  %v6770 = vpop.f32.mrf.mxu0
  %v6771 = vadd.f32 %v6730, %v6770
  %6772 = vmatmul.f32.gmra.mxu0 %v5690
  %v6773 = vpop.f32.mrf.mxu0
  %v6774 = vadd.f32 %v6733, %v6773
  %6775 = vmatmul.f32.gmra.mxu0 %v5693
  %v6776 = vpop.f32.mrf.mxu0
  %v6777 = vadd.f32 %v6736, %v6776
  %6778 = vmatmul.f32.gmra.mxu0 %v5696
  %v6779 = vpop.f32.mrf.mxu0
  %v6780 = vadd.f32 %v6739, %v6779
  %6781 = vmatmul.f32.gmra.mxu0 %v5699
  %v6782 = vpop.f32.mrf.mxu0
  %v6783 = vadd.f32 %v6742, %v6782
  %6784 = vmatmul.f32.gmra.mxu0 %v5702
  %v6785 = vpop.f32.mrf.mxu0
  %v6786 = vadd.f32 %v6745, %v6785
  %6787 = vmatmul.f32.gmra.mxu0 %v5705
  %v6788 = vpop.f32.mrf.mxu0
  %v6789 = vadd.f32 %v6748, %v6788
  %6790 = vdwg.mxu0
  %6791 = vmatpush.msra.mxu0 %v6638
  %6792 = vmatpush.msra.mxu0 %v6637
  %6793 = vmatpush.msra.mxu0 %v6636
  %6794 = vmatpush.msra.mxu0 %v6635
  %6795 = vmatpush.msra.mxu0 %v6634
  %6796 = vmatpush.msra.mxu0 %v6633
  %6797 = vmatpush.msra.mxu0 %v6632
  %6798 = vmatpush.msra.mxu0 %v6631
  %6799 = vmatpush.msra.mxu0 %v6630
  %6800 = vmatpush.msra.mxu0 %v6629
  %6801 = vmatpush.msra.mxu0 %v6628
  %6802 = vmatpush.msra.mxu0 %v6627
  %6803 = vmatpush.msra.mxu0 %v6626
  %6804 = vmatpush.msra.mxu0 %v6625
  %6805 = vmatpush.msra.mxu0 %v6624
  %6806 = vmatpush.msra.mxu0 %v6623
  %6807 = vmatmul.f32.gmra.mxu0 %v113
  %v6808 = vpop.f32.mrf.mxu0
  %v6809 = vadd.f32 %v5645, %v6808
  %6810 = vmatmul.f32.gmra.mxu0 %v116
  %v6811 = vpop.f32.mrf.mxu0
  %v6812 = vadd.f32 %v5650, %v6811
  %6813 = vmatmul.f32.gmra.mxu0 %v119
  %v6814 = vpop.f32.mrf.mxu0
  %v6815 = vadd.f32 %v5655, %v6814
  %6816 = vmatmul.f32.gmra.mxu0 %v122
  %v6817 = vpop.f32.mrf.mxu0
  %v6818 = vadd.f32 %v5660, %v6817
  %6819 = vmatmul.f32.gmra.mxu0 %v125
  %v6820 = vpop.f32.mrf.mxu0
  %v6821 = vadd.f32 %v5665, %v6820
  %6822 = vmatmul.f32.gmra.mxu0 %v128
  %v6823 = vpop.f32.mrf.mxu0
  %v6824 = vadd.f32 %v5670, %v6823
  %6825 = vmatmul.f32.gmra.mxu0 %v131
  %v6826 = vpop.f32.mrf.mxu0
  %v6827 = vadd.f32 %v5675, %v6826
  %6828 = vmatmul.f32.gmra.mxu0 %v134
  %v6829 = vpop.f32.mrf.mxu0
  %v6830 = vadd.f32 %v5680, %v6829
  %6831 = vdwg.mxu0
  %6832 = vmatpush.msra.mxu0 %v6654
  %6833 = vmatpush.msra.mxu0 %v6653
  %6834 = vmatpush.msra.mxu0 %v6652
  %6835 = vmatpush.msra.mxu0 %v6651
  %6836 = vmatpush.msra.mxu0 %v6650
  %6837 = vmatpush.msra.mxu0 %v6649
  %6838 = vmatpush.msra.mxu0 %v6648
  %6839 = vmatpush.msra.mxu0 %v6647
  %6840 = vmatpush.msra.mxu0 %v6646
  %6841 = vmatpush.msra.mxu0 %v6645
  %6842 = vmatpush.msra.mxu0 %v6644
  %6843 = vmatpush.msra.mxu0 %v6643
  %6844 = vmatpush.msra.mxu0 %v6642
  %6845 = vmatpush.msra.mxu0 %v6641
  %6846 = vmatpush.msra.mxu0 %v6640
  %6847 = vmatpush.msra.mxu0 %v6639
  %6848 = vmatmul.f32.gmra.mxu0 %v114
  %v6849 = vpop.f32.mrf.mxu0
  %v6850 = vadd.f32 %v6809, %v6849
  %6851 = vmatmul.f32.gmra.mxu0 %v117
  %v6852 = vpop.f32.mrf.mxu0
  %v6853 = vadd.f32 %v6812, %v6852
  %6854 = vmatmul.f32.gmra.mxu0 %v120
  %v6855 = vpop.f32.mrf.mxu0
  %v6856 = vadd.f32 %v6815, %v6855
  %6857 = vmatmul.f32.gmra.mxu0 %v123
  %v6858 = vpop.f32.mrf.mxu0
  %v6859 = vadd.f32 %v6818, %v6858
  %6860 = vmatmul.f32.gmra.mxu0 %v126
  %v6861 = vpop.f32.mrf.mxu0
  %v6862 = vadd.f32 %v6821, %v6861
  %6863 = vmatmul.f32.gmra.mxu0 %v129
  %v6864 = vpop.f32.mrf.mxu0
  %v6865 = vadd.f32 %v6824, %v6864
  %6866 = vmatmul.f32.gmra.mxu0 %v132
  %v6867 = vpop.f32.mrf.mxu0
  %v6868 = vadd.f32 %v6827, %v6867
  %6869 = vmatmul.f32.gmra.mxu0 %v135
  %v6870 = vpop.f32.mrf.mxu0
  %v6871 = vadd.f32 %v6830, %v6870
  %6872 = vdwg.mxu0
  %6873 = vmatpush.msra.mxu0 0.0
  %6874 = vmatpush.msra.mxu0 0.0
  %6875 = vmatpush.msra.mxu0 0.0
  %6876 = vmatpush.msra.mxu0 %v6667
  %6877 = vmatpush.msra.mxu0 %v6666
  %6878 = vmatpush.msra.mxu0 %v6665
  %6879 = vmatpush.msra.mxu0 %v6664
  %6880 = vmatpush.msra.mxu0 %v6663
  %6881 = vmatpush.msra.mxu0 %v6662
  %6882 = vmatpush.msra.mxu0 %v6661
  %6883 = vmatpush.msra.mxu0 %v6660
  %6884 = vmatpush.msra.mxu0 %v6659
  %6885 = vmatpush.msra.mxu0 %v6658
  %6886 = vmatpush.msra.mxu0 %v6657
  %6887 = vmatpush.msra.mxu0 %v6656
  %6888 = vmatpush.msra.mxu0 %v6655
  %6889 = vmatmul.f32.gmra.mxu0 %v5831
  %v6890 = vpop.f32.mrf.mxu0
  %v6891 = vadd.f32 %v6850, %v6890
  %6892 = vmatmul.f32.gmra.mxu0 %v5834
  %v6893 = vpop.f32.mrf.mxu0
  %v6894 = vadd.f32 %v6853, %v6893
  %6895 = vmatmul.f32.gmra.mxu0 %v5837
  %v6896 = vpop.f32.mrf.mxu0
  %v6897 = vadd.f32 %v6856, %v6896
  %6898 = vmatmul.f32.gmra.mxu0 %v5840
  %v6899 = vpop.f32.mrf.mxu0
  %v6900 = vadd.f32 %v6859, %v6899
  %6901 = vmatmul.f32.gmra.mxu0 %v5843
  %v6902 = vpop.f32.mrf.mxu0
  %v6903 = vadd.f32 %v6862, %v6902
  %6904 = vmatmul.f32.gmra.mxu0 %v5846
  %v6905 = vpop.f32.mrf.mxu0
  %v6906 = vadd.f32 %v6865, %v6905
  %6907 = vmatmul.f32.gmra.mxu0 %v5849
  %v6908 = vpop.f32.mrf.mxu0
  %v6909 = vadd.f32 %v6868, %v6908
  %6910 = vmatmul.f32.gmra.mxu0 %v5852
  %v6911 = vpop.f32.mrf.mxu0
  %v6912 = vadd.f32 %v6871, %v6911
  %6913 = vdwg.mxu0
  %v6914 = vmax.f32 %v6768, %v6891
  %v6915 = vmax.f32 %v6771, %v6894
  %v6916 = vmax.f32 %v6774, %v6897
  %v6917 = vmax.f32 %v6777, %v6900
  %v6918 = vmax.f32 %v6780, %v6903
  %v6919 = vmax.f32 %v6783, %v6906
  %v6920 = vmax.f32 %v6786, %v6909
  %v6921 = vmax.f32 %v6789, %v6912
  %v6922 = vmax.f32 %v6914, 0.0
  %v6923 = vmax.f32 %v6915, 0.0
  %v6924 = vmax.f32 %v6916, 0.0
  %v6925 = vmax.f32 %v6917, 0.0
  %v6926 = vmax.f32 %v6918, 0.0
  %v6927 = vmax.f32 %v6919, 0.0
  %v6928 = vmax.f32 %v6920, 0.0
  %v6929 = vmax.f32 %v6921, 0.0
  %v6930 = vmax.f32 %v6615, %v6922
  %v6931 = vmax.f32 %v6616, %v6923
  %v6932 = vmax.f32 %v6617, %v6924
  %v6933 = vmax.f32 %v6618, %v6925
  %v6934 = vmax.f32 %v6619, %v6926
  %v6935 = vmax.f32 %v6620, %v6927
  %v6936 = vmax.f32 %v6621, %v6928
  %v6937 = vmax.f32 %v6622, %v6929
  %6938 = vst [vmem:[#allocation3 + $0x40] sm:$0xff] %v6930
  %6939 = vst [vmem:[#allocation3 + $0x48] sm:$0xff] %v6931
  %6940 = vst [vmem:[#allocation3 + $0x50] sm:$0xff] %v6932
  %6941 = vst [vmem:[#allocation3 + $0x58] sm:$0xff] %v6933
  %6942 = vst [vmem:[#allocation3 + $0x60] sm:$0xff] %v6934
  %6943 = vst [vmem:[#allocation3 + $0x68] sm:$0xff] %v6935
  %6944 = vst [vmem:[#allocation3 + $0x70] sm:$0xff] %v6936
  %6945 = vst [vmem:[#allocation3 + $0x78] sm:$0xff] %v6937
  %v6946 = vld [vmem:[#allocation2 + $0x120] sm:$0xff]
  %v6947 = vld [vmem:[#allocation2 + $0x128] sm:$0xff]
  %v6948 = vld [vmem:[#allocation2 + $0x130] sm:$0xff]
  %v6949 = vld [vmem:[#allocation2 + $0x138] sm:$0xff]
  %v6950 = vld [vmem:[#allocation2 + $0x140] sm:$0xff]
  %v6951 = vld [vmem:[#allocation2 + $0x148] sm:$0xff]
  %v6952 = vld [vmem:[#allocation2 + $0x150] sm:$0xff]
  %v6953 = vld [vmem:[#allocation2 + $0x158] sm:$0xff]
  %v6954 = vld [vmem:[#allocation2 + $0x160] sm:$0xff]
  %v6955 = vld [vmem:[#allocation2 + $0x168] sm:$0xff]
  %v6956 = vld [vmem:[#allocation2 + $0x170] sm:$0xff]
  %v6957 = vld [vmem:[#allocation2 + $0x178] sm:$0xff]
  %v6958 = vld [vmem:[#allocation2 + $0x180] sm:$0xff]
  %v6959 = vld [vmem:[#allocation2 + $0x188] sm:$0xff]
  %v6960 = vld [vmem:[#allocation2 + $0x190] sm:$0xff]
  %v6961 = vld [vmem:[#allocation2 + $0x198] sm:$0xff]
  %v6962 = vld [vmem:[#allocation2 + $0x1a0] sm:$0xff]
  %v6963 = vld [vmem:[#allocation2 + $0x1a8] sm:$0xff]
  %v6964 = vld [vmem:[#allocation2 + $0x1b0] sm:$0xff]
  %v6965 = vld [vmem:[#allocation2 + $0x1b8] sm:$0xff]
  %v6966 = vld [vmem:[#allocation2 + $0x1c0] sm:$0xff]
  %v6967 = vld [vmem:[#allocation2 + $0x1c8] sm:$0xff]
  %v6968 = vld [vmem:[#allocation2 + $0x1d0] sm:$0xff]
  %v6969 = vld [vmem:[#allocation2 + $0x1d8] sm:$0xff]
  %v6970 = vld [vmem:[#allocation2 + $0x1e0] sm:$0xff]
  %v6971 = vld [vmem:[#allocation2 + $0x1e8] sm:$0xff]
  %v6972 = vld [vmem:[#allocation2 + $0x1f0] sm:$0xff]
  %v6973 = vld [vmem:[#allocation2 + $0x1f8] sm:$0xff]
  %v6974 = vld [vmem:[#allocation2 + $0x200] sm:$0xff]
  %v6975 = vld [vmem:[#allocation2 + $0x208] sm:$0xff]
  %v6976 = vld [vmem:[#allocation2 + $0x210] sm:$0xff]
  %v6977 = vld [vmem:[#allocation2 + $0x218] sm:$0xff]
  %v6978 = vld [vmem:[#allocation2 + $0x220] sm:$0xff]
  %v6979 = vld [vmem:[#allocation2 + $0x228] sm:$0xff]
  %v6980 = vld [vmem:[#allocation2 + $0x230] sm:$0xff]
  %v6981 = vld [vmem:[#allocation2 + $0x238] sm:$0xff]
  %v6982 = vld [vmem:[#allocation2 + $0x240] sm:$0xff]
  %v6983 = vld [vmem:[#allocation2 + $0x248] sm:$0xff]
  %v6984 = vld [vmem:[#allocation2 + $0x250] sm:$0xff]
  %v6985 = vld [vmem:[#allocation2 + $0x258] sm:$0xff]
  %v6986 = vld [vmem:[#allocation2 + $0x260] sm:$0xff]
  %v6987 = vld [vmem:[#allocation2 + $0x268] sm:$0xff]
  %v6988 = vld [vmem:[#allocation2 + $0x270] sm:$0xff]
  %v6989 = vld [vmem:[#allocation2 + $0x278] sm:$0xff]
  %v6990 = vld [vmem:[#allocation2 + $0x280] sm:$0xff]
  %6991 = vmatpush.msra.mxu0 %v6961
  %6992 = vmatpush.msra.mxu0 %v6960
  %6993 = vmatpush.msra.mxu0 %v6959
  %6994 = vmatpush.msra.mxu0 %v6958
  %6995 = vmatpush.msra.mxu0 %v6957
  %6996 = vmatpush.msra.mxu0 %v6956
  %6997 = vmatpush.msra.mxu0 %v6955
  %6998 = vmatpush.msra.mxu0 %v6954
  %6999 = vmatpush.msra.mxu0 %v6953
  %7000 = vmatpush.msra.mxu0 %v6952
  %7001 = vmatpush.msra.mxu0 %v6951
  %7002 = vmatpush.msra.mxu0 %v6950
  %7003 = vmatpush.msra.mxu0 %v6949
  %7004 = vmatpush.msra.mxu0 %v6948
  %7005 = vmatpush.msra.mxu0 %v6947
  %7006 = vmatpush.msra.mxu0 %v6946
  %7007 = vmatmul.f32.gmra.mxu0 %v89
  %v7008 = vpop.f32.mrf.mxu0
  %v7009 = vadd.f32 %v5645, %v7008
  %7010 = vmatmul.f32.gmra.mxu0 %v92
  %v7011 = vpop.f32.mrf.mxu0
  %v7012 = vadd.f32 %v5650, %v7011
  %7013 = vmatmul.f32.gmra.mxu0 %v95
  %v7014 = vpop.f32.mrf.mxu0
  %v7015 = vadd.f32 %v5655, %v7014
  %7016 = vmatmul.f32.gmra.mxu0 %v98
  %v7017 = vpop.f32.mrf.mxu0
  %v7018 = vadd.f32 %v5660, %v7017
  %7019 = vmatmul.f32.gmra.mxu0 %v101
  %v7020 = vpop.f32.mrf.mxu0
  %v7021 = vadd.f32 %v5665, %v7020
  %7022 = vmatmul.f32.gmra.mxu0 %v104
  %v7023 = vpop.f32.mrf.mxu0
  %v7024 = vadd.f32 %v5670, %v7023
  %7025 = vmatmul.f32.gmra.mxu0 %v107
  %v7026 = vpop.f32.mrf.mxu0
  %v7027 = vadd.f32 %v5675, %v7026
  %7028 = vmatmul.f32.gmra.mxu0 %v110
  %v7029 = vpop.f32.mrf.mxu0
  %v7030 = vadd.f32 %v5680, %v7029
  %7031 = vdwg.mxu0
  %7032 = vmatpush.msra.mxu0 %v6977
  %7033 = vmatpush.msra.mxu0 %v6976
  %7034 = vmatpush.msra.mxu0 %v6975
  %7035 = vmatpush.msra.mxu0 %v6974
  %7036 = vmatpush.msra.mxu0 %v6973
  %7037 = vmatpush.msra.mxu0 %v6972
  %7038 = vmatpush.msra.mxu0 %v6971
  %7039 = vmatpush.msra.mxu0 %v6970
  %7040 = vmatpush.msra.mxu0 %v6969
  %7041 = vmatpush.msra.mxu0 %v6968
  %7042 = vmatpush.msra.mxu0 %v6967
  %7043 = vmatpush.msra.mxu0 %v6966
  %7044 = vmatpush.msra.mxu0 %v6965
  %7045 = vmatpush.msra.mxu0 %v6964
  %7046 = vmatpush.msra.mxu0 %v6963
  %7047 = vmatpush.msra.mxu0 %v6962
  %7048 = vmatmul.f32.gmra.mxu0 %v90
  %v7049 = vpop.f32.mrf.mxu0
  %v7050 = vadd.f32 %v7009, %v7049
  %7051 = vmatmul.f32.gmra.mxu0 %v93
  %v7052 = vpop.f32.mrf.mxu0
  %v7053 = vadd.f32 %v7012, %v7052
  %7054 = vmatmul.f32.gmra.mxu0 %v96
  %v7055 = vpop.f32.mrf.mxu0
  %v7056 = vadd.f32 %v7015, %v7055
  %7057 = vmatmul.f32.gmra.mxu0 %v99
  %v7058 = vpop.f32.mrf.mxu0
  %v7059 = vadd.f32 %v7018, %v7058
  %7060 = vmatmul.f32.gmra.mxu0 %v102
  %v7061 = vpop.f32.mrf.mxu0
  %v7062 = vadd.f32 %v7021, %v7061
  %7063 = vmatmul.f32.gmra.mxu0 %v105
  %v7064 = vpop.f32.mrf.mxu0
  %v7065 = vadd.f32 %v7024, %v7064
  %7066 = vmatmul.f32.gmra.mxu0 %v108
  %v7067 = vpop.f32.mrf.mxu0
  %v7068 = vadd.f32 %v7027, %v7067
  %7069 = vmatmul.f32.gmra.mxu0 %v111
  %v7070 = vpop.f32.mrf.mxu0
  %v7071 = vadd.f32 %v7030, %v7070
  %7072 = vdwg.mxu0
  %7073 = vmatpush.msra.mxu0 0.0
  %7074 = vmatpush.msra.mxu0 0.0
  %7075 = vmatpush.msra.mxu0 0.0
  %7076 = vmatpush.msra.mxu0 %v6990
  %7077 = vmatpush.msra.mxu0 %v6989
  %7078 = vmatpush.msra.mxu0 %v6988
  %7079 = vmatpush.msra.mxu0 %v6987
  %7080 = vmatpush.msra.mxu0 %v6986
  %7081 = vmatpush.msra.mxu0 %v6985
  %7082 = vmatpush.msra.mxu0 %v6984
  %7083 = vmatpush.msra.mxu0 %v6983
  %7084 = vmatpush.msra.mxu0 %v6982
  %7085 = vmatpush.msra.mxu0 %v6981
  %7086 = vmatpush.msra.mxu0 %v6980
  %7087 = vmatpush.msra.mxu0 %v6979
  %7088 = vmatpush.msra.mxu0 %v6978
  %7089 = vmatmul.f32.gmra.mxu0 %v5684
  %v7090 = vpop.f32.mrf.mxu0
  %v7091 = vadd.f32 %v7050, %v7090
  %7092 = vmatmul.f32.gmra.mxu0 %v5687
  %v7093 = vpop.f32.mrf.mxu0
  %v7094 = vadd.f32 %v7053, %v7093
  %7095 = vmatmul.f32.gmra.mxu0 %v5690
  %v7096 = vpop.f32.mrf.mxu0
  %v7097 = vadd.f32 %v7056, %v7096
  %7098 = vmatmul.f32.gmra.mxu0 %v5693
  %v7099 = vpop.f32.mrf.mxu0
  %v7100 = vadd.f32 %v7059, %v7099
  %7101 = vmatmul.f32.gmra.mxu0 %v5696
  %v7102 = vpop.f32.mrf.mxu0
  %v7103 = vadd.f32 %v7062, %v7102
  %7104 = vmatmul.f32.gmra.mxu0 %v5699
  %v7105 = vpop.f32.mrf.mxu0
  %v7106 = vadd.f32 %v7065, %v7105
  %7107 = vmatmul.f32.gmra.mxu0 %v5702
  %v7108 = vpop.f32.mrf.mxu0
  %v7109 = vadd.f32 %v7068, %v7108
  %7110 = vmatmul.f32.gmra.mxu0 %v5705
  %v7111 = vpop.f32.mrf.mxu0
  %v7112 = vadd.f32 %v7071, %v7111
  %7113 = vdwg.mxu0
  %7114 = vmatpush.msra.mxu0 %v6961
  %7115 = vmatpush.msra.mxu0 %v6960
  %7116 = vmatpush.msra.mxu0 %v6959
  %7117 = vmatpush.msra.mxu0 %v6958
  %7118 = vmatpush.msra.mxu0 %v6957
  %7119 = vmatpush.msra.mxu0 %v6956
  %7120 = vmatpush.msra.mxu0 %v6955
  %7121 = vmatpush.msra.mxu0 %v6954
  %7122 = vmatpush.msra.mxu0 %v6953
  %7123 = vmatpush.msra.mxu0 %v6952
  %7124 = vmatpush.msra.mxu0 %v6951
  %7125 = vmatpush.msra.mxu0 %v6950
  %7126 = vmatpush.msra.mxu0 %v6949
  %7127 = vmatpush.msra.mxu0 %v6948
  %7128 = vmatpush.msra.mxu0 %v6947
  %7129 = vmatpush.msra.mxu0 %v6946
  %7130 = vmatmul.f32.gmra.mxu0 %v113
  %v7131 = vpop.f32.mrf.mxu0
  %v7132 = vadd.f32 %v5645, %v7131
  %7133 = vmatmul.f32.gmra.mxu0 %v116
  %v7134 = vpop.f32.mrf.mxu0
  %v7135 = vadd.f32 %v5650, %v7134
  %7136 = vmatmul.f32.gmra.mxu0 %v119
  %v7137 = vpop.f32.mrf.mxu0
  %v7138 = vadd.f32 %v5655, %v7137
  %7139 = vmatmul.f32.gmra.mxu0 %v122
  %v7140 = vpop.f32.mrf.mxu0
  %v7141 = vadd.f32 %v5660, %v7140
  %7142 = vmatmul.f32.gmra.mxu0 %v125
  %v7143 = vpop.f32.mrf.mxu0
  %v7144 = vadd.f32 %v5665, %v7143
  %7145 = vmatmul.f32.gmra.mxu0 %v128
  %v7146 = vpop.f32.mrf.mxu0
  %v7147 = vadd.f32 %v5670, %v7146
  %7148 = vmatmul.f32.gmra.mxu0 %v131
  %v7149 = vpop.f32.mrf.mxu0
  %v7150 = vadd.f32 %v5675, %v7149
  %7151 = vmatmul.f32.gmra.mxu0 %v134
  %v7152 = vpop.f32.mrf.mxu0
  %v7153 = vadd.f32 %v5680, %v7152
  %7154 = vdwg.mxu0
  %7155 = vmatpush.msra.mxu0 %v6977
  %7156 = vmatpush.msra.mxu0 %v6976
  %7157 = vmatpush.msra.mxu0 %v6975
  %7158 = vmatpush.msra.mxu0 %v6974
  %7159 = vmatpush.msra.mxu0 %v6973
  %7160 = vmatpush.msra.mxu0 %v6972
  %7161 = vmatpush.msra.mxu0 %v6971
  %7162 = vmatpush.msra.mxu0 %v6970
  %7163 = vmatpush.msra.mxu0 %v6969
  %7164 = vmatpush.msra.mxu0 %v6968
  %7165 = vmatpush.msra.mxu0 %v6967
  %7166 = vmatpush.msra.mxu0 %v6966
  %7167 = vmatpush.msra.mxu0 %v6965
  %7168 = vmatpush.msra.mxu0 %v6964
  %7169 = vmatpush.msra.mxu0 %v6963
  %7170 = vmatpush.msra.mxu0 %v6962
  %7171 = vmatmul.f32.gmra.mxu0 %v114
  %v7172 = vpop.f32.mrf.mxu0
  %v7173 = vadd.f32 %v7132, %v7172
  %7174 = vmatmul.f32.gmra.mxu0 %v117
  %v7175 = vpop.f32.mrf.mxu0
  %v7176 = vadd.f32 %v7135, %v7175
  %7177 = vmatmul.f32.gmra.mxu0 %v120
  %v7178 = vpop.f32.mrf.mxu0
  %v7179 = vadd.f32 %v7138, %v7178
  %7180 = vmatmul.f32.gmra.mxu0 %v123
  %v7181 = vpop.f32.mrf.mxu0
  %v7182 = vadd.f32 %v7141, %v7181
  %7183 = vmatmul.f32.gmra.mxu0 %v126
  %v7184 = vpop.f32.mrf.mxu0
  %v7185 = vadd.f32 %v7144, %v7184
  %7186 = vmatmul.f32.gmra.mxu0 %v129
  %v7187 = vpop.f32.mrf.mxu0
  %v7188 = vadd.f32 %v7147, %v7187
  %7189 = vmatmul.f32.gmra.mxu0 %v132
  %v7190 = vpop.f32.mrf.mxu0
  %v7191 = vadd.f32 %v7150, %v7190
  %7192 = vmatmul.f32.gmra.mxu0 %v135
  %v7193 = vpop.f32.mrf.mxu0
  %v7194 = vadd.f32 %v7153, %v7193
  %7195 = vdwg.mxu0
  %7196 = vmatpush.msra.mxu0 0.0
  %7197 = vmatpush.msra.mxu0 0.0
  %7198 = vmatpush.msra.mxu0 0.0
  %7199 = vmatpush.msra.mxu0 %v6990
  %7200 = vmatpush.msra.mxu0 %v6989
  %7201 = vmatpush.msra.mxu0 %v6988
  %7202 = vmatpush.msra.mxu0 %v6987
  %7203 = vmatpush.msra.mxu0 %v6986
  %7204 = vmatpush.msra.mxu0 %v6985
  %7205 = vmatpush.msra.mxu0 %v6984
  %7206 = vmatpush.msra.mxu0 %v6983
  %7207 = vmatpush.msra.mxu0 %v6982
  %7208 = vmatpush.msra.mxu0 %v6981
  %7209 = vmatpush.msra.mxu0 %v6980
  %7210 = vmatpush.msra.mxu0 %v6979
  %7211 = vmatpush.msra.mxu0 %v6978
  %7212 = vmatmul.f32.gmra.mxu0 %v5831
  %v7213 = vpop.f32.mrf.mxu0
  %v7214 = vadd.f32 %v7173, %v7213
  %7215 = vmatmul.f32.gmra.mxu0 %v5834
  %v7216 = vpop.f32.mrf.mxu0
  %v7217 = vadd.f32 %v7176, %v7216
  %7218 = vmatmul.f32.gmra.mxu0 %v5837
  %v7219 = vpop.f32.mrf.mxu0
  %v7220 = vadd.f32 %v7179, %v7219
  %7221 = vmatmul.f32.gmra.mxu0 %v5840
  %v7222 = vpop.f32.mrf.mxu0
  %v7223 = vadd.f32 %v7182, %v7222
  %7224 = vmatmul.f32.gmra.mxu0 %v5843
  %v7225 = vpop.f32.mrf.mxu0
  %v7226 = vadd.f32 %v7185, %v7225
  %7227 = vmatmul.f32.gmra.mxu0 %v5846
  %v7228 = vpop.f32.mrf.mxu0
  %v7229 = vadd.f32 %v7188, %v7228
  %7230 = vmatmul.f32.gmra.mxu0 %v5849
  %v7231 = vpop.f32.mrf.mxu0
  %v7232 = vadd.f32 %v7191, %v7231
  %7233 = vmatmul.f32.gmra.mxu0 %v5852
  %v7234 = vpop.f32.mrf.mxu0
  %v7235 = vadd.f32 %v7194, %v7234
  %7236 = vdwg.mxu0
  %v7237 = vmax.f32 %v7091, %v7214
  %v7238 = vmax.f32 %v7094, %v7217
  %v7239 = vmax.f32 %v7097, %v7220
  %v7240 = vmax.f32 %v7100, %v7223
  %v7241 = vmax.f32 %v7103, %v7226
  %v7242 = vmax.f32 %v7106, %v7229
  %v7243 = vmax.f32 %v7109, %v7232
  %v7244 = vmax.f32 %v7112, %v7235
  %v7245 = vmax.f32 %v7237, 0.0
  %v7246 = vmax.f32 %v7238, 0.0
  %v7247 = vmax.f32 %v7239, 0.0
  %v7248 = vmax.f32 %v7240, 0.0
  %v7249 = vmax.f32 %v7241, 0.0
  %v7250 = vmax.f32 %v7242, 0.0
  %v7251 = vmax.f32 %v7243, 0.0
  %v7252 = vmax.f32 %v7244, 0.0
  %v7253 = vld [vmem:[#allocation2 + $0x168] sm:$0xff]
  %v7254 = vld [vmem:[#allocation2 + $0x170] sm:$0xff]
  %v7255 = vld [vmem:[#allocation2 + $0x178] sm:$0xff]
  %v7256 = vld [vmem:[#allocation2 + $0x180] sm:$0xff]
  %v7257 = vld [vmem:[#allocation2 + $0x188] sm:$0xff]
  %v7258 = vld [vmem:[#allocation2 + $0x190] sm:$0xff]
  %v7259 = vld [vmem:[#allocation2 + $0x198] sm:$0xff]
  %v7260 = vld [vmem:[#allocation2 + $0x1a0] sm:$0xff]
  %v7261 = vld [vmem:[#allocation2 + $0x1a8] sm:$0xff]
  %v7262 = vld [vmem:[#allocation2 + $0x1b0] sm:$0xff]
  %v7263 = vld [vmem:[#allocation2 + $0x1b8] sm:$0xff]
  %v7264 = vld [vmem:[#allocation2 + $0x1c0] sm:$0xff]
  %v7265 = vld [vmem:[#allocation2 + $0x1c8] sm:$0xff]
  %v7266 = vld [vmem:[#allocation2 + $0x1d0] sm:$0xff]
  %v7267 = vld [vmem:[#allocation2 + $0x1d8] sm:$0xff]
  %v7268 = vld [vmem:[#allocation2 + $0x1e0] sm:$0xff]
  %v7269 = vld [vmem:[#allocation2 + $0x1e8] sm:$0xff]
  %v7270 = vld [vmem:[#allocation2 + $0x1f0] sm:$0xff]
  %v7271 = vld [vmem:[#allocation2 + $0x1f8] sm:$0xff]
  %v7272 = vld [vmem:[#allocation2 + $0x200] sm:$0xff]
  %v7273 = vld [vmem:[#allocation2 + $0x208] sm:$0xff]
  %v7274 = vld [vmem:[#allocation2 + $0x210] sm:$0xff]
  %v7275 = vld [vmem:[#allocation2 + $0x218] sm:$0xff]
  %v7276 = vld [vmem:[#allocation2 + $0x220] sm:$0xff]
  %v7277 = vld [vmem:[#allocation2 + $0x228] sm:$0xff]
  %v7278 = vld [vmem:[#allocation2 + $0x230] sm:$0xff]
  %v7279 = vld [vmem:[#allocation2 + $0x238] sm:$0xff]
  %v7280 = vld [vmem:[#allocation2 + $0x240] sm:$0xff]
  %v7281 = vld [vmem:[#allocation2 + $0x248] sm:$0xff]
  %v7282 = vld [vmem:[#allocation2 + $0x250] sm:$0xff]
  %v7283 = vld [vmem:[#allocation2 + $0x258] sm:$0xff]
  %v7284 = vld [vmem:[#allocation2 + $0x260] sm:$0xff]
  %v7285 = vld [vmem:[#allocation2 + $0x268] sm:$0xff]
  %v7286 = vld [vmem:[#allocation2 + $0x270] sm:$0xff]
  %v7287 = vld [vmem:[#allocation2 + $0x278] sm:$0xff]
  %v7288 = vld [vmem:[#allocation2 + $0x280] sm:$0xff]
  %v7289 = vld [vmem:[#allocation2 + $0x288] sm:$0xff]
  %v7290 = vld [vmem:[#allocation2 + $0x290] sm:$0xff]
  %v7291 = vld [vmem:[#allocation2 + $0x298] sm:$0xff]
  %v7292 = vld [vmem:[#allocation2 + $0x2a0] sm:$0xff]
  %v7293 = vld [vmem:[#allocation2 + $0x2a8] sm:$0xff]
  %v7294 = vld [vmem:[#allocation2 + $0x2b0] sm:$0xff]
  %v7295 = vld [vmem:[#allocation2 + $0x2b8] sm:$0xff]
  %v7296 = vld [vmem:[#allocation2 + $0x2c0] sm:$0xff]
  %v7297 = vld [vmem:[#allocation2 + $0x2c8] sm:$0xff]
  %7298 = vmatpush.msra.mxu0 %v7268
  %7299 = vmatpush.msra.mxu0 %v7267
  %7300 = vmatpush.msra.mxu0 %v7266
  %7301 = vmatpush.msra.mxu0 %v7265
  %7302 = vmatpush.msra.mxu0 %v7264
  %7303 = vmatpush.msra.mxu0 %v7263
  %7304 = vmatpush.msra.mxu0 %v7262
  %7305 = vmatpush.msra.mxu0 %v7261
  %7306 = vmatpush.msra.mxu0 %v7260
  %7307 = vmatpush.msra.mxu0 %v7259
  %7308 = vmatpush.msra.mxu0 %v7258
  %7309 = vmatpush.msra.mxu0 %v7257
  %7310 = vmatpush.msra.mxu0 %v7256
  %7311 = vmatpush.msra.mxu0 %v7255
  %7312 = vmatpush.msra.mxu0 %v7254
  %7313 = vmatpush.msra.mxu0 %v7253
  %7314 = vmatmul.f32.gmra.mxu0 %v89
  %v7315 = vpop.f32.mrf.mxu0
  %v7316 = vadd.f32 %v5645, %v7315
  %7317 = vmatmul.f32.gmra.mxu0 %v92
  %v7318 = vpop.f32.mrf.mxu0
  %v7319 = vadd.f32 %v5650, %v7318
  %7320 = vmatmul.f32.gmra.mxu0 %v95
  %v7321 = vpop.f32.mrf.mxu0
  %v7322 = vadd.f32 %v5655, %v7321
  %7323 = vmatmul.f32.gmra.mxu0 %v98
  %v7324 = vpop.f32.mrf.mxu0
  %v7325 = vadd.f32 %v5660, %v7324
  %7326 = vmatmul.f32.gmra.mxu0 %v101
  %v7327 = vpop.f32.mrf.mxu0
  %v7328 = vadd.f32 %v5665, %v7327
  %7329 = vmatmul.f32.gmra.mxu0 %v104
  %v7330 = vpop.f32.mrf.mxu0
  %v7331 = vadd.f32 %v5670, %v7330
  %7332 = vmatmul.f32.gmra.mxu0 %v107
  %v7333 = vpop.f32.mrf.mxu0
  %v7334 = vadd.f32 %v5675, %v7333
  %7335 = vmatmul.f32.gmra.mxu0 %v110
  %v7336 = vpop.f32.mrf.mxu0
  %v7337 = vadd.f32 %v5680, %v7336
  %7338 = vdwg.mxu0
  %7339 = vmatpush.msra.mxu0 %v7284
  %7340 = vmatpush.msra.mxu0 %v7283
  %7341 = vmatpush.msra.mxu0 %v7282
  %7342 = vmatpush.msra.mxu0 %v7281
  %7343 = vmatpush.msra.mxu0 %v7280
  %7344 = vmatpush.msra.mxu0 %v7279
  %7345 = vmatpush.msra.mxu0 %v7278
  %7346 = vmatpush.msra.mxu0 %v7277
  %7347 = vmatpush.msra.mxu0 %v7276
  %7348 = vmatpush.msra.mxu0 %v7275
  %7349 = vmatpush.msra.mxu0 %v7274
  %7350 = vmatpush.msra.mxu0 %v7273
  %7351 = vmatpush.msra.mxu0 %v7272
  %7352 = vmatpush.msra.mxu0 %v7271
  %7353 = vmatpush.msra.mxu0 %v7270
  %7354 = vmatpush.msra.mxu0 %v7269
  %7355 = vmatmul.f32.gmra.mxu0 %v90
  %v7356 = vpop.f32.mrf.mxu0
  %v7357 = vadd.f32 %v7316, %v7356
  %7358 = vmatmul.f32.gmra.mxu0 %v93
  %v7359 = vpop.f32.mrf.mxu0
  %v7360 = vadd.f32 %v7319, %v7359
  %7361 = vmatmul.f32.gmra.mxu0 %v96
  %v7362 = vpop.f32.mrf.mxu0
  %v7363 = vadd.f32 %v7322, %v7362
  %7364 = vmatmul.f32.gmra.mxu0 %v99
  %v7365 = vpop.f32.mrf.mxu0
  %v7366 = vadd.f32 %v7325, %v7365
  %7367 = vmatmul.f32.gmra.mxu0 %v102
  %v7368 = vpop.f32.mrf.mxu0
  %v7369 = vadd.f32 %v7328, %v7368
  %7370 = vmatmul.f32.gmra.mxu0 %v105
  %v7371 = vpop.f32.mrf.mxu0
  %v7372 = vadd.f32 %v7331, %v7371
  %7373 = vmatmul.f32.gmra.mxu0 %v108
  %v7374 = vpop.f32.mrf.mxu0
  %v7375 = vadd.f32 %v7334, %v7374
  %7376 = vmatmul.f32.gmra.mxu0 %v111
  %v7377 = vpop.f32.mrf.mxu0
  %v7378 = vadd.f32 %v7337, %v7377
  %7379 = vdwg.mxu0
  %7380 = vmatpush.msra.mxu0 0.0
  %7381 = vmatpush.msra.mxu0 0.0
  %7382 = vmatpush.msra.mxu0 0.0
  %7383 = vmatpush.msra.mxu0 %v7297
  %7384 = vmatpush.msra.mxu0 %v7296
  %7385 = vmatpush.msra.mxu0 %v7295
  %7386 = vmatpush.msra.mxu0 %v7294
  %7387 = vmatpush.msra.mxu0 %v7293
  %7388 = vmatpush.msra.mxu0 %v7292
  %7389 = vmatpush.msra.mxu0 %v7291
  %7390 = vmatpush.msra.mxu0 %v7290
  %7391 = vmatpush.msra.mxu0 %v7289
  %7392 = vmatpush.msra.mxu0 %v7288
  %7393 = vmatpush.msra.mxu0 %v7287
  %7394 = vmatpush.msra.mxu0 %v7286
  %7395 = vmatpush.msra.mxu0 %v7285
  %7396 = vmatmul.f32.gmra.mxu0 %v5684
  %v7397 = vpop.f32.mrf.mxu0
  %v7398 = vadd.f32 %v7357, %v7397
  %7399 = vmatmul.f32.gmra.mxu0 %v5687
  %v7400 = vpop.f32.mrf.mxu0
  %v7401 = vadd.f32 %v7360, %v7400
  %7402 = vmatmul.f32.gmra.mxu0 %v5690
  %v7403 = vpop.f32.mrf.mxu0
  %v7404 = vadd.f32 %v7363, %v7403
  %7405 = vmatmul.f32.gmra.mxu0 %v5693
  %v7406 = vpop.f32.mrf.mxu0
  %v7407 = vadd.f32 %v7366, %v7406
  %7408 = vmatmul.f32.gmra.mxu0 %v5696
  %v7409 = vpop.f32.mrf.mxu0
  %v7410 = vadd.f32 %v7369, %v7409
  %7411 = vmatmul.f32.gmra.mxu0 %v5699
  %v7412 = vpop.f32.mrf.mxu0
  %v7413 = vadd.f32 %v7372, %v7412
  %7414 = vmatmul.f32.gmra.mxu0 %v5702
  %v7415 = vpop.f32.mrf.mxu0
  %v7416 = vadd.f32 %v7375, %v7415
  %7417 = vmatmul.f32.gmra.mxu0 %v5705
  %v7418 = vpop.f32.mrf.mxu0
  %v7419 = vadd.f32 %v7378, %v7418
  %7420 = vdwg.mxu0
  %7421 = vmatpush.msra.mxu0 %v7268
  %7422 = vmatpush.msra.mxu0 %v7267
  %7423 = vmatpush.msra.mxu0 %v7266
  %7424 = vmatpush.msra.mxu0 %v7265
  %7425 = vmatpush.msra.mxu0 %v7264
  %7426 = vmatpush.msra.mxu0 %v7263
  %7427 = vmatpush.msra.mxu0 %v7262
  %7428 = vmatpush.msra.mxu0 %v7261
  %7429 = vmatpush.msra.mxu0 %v7260
  %7430 = vmatpush.msra.mxu0 %v7259
  %7431 = vmatpush.msra.mxu0 %v7258
  %7432 = vmatpush.msra.mxu0 %v7257
  %7433 = vmatpush.msra.mxu0 %v7256
  %7434 = vmatpush.msra.mxu0 %v7255
  %7435 = vmatpush.msra.mxu0 %v7254
  %7436 = vmatpush.msra.mxu0 %v7253
  %7437 = vmatmul.f32.gmra.mxu0 %v113
  %v7438 = vpop.f32.mrf.mxu0
  %v7439 = vadd.f32 %v5645, %v7438
  %7440 = vmatmul.f32.gmra.mxu0 %v116
  %v7441 = vpop.f32.mrf.mxu0
  %v7442 = vadd.f32 %v5650, %v7441
  %7443 = vmatmul.f32.gmra.mxu0 %v119
  %v7444 = vpop.f32.mrf.mxu0
  %v7445 = vadd.f32 %v5655, %v7444
  %7446 = vmatmul.f32.gmra.mxu0 %v122
  %v7447 = vpop.f32.mrf.mxu0
  %v7448 = vadd.f32 %v5660, %v7447
  %7449 = vmatmul.f32.gmra.mxu0 %v125
  %v7450 = vpop.f32.mrf.mxu0
  %v7451 = vadd.f32 %v5665, %v7450
  %7452 = vmatmul.f32.gmra.mxu0 %v128
  %v7453 = vpop.f32.mrf.mxu0
  %v7454 = vadd.f32 %v5670, %v7453
  %7455 = vmatmul.f32.gmra.mxu0 %v131
  %v7456 = vpop.f32.mrf.mxu0
  %v7457 = vadd.f32 %v5675, %v7456
  %7458 = vmatmul.f32.gmra.mxu0 %v134
  %v7459 = vpop.f32.mrf.mxu0
  %v7460 = vadd.f32 %v5680, %v7459
  %7461 = vdwg.mxu0
  %7462 = vmatpush.msra.mxu0 %v7284
  %7463 = vmatpush.msra.mxu0 %v7283
  %7464 = vmatpush.msra.mxu0 %v7282
  %7465 = vmatpush.msra.mxu0 %v7281
  %7466 = vmatpush.msra.mxu0 %v7280
  %7467 = vmatpush.msra.mxu0 %v7279
  %7468 = vmatpush.msra.mxu0 %v7278
  %7469 = vmatpush.msra.mxu0 %v7277
  %7470 = vmatpush.msra.mxu0 %v7276
  %7471 = vmatpush.msra.mxu0 %v7275
  %7472 = vmatpush.msra.mxu0 %v7274
  %7473 = vmatpush.msra.mxu0 %v7273
  %7474 = vmatpush.msra.mxu0 %v7272
  %7475 = vmatpush.msra.mxu0 %v7271
  %7476 = vmatpush.msra.mxu0 %v7270
  %7477 = vmatpush.msra.mxu0 %v7269
  %7478 = vmatmul.f32.gmra.mxu0 %v114
  %v7479 = vpop.f32.mrf.mxu0
  %v7480 = vadd.f32 %v7439, %v7479
  %7481 = vmatmul.f32.gmra.mxu0 %v117
  %v7482 = vpop.f32.mrf.mxu0
  %v7483 = vadd.f32 %v7442, %v7482
  %7484 = vmatmul.f32.gmra.mxu0 %v120
  %v7485 = vpop.f32.mrf.mxu0
  %v7486 = vadd.f32 %v7445, %v7485
  %7487 = vmatmul.f32.gmra.mxu0 %v123
  %v7488 = vpop.f32.mrf.mxu0
  %v7489 = vadd.f32 %v7448, %v7488
  %7490 = vmatmul.f32.gmra.mxu0 %v126
  %v7491 = vpop.f32.mrf.mxu0
  %v7492 = vadd.f32 %v7451, %v7491
  %7493 = vmatmul.f32.gmra.mxu0 %v129
  %v7494 = vpop.f32.mrf.mxu0
  %v7495 = vadd.f32 %v7454, %v7494
  %7496 = vmatmul.f32.gmra.mxu0 %v132
  %v7497 = vpop.f32.mrf.mxu0
  %v7498 = vadd.f32 %v7457, %v7497
  %7499 = vmatmul.f32.gmra.mxu0 %v135
  %v7500 = vpop.f32.mrf.mxu0
  %v7501 = vadd.f32 %v7460, %v7500
  %7502 = vdwg.mxu0
  %7503 = vmatpush.msra.mxu0 0.0
  %7504 = vmatpush.msra.mxu0 0.0
  %7505 = vmatpush.msra.mxu0 0.0
  %7506 = vmatpush.msra.mxu0 %v7297
  %7507 = vmatpush.msra.mxu0 %v7296
  %7508 = vmatpush.msra.mxu0 %v7295
  %7509 = vmatpush.msra.mxu0 %v7294
  %7510 = vmatpush.msra.mxu0 %v7293
  %7511 = vmatpush.msra.mxu0 %v7292
  %7512 = vmatpush.msra.mxu0 %v7291
  %7513 = vmatpush.msra.mxu0 %v7290
  %7514 = vmatpush.msra.mxu0 %v7289
  %7515 = vmatpush.msra.mxu0 %v7288
  %7516 = vmatpush.msra.mxu0 %v7287
  %7517 = vmatpush.msra.mxu0 %v7286
  %7518 = vmatpush.msra.mxu0 %v7285
  %7519 = vmatmul.f32.gmra.mxu0 %v5831
  %v7520 = vpop.f32.mrf.mxu0
  %v7521 = vadd.f32 %v7480, %v7520
  %7522 = vmatmul.f32.gmra.mxu0 %v5834
  %v7523 = vpop.f32.mrf.mxu0
  %v7524 = vadd.f32 %v7483, %v7523
  %7525 = vmatmul.f32.gmra.mxu0 %v5837
  %v7526 = vpop.f32.mrf.mxu0
  %v7527 = vadd.f32 %v7486, %v7526
  %7528 = vmatmul.f32.gmra.mxu0 %v5840
  %v7529 = vpop.f32.mrf.mxu0
  %v7530 = vadd.f32 %v7489, %v7529
  %7531 = vmatmul.f32.gmra.mxu0 %v5843
  %v7532 = vpop.f32.mrf.mxu0
  %v7533 = vadd.f32 %v7492, %v7532
  %7534 = vmatmul.f32.gmra.mxu0 %v5846
  %v7535 = vpop.f32.mrf.mxu0
  %v7536 = vadd.f32 %v7495, %v7535
  %7537 = vmatmul.f32.gmra.mxu0 %v5849
  %v7538 = vpop.f32.mrf.mxu0
  %v7539 = vadd.f32 %v7498, %v7538
  %7540 = vmatmul.f32.gmra.mxu0 %v5852
  %v7541 = vpop.f32.mrf.mxu0
  %v7542 = vadd.f32 %v7501, %v7541
  %7543 = vdwg.mxu0
  %v7544 = vmax.f32 %v7398, %v7521
  %v7545 = vmax.f32 %v7401, %v7524
  %v7546 = vmax.f32 %v7404, %v7527
  %v7547 = vmax.f32 %v7407, %v7530
  %v7548 = vmax.f32 %v7410, %v7533
  %v7549 = vmax.f32 %v7413, %v7536
  %v7550 = vmax.f32 %v7416, %v7539
  %v7551 = vmax.f32 %v7419, %v7542
  %v7552 = vmax.f32 %v7544, 0.0
  %v7553 = vmax.f32 %v7545, 0.0
  %v7554 = vmax.f32 %v7546, 0.0
  %v7555 = vmax.f32 %v7547, 0.0
  %v7556 = vmax.f32 %v7548, 0.0
  %v7557 = vmax.f32 %v7549, 0.0
  %v7558 = vmax.f32 %v7550, 0.0
  %v7559 = vmax.f32 %v7551, 0.0
  %v7560 = vmax.f32 %v7245, %v7552
  %v7561 = vmax.f32 %v7246, %v7553
  %v7562 = vmax.f32 %v7247, %v7554
  %v7563 = vmax.f32 %v7248, %v7555
  %v7564 = vmax.f32 %v7249, %v7556
  %v7565 = vmax.f32 %v7250, %v7557
  %v7566 = vmax.f32 %v7251, %v7558
  %v7567 = vmax.f32 %v7252, %v7559
  %7568 = vst [vmem:[#allocation3 + $0x80] sm:$0xff] %v7560
  %7569 = vst [vmem:[#allocation3 + $0x88] sm:$0xff] %v7561
  %7570 = vst [vmem:[#allocation3 + $0x90] sm:$0xff] %v7562
  %7571 = vst [vmem:[#allocation3 + $0x98] sm:$0xff] %v7563
  %7572 = vst [vmem:[#allocation3 + $0xa0] sm:$0xff] %v7564
  %7573 = vst [vmem:[#allocation3 + $0xa8] sm:$0xff] %v7565
  %7574 = vst [vmem:[#allocation3 + $0xb0] sm:$0xff] %v7566
  %7575 = vst [vmem:[#allocation3 + $0xb8] sm:$0xff] %v7567
  %v7576 = vld [vmem:[#allocation2 + $0x1b0] sm:$0xff]
  %v7577 = vld [vmem:[#allocation2 + $0x1b8] sm:$0xff]
  %v7578 = vld [vmem:[#allocation2 + $0x1c0] sm:$0xff]
  %v7579 = vld [vmem:[#allocation2 + $0x1c8] sm:$0xff]
  %v7580 = vld [vmem:[#allocation2 + $0x1d0] sm:$0xff]
  %v7581 = vld [vmem:[#allocation2 + $0x1d8] sm:$0xff]
  %v7582 = vld [vmem:[#allocation2 + $0x1e0] sm:$0xff]
  %v7583 = vld [vmem:[#allocation2 + $0x1e8] sm:$0xff]
  %v7584 = vld [vmem:[#allocation2 + $0x1f0] sm:$0xff]
  %v7585 = vld [vmem:[#allocation2 + $0x1f8] sm:$0xff]
  %v7586 = vld [vmem:[#allocation2 + $0x200] sm:$0xff]
  %v7587 = vld [vmem:[#allocation2 + $0x208] sm:$0xff]
  %v7588 = vld [vmem:[#allocation2 + $0x210] sm:$0xff]
  %v7589 = vld [vmem:[#allocation2 + $0x218] sm:$0xff]
  %v7590 = vld [vmem:[#allocation2 + $0x220] sm:$0xff]
  %v7591 = vld [vmem:[#allocation2 + $0x228] sm:$0xff]
  %v7592 = vld [vmem:[#allocation2 + $0x230] sm:$0xff]
  %v7593 = vld [vmem:[#allocation2 + $0x238] sm:$0xff]
  %v7594 = vld [vmem:[#allocation2 + $0x240] sm:$0xff]
  %v7595 = vld [vmem:[#allocation2 + $0x248] sm:$0xff]
  %v7596 = vld [vmem:[#allocation2 + $0x250] sm:$0xff]
  %v7597 = vld [vmem:[#allocation2 + $0x258] sm:$0xff]
  %v7598 = vld [vmem:[#allocation2 + $0x260] sm:$0xff]
  %v7599 = vld [vmem:[#allocation2 + $0x268] sm:$0xff]
  %v7600 = vld [vmem:[#allocation2 + $0x270] sm:$0xff]
  %v7601 = vld [vmem:[#allocation2 + $0x278] sm:$0xff]
  %v7602 = vld [vmem:[#allocation2 + $0x280] sm:$0xff]
  %v7603 = vld [vmem:[#allocation2 + $0x288] sm:$0xff]
  %v7604 = vld [vmem:[#allocation2 + $0x290] sm:$0xff]
  %v7605 = vld [vmem:[#allocation2 + $0x298] sm:$0xff]
  %v7606 = vld [vmem:[#allocation2 + $0x2a0] sm:$0xff]
  %v7607 = vld [vmem:[#allocation2 + $0x2a8] sm:$0xff]
  %v7608 = vld [vmem:[#allocation2 + $0x2b0] sm:$0xff]
  %v7609 = vld [vmem:[#allocation2 + $0x2b8] sm:$0xff]
  %v7610 = vld [vmem:[#allocation2 + $0x2c0] sm:$0xff]
  %v7611 = vld [vmem:[#allocation2 + $0x2c8] sm:$0xff]
  %v7612 = vld [vmem:[#allocation2 + $0x2d0] sm:$0xff]
  %v7613 = vld [vmem:[#allocation2 + $0x2d8] sm:$0xff]
  %v7614 = vld [vmem:[#allocation2 + $0x2e0] sm:$0xff]
  %v7615 = vld [vmem:[#allocation2 + $0x2e8] sm:$0xff]
  %v7616 = vld [vmem:[#allocation2 + $0x2f0] sm:$0xff]
  %v7617 = vld [vmem:[#allocation2 + $0x2f8] sm:$0xff]
  %v7618 = vld [vmem:[#allocation2 + $0x300] sm:$0xff]
  %v7619 = vld [vmem:[#allocation2 + $0x308] sm:$0xff]
  %v7620 = vld [vmem:[#allocation2 + $0x310] sm:$0xff]
  %7621 = vmatpush.msra.mxu0 %v7591
  %7622 = vmatpush.msra.mxu0 %v7590
  %7623 = vmatpush.msra.mxu0 %v7589
  %7624 = vmatpush.msra.mxu0 %v7588
  %7625 = vmatpush.msra.mxu0 %v7587
  %7626 = vmatpush.msra.mxu0 %v7586
  %7627 = vmatpush.msra.mxu0 %v7585
  %7628 = vmatpush.msra.mxu0 %v7584
  %7629 = vmatpush.msra.mxu0 %v7583
  %7630 = vmatpush.msra.mxu0 %v7582
  %7631 = vmatpush.msra.mxu0 %v7581
  %7632 = vmatpush.msra.mxu0 %v7580
  %7633 = vmatpush.msra.mxu0 %v7579
  %7634 = vmatpush.msra.mxu0 %v7578
  %7635 = vmatpush.msra.mxu0 %v7577
  %7636 = vmatpush.msra.mxu0 %v7576
  %7637 = vmatmul.f32.gmra.mxu0 %v89
  %v7638 = vpop.f32.mrf.mxu0
  %v7639 = vadd.f32 %v5645, %v7638
  %7640 = vmatmul.f32.gmra.mxu0 %v92
  %v7641 = vpop.f32.mrf.mxu0
  %v7642 = vadd.f32 %v5650, %v7641
  %7643 = vmatmul.f32.gmra.mxu0 %v95
  %v7644 = vpop.f32.mrf.mxu0
  %v7645 = vadd.f32 %v5655, %v7644
  %7646 = vmatmul.f32.gmra.mxu0 %v98
  %v7647 = vpop.f32.mrf.mxu0
  %v7648 = vadd.f32 %v5660, %v7647
  %7649 = vmatmul.f32.gmra.mxu0 %v101
  %v7650 = vpop.f32.mrf.mxu0
  %v7651 = vadd.f32 %v5665, %v7650
  %7652 = vmatmul.f32.gmra.mxu0 %v104
  %v7653 = vpop.f32.mrf.mxu0
  %v7654 = vadd.f32 %v5670, %v7653
  %7655 = vmatmul.f32.gmra.mxu0 %v107
  %v7656 = vpop.f32.mrf.mxu0
  %v7657 = vadd.f32 %v5675, %v7656
  %7658 = vmatmul.f32.gmra.mxu0 %v110
  %v7659 = vpop.f32.mrf.mxu0
  %v7660 = vadd.f32 %v5680, %v7659
  %7661 = vdwg.mxu0
  %7662 = vmatpush.msra.mxu0 %v7607
  %7663 = vmatpush.msra.mxu0 %v7606
  %7664 = vmatpush.msra.mxu0 %v7605
  %7665 = vmatpush.msra.mxu0 %v7604
  %7666 = vmatpush.msra.mxu0 %v7603
  %7667 = vmatpush.msra.mxu0 %v7602
  %7668 = vmatpush.msra.mxu0 %v7601
  %7669 = vmatpush.msra.mxu0 %v7600
  %7670 = vmatpush.msra.mxu0 %v7599
  %7671 = vmatpush.msra.mxu0 %v7598
  %7672 = vmatpush.msra.mxu0 %v7597
  %7673 = vmatpush.msra.mxu0 %v7596
  %7674 = vmatpush.msra.mxu0 %v7595
  %7675 = vmatpush.msra.mxu0 %v7594
  %7676 = vmatpush.msra.mxu0 %v7593
  %7677 = vmatpush.msra.mxu0 %v7592
  %7678 = vmatmul.f32.gmra.mxu0 %v90
  %v7679 = vpop.f32.mrf.mxu0
  %v7680 = vadd.f32 %v7639, %v7679
  %7681 = vmatmul.f32.gmra.mxu0 %v93
  %v7682 = vpop.f32.mrf.mxu0
  %v7683 = vadd.f32 %v7642, %v7682
  %7684 = vmatmul.f32.gmra.mxu0 %v96
  %v7685 = vpop.f32.mrf.mxu0
  %v7686 = vadd.f32 %v7645, %v7685
  %7687 = vmatmul.f32.gmra.mxu0 %v99
  %v7688 = vpop.f32.mrf.mxu0
  %v7689 = vadd.f32 %v7648, %v7688
  %7690 = vmatmul.f32.gmra.mxu0 %v102
  %v7691 = vpop.f32.mrf.mxu0
  %v7692 = vadd.f32 %v7651, %v7691
  %7693 = vmatmul.f32.gmra.mxu0 %v105
  %v7694 = vpop.f32.mrf.mxu0
  %v7695 = vadd.f32 %v7654, %v7694
  %7696 = vmatmul.f32.gmra.mxu0 %v108
  %v7697 = vpop.f32.mrf.mxu0
  %v7698 = vadd.f32 %v7657, %v7697
  %7699 = vmatmul.f32.gmra.mxu0 %v111
  %v7700 = vpop.f32.mrf.mxu0
  %v7701 = vadd.f32 %v7660, %v7700
  %7702 = vdwg.mxu0
  %7703 = vmatpush.msra.mxu0 0.0
  %7704 = vmatpush.msra.mxu0 0.0
  %7705 = vmatpush.msra.mxu0 0.0
  %7706 = vmatpush.msra.mxu0 %v7620
  %7707 = vmatpush.msra.mxu0 %v7619
  %7708 = vmatpush.msra.mxu0 %v7618
  %7709 = vmatpush.msra.mxu0 %v7617
  %7710 = vmatpush.msra.mxu0 %v7616
  %7711 = vmatpush.msra.mxu0 %v7615
  %7712 = vmatpush.msra.mxu0 %v7614
  %7713 = vmatpush.msra.mxu0 %v7613
  %7714 = vmatpush.msra.mxu0 %v7612
  %7715 = vmatpush.msra.mxu0 %v7611
  %7716 = vmatpush.msra.mxu0 %v7610
  %7717 = vmatpush.msra.mxu0 %v7609
  %7718 = vmatpush.msra.mxu0 %v7608
  %7719 = vmatmul.f32.gmra.mxu0 %v5684
  %v7720 = vpop.f32.mrf.mxu0
  %v7721 = vadd.f32 %v7680, %v7720
  %7722 = vmatmul.f32.gmra.mxu0 %v5687
  %v7723 = vpop.f32.mrf.mxu0
  %v7724 = vadd.f32 %v7683, %v7723
  %7725 = vmatmul.f32.gmra.mxu0 %v5690
  %v7726 = vpop.f32.mrf.mxu0
  %v7727 = vadd.f32 %v7686, %v7726
  %7728 = vmatmul.f32.gmra.mxu0 %v5693
  %v7729 = vpop.f32.mrf.mxu0
  %v7730 = vadd.f32 %v7689, %v7729
  %7731 = vmatmul.f32.gmra.mxu0 %v5696
  %v7732 = vpop.f32.mrf.mxu0
  %v7733 = vadd.f32 %v7692, %v7732
  %7734 = vmatmul.f32.gmra.mxu0 %v5699
  %v7735 = vpop.f32.mrf.mxu0
  %v7736 = vadd.f32 %v7695, %v7735
  %7737 = vmatmul.f32.gmra.mxu0 %v5702
  %v7738 = vpop.f32.mrf.mxu0
  %v7739 = vadd.f32 %v7698, %v7738
  %7740 = vmatmul.f32.gmra.mxu0 %v5705
  %v7741 = vpop.f32.mrf.mxu0
  %v7742 = vadd.f32 %v7701, %v7741
  %7743 = vdwg.mxu0
  %7744 = vmatpush.msra.mxu0 %v7591
  %7745 = vmatpush.msra.mxu0 %v7590
  %7746 = vmatpush.msra.mxu0 %v7589
  %7747 = vmatpush.msra.mxu0 %v7588
  %7748 = vmatpush.msra.mxu0 %v7587
  %7749 = vmatpush.msra.mxu0 %v7586
  %7750 = vmatpush.msra.mxu0 %v7585
  %7751 = vmatpush.msra.mxu0 %v7584
  %7752 = vmatpush.msra.mxu0 %v7583
  %7753 = vmatpush.msra.mxu0 %v7582
  %7754 = vmatpush.msra.mxu0 %v7581
  %7755 = vmatpush.msra.mxu0 %v7580
  %7756 = vmatpush.msra.mxu0 %v7579
  %7757 = vmatpush.msra.mxu0 %v7578
  %7758 = vmatpush.msra.mxu0 %v7577
  %7759 = vmatpush.msra.mxu0 %v7576
  %7760 = vmatmul.f32.gmra.mxu0 %v113
  %v7761 = vpop.f32.mrf.mxu0
  %v7762 = vadd.f32 %v5645, %v7761
  %7763 = vmatmul.f32.gmra.mxu0 %v116
  %v7764 = vpop.f32.mrf.mxu0
  %v7765 = vadd.f32 %v5650, %v7764
  %7766 = vmatmul.f32.gmra.mxu0 %v119
  %v7767 = vpop.f32.mrf.mxu0
  %v7768 = vadd.f32 %v5655, %v7767
  %7769 = vmatmul.f32.gmra.mxu0 %v122
  %v7770 = vpop.f32.mrf.mxu0
  %v7771 = vadd.f32 %v5660, %v7770
  %7772 = vmatmul.f32.gmra.mxu0 %v125
  %v7773 = vpop.f32.mrf.mxu0
  %v7774 = vadd.f32 %v5665, %v7773
  %7775 = vmatmul.f32.gmra.mxu0 %v128
  %v7776 = vpop.f32.mrf.mxu0
  %v7777 = vadd.f32 %v5670, %v7776
  %7778 = vmatmul.f32.gmra.mxu0 %v131
  %v7779 = vpop.f32.mrf.mxu0
  %v7780 = vadd.f32 %v5675, %v7779
  %7781 = vmatmul.f32.gmra.mxu0 %v134
  %v7782 = vpop.f32.mrf.mxu0
  %v7783 = vadd.f32 %v5680, %v7782
  %7784 = vdwg.mxu0
  %7785 = vmatpush.msra.mxu0 %v7607
  %7786 = vmatpush.msra.mxu0 %v7606
  %7787 = vmatpush.msra.mxu0 %v7605
  %7788 = vmatpush.msra.mxu0 %v7604
  %7789 = vmatpush.msra.mxu0 %v7603
  %7790 = vmatpush.msra.mxu0 %v7602
  %7791 = vmatpush.msra.mxu0 %v7601
  %7792 = vmatpush.msra.mxu0 %v7600
  %7793 = vmatpush.msra.mxu0 %v7599
  %7794 = vmatpush.msra.mxu0 %v7598
  %7795 = vmatpush.msra.mxu0 %v7597
  %7796 = vmatpush.msra.mxu0 %v7596
  %7797 = vmatpush.msra.mxu0 %v7595
  %7798 = vmatpush.msra.mxu0 %v7594
  %7799 = vmatpush.msra.mxu0 %v7593
  %7800 = vmatpush.msra.mxu0 %v7592
  %7801 = vmatmul.f32.gmra.mxu0 %v114
  %v7802 = vpop.f32.mrf.mxu0
  %v7803 = vadd.f32 %v7762, %v7802
  %7804 = vmatmul.f32.gmra.mxu0 %v117
  %v7805 = vpop.f32.mrf.mxu0
  %v7806 = vadd.f32 %v7765, %v7805
  %7807 = vmatmul.f32.gmra.mxu0 %v120
  %v7808 = vpop.f32.mrf.mxu0
  %v7809 = vadd.f32 %v7768, %v7808
  %7810 = vmatmul.f32.gmra.mxu0 %v123
  %v7811 = vpop.f32.mrf.mxu0
  %v7812 = vadd.f32 %v7771, %v7811
  %7813 = vmatmul.f32.gmra.mxu0 %v126
  %v7814 = vpop.f32.mrf.mxu0
  %v7815 = vadd.f32 %v7774, %v7814
  %7816 = vmatmul.f32.gmra.mxu0 %v129
  %v7817 = vpop.f32.mrf.mxu0
  %v7818 = vadd.f32 %v7777, %v7817
  %7819 = vmatmul.f32.gmra.mxu0 %v132
  %v7820 = vpop.f32.mrf.mxu0
  %v7821 = vadd.f32 %v7780, %v7820
  %7822 = vmatmul.f32.gmra.mxu0 %v135
  %v7823 = vpop.f32.mrf.mxu0
  %v7824 = vadd.f32 %v7783, %v7823
  %7825 = vdwg.mxu0
  %7826 = vmatpush.msra.mxu0 0.0
  %7827 = vmatpush.msra.mxu0 0.0
  %7828 = vmatpush.msra.mxu0 0.0
  %7829 = vmatpush.msra.mxu0 %v7620
  %7830 = vmatpush.msra.mxu0 %v7619
  %7831 = vmatpush.msra.mxu0 %v7618
  %7832 = vmatpush.msra.mxu0 %v7617
  %7833 = vmatpush.msra.mxu0 %v7616
  %7834 = vmatpush.msra.mxu0 %v7615
  %7835 = vmatpush.msra.mxu0 %v7614
  %7836 = vmatpush.msra.mxu0 %v7613
  %7837 = vmatpush.msra.mxu0 %v7612
  %7838 = vmatpush.msra.mxu0 %v7611
  %7839 = vmatpush.msra.mxu0 %v7610
  %7840 = vmatpush.msra.mxu0 %v7609
  %7841 = vmatpush.msra.mxu0 %v7608
  %7842 = vmatmul.f32.gmra.mxu0 %v5831
  %v7843 = vpop.f32.mrf.mxu0
  %v7844 = vadd.f32 %v7803, %v7843
  %7845 = vmatmul.f32.gmra.mxu0 %v5834
  %v7846 = vpop.f32.mrf.mxu0
  %v7847 = vadd.f32 %v7806, %v7846
  %7848 = vmatmul.f32.gmra.mxu0 %v5837
  %v7849 = vpop.f32.mrf.mxu0
  %v7850 = vadd.f32 %v7809, %v7849
  %7851 = vmatmul.f32.gmra.mxu0 %v5840
  %v7852 = vpop.f32.mrf.mxu0
  %v7853 = vadd.f32 %v7812, %v7852
  %7854 = vmatmul.f32.gmra.mxu0 %v5843
  %v7855 = vpop.f32.mrf.mxu0
  %v7856 = vadd.f32 %v7815, %v7855
  %7857 = vmatmul.f32.gmra.mxu0 %v5846
  %v7858 = vpop.f32.mrf.mxu0
  %v7859 = vadd.f32 %v7818, %v7858
  %7860 = vmatmul.f32.gmra.mxu0 %v5849
  %v7861 = vpop.f32.mrf.mxu0
  %v7862 = vadd.f32 %v7821, %v7861
  %7863 = vmatmul.f32.gmra.mxu0 %v5852
  %v7864 = vpop.f32.mrf.mxu0
  %v7865 = vadd.f32 %v7824, %v7864
  %7866 = vdwg.mxu0
  %v7867 = vmax.f32 %v7721, %v7844
  %v7868 = vmax.f32 %v7724, %v7847
  %v7869 = vmax.f32 %v7727, %v7850
  %v7870 = vmax.f32 %v7730, %v7853
  %v7871 = vmax.f32 %v7733, %v7856
  %v7872 = vmax.f32 %v7736, %v7859
  %v7873 = vmax.f32 %v7739, %v7862
  %v7874 = vmax.f32 %v7742, %v7865
  %v7875 = vmax.f32 %v7867, 0.0
  %v7876 = vmax.f32 %v7868, 0.0
  %v7877 = vmax.f32 %v7869, 0.0
  %v7878 = vmax.f32 %v7870, 0.0
  %v7879 = vmax.f32 %v7871, 0.0
  %v7880 = vmax.f32 %v7872, 0.0
  %v7881 = vmax.f32 %v7873, 0.0
  %v7882 = vmax.f32 %v7874, 0.0
  %v7883 = vld [vmem:[#allocation2 + $0x1f8] sm:$0xff]
  %v7884 = vld [vmem:[#allocation2 + $0x200] sm:$0xff]
  %v7885 = vld [vmem:[#allocation2 + $0x208] sm:$0xff]
  %v7886 = vld [vmem:[#allocation2 + $0x210] sm:$0xff]
  %v7887 = vld [vmem:[#allocation2 + $0x218] sm:$0xff]
  %v7888 = vld [vmem:[#allocation2 + $0x220] sm:$0xff]
  %v7889 = vld [vmem:[#allocation2 + $0x228] sm:$0xff]
  %v7890 = vld [vmem:[#allocation2 + $0x230] sm:$0xff]
  %v7891 = vld [vmem:[#allocation2 + $0x238] sm:$0xff]
  %v7892 = vld [vmem:[#allocation2 + $0x240] sm:$0xff]
  %v7893 = vld [vmem:[#allocation2 + $0x248] sm:$0xff]
  %v7894 = vld [vmem:[#allocation2 + $0x250] sm:$0xff]
  %v7895 = vld [vmem:[#allocation2 + $0x258] sm:$0xff]
  %v7896 = vld [vmem:[#allocation2 + $0x260] sm:$0xff]
  %v7897 = vld [vmem:[#allocation2 + $0x268] sm:$0xff]
  %v7898 = vld [vmem:[#allocation2 + $0x270] sm:$0xff]
  %v7899 = vld [vmem:[#allocation2 + $0x278] sm:$0xff]
  %v7900 = vld [vmem:[#allocation2 + $0x280] sm:$0xff]
  %v7901 = vld [vmem:[#allocation2 + $0x288] sm:$0xff]
  %v7902 = vld [vmem:[#allocation2 + $0x290] sm:$0xff]
  %v7903 = vld [vmem:[#allocation2 + $0x298] sm:$0xff]
  %v7904 = vld [vmem:[#allocation2 + $0x2a0] sm:$0xff]
  %v7905 = vld [vmem:[#allocation2 + $0x2a8] sm:$0xff]
  %v7906 = vld [vmem:[#allocation2 + $0x2b0] sm:$0xff]
  %v7907 = vld [vmem:[#allocation2 + $0x2b8] sm:$0xff]
  %v7908 = vld [vmem:[#allocation2 + $0x2c0] sm:$0xff]
  %v7909 = vld [vmem:[#allocation2 + $0x2c8] sm:$0xff]
  %v7910 = vld [vmem:[#allocation2 + $0x2d0] sm:$0xff]
  %v7911 = vld [vmem:[#allocation2 + $0x2d8] sm:$0xff]
  %v7912 = vld [vmem:[#allocation2 + $0x2e0] sm:$0xff]
  %v7913 = vld [vmem:[#allocation2 + $0x2e8] sm:$0xff]
  %v7914 = vld [vmem:[#allocation2 + $0x2f0] sm:$0xff]
  %v7915 = vld [vmem:[#allocation2 + $0x2f8] sm:$0xff]
  %v7916 = vld [vmem:[#allocation2 + $0x300] sm:$0xff]
  %v7917 = vld [vmem:[#allocation2 + $0x308] sm:$0xff]
  %v7918 = vld [vmem:[#allocation2 + $0x310] sm:$0xff]
  %v7919 = vld [vmem:[#allocation2 + $0x318] sm:$0xff]
  %v7920 = vld [vmem:[#allocation2 + $0x320] sm:$0xff]
  %v7921 = vld [vmem:[#allocation2 + $0x328] sm:$0xff]
  %v7922 = vld [vmem:[#allocation2 + $0x330] sm:$0xff]
  %v7923 = vld [vmem:[#allocation2 + $0x338] sm:$0xff]
  %v7924 = vld [vmem:[#allocation2 + $0x340] sm:$0xff]
  %v7925 = vld [vmem:[#allocation2 + $0x348] sm:$0xff]
  %v7926 = vld [vmem:[#allocation2 + $0x350] sm:$0xff]
  %v7927 = vld [vmem:[#allocation2 + $0x358] sm:$0xff]
  %7928 = vmatpush.msra.mxu0 %v7898
  %7929 = vmatpush.msra.mxu0 %v7897
  %7930 = vmatpush.msra.mxu0 %v7896
  %7931 = vmatpush.msra.mxu0 %v7895
  %7932 = vmatpush.msra.mxu0 %v7894
  %7933 = vmatpush.msra.mxu0 %v7893
  %7934 = vmatpush.msra.mxu0 %v7892
  %7935 = vmatpush.msra.mxu0 %v7891
  %7936 = vmatpush.msra.mxu0 %v7890
  %7937 = vmatpush.msra.mxu0 %v7889
  %7938 = vmatpush.msra.mxu0 %v7888
  %7939 = vmatpush.msra.mxu0 %v7887
  %7940 = vmatpush.msra.mxu0 %v7886
  %7941 = vmatpush.msra.mxu0 %v7885
  %7942 = vmatpush.msra.mxu0 %v7884
  %7943 = vmatpush.msra.mxu0 %v7883
  %7944 = vmatmul.f32.gmra.mxu0 %v89
  %v7945 = vpop.f32.mrf.mxu0
  %v7946 = vadd.f32 %v5645, %v7945
  %7947 = vmatmul.f32.gmra.mxu0 %v92
  %v7948 = vpop.f32.mrf.mxu0
  %v7949 = vadd.f32 %v5650, %v7948
  %7950 = vmatmul.f32.gmra.mxu0 %v95
  %v7951 = vpop.f32.mrf.mxu0
  %v7952 = vadd.f32 %v5655, %v7951
  %7953 = vmatmul.f32.gmra.mxu0 %v98
  %v7954 = vpop.f32.mrf.mxu0
  %v7955 = vadd.f32 %v5660, %v7954
  %7956 = vmatmul.f32.gmra.mxu0 %v101
  %v7957 = vpop.f32.mrf.mxu0
  %v7958 = vadd.f32 %v5665, %v7957
  %7959 = vmatmul.f32.gmra.mxu0 %v104
  %v7960 = vpop.f32.mrf.mxu0
  %v7961 = vadd.f32 %v5670, %v7960
  %7962 = vmatmul.f32.gmra.mxu0 %v107
  %v7963 = vpop.f32.mrf.mxu0
  %v7964 = vadd.f32 %v5675, %v7963
  %7965 = vmatmul.f32.gmra.mxu0 %v110
  %v7966 = vpop.f32.mrf.mxu0
  %v7967 = vadd.f32 %v5680, %v7966
  %7968 = vdwg.mxu0
  %7969 = vmatpush.msra.mxu0 %v7914
  %7970 = vmatpush.msra.mxu0 %v7913
  %7971 = vmatpush.msra.mxu0 %v7912
  %7972 = vmatpush.msra.mxu0 %v7911
  %7973 = vmatpush.msra.mxu0 %v7910
  %7974 = vmatpush.msra.mxu0 %v7909
  %7975 = vmatpush.msra.mxu0 %v7908
  %7976 = vmatpush.msra.mxu0 %v7907
  %7977 = vmatpush.msra.mxu0 %v7906
  %7978 = vmatpush.msra.mxu0 %v7905
  %7979 = vmatpush.msra.mxu0 %v7904
  %7980 = vmatpush.msra.mxu0 %v7903
  %7981 = vmatpush.msra.mxu0 %v7902
  %7982 = vmatpush.msra.mxu0 %v7901
  %7983 = vmatpush.msra.mxu0 %v7900
  %7984 = vmatpush.msra.mxu0 %v7899
  %7985 = vmatmul.f32.gmra.mxu0 %v90
  %v7986 = vpop.f32.mrf.mxu0
  %v7987 = vadd.f32 %v7946, %v7986
  %7988 = vmatmul.f32.gmra.mxu0 %v93
  %v7989 = vpop.f32.mrf.mxu0
  %v7990 = vadd.f32 %v7949, %v7989
  %7991 = vmatmul.f32.gmra.mxu0 %v96
  %v7992 = vpop.f32.mrf.mxu0
  %v7993 = vadd.f32 %v7952, %v7992
  %7994 = vmatmul.f32.gmra.mxu0 %v99
  %v7995 = vpop.f32.mrf.mxu0
  %v7996 = vadd.f32 %v7955, %v7995
  %7997 = vmatmul.f32.gmra.mxu0 %v102
  %v7998 = vpop.f32.mrf.mxu0
  %v7999 = vadd.f32 %v7958, %v7998
  %8000 = vmatmul.f32.gmra.mxu0 %v105
  %v8001 = vpop.f32.mrf.mxu0
  %v8002 = vadd.f32 %v7961, %v8001
  %8003 = vmatmul.f32.gmra.mxu0 %v108
  %v8004 = vpop.f32.mrf.mxu0
  %v8005 = vadd.f32 %v7964, %v8004
  %8006 = vmatmul.f32.gmra.mxu0 %v111
  %v8007 = vpop.f32.mrf.mxu0
  %v8008 = vadd.f32 %v7967, %v8007
  %8009 = vdwg.mxu0
  %8010 = vmatpush.msra.mxu0 0.0
  %8011 = vmatpush.msra.mxu0 0.0
  %8012 = vmatpush.msra.mxu0 0.0
  %8013 = vmatpush.msra.mxu0 %v7927
  %8014 = vmatpush.msra.mxu0 %v7926
  %8015 = vmatpush.msra.mxu0 %v7925
  %8016 = vmatpush.msra.mxu0 %v7924
  %8017 = vmatpush.msra.mxu0 %v7923
  %8018 = vmatpush.msra.mxu0 %v7922
  %8019 = vmatpush.msra.mxu0 %v7921
  %8020 = vmatpush.msra.mxu0 %v7920
  %8021 = vmatpush.msra.mxu0 %v7919
  %8022 = vmatpush.msra.mxu0 %v7918
  %8023 = vmatpush.msra.mxu0 %v7917
  %8024 = vmatpush.msra.mxu0 %v7916
  %8025 = vmatpush.msra.mxu0 %v7915
  %8026 = vmatmul.f32.gmra.mxu0 %v5684
  %v8027 = vpop.f32.mrf.mxu0
  %v8028 = vadd.f32 %v7987, %v8027
  %8029 = vmatmul.f32.gmra.mxu0 %v5687
  %v8030 = vpop.f32.mrf.mxu0
  %v8031 = vadd.f32 %v7990, %v8030
  %8032 = vmatmul.f32.gmra.mxu0 %v5690
  %v8033 = vpop.f32.mrf.mxu0
  %v8034 = vadd.f32 %v7993, %v8033
  %8035 = vmatmul.f32.gmra.mxu0 %v5693
  %v8036 = vpop.f32.mrf.mxu0
  %v8037 = vadd.f32 %v7996, %v8036
  %8038 = vmatmul.f32.gmra.mxu0 %v5696
  %v8039 = vpop.f32.mrf.mxu0
  %v8040 = vadd.f32 %v7999, %v8039
  %8041 = vmatmul.f32.gmra.mxu0 %v5699
  %v8042 = vpop.f32.mrf.mxu0
  %v8043 = vadd.f32 %v8002, %v8042
  %8044 = vmatmul.f32.gmra.mxu0 %v5702
  %v8045 = vpop.f32.mrf.mxu0
  %v8046 = vadd.f32 %v8005, %v8045
  %8047 = vmatmul.f32.gmra.mxu0 %v5705
  %v8048 = vpop.f32.mrf.mxu0
  %v8049 = vadd.f32 %v8008, %v8048
  %8050 = vdwg.mxu0
  %8051 = vmatpush.msra.mxu0 %v7898
  %8052 = vmatpush.msra.mxu0 %v7897
  %8053 = vmatpush.msra.mxu0 %v7896
  %8054 = vmatpush.msra.mxu0 %v7895
  %8055 = vmatpush.msra.mxu0 %v7894
  %8056 = vmatpush.msra.mxu0 %v7893
  %8057 = vmatpush.msra.mxu0 %v7892
  %8058 = vmatpush.msra.mxu0 %v7891
  %8059 = vmatpush.msra.mxu0 %v7890
  %8060 = vmatpush.msra.mxu0 %v7889
  %8061 = vmatpush.msra.mxu0 %v7888
  %8062 = vmatpush.msra.mxu0 %v7887
  %8063 = vmatpush.msra.mxu0 %v7886
  %8064 = vmatpush.msra.mxu0 %v7885
  %8065 = vmatpush.msra.mxu0 %v7884
  %8066 = vmatpush.msra.mxu0 %v7883
  %8067 = vmatmul.f32.gmra.mxu0 %v113
  %v8068 = vpop.f32.mrf.mxu0
  %v8069 = vadd.f32 %v5645, %v8068
  %8070 = vmatmul.f32.gmra.mxu0 %v116
  %v8071 = vpop.f32.mrf.mxu0
  %v8072 = vadd.f32 %v5650, %v8071
  %8073 = vmatmul.f32.gmra.mxu0 %v119
  %v8074 = vpop.f32.mrf.mxu0
  %v8075 = vadd.f32 %v5655, %v8074
  %8076 = vmatmul.f32.gmra.mxu0 %v122
  %v8077 = vpop.f32.mrf.mxu0
  %v8078 = vadd.f32 %v5660, %v8077
  %8079 = vmatmul.f32.gmra.mxu0 %v125
  %v8080 = vpop.f32.mrf.mxu0
  %v8081 = vadd.f32 %v5665, %v8080
  %8082 = vmatmul.f32.gmra.mxu0 %v128
  %v8083 = vpop.f32.mrf.mxu0
  %v8084 = vadd.f32 %v5670, %v8083
  %8085 = vmatmul.f32.gmra.mxu0 %v131
  %v8086 = vpop.f32.mrf.mxu0
  %v8087 = vadd.f32 %v5675, %v8086
  %8088 = vmatmul.f32.gmra.mxu0 %v134
  %v8089 = vpop.f32.mrf.mxu0
  %v8090 = vadd.f32 %v5680, %v8089
  %8091 = vdwg.mxu0
  %8092 = vmatpush.msra.mxu0 %v7914
  %8093 = vmatpush.msra.mxu0 %v7913
  %8094 = vmatpush.msra.mxu0 %v7912
  %8095 = vmatpush.msra.mxu0 %v7911
  %8096 = vmatpush.msra.mxu0 %v7910
  %8097 = vmatpush.msra.mxu0 %v7909
  %8098 = vmatpush.msra.mxu0 %v7908
  %8099 = vmatpush.msra.mxu0 %v7907
  %8100 = vmatpush.msra.mxu0 %v7906
  %8101 = vmatpush.msra.mxu0 %v7905
  %8102 = vmatpush.msra.mxu0 %v7904
  %8103 = vmatpush.msra.mxu0 %v7903
  %8104 = vmatpush.msra.mxu0 %v7902
  %8105 = vmatpush.msra.mxu0 %v7901
  %8106 = vmatpush.msra.mxu0 %v7900
  %8107 = vmatpush.msra.mxu0 %v7899
  %8108 = vmatmul.f32.gmra.mxu0 %v114
  %v8109 = vpop.f32.mrf.mxu0
  %v8110 = vadd.f32 %v8069, %v8109
  %8111 = vmatmul.f32.gmra.mxu0 %v117
  %v8112 = vpop.f32.mrf.mxu0
  %v8113 = vadd.f32 %v8072, %v8112
  %8114 = vmatmul.f32.gmra.mxu0 %v120
  %v8115 = vpop.f32.mrf.mxu0
  %v8116 = vadd.f32 %v8075, %v8115
  %8117 = vmatmul.f32.gmra.mxu0 %v123
  %v8118 = vpop.f32.mrf.mxu0
  %v8119 = vadd.f32 %v8078, %v8118
  %8120 = vmatmul.f32.gmra.mxu0 %v126
  %v8121 = vpop.f32.mrf.mxu0
  %v8122 = vadd.f32 %v8081, %v8121
  %8123 = vmatmul.f32.gmra.mxu0 %v129
  %v8124 = vpop.f32.mrf.mxu0
  %v8125 = vadd.f32 %v8084, %v8124
  %8126 = vmatmul.f32.gmra.mxu0 %v132
  %v8127 = vpop.f32.mrf.mxu0
  %v8128 = vadd.f32 %v8087, %v8127
  %8129 = vmatmul.f32.gmra.mxu0 %v135
  %v8130 = vpop.f32.mrf.mxu0
  %v8131 = vadd.f32 %v8090, %v8130
  %8132 = vdwg.mxu0
  %8133 = vmatpush.msra.mxu0 0.0
  %8134 = vmatpush.msra.mxu0 0.0
  %8135 = vmatpush.msra.mxu0 0.0
  %8136 = vmatpush.msra.mxu0 %v7927
  %8137 = vmatpush.msra.mxu0 %v7926
  %8138 = vmatpush.msra.mxu0 %v7925
  %8139 = vmatpush.msra.mxu0 %v7924
  %8140 = vmatpush.msra.mxu0 %v7923
  %8141 = vmatpush.msra.mxu0 %v7922
  %8142 = vmatpush.msra.mxu0 %v7921
  %8143 = vmatpush.msra.mxu0 %v7920
  %8144 = vmatpush.msra.mxu0 %v7919
  %8145 = vmatpush.msra.mxu0 %v7918
  %8146 = vmatpush.msra.mxu0 %v7917
  %8147 = vmatpush.msra.mxu0 %v7916
  %8148 = vmatpush.msra.mxu0 %v7915
  %8149 = vmatmul.f32.gmra.mxu0 %v5831
  %v8150 = vpop.f32.mrf.mxu0
  %v8151 = vadd.f32 %v8110, %v8150
  %8152 = vmatmul.f32.gmra.mxu0 %v5834
  %v8153 = vpop.f32.mrf.mxu0
  %v8154 = vadd.f32 %v8113, %v8153
  %8155 = vmatmul.f32.gmra.mxu0 %v5837
  %v8156 = vpop.f32.mrf.mxu0
  %v8157 = vadd.f32 %v8116, %v8156
  %8158 = vmatmul.f32.gmra.mxu0 %v5840
  %v8159 = vpop.f32.mrf.mxu0
  %v8160 = vadd.f32 %v8119, %v8159
  %8161 = vmatmul.f32.gmra.mxu0 %v5843
  %v8162 = vpop.f32.mrf.mxu0
  %v8163 = vadd.f32 %v8122, %v8162
  %8164 = vmatmul.f32.gmra.mxu0 %v5846
  %v8165 = vpop.f32.mrf.mxu0
  %v8166 = vadd.f32 %v8125, %v8165
  %8167 = vmatmul.f32.gmra.mxu0 %v5849
  %v8168 = vpop.f32.mrf.mxu0
  %v8169 = vadd.f32 %v8128, %v8168
  %8170 = vmatmul.f32.gmra.mxu0 %v5852
  %v8171 = vpop.f32.mrf.mxu0
  %v8172 = vadd.f32 %v8131, %v8171
  %8173 = vdwg.mxu0
  %v8174 = vmax.f32 %v8028, %v8151
  %v8175 = vmax.f32 %v8031, %v8154
  %v8176 = vmax.f32 %v8034, %v8157
  %v8177 = vmax.f32 %v8037, %v8160
  %v8178 = vmax.f32 %v8040, %v8163
  %v8179 = vmax.f32 %v8043, %v8166
  %v8180 = vmax.f32 %v8046, %v8169
  %v8181 = vmax.f32 %v8049, %v8172
  %v8182 = vmax.f32 %v8174, 0.0
  %v8183 = vmax.f32 %v8175, 0.0
  %v8184 = vmax.f32 %v8176, 0.0
  %v8185 = vmax.f32 %v8177, 0.0
  %v8186 = vmax.f32 %v8178, 0.0
  %v8187 = vmax.f32 %v8179, 0.0
  %v8188 = vmax.f32 %v8180, 0.0
  %v8189 = vmax.f32 %v8181, 0.0
  %v8190 = vmax.f32 %v7875, %v8182
  %v8191 = vmax.f32 %v7876, %v8183
  %v8192 = vmax.f32 %v7877, %v8184
  %v8193 = vmax.f32 %v7878, %v8185
  %v8194 = vmax.f32 %v7879, %v8186
  %v8195 = vmax.f32 %v7880, %v8187
  %v8196 = vmax.f32 %v7881, %v8188
  %v8197 = vmax.f32 %v7882, %v8189
  %8198 = vst [vmem:[#allocation3 + $0xc0] sm:$0xff] %v8190
  %8199 = vst [vmem:[#allocation3 + $0xc8] sm:$0xff] %v8191
  %8200 = vst [vmem:[#allocation3 + $0xd0] sm:$0xff] %v8192
  %8201 = vst [vmem:[#allocation3 + $0xd8] sm:$0xff] %v8193
  %8202 = vst [vmem:[#allocation3 + $0xe0] sm:$0xff] %v8194
  %8203 = vst [vmem:[#allocation3 + $0xe8] sm:$0xff] %v8195
  %8204 = vst [vmem:[#allocation3 + $0xf0] sm:$0xff] %v8196
  %8205 = vst [vmem:[#allocation3 + $0xf8] sm:$0xff] %v8197
  %v8206 = vld [vmem:[#allocation3] sm:$0xff]
  %v8207 = vld [vmem:[#allocation3 + $0x8] sm:$0xff]
  %v8208 = vld [vmem:[#allocation3 + $0x10] sm:$0xff]
  %v8209 = vld [vmem:[#allocation3 + $0x18] sm:$0xff]
  %v8210 = vld [vmem:[#allocation3 + $0x20] sm:$0xff]
  %v8211 = vld [vmem:[#allocation3 + $0x28] sm:$0xff]
  %v8212 = vld [vmem:[#allocation3 + $0x30] sm:$0xff]
  %v8213 = vld [vmem:[#allocation3 + $0x38] sm:$0xff]
  %v8214 = vld [vmem:[#allocation3 + $0x40] sm:$0xff]
  %v8215 = vld [vmem:[#allocation3 + $0x48] sm:$0xff]
  %v8216 = vld [vmem:[#allocation3 + $0x50] sm:$0xff]
  %v8217 = vld [vmem:[#allocation3 + $0x58] sm:$0xff]
  %v8218 = vld [vmem:[#allocation3 + $0x60] sm:$0xff]
  %v8219 = vld [vmem:[#allocation3 + $0x68] sm:$0xff]
  %v8220 = vld [vmem:[#allocation3 + $0x70] sm:$0xff]
  %v8221 = vld [vmem:[#allocation3 + $0x78] sm:$0xff]
  %v8222 = vld [vmem:[#allocation3 + $0x80] sm:$0xff]
  %v8223 = vld [vmem:[#allocation3 + $0x88] sm:$0xff]
  %v8224 = vld [vmem:[#allocation3 + $0x90] sm:$0xff]
  %v8225 = vld [vmem:[#allocation3 + $0x98] sm:$0xff]
  %v8226 = vld [vmem:[#allocation3 + $0xa0] sm:$0xff]
  %v8227 = vld [vmem:[#allocation3 + $0xa8] sm:$0xff]
  %v8228 = vld [vmem:[#allocation3 + $0xb0] sm:$0xff]
  %v8229 = vld [vmem:[#allocation3 + $0xb8] sm:$0xff]
  %v8230 = vld [vmem:[#allocation3 + $0xc0] sm:$0xff]
  %v8231 = vld [vmem:[#allocation3 + $0xc8] sm:$0xff]
  %v8232 = vld [vmem:[#allocation3 + $0xd0] sm:$0xff]
  %v8233 = vld [vmem:[#allocation3 + $0xd8] sm:$0xff]
  %v8234 = vld [vmem:[#allocation3 + $0xe0] sm:$0xff]
  %v8235 = vld [vmem:[#allocation3 + $0xe8] sm:$0xff]
  %v8236 = vld [vmem:[#allocation3 + $0xf0] sm:$0xff]
  %v8237 = vld [vmem:[#allocation3 + $0xf8] sm:$0xff]
  %v8238 = vld [vmem:[%s7] sm:$0xff]
  %v8239 = vld [vmem:[%s7 + $0x8] sm:$0xff]
  %v8240 = vld [vmem:[%s7 + $0x10] sm:$0xff]
  %v8241 = vld [vmem:[%s7 + $0x18] sm:$0xff]
  %v8242 = vld [vmem:[%s7 + $0x20] sm:$0xff]
  %v8243 = vld [vmem:[%s7 + $0x28] sm:$0xff]
  %v8244 = vld [vmem:[%s7 + $0x30] sm:$0xff]
  %v8245 = vld [vmem:[%s7 + $0x38] sm:$0xff]
  %v8246 = vld [vmem:[%s7 + $0x40] sm:$0xff]
  %v8247 = vld [vmem:[%s7 + $0x48] sm:$0xff]
  %v8248 = vld [vmem:[%s7 + $0x50] sm:$0xff]
  %v8249 = vld [vmem:[%s7 + $0x58] sm:$0xff]
  %v8250 = vld [vmem:[%s7 + $0x60] sm:$0xff]
  %v8251 = vld [vmem:[%s7 + $0x68] sm:$0xff]
  %v8252 = vld [vmem:[%s7 + $0x70] sm:$0xff]
  %v8253 = vld [vmem:[%s7 + $0x78] sm:$0xff]
  %v8254 = vld [vmem:[%s7 + $0x80] sm:$0xff]
  %v8255 = vld [vmem:[%s7 + $0x88] sm:$0xff]
  %v8256 = vld [vmem:[%s7 + $0x90] sm:$0xff]
  %v8257 = vld [vmem:[%s7 + $0x98] sm:$0xff]
  %v8258 = vld [vmem:[%s7 + $0xa0] sm:$0xff]
  %v8259 = vld [vmem:[%s7 + $0xa8] sm:$0xff]
  %v8260 = vld [vmem:[%s7 + $0xb0] sm:$0xff]
  %v8261 = vld [vmem:[%s7 + $0xb8] sm:$0xff]
  %v8262 = vld [vmem:[%s7 + $0xc0] sm:$0xff]
  %v8263 = vld [vmem:[%s7 + $0xc8] sm:$0xff]
  %v8264 = vld [vmem:[%s7 + $0xd0] sm:$0xff]
  %v8265 = vld [vmem:[%s7 + $0xd8] sm:$0xff]
  %v8266 = vld [vmem:[%s7 + $0xe0] sm:$0xff]
  %v8267 = vld [vmem:[%s7 + $0xe8] sm:$0xff]
  %v8268 = vld [vmem:[%s7 + $0xf0] sm:$0xff]
  %v8269 = vld [vmem:[%s7 + $0xf8] sm:$0xff]
  %v8270 = vld [vmem:[%s8] sm:$0xff]
  %v8271 = vld [vmem:[%s8 + $0x8] sm:$0xff]
  %v8272 = vld [vmem:[%s8 + $0x10] sm:$0xff]
  %v8273 = vld [vmem:[%s8 + $0x18] sm:$0xff]
  %v8274 = vld [vmem:[%s8 + $0x20] sm:$0xff]
  %v8275 = vld [vmem:[%s8 + $0x28] sm:$0xff]
  %v8276 = vld [vmem:[%s8 + $0x30] sm:$0xff]
  %v8277 = vld [vmem:[%s8 + $0x38] sm:$0xff]
  %v8278 = vld [vmem:[%s8 + $0x40] sm:$0xff]
  %v8279 = vld [vmem:[%s8 + $0x48] sm:$0xff]
  %v8280 = vld [vmem:[%s8 + $0x50] sm:$0xff]
  %v8281 = vld [vmem:[%s8 + $0x58] sm:$0xff]
  %v8282 = vld [vmem:[%s8 + $0x60] sm:$0xff]
  %v8283 = vld [vmem:[%s8 + $0x68] sm:$0xff]
  %v8284 = vld [vmem:[%s8 + $0x70] sm:$0xff]
  %v8285 = vld [vmem:[%s8 + $0x78] sm:$0xff]
  %8287 = vset.pattern.permute.xlu0 0
  %8288 = vperm.xlu0 %8287, %v8270
  %v8289 = vpop.permute.xlu0 %8288
  %8292 = vset.pattern.permute.xlu0 0
  %8293 = vperm.xlu0 %8292, %v8271
  %v8294 = vpop.permute.xlu0 %8293
  %8297 = vset.pattern.permute.xlu0 0
  %8298 = vperm.xlu0 %8297, %v8272
  %v8299 = vpop.permute.xlu0 %8298
  %8302 = vset.pattern.permute.xlu0 0
  %8303 = vperm.xlu0 %8302, %v8273
  %v8304 = vpop.permute.xlu0 %8303
  %8307 = vset.pattern.permute.xlu0 0
  %8308 = vperm.xlu0 %8307, %v8274
  %v8309 = vpop.permute.xlu0 %8308
  %8312 = vset.pattern.permute.xlu0 0
  %8313 = vperm.xlu0 %8312, %v8275
  %v8314 = vpop.permute.xlu0 %8313
  %8317 = vset.pattern.permute.xlu0 0
  %8318 = vperm.xlu0 %8317, %v8276
  %v8319 = vpop.permute.xlu0 %8318
  %8322 = vset.pattern.permute.xlu0 0
  %8323 = vperm.xlu0 %8322, %v8277
  %v8324 = vpop.permute.xlu0 %8323
  %8327 = vset.pattern.permute.xlu0 0
  %8328 = vperm.xlu0 %8327, %v8278
  %v8329 = vpop.permute.xlu0 %8328
  %8332 = vset.pattern.permute.xlu0 0
  %8333 = vperm.xlu0 %8332, %v8279
  %v8334 = vpop.permute.xlu0 %8333
  %8337 = vset.pattern.permute.xlu0 0
  %8338 = vperm.xlu0 %8337, %v8280
  %v8339 = vpop.permute.xlu0 %8338
  %8342 = vset.pattern.permute.xlu0 0
  %8343 = vperm.xlu0 %8342, %v8281
  %v8344 = vpop.permute.xlu0 %8343
  %8347 = vset.pattern.permute.xlu0 0
  %8348 = vperm.xlu0 %8347, %v8282
  %v8349 = vpop.permute.xlu0 %8348
  %8352 = vset.pattern.permute.xlu0 0
  %8353 = vperm.xlu0 %8352, %v8283
  %v8354 = vpop.permute.xlu0 %8353
  %8357 = vset.pattern.permute.xlu0 0
  %8358 = vperm.xlu0 %8357, %v8284
  %v8359 = vpop.permute.xlu0 %8358
  %8362 = vset.pattern.permute.xlu0 0
  %8363 = vperm.xlu0 %8362, %v8285
  %v8364 = vpop.permute.xlu0 %8363
  %8366 = vmatpush.msra.mxu0 %v8221
  %8367 = vmatpush.msra.mxu0 %v8220
  %8368 = vmatpush.msra.mxu0 %v8219
  %8369 = vmatpush.msra.mxu0 %v8218
  %8370 = vmatpush.msra.mxu0 %v8217
  %8371 = vmatpush.msra.mxu0 %v8216
  %8372 = vmatpush.msra.mxu0 %v8215
  %8373 = vmatpush.msra.mxu0 %v8214
  %8374 = vmatpush.msra.mxu0 %v8213
  %8375 = vmatpush.msra.mxu0 %v8212
  %8376 = vmatpush.msra.mxu0 %v8211
  %8377 = vmatpush.msra.mxu0 %v8210
  %8378 = vmatpush.msra.mxu0 %v8209
  %8379 = vmatpush.msra.mxu0 %v8208
  %8380 = vmatpush.msra.mxu0 %v8207
  %8381 = vmatpush.msra.mxu0 %v8206
  %8382 = vmatmul.f32.gmra.mxu0 %v8238
  %v8383 = vpop.f32.mrf.mxu0
  %v8384 = vadd.f32 %v8289, %v8383
  %8385 = vmatmul.f32.gmra.mxu0 %v8240
  %v8386 = vpop.f32.mrf.mxu0
  %v8387 = vadd.f32 %v8294, %v8386
  %8388 = vmatmul.f32.gmra.mxu0 %v8242
  %v8389 = vpop.f32.mrf.mxu0
  %v8390 = vadd.f32 %v8299, %v8389
  %8391 = vmatmul.f32.gmra.mxu0 %v8244
  %v8392 = vpop.f32.mrf.mxu0
  %v8393 = vadd.f32 %v8304, %v8392
  %8394 = vmatmul.f32.gmra.mxu0 %v8246
  %v8395 = vpop.f32.mrf.mxu0
  %v8396 = vadd.f32 %v8309, %v8395
  %8397 = vmatmul.f32.gmra.mxu0 %v8248
  %v8398 = vpop.f32.mrf.mxu0
  %v8399 = vadd.f32 %v8314, %v8398
  %8400 = vmatmul.f32.gmra.mxu0 %v8250
  %v8401 = vpop.f32.mrf.mxu0
  %v8402 = vadd.f32 %v8319, %v8401
  %8403 = vmatmul.f32.gmra.mxu0 %v8252
  %v8404 = vpop.f32.mrf.mxu0
  %v8405 = vadd.f32 %v8324, %v8404
  %8406 = vmatmul.f32.gmra.mxu0 %v8254
  %v8407 = vpop.f32.mrf.mxu0
  %v8408 = vadd.f32 %v8329, %v8407
  %8409 = vmatmul.f32.gmra.mxu0 %v8256
  %v8410 = vpop.f32.mrf.mxu0
  %v8411 = vadd.f32 %v8334, %v8410
  %8412 = vmatmul.f32.gmra.mxu0 %v8258
  %v8413 = vpop.f32.mrf.mxu0
  %v8414 = vadd.f32 %v8339, %v8413
  %8415 = vmatmul.f32.gmra.mxu0 %v8260
  %v8416 = vpop.f32.mrf.mxu0
  %v8417 = vadd.f32 %v8344, %v8416
  %8418 = vmatmul.f32.gmra.mxu0 %v8262
  %v8419 = vpop.f32.mrf.mxu0
  %v8420 = vadd.f32 %v8349, %v8419
  %8421 = vmatmul.f32.gmra.mxu0 %v8264
  %v8422 = vpop.f32.mrf.mxu0
  %v8423 = vadd.f32 %v8354, %v8422
  %8424 = vmatmul.f32.gmra.mxu0 %v8266
  %v8425 = vpop.f32.mrf.mxu0
  %v8426 = vadd.f32 %v8359, %v8425
  %8427 = vmatmul.f32.gmra.mxu0 %v8268
  %v8428 = vpop.f32.mrf.mxu0
  %v8429 = vadd.f32 %v8364, %v8428
  %8430 = vdwg.mxu0
  %8431 = vmatpush.msra.mxu0 %v8237
  %8432 = vmatpush.msra.mxu0 %v8236
  %8433 = vmatpush.msra.mxu0 %v8235
  %8434 = vmatpush.msra.mxu0 %v8234
  %8435 = vmatpush.msra.mxu0 %v8233
  %8436 = vmatpush.msra.mxu0 %v8232
  %8437 = vmatpush.msra.mxu0 %v8231
  %8438 = vmatpush.msra.mxu0 %v8230
  %8439 = vmatpush.msra.mxu0 %v8229
  %8440 = vmatpush.msra.mxu0 %v8228
  %8441 = vmatpush.msra.mxu0 %v8227
  %8442 = vmatpush.msra.mxu0 %v8226
  %8443 = vmatpush.msra.mxu0 %v8225
  %8444 = vmatpush.msra.mxu0 %v8224
  %8445 = vmatpush.msra.mxu0 %v8223
  %8446 = vmatpush.msra.mxu0 %v8222
  %8447 = vmatmul.f32.gmra.mxu0 %v8239
  %v8448 = vpop.f32.mrf.mxu0
  %v8449 = vadd.f32 %v8384, %v8448
  %8450 = vmatmul.f32.gmra.mxu0 %v8241
  %v8451 = vpop.f32.mrf.mxu0
  %v8452 = vadd.f32 %v8387, %v8451
  %8453 = vmatmul.f32.gmra.mxu0 %v8243
  %v8454 = vpop.f32.mrf.mxu0
  %v8455 = vadd.f32 %v8390, %v8454
  %8456 = vmatmul.f32.gmra.mxu0 %v8245
  %v8457 = vpop.f32.mrf.mxu0
  %v8458 = vadd.f32 %v8393, %v8457
  %8459 = vmatmul.f32.gmra.mxu0 %v8247
  %v8460 = vpop.f32.mrf.mxu0
  %v8461 = vadd.f32 %v8396, %v8460
  %8462 = vmatmul.f32.gmra.mxu0 %v8249
  %v8463 = vpop.f32.mrf.mxu0
  %v8464 = vadd.f32 %v8399, %v8463
  %8465 = vmatmul.f32.gmra.mxu0 %v8251
  %v8466 = vpop.f32.mrf.mxu0
  %v8467 = vadd.f32 %v8402, %v8466
  %8468 = vmatmul.f32.gmra.mxu0 %v8253
  %v8469 = vpop.f32.mrf.mxu0
  %v8470 = vadd.f32 %v8405, %v8469
  %8471 = vmatmul.f32.gmra.mxu0 %v8255
  %v8472 = vpop.f32.mrf.mxu0
  %v8473 = vadd.f32 %v8408, %v8472
  %8474 = vmatmul.f32.gmra.mxu0 %v8257
  %v8475 = vpop.f32.mrf.mxu0
  %v8476 = vadd.f32 %v8411, %v8475
  %8477 = vmatmul.f32.gmra.mxu0 %v8259
  %v8478 = vpop.f32.mrf.mxu0
  %v8479 = vadd.f32 %v8414, %v8478
  %8480 = vmatmul.f32.gmra.mxu0 %v8261
  %v8481 = vpop.f32.mrf.mxu0
  %v8482 = vadd.f32 %v8417, %v8481
  %8483 = vmatmul.f32.gmra.mxu0 %v8263
  %v8484 = vpop.f32.mrf.mxu0
  %v8485 = vadd.f32 %v8420, %v8484
  %8486 = vmatmul.f32.gmra.mxu0 %v8265
  %v8487 = vpop.f32.mrf.mxu0
  %v8488 = vadd.f32 %v8423, %v8487
  %8489 = vmatmul.f32.gmra.mxu0 %v8267
  %v8490 = vpop.f32.mrf.mxu0
  %v8491 = vadd.f32 %v8426, %v8490
  %8492 = vmatmul.f32.gmra.mxu0 %v8269
  %v8493 = vpop.f32.mrf.mxu0
  %v8494 = vadd.f32 %v8429, %v8493
  %8495 = vdwg.mxu0
  %v8496 = vmax.f32 %v8449, 0.0
  %v8497 = vmax.f32 %v8452, 0.0
  %v8498 = vmax.f32 %v8455, 0.0
  %v8499 = vmax.f32 %v8458, 0.0
  %v8500 = vmax.f32 %v8461, 0.0
  %v8501 = vmax.f32 %v8464, 0.0
  %v8502 = vmax.f32 %v8467, 0.0
  %v8503 = vmax.f32 %v8470, 0.0
  %v8504 = vmax.f32 %v8473, 0.0
  %v8505 = vmax.f32 %v8476, 0.0
  %v8506 = vmax.f32 %v8479, 0.0
  %v8507 = vmax.f32 %v8482, 0.0
  %v8508 = vmax.f32 %v8485, 0.0
  %v8509 = vmax.f32 %v8488, 0.0
  %v8510 = vmax.f32 %v8491, 0.0
  %v8511 = vmax.f32 %v8494, 0.0
  %v8512 = vld [vmem:[%s9] sm:$0xff]
  %v8513 = vld [vmem:[%s9 + $0x8] sm:$0xff]
  %v8514 = vld [vmem:[%s9 + $0x10] sm:$0xff]
  %v8515 = vld [vmem:[%s9 + $0x18] sm:$0xff]
  %v8516 = vld [vmem:[%s9 + $0x20] sm:$0xff]
  %v8517 = vld [vmem:[%s9 + $0x28] sm:$0xff]
  %v8518 = vld [vmem:[%s9 + $0x30] sm:$0xff]
  %v8519 = vld [vmem:[%s9 + $0x38] sm:$0xff]
  %v8520 = vld [vmem:[%s9 + $0x40] sm:$0xff]
  %v8521 = vld [vmem:[%s9 + $0x48] sm:$0xff]
  %v8522 = vld [vmem:[%s9 + $0x50] sm:$0xff]
  %v8523 = vld [vmem:[%s9 + $0x58] sm:$0xff]
  %v8524 = vld [vmem:[%s9 + $0x60] sm:$0xff]
  %v8525 = vld [vmem:[%s9 + $0x68] sm:$0xff]
  %v8526 = vld [vmem:[%s9 + $0x70] sm:$0xff]
  %v8527 = vld [vmem:[%s9 + $0x78] sm:$0xff]
  %v8528 = vld [vmem:[%s10] sm:$0xff]
  %v8529 = vld [vmem:[%s10 + $0x8] sm:$0xff]
  %v8530 = vld [vmem:[%s10 + $0x10] sm:$0xff]
  %v8531 = vld [vmem:[%s10 + $0x18] sm:$0xff]
  %v8532 = vld [vmem:[%s10 + $0x20] sm:$0xff]
  %v8533 = vld [vmem:[%s10 + $0x28] sm:$0xff]
  %v8534 = vld [vmem:[%s10 + $0x30] sm:$0xff]
  %v8535 = vld [vmem:[%s10 + $0x38] sm:$0xff]
  %v8536 = vld [vmem:[%s10 + $0x40] sm:$0xff]
  %v8537 = vld [vmem:[%s10 + $0x48] sm:$0xff]
  %v8538 = vld [vmem:[%s10 + $0x50] sm:$0xff]
  %v8539 = vld [vmem:[%s10 + $0x58] sm:$0xff]
  %v8540 = vld [vmem:[%s10 + $0x60] sm:$0xff]
  %v8541 = vld [vmem:[%s10 + $0x68] sm:$0xff]
  %v8542 = vld [vmem:[%s10 + $0x70] sm:$0xff]
  %v8543 = vld [vmem:[%s10 + $0x78] sm:$0xff]
  %8545 = vset.pattern.permute.xlu0 0
  %8546 = vperm.xlu0 %8545, %v8528
  %v8547 = vpop.permute.xlu0 %8546
  %8550 = vset.pattern.permute.xlu0 0
  %8551 = vperm.xlu0 %8550, %v8529
  %v8552 = vpop.permute.xlu0 %8551
  %8555 = vset.pattern.permute.xlu0 0
  %8556 = vperm.xlu0 %8555, %v8530
  %v8557 = vpop.permute.xlu0 %8556
  %8560 = vset.pattern.permute.xlu0 0
  %8561 = vperm.xlu0 %8560, %v8531
  %v8562 = vpop.permute.xlu0 %8561
  %8565 = vset.pattern.permute.xlu0 0
  %8566 = vperm.xlu0 %8565, %v8532
  %v8567 = vpop.permute.xlu0 %8566
  %8570 = vset.pattern.permute.xlu0 0
  %8571 = vperm.xlu0 %8570, %v8533
  %v8572 = vpop.permute.xlu0 %8571
  %8575 = vset.pattern.permute.xlu0 0
  %8576 = vperm.xlu0 %8575, %v8534
  %v8577 = vpop.permute.xlu0 %8576
  %8580 = vset.pattern.permute.xlu0 0
  %8581 = vperm.xlu0 %8580, %v8535
  %v8582 = vpop.permute.xlu0 %8581
  %8585 = vset.pattern.permute.xlu0 0
  %8586 = vperm.xlu0 %8585, %v8536
  %v8587 = vpop.permute.xlu0 %8586
  %8590 = vset.pattern.permute.xlu0 0
  %8591 = vperm.xlu0 %8590, %v8537
  %v8592 = vpop.permute.xlu0 %8591
  %8595 = vset.pattern.permute.xlu0 0
  %8596 = vperm.xlu0 %8595, %v8538
  %v8597 = vpop.permute.xlu0 %8596
  %8600 = vset.pattern.permute.xlu0 0
  %8601 = vperm.xlu0 %8600, %v8539
  %v8602 = vpop.permute.xlu0 %8601
  %8605 = vset.pattern.permute.xlu0 0
  %8606 = vperm.xlu0 %8605, %v8540
  %v8607 = vpop.permute.xlu0 %8606
  %8610 = vset.pattern.permute.xlu0 0
  %8611 = vperm.xlu0 %8610, %v8541
  %v8612 = vpop.permute.xlu0 %8611
  %8615 = vset.pattern.permute.xlu0 0
  %8616 = vperm.xlu0 %8615, %v8542
  %v8617 = vpop.permute.xlu0 %8616
  %8620 = vset.pattern.permute.xlu0 0
  %8621 = vperm.xlu0 %8620, %v8543
  %v8622 = vpop.permute.xlu0 %8621
  %8624 = vmatpush.msra.mxu0 %v8511
  %8625 = vmatpush.msra.mxu0 %v8510
  %8626 = vmatpush.msra.mxu0 %v8509
  %8627 = vmatpush.msra.mxu0 %v8508
  %8628 = vmatpush.msra.mxu0 %v8507
  %8629 = vmatpush.msra.mxu0 %v8506
  %8630 = vmatpush.msra.mxu0 %v8505
  %8631 = vmatpush.msra.mxu0 %v8504
  %8632 = vmatpush.msra.mxu0 %v8503
  %8633 = vmatpush.msra.mxu0 %v8502
  %8634 = vmatpush.msra.mxu0 %v8501
  %8635 = vmatpush.msra.mxu0 %v8500
  %8636 = vmatpush.msra.mxu0 %v8499
  %8637 = vmatpush.msra.mxu0 %v8498
  %8638 = vmatpush.msra.mxu0 %v8497
  %8639 = vmatpush.msra.mxu0 %v8496
  %8640 = vmatmul.f32.gmra.mxu0 %v8512
  %v8641 = vpop.f32.mrf.mxu0
  %v8642 = vadd.f32 %v8547, %v8641
  %8643 = vmatmul.f32.gmra.mxu0 %v8513
  %v8644 = vpop.f32.mrf.mxu0
  %v8645 = vadd.f32 %v8552, %v8644
  %8646 = vmatmul.f32.gmra.mxu0 %v8514
  %v8647 = vpop.f32.mrf.mxu0
  %v8648 = vadd.f32 %v8557, %v8647
  %8649 = vmatmul.f32.gmra.mxu0 %v8515
  %v8650 = vpop.f32.mrf.mxu0
  %v8651 = vadd.f32 %v8562, %v8650
  %8652 = vmatmul.f32.gmra.mxu0 %v8516
  %v8653 = vpop.f32.mrf.mxu0
  %v8654 = vadd.f32 %v8567, %v8653
  %8655 = vmatmul.f32.gmra.mxu0 %v8517
  %v8656 = vpop.f32.mrf.mxu0
  %v8657 = vadd.f32 %v8572, %v8656
  %8658 = vmatmul.f32.gmra.mxu0 %v8518
  %v8659 = vpop.f32.mrf.mxu0
  %v8660 = vadd.f32 %v8577, %v8659
  %8661 = vmatmul.f32.gmra.mxu0 %v8519
  %v8662 = vpop.f32.mrf.mxu0
  %v8663 = vadd.f32 %v8582, %v8662
  %8664 = vmatmul.f32.gmra.mxu0 %v8520
  %v8665 = vpop.f32.mrf.mxu0
  %v8666 = vadd.f32 %v8587, %v8665
  %8667 = vmatmul.f32.gmra.mxu0 %v8521
  %v8668 = vpop.f32.mrf.mxu0
  %v8669 = vadd.f32 %v8592, %v8668
  %8670 = vmatmul.f32.gmra.mxu0 %v8522
  %v8671 = vpop.f32.mrf.mxu0
  %v8672 = vadd.f32 %v8597, %v8671
  %8673 = vmatmul.f32.gmra.mxu0 %v8523
  %v8674 = vpop.f32.mrf.mxu0
  %v8675 = vadd.f32 %v8602, %v8674
  %8676 = vmatmul.f32.gmra.mxu0 %v8524
  %v8677 = vpop.f32.mrf.mxu0
  %v8678 = vadd.f32 %v8607, %v8677
  %8679 = vmatmul.f32.gmra.mxu0 %v8525
  %v8680 = vpop.f32.mrf.mxu0
  %v8681 = vadd.f32 %v8612, %v8680
  %8682 = vmatmul.f32.gmra.mxu0 %v8526
  %v8683 = vpop.f32.mrf.mxu0
  %v8684 = vadd.f32 %v8617, %v8683
  %8685 = vmatmul.f32.gmra.mxu0 %v8527
  %v8686 = vpop.f32.mrf.mxu0
  %v8687 = vadd.f32 %v8622, %v8686
  %8688 = vdwg.mxu0
  %v8689 = vmax.f32 %v8642, 0.0
  %v8690 = vmax.f32 %v8645, 0.0
  %v8691 = vmax.f32 %v8648, 0.0
  %v8692 = vmax.f32 %v8651, 0.0
  %v8693 = vmax.f32 %v8654, 0.0
  %v8694 = vmax.f32 %v8657, 0.0
  %v8695 = vmax.f32 %v8660, 0.0
  %v8696 = vmax.f32 %v8663, 0.0
  %v8697 = vmax.f32 %v8666, 0.0
  %v8698 = vmax.f32 %v8669, 0.0
  %v8699 = vmax.f32 %v8672, 0.0
  %v8700 = vmax.f32 %v8675, 0.0
  %v8701 = vmax.f32 %v8678, 0.0
  %v8702 = vmax.f32 %v8681, 0.0
  %v8703 = vmax.f32 %v8684, 0.0
  %v8704 = vmax.f32 %v8687, 0.0
  %v8705 = vld [vmem:[%s11] sm:$0xff]
  %v8706 = vld [vmem:[%s11 + $0x8] sm:$0xff]
  %v8707 = vld [vmem:[%s12] sm:$0xff]
  %v8708 = vld [vmem:[%s12 + $0x8] sm:$0xff]
  %8710 = vset.pattern.permute.xlu0 0
  %8711 = vperm.xlu0 %8710, %v8707
  %v8712 = vpop.permute.xlu0 %8711
  %8715 = vset.pattern.permute.xlu0 0
  %8716 = vperm.xlu0 %8715, %v8708
  %v8717 = vpop.permute.xlu0 %8716
  %8719 = vmatpush.msra.mxu0 %v8704
  %8720 = vmatpush.msra.mxu0 %v8703
  %8721 = vmatpush.msra.mxu0 %v8702
  %8722 = vmatpush.msra.mxu0 %v8701
  %8723 = vmatpush.msra.mxu0 %v8700
  %8724 = vmatpush.msra.mxu0 %v8699
  %8725 = vmatpush.msra.mxu0 %v8698
  %8726 = vmatpush.msra.mxu0 %v8697
  %8727 = vmatpush.msra.mxu0 %v8696
  %8728 = vmatpush.msra.mxu0 %v8695
  %8729 = vmatpush.msra.mxu0 %v8694
  %8730 = vmatpush.msra.mxu0 %v8693
  %8731 = vmatpush.msra.mxu0 %v8692
  %8732 = vmatpush.msra.mxu0 %v8691
  %8733 = vmatpush.msra.mxu0 %v8690
  %8734 = vmatpush.msra.mxu0 %v8689
  %8735 = vmatmul.f32.gmra.mxu0 %v8705
  %v8736 = vpop.f32.mrf.mxu0
  %v8737 = vadd.f32 %v8712, %v8736
  %8738 = vmatmul.f32.gmra.mxu0 %v8706
  %v8739 = vpop.f32.mrf.mxu0
  %v8740 = vadd.f32 %v8717, %v8739
  %8741 = vdwg.mxu0
  %8742 = vst [vmem:[%s13] sm:$0xff] %v8737
  %8743 = vst [vmem:[%s13 + $0x8] sm:$0xff] %v8740
  // Predicated region
  $region54: #{lenet5_forward.1} parent=0 // pred_check
    _
  $region55: #{lenet5_forward.1} parent=0 // pred_check_branch
    %8745 = sbr.rel (0) target = $region57
  $region56: #{lenet5_forward.1} parent=0 // pred_region
    _
  $region57: #{lenet5_forward.1} parent=0 // pred_fallthru
    _
  // Predicated region
  $region58: #{lenet5_forward.1} parent=0 // pred_check
    _
  $region59: #{lenet5_forward.1} parent=0 // pred_check_branch
    %8747 = sbr.rel (0) target = $region61
  $region60: #{lenet5_forward.1} parent=0 // pred_region
    _
  $region61: #{lenet5_forward.1} parent=0 // pred_fallthru
    _

</llo_original>
